<compile_context>
chip_gen: v6e
topology: v6e:2x2x1
jax: 0.10.0
libtpu: 0.0.40
codegen_flags: <defaults>
</compile_context>

<pallas_src>
import jax
import jax.numpy as jnp
from jax.experimental import pallas as pl
from jax.experimental.pallas import tpu as pltpu

BN_EPS = 1e-5
LANE = 128
# f32 keeps the numerical check tight; flip to jnp.bfloat16 on v6e/v7x for
# production (full MXU bf16 rate, half the HBM/VMEM traffic; accum stays f32).
MXU_DTYPE = jnp.float32
# Tile working set is small (<~6 MiB double-buffered at 1024-row tiles), so a
# single limit fits v5e/v6e (128 MiB VMEM) and v7x (64 MiB) alike.
VMEM_LIMIT_BYTES = 32 * 1024 * 1024


def _round_up(x, m):
    return (x + m - 1) // m * m


def _pick_rows_per_tile(img_rows, wp, max_rows):
    """Rows per grid tile for the flattened (img_row, padded_col) pixel grid.

    Must be a multiple of the padded width wp (tiles cover whole image rows so
    the in-kernel dx rolls only wrap into the discarded pad columns), must
    divide the total row count, and must satisfy the (8,128) block rule.
    """
    valid = [d * wp for d in range(1, img_rows + 1)
             if img_rows % d == 0 and (d * wp) % 8 == 0]
    fitting = [tm for tm in valid if tm <= max_rows]
    if fitting:
        return max(fitting)
    if valid:
        return min(valid)           # smallest legal tile (bigger than target)
    return img_rows * wp            # single full-slab tile (block == full dims)


def _make_conv_stats_kernel(wp, w_valid):
    """Pass 1: 3x3 conv as 9 shifted MXU matmuls + per-tile BN partial stats.

    x0/x1/x2: (TM, Cin)    row-flattened width-padded input, dy = 0, 1, 2
    w:        (9, Cin, Cp) per-tap weight matrices, tap index = 3*dy + dx
    y:        (TM, Cp)     raw conv output (pre-BN); pad columns hold garbage
    stats:    (1, 2, Cp)   per-tile [sum, sum_of_squares] over valid pixels
    """
    def kernel(x0_ref, x1_ref, x2_ref, w_ref, y_ref, stats_ref):
        tm = y_ref.shape[0]
        xs = (x0_ref[...], x1_ref[...], x2_ref[...])
        acc = jnp.zeros(y_ref.shape, jnp.float32)
        for dy in range(3):
            for dx in range(3):
                x = xs[dy]
                if dx:
                    # row i of the rolled tile holds x[i + dx]; the circular
                    # wrap at the tile end only lands in rows belonging to the
                    # two discarded right-pad columns.
                    x = pltpu.roll(x, shift=tm - dx, axis=0)
                acc = acc + jnp.dot(x, w_ref[3 * dy + dx],
                                    preferred_element_type=jnp.float32)
        # Mask the right-pad columns (w' in {W, W+1}) out of the batch stats.
        col = jax.lax.broadcasted_iota(jnp.int32, (tm, 1), 0) % wp
        mask = (col < w_valid).astype(jnp.float32)
        masked = acc * mask
        stats_ref[0, 0:1, :] = jnp.sum(masked, axis=0, keepdims=True)
        stats_ref[0, 1:2, :] = jnp.sum(masked * acc, axis=0, keepdims=True)
        y_ref[...] = acc

    return kernel


def _bn_relu_kernel(y_ref, scale_ref, shift_ref, o_ref):
    """Pass 2: folded BatchNorm affine (y*scale + shift) followed by ReLU."""
    o_ref[...] = jnp.maximum(y_ref[...] * scale_ref[...] + shift_ref[...], 0.0)


def _conv_bn_relu(x_nhwc, w_oihw, gamma, beta, *, max_rows):
    """One Conv(3x3, pad=1, bias folded away) + BatchNorm(train) + ReLU block.

    x_nhwc may carry trailing zero-padded channels (they meet zero weight
    rows). Returns NHWC with the channel dim padded to a multiple of 128.
    """
    N, H, W, Cin = x_nhwc.shape
    Cout, Cin_w = w_oihw.shape[0], w_oihw.shape[1]
    Coutp = _round_up(Cout, LANE)
    wp = W + 2                       # padded width
    M3 = N * H * wp                  # rows of the flattened width-padded grid
    TM = _pick_rows_per_tile(N * H, wp, max_rows)
    G = M3 // TM

    # conv padding=1 -> zero-pad spatially, then three dy-shifted row-flattened
    # views (3x duplication instead of im2col's 9x; dx is handled in-kernel).
    xpad = jnp.pad(x_nhwc, ((0, 0), (1, 1), (1, 1), (0, 0)))
    xd = [xpad[:, dy:dy + H].reshape(M3, Cin).astype(MXU_DTYPE)
          for dy in range(3)]

    # (Cout, Cin_w, 3, 3) -> (3, 3, Cin_w, Cout) -> (9, Cin, Coutp), zero-pad.
    wk = jnp.transpose(w_oihw, (2, 3, 1, 0)).reshape(9, Cin_w, Cout)
    wk = jnp.pad(wk, ((0, 0), (0, Cin - Cin_w), (0, Coutp - Cout)))
    wk = wk.astype(MXU_DTYPE)

    x_spec = pl.BlockSpec((TM, Cin), lambda i: (i, 0))
    compiler_params = pltpu.CompilerParams(
        dimension_semantics=("parallel",),
        vmem_limit_bytes=VMEM_LIMIT_BYTES)

    y_flat, part = pl.pallas_call(
        _make_conv_stats_kernel(wp, W),
        out_shape=(jax.ShapeDtypeStruct((M3, Coutp), jnp.float32),
                   jax.ShapeDtypeStruct((G, 2, Coutp), jnp.float32)),
        grid_spec=pltpu.PrefetchScalarGridSpec(
            num_scalar_prefetch=0,
            grid=(G,),
            in_specs=[x_spec, x_spec, x_spec,
                      pl.BlockSpec((9, Cin, Coutp), lambda i: (0, 0, 0))],
            out_specs=[pl.BlockSpec((TM, Coutp), lambda i: (i, 0)),
                       pl.BlockSpec((1, 2, Coutp), lambda i: (i, 0, 0))]),
        compiler_params=compiler_params,
        cost_estimate=pl.CostEstimate(
            flops=2 * 9 * M3 * Cin * Coutp,
            transcendentals=0,
            bytes_accessed=4 * (3 * M3 * Cin + M3 * Coutp
                                + 9 * Cin * Coutp + G * 2 * Coutp)),
    )(xd[0], xd[1], xd[2], wk)

    # Tiny cross-tile reduction + BN fold (Coutp scalars; plain JAX glue).
    sums = jnp.sum(part, axis=0)                        # (2, Coutp)
    count = jnp.float32(N * H * W)
    mean = sums[0] / count
    var = jnp.maximum(sums[1] / count - mean * mean, 0.0)   # biased variance
    gamma_p = jnp.pad(gamma.astype(jnp.float32), (0, Coutp - Cout))
    beta_p = jnp.pad(beta.astype(jnp.float32), (0, Coutp - Cout))
    scale = gamma_p * jax.lax.rsqrt(var + BN_EPS)
    shift = beta_p - mean * scale

    out_flat = pl.pallas_call(
        _bn_relu_kernel,
        out_shape=jax.ShapeDtypeStruct((M3, Coutp), jnp.float32),
        grid_spec=pltpu.PrefetchScalarGridSpec(
            num_scalar_prefetch=0,
            grid=(G,),
            in_specs=[pl.BlockSpec((TM, Coutp), lambda i: (i, 0)),
                      pl.BlockSpec((1, Coutp), lambda i: (0, 0)),
                      pl.BlockSpec((1, Coutp), lambda i: (0, 0))],
            out_specs=pl.BlockSpec((TM, Coutp), lambda i: (i, 0))),
        compiler_params=compiler_params,
        cost_estimate=pl.CostEstimate(
            flops=2 * M3 * Coutp,
            transcendentals=0,
            bytes_accessed=4 * (2 * M3 * Coutp + 2 * Coutp)),
    )(y_flat, scale.reshape(1, Coutp), shift.reshape(1, Coutp))

    # Back to NHWC, dropping the two right-pad columns; channels stay padded
    # to Coutp (exact zeros) and meet zero weight rows in the next conv.
    return out_flat.reshape(N, H, wp, Coutp)[:, :, :W, :]


def double_conv(x_nchw, params, *, max_rows_per_tile=1024):
    """DoubleConv forward. Input/output are NCHW, matching PyTorch.

    Conv biases b1/b2 are deliberately not applied inside the kernels:
    training-mode BatchNorm subtracts the per-channel batch mean immediately
    after the conv, which cancels a per-channel bias exactly.
    """
    out_ch = params["w1"].shape[0]
    x = jnp.transpose(x_nchw, (0, 2, 3, 1))               # NCHW -> NHWC
    h = _conv_bn_relu(x, params["w1"], params["g1"], params["beta1"],
                      max_rows=max_rows_per_tile)
    h = _conv_bn_relu(h, params["w2"], params["g2"], params["beta2"],
                      max_rows=max_rows_per_tile)
    return jnp.transpose(h[..., :out_ch], (0, 3, 1, 2))   # NHWC -> NCHW


def init_params(key, in_ch, out_ch):
    """Deterministic init mirroring the module's parameter shapes.

    Conv: uniform(-1/sqrt(fan_in), 1/sqrt(fan_in)) like PyTorch defaults.
    BatchNorm: weight=1, bias=0 (PyTorch defaults).
    """
    k1, k2, k3, k4 = jax.random.split(key, 4)
    lim1 = 1.0 / jnp.sqrt(in_ch * 9)
    lim2 = 1.0 / jnp.sqrt(out_ch * 9)
    return {
        "w1": jax.random.uniform(k1, (out_ch, in_ch, 3, 3), jnp.float32, -lim1, lim1),
        "b1": jax.random.uniform(k2, (out_ch,), jnp.float32, -lim1, lim1),
        "g1": jnp.ones((out_ch,), jnp.float32),
        "beta1": jnp.zeros((out_ch,), jnp.float32),
        "w2": jax.random.uniform(k3, (out_ch, out_ch, 3, 3), jnp.float32, -lim2, lim2),
        "b2": jax.random.uniform(k4, (out_ch,), jnp.float32, -lim2, lim2),
        "g2": jnp.ones((out_ch,), jnp.float32),
        "beta2": jnp.zeros((out_ch,), jnp.float32),
    }


def _double_conv_ref(x_nchw, params):
    """Pure-JAX reference (lax conv + bias + training-mode BN + ReLU)."""

    def block(x, w, b, g, be):
        y = jax.lax.conv_general_dilated(
            x, w, window_strides=(1, 1), padding="SAME",
            dimension_numbers=("NCHW", "OIHW", "NCHW"),
        ) + b[None, :, None, None]
        mean = y.mean(axis=(0, 2, 3), keepdims=True)
        var = jnp.square(y - mean).mean(axis=(0, 2, 3), keepdims=True)
        y = (y - mean) * jax.lax.rsqrt(var + BN_EPS)
        y = y * g[None, :, None, None] + be[None, :, None, None]
        return jnp.maximum(y, 0.0)

    h = block(x_nchw, params["w1"], params["b1"], params["g1"], params["beta1"])
    return block(h, params["w2"], params["b2"], params["g2"], params["beta2"])


if __name__ == "__main__":
    key = jax.random.PRNGKey(0)
    k_x, k_p = jax.random.split(key)

    N, IN_CH, OUT_CH, H, W = 2, 4, 8, 16, 16
    x = jax.random.normal(k_x, (N, IN_CH, H, W), jnp.float32)
    params = init_params(k_p, IN_CH, OUT_CH)

    ref = jax.block_until_ready(_double_conv_ref(x, params))

    out = jax.block_until_ready(double_conv(x, params))
    assert out.shape == (N, OUT_CH, H, W), out.shape
    err = float(jnp.max(jnp.abs(out - ref)))
    assert err < 1e-3, f"max abs error vs reference: {err}"

    # Also exercise the multi-tile grid path (4 pixel tiles per pass, partial
    # BN stats reduced across tiles) to validate the tiled pipeline end to end.
    out_tiled = jax.block_until_ready(
        double_conv(x, params, max_rows_per_tile=200))
    err_tiled = float(jnp.max(jnp.abs(out_tiled - ref)))
    assert err_tiled < 1e-3, f"max abs error (tiled) vs reference: {err_tiled}"

    print("KERNEL_OK")
</pallas_src>

<mosaic_0001>
module attributes {stable_mosaic.version = 11 : i64} {
  func.func @kernel(%arg0: i32, %arg1: memref<576x4xf32, #tpu.memory_space<vmem>>, %arg2: memref<576x4xf32, #tpu.memory_space<vmem>>, %arg3: memref<576x4xf32, #tpu.memory_space<vmem>>, %arg4: memref<9x4x128xf32, #tpu.memory_space<vmem>>, %arg5: memref<576x128xf32, #tpu.memory_space<vmem>>, %arg6: memref<1x2x128xf32, #tpu.memory_space<vmem>>) attributes {dimension_semantics = [#tpu.dimension_semantics<parallel>], iteration_bounds = array<i64: 1>, scalar_prefetch = 0 : i64, scratch_operands = 0 : i64, tpu.core_type = #tpu.core_type<tc>, window_params = [{transform_indices = @transform_0, window_bounds = array<i64: 576, 4>}, {transform_indices = @transform_1, window_bounds = array<i64: 576, 4>}, {transform_indices = @transform_2, window_bounds = array<i64: 576, 4>}, {pipeline_mode = #tpu.pipeline_mode<synchronous>, transform_indices = @transform_3, window_bounds = array<i64: 9, 4, 128>}, {transform_indices = @transform_4, window_bounds = array<i64: 576, 128>}, {transform_indices = @transform_5, window_bounds = array<i64: 1, 2, 128>}]} {
    %c0 = arith.constant 0 : index
    %c0_0 = arith.constant 0 : index
    %0 = vector.load %arg1[%c0, %c0_0] : memref<576x4xf32, #tpu.memory_space<vmem>>, vector<576x4xf32>
    %c0_1 = arith.constant 0 : index
    %c0_2 = arith.constant 0 : index
    %1 = vector.load %arg2[%c0_1, %c0_2] : memref<576x4xf32, #tpu.memory_space<vmem>>, vector<576x4xf32>
    %c0_3 = arith.constant 0 : index
    %c0_4 = arith.constant 0 : index
    %2 = vector.load %arg3[%c0_3, %c0_4] : memref<576x4xf32, #tpu.memory_space<vmem>>, vector<576x4xf32>
    %cst = arith.constant 0.000000e+00 : f32
    %3 = vector.broadcast %cst : f32 to vector<576x128xf32>
    %c0_5 = arith.constant 0 : index
    %c0_6 = arith.constant 0 : index
    %c0_7 = arith.constant 0 : index
    %4 = vector.load %arg4[%c0_5, %c0_6, %c0_7] : memref<9x4x128xf32, #tpu.memory_space<vmem>>, vector<1x4x128xf32>
    %5 = vector.shape_cast %4 : vector<1x4x128xf32> to vector<4x128xf32>
    %cst_8 = arith.constant dense<0.000000e+00> : vector<576x128xf32>
    %6 = tpu.matmul %0, %5, %cst_8 {dimension_numbers = #tpu.dot_dimension_numbers<[1], [0], [0], [1], [0, 0, 1, 1], [], []>} : vector<576x4xf32>, vector<4x128xf32>, vector<576x128xf32> -> vector<576x128xf32>
    %7 = arith.addf %3, %6 : vector<576x128xf32>
    %c575_i32 = arith.constant 575 : i32
    %8 = tpu.dynamic_rotate %0 by %c575_i32 dim 0 : vector<576x4xf32>, i32 -> vector<576x4xf32>
    %c1 = arith.constant 1 : index
    %c0_9 = arith.constant 0 : index
    %c0_10 = arith.constant 0 : index
    %9 = vector.load %arg4[%c1, %c0_9, %c0_10] : memref<9x4x128xf32, #tpu.memory_space<vmem>>, vector<1x4x128xf32>
    %10 = vector.shape_cast %9 : vector<1x4x128xf32> to vector<4x128xf32>
    %cst_11 = arith.constant dense<0.000000e+00> : vector<576x128xf32>
    %11 = tpu.matmul %8, %10, %cst_11 {dimension_numbers = #tpu.dot_dimension_numbers<[1], [0], [0], [1], [0, 0, 1, 1], [], []>} : vector<576x4xf32>, vector<4x128xf32>, vector<576x128xf32> -> vector<576x128xf32>
    %12 = arith.addf %7, %11 : vector<576x128xf32>
    %c574_i32 = arith.constant 574 : i32
    %13 = tpu.dynamic_rotate %0 by %c574_i32 dim 0 : vector<576x4xf32>, i32 -> vector<576x4xf32>
    %c2 = arith.constant 2 : index
    %c0_12 = arith.constant 0 : index
    %c0_13 = arith.constant 0 : index
    %14 = vector.load %arg4[%c2, %c0_12, %c0_13] : memref<9x4x128xf32, #tpu.memory_space<vmem>>, vector<1x4x128xf32>
    %15 = vector.shape_cast %14 : vector<1x4x128xf32> to vector<4x128xf32>
    %cst_14 = arith.constant dense<0.000000e+00> : vector<576x128xf32>
    %16 = tpu.matmul %13, %15, %cst_14 {dimension_numbers = #tpu.dot_dimension_numbers<[1], [0], [0], [1], [0, 0, 1, 1], [], []>} : vector<576x4xf32>, vector<4x128xf32>, vector<576x128xf32> -> vector<576x128xf32>
    %17 = arith.addf %12, %16 : vector<576x128xf32>
    %c3 = arith.constant 3 : index
    %c0_15 = arith.constant 0 : index
    %c0_16 = arith.constant 0 : index
    %18 = vector.load %arg4[%c3, %c0_15, %c0_16] : memref<9x4x128xf32, #tpu.memory_space<vmem>>, vector<1x4x128xf32>
    %19 = vector.shape_cast %18 : vector<1x4x128xf32> to vector<4x128xf32>
    %cst_17 = arith.constant dense<0.000000e+00> : vector<576x128xf32>
    %20 = tpu.matmul %1, %19, %cst_17 {dimension_numbers = #tpu.dot_dimension_numbers<[1], [0], [0], [1], [0, 0, 1, 1], [], []>} : vector<576x4xf32>, vector<4x128xf32>, vector<576x128xf32> -> vector<576x128xf32>
    %21 = arith.addf %17, %20 : vector<576x128xf32>
    %c575_i32_18 = arith.constant 575 : i32
    %22 = tpu.dynamic_rotate %1 by %c575_i32_18 dim 0 : vector<576x4xf32>, i32 -> vector<576x4xf32>
    %c4 = arith.constant 4 : index
    %c0_19 = arith.constant 0 : index
    %c0_20 = arith.constant 0 : index
    %23 = vector.load %arg4[%c4, %c0_19, %c0_20] : memref<9x4x128xf32, #tpu.memory_space<vmem>>, vector<1x4x128xf32>
    %24 = vector.shape_cast %23 : vector<1x4x128xf32> to vector<4x128xf32>
    %cst_21 = arith.constant dense<0.000000e+00> : vector<576x128xf32>
    %25 = tpu.matmul %22, %24, %cst_21 {dimension_numbers = #tpu.dot_dimension_numbers<[1], [0], [0], [1], [0, 0, 1, 1], [], []>} : vector<576x4xf32>, vector<4x128xf32>, vector<576x128xf32> -> vector<576x128xf32>
    %26 = arith.addf %21, %25 : vector<576x128xf32>
    %c574_i32_22 = arith.constant 574 : i32
    %27 = tpu.dynamic_rotate %1 by %c574_i32_22 dim 0 : vector<576x4xf32>, i32 -> vector<576x4xf32>
    %c5 = arith.constant 5 : index
    %c0_23 = arith.constant 0 : index
    %c0_24 = arith.constant 0 : index
    %28 = vector.load %arg4[%c5, %c0_23, %c0_24] : memref<9x4x128xf32, #tpu.memory_space<vmem>>, vector<1x4x128xf32>
    %29 = vector.shape_cast %28 : vector<1x4x128xf32> to vector<4x128xf32>
    %cst_25 = arith.constant dense<0.000000e+00> : vector<576x128xf32>
    %30 = tpu.matmul %27, %29, %cst_25 {dimension_numbers = #tpu.dot_dimension_numbers<[1], [0], [0], [1], [0, 0, 1, 1], [], []>} : vector<576x4xf32>, vector<4x128xf32>, vector<576x128xf32> -> vector<576x128xf32>
    %31 = arith.addf %26, %30 : vector<576x128xf32>
    %c6 = arith.constant 6 : index
    %c0_26 = arith.constant 0 : index
    %c0_27 = arith.constant 0 : index
    %32 = vector.load %arg4[%c6, %c0_26, %c0_27] : memref<9x4x128xf32, #tpu.memory_space<vmem>>, vector<1x4x128xf32>
    %33 = vector.shape_cast %32 : vector<1x4x128xf32> to vector<4x128xf32>
    %cst_28 = arith.constant dense<0.000000e+00> : vector<576x128xf32>
    %34 = tpu.matmul %2, %33, %cst_28 {dimension_numbers = #tpu.dot_dimension_numbers<[1], [0], [0], [1], [0, 0, 1, 1], [], []>} : vector<576x4xf32>, vector<4x128xf32>, vector<576x128xf32> -> vector<576x128xf32>
    %35 = arith.addf %31, %34 : vector<576x128xf32>
    %c575_i32_29 = arith.constant 575 : i32
    %36 = tpu.dynamic_rotate %2 by %c575_i32_29 dim 0 : vector<576x4xf32>, i32 -> vector<576x4xf32>
    %c7 = arith.constant 7 : index
    %c0_30 = arith.constant 0 : index
    %c0_31 = arith.constant 0 : index
    %37 = vector.load %arg4[%c7, %c0_30, %c0_31] : memref<9x4x128xf32, #tpu.memory_space<vmem>>, vector<1x4x128xf32>
    %38 = vector.shape_cast %37 : vector<1x4x128xf32> to vector<4x128xf32>
    %cst_32 = arith.constant dense<0.000000e+00> : vector<576x128xf32>
    %39 = tpu.matmul %36, %38, %cst_32 {dimension_numbers = #tpu.dot_dimension_numbers<[1], [0], [0], [1], [0, 0, 1, 1], [], []>} : vector<576x4xf32>, vector<4x128xf32>, vector<576x128xf32> -> vector<576x128xf32>
    %40 = arith.addf %35, %39 : vector<576x128xf32>
    %c574_i32_33 = arith.constant 574 : i32
    %41 = tpu.dynamic_rotate %2 by %c574_i32_33 dim 0 : vector<576x4xf32>, i32 -> vector<576x4xf32>
    %c8 = arith.constant 8 : index
    %c0_34 = arith.constant 0 : index
    %c0_35 = arith.constant 0 : index
    %42 = vector.load %arg4[%c8, %c0_34, %c0_35] : memref<9x4x128xf32, #tpu.memory_space<vmem>>, vector<1x4x128xf32>
    %43 = vector.shape_cast %42 : vector<1x4x128xf32> to vector<4x128xf32>
    %cst_36 = arith.constant dense<0.000000e+00> : vector<576x128xf32>
    %44 = tpu.matmul %41, %43, %cst_36 {dimension_numbers = #tpu.dot_dimension_numbers<[1], [0], [0], [1], [0, 0, 1, 1], [], []>} : vector<576x4xf32>, vector<4x128xf32>, vector<576x128xf32> -> vector<576x128xf32>
    %45 = arith.addf %40, %44 : vector<576x128xf32>
    %46 = tpu.iota {dimensions = array<i32: 0>} : vector<576x1xi32>
    %c18_i32 = arith.constant 18 : i32
    %c0_i32 = arith.constant 0 : i32
    %47 = arith.cmpi eq, %c18_i32, %c0_i32 : i32
    %c1_i32 = arith.constant 1 : i32
    %48 = arith.select %47, %c1_i32, %c18_i32 : i32
    %49 = vector.broadcast %48 : i32 to vector<576x1xi32>
    %50 = arith.remsi %46, %49 : vector<576x1xi32>
    %c0_i32_37 = arith.constant 0 : i32
    %51 = vector.broadcast %c0_i32_37 : i32 to vector<576x1xi32>
    %52 = arith.cmpi ne, %50, %51 : vector<576x1xi32>
    %c0_i32_38 = arith.constant 0 : i32
    %53 = vector.broadcast %c0_i32_38 : i32 to vector<576x1xi32>
    %54 = arith.cmpi slt, %50, %53 : vector<576x1xi32>
    %c0_i32_39 = arith.constant 0 : i32
    %55 = arith.cmpi slt, %48, %c0_i32_39 : i32
    %56 = vector.broadcast %55 : i1 to vector<576x1xi1>
    %57 = vector.broadcast %56 : vector<576x1xi1> to vector<576x1xi1>
    %58 = arith.xori %54, %57 : vector<576x1xi1>
    %59 = arith.andi %58, %52 : vector<576x1xi1>
    %60 = vector.broadcast %48 : i32 to vector<576x1xi32>
    %61 = arith.addi %50, %60 : vector<576x1xi32>
    %62 = arith.select %59, %61, %50 : vector<576x1xi1>, vector<576x1xi32>
    %c16_i32 = arith.constant 16 : i32
    %63 = vector.broadcast %c16_i32 : i32 to vector<576x1xi32>
    %64 = arith.cmpi slt, %62, %63 : vector<576x1xi32>
    %65 = arith.extui %64 : vector<576x1xi1> to vector<576x1xi32>
    %66 = arith.sitofp %65 : vector<576x1xi32> to vector<576x1xf32>
    %67 = vector.broadcast %66 : vector<576x1xf32> to vector<576x128xf32>
    %68 = arith.mulf %45, %67 : vector<576x128xf32>
    %cst_40 = arith.constant dense<0.000000e+00> : vector<128xf32>
    %69 = vector.multi_reduction <add>, %68, %cst_40 [0] : vector<576x128xf32> to vector<128xf32>
    %70 = vector.shape_cast %69 : vector<128xf32> to vector<1x128xf32>
    %c0_41 = arith.constant 0 : index
    %c0_42 = arith.constant 0 : index
    %c0_43 = arith.constant 0 : index
    %71 = vector.load %arg6[%c0_41, %c0_42, %c0_43] : memref<1x2x128xf32, #tpu.memory_space<vmem>>, vector<1x1x128xf32>
    %72 = vector.shape_cast %71 : vector<1x1x128xf32> to vector<1x128xf32>
    %73 = vector.shape_cast %70 : vector<1x128xf32> to vector<1x1x128xf32>
    tpu.vector_store %arg6[%c0_41, %c0_42, %c0_43], %73 {strides = array<i32>} : memref<1x2x128xf32, #tpu.memory_space<vmem>>, vector<1x1x128xf32>,
    %74 = arith.mulf %68, %45 : vector<576x128xf32>
    %cst_44 = arith.constant dense<0.000000e+00> : vector<128xf32>
    %75 = vector.multi_reduction <add>, %74, %cst_44 [0] : vector<576x128xf32> to vector<128xf32>
    %76 = vector.shape_cast %75 : vector<128xf32> to vector<1x128xf32>
    %c0_45 = arith.constant 0 : index
    %c1_46 = arith.constant 1 : index
    %c0_47 = arith.constant 0 : index
    %77 = vector.load %arg6[%c0_45, %c1_46, %c0_47] : memref<1x2x128xf32, #tpu.memory_space<vmem>>, vector<1x1x128xf32>
    %78 = vector.shape_cast %77 : vector<1x1x128xf32> to vector<1x128xf32>
    %79 = vector.shape_cast %76 : vector<1x128xf32> to vector<1x1x128xf32>
    tpu.vector_store %arg6[%c0_45, %c1_46, %c0_47], %79 {strides = array<i32>} : memref<1x2x128xf32, #tpu.memory_space<vmem>>, vector<1x1x128xf32>,
    %c0_48 = arith.constant 0 : index
    %c0_49 = arith.constant 0 : index
    %80 = vector.load %arg5[%c0_48, %c0_49] : memref<576x128xf32, #tpu.memory_space<vmem>>, vector<576x128xf32>
    tpu.vector_store %arg5[%c0_48, %c0_49], %45 {strides = array<i32>} : memref<576x128xf32, #tpu.memory_space<vmem>>, vector<576x128xf32>,
    return
  }
  func.func @transform_0(%arg0: i32) -> (i32, i32) {
    %c0_i32 = arith.constant 0 : i32
    %c0_i32_0 = arith.constant 0 : i32
    return %arg0, %c0_i32 : i32, i32
  }
  func.func @transform_1(%arg0: i32) -> (i32, i32) {
    %c0_i32 = arith.constant 0 : i32
    %c0_i32_0 = arith.constant 0 : i32
    return %arg0, %c0_i32 : i32, i32
  }
  func.func @transform_2(%arg0: i32) -> (i32, i32) {
    %c0_i32 = arith.constant 0 : i32
    %c0_i32_0 = arith.constant 0 : i32
    return %arg0, %c0_i32 : i32, i32
  }
  func.func @transform_3(%arg0: i32) -> (i32, i32, i32) {
    %c0_i32 = arith.constant 0 : i32
    %c0_i32_0 = arith.constant 0 : i32
    %c0_i32_1 = arith.constant 0 : i32
    %c0_i32_2 = arith.constant 0 : i32
    return %c0_i32, %c0_i32_0, %c0_i32_1 : i32, i32, i32
  }
  func.func @transform_4(%arg0: i32) -> (i32, i32) {
    %c0_i32 = arith.constant 0 : i32
    %c0_i32_0 = arith.constant 0 : i32
    return %arg0, %c0_i32 : i32, i32
  }
  func.func @transform_5(%arg0: i32) -> (i32, i32, i32) {
    %c0_i32 = arith.constant 0 : i32
    %c0_i32_0 = arith.constant 0 : i32
    %c0_i32_1 = arith.constant 0 : i32
    return %arg0, %c0_i32, %c0_i32_0 : i32, i32, i32
  }
}

</mosaic_0001>

<llo_original>
// kernel: tpu_custom_call.1
$region0: #{tpu_custom_call.1}
  #allocation0 [shape = 'u32[]', space=smem, size = 0x4, offset = 0x4, fixed_abs, tag = 'smem constant byte address 0x4 - core index']
  #allocation1 [shape = 'u32[144,128]{1,0:T(1,128)}', space=vmem, size = 0x12000, scoped, tag = 'internal scratch']
  %s0 = inlined_call_operand.vmem [shape: f32[576,4], index: 0, kind: input, shape index: {}]
  %s1 = inlined_call_operand.vmem [shape: f32[576,4], index: 1, kind: input, shape index: {}]
  %s2 = inlined_call_operand.vmem [shape: f32[576,4], index: 2, kind: input, shape index: {}]
  %s3 = inlined_call_operand.vmem [shape: f32[9,4,128], index: 3, kind: input, shape index: {}]
  %s4 = inlined_call_operand.hbm [shape: f32[576,128], index: 4, kind: output, shape index: {0}]
  %s5 = inlined_call_operand.hbm [shape: f32[1,2,128], index: 5, kind: output, shape index: {1}]
  %6 = xla_tuple %s4, %s5
  %s7 = sld [smem:[#allocation0]]
  $region34: #{tpu_custom_call.1} parent=0
    _
  %s9 = ssub.s32 1, %s7
  %s10 = scalar_select 0, %s9, %s7
  $region1: #{tpu_custom_call.1} parent=0
    #allocation2 [shape = 'u8[294912]{0}', space=vmem, size = 0x48000, scoped, tag = 'output window, operand 0, single buffered']
    #allocation3 [shape = 's32[1]{0}', space=sflag, size = 0x4, scoped, tag = 'scoped memory for tpu_custom_call.1']
    #allocation4 [shape = 'u8[1024]{0}', space=vmem, size = 0x400, scoped, tag = 'output window, operand 1, single buffered']
    #allocation5 [shape = 's32[1]{0}', space=sflag, size = 0x4, scoped, tag = 'scoped memory for tpu_custom_call.1']
    %11 = vsyncpa [#allocation3], 0
    %12 = vsyncpa [#allocation5], 0
    // Predicated region
    $region2: #{tpu_custom_call.1} parent=1 // pred_check
      _
    $region3: #{tpu_custom_call.1} parent=1 // pred_check_branch
      %14 = sbr.rel (0) target = $region5
    $region4: #{tpu_custom_call.1} parent=1 // pred_region
      _
    $region5: #{tpu_custom_call.1} parent=1 // pred_fallthru
      _
    // Predicated region
    $region6: #{tpu_custom_call.1} parent=1 // pred_check
      _
    $region7: #{tpu_custom_call.1} parent=1 // pred_check_branch
      %16 = sbr.rel (0) target = $region9
    $region8: #{tpu_custom_call.1} parent=1 // pred_region
      _
    $region9: #{tpu_custom_call.1} parent=1 // pred_fallthru
      _
    // Predicated region
    $region10: #{tpu_custom_call.1} parent=1 // pred_check
      _
    $region11: #{tpu_custom_call.1} parent=1 // pred_check_branch
      %18 = sbr.rel (0) target = $region13
    $region12: #{tpu_custom_call.1} parent=1 // pred_region
      _
    $region13: #{tpu_custom_call.1} parent=1 // pred_fallthru
      _
    // Predicated region
    $region14: #{tpu_custom_call.1} parent=1 // pred_check
      _
    $region15: #{tpu_custom_call.1} parent=1 // pred_check_branch
      %20 = sbr.rel (0) target = $region17
    $region16: #{tpu_custom_call.1} parent=1 // pred_region
      _
    $region17: #{tpu_custom_call.1} parent=1 // pred_fallthru
      _
    %v21 = vld [vmem:[%s0] sm:$0xff]
    %v22 = vld [vmem:[%s0 + $0x8] sm:$0xff]
    %v23 = vld [vmem:[%s0 + $0x10] sm:$0xff]
    %v24 = vld [vmem:[%s0 + $0x18] sm:$0xff]
    %v25 = vld [vmem:[%s0 + $0x20] sm:$0xff]
    %v26 = vld [vmem:[%s0 + $0x28] sm:$0xff]
    %v27 = vld [vmem:[%s0 + $0x30] sm:$0xff]
    %v28 = vld [vmem:[%s0 + $0x38] sm:$0xff]
    %v29 = vld [vmem:[%s0 + $0x40] sm:$0xff]
    %v30 = vld [vmem:[%s0 + $0x48] sm:$0xff]
    %v31 = vld [vmem:[%s0 + $0x50] sm:$0xff]
    %v32 = vld [vmem:[%s0 + $0x58] sm:$0xff]
    %v33 = vld [vmem:[%s0 + $0x60] sm:$0xff]
    %v34 = vld [vmem:[%s0 + $0x68] sm:$0xff]
    %v35 = vld [vmem:[%s0 + $0x70] sm:$0xff]
    %v36 = vld [vmem:[%s0 + $0x78] sm:$0xff]
    %v37 = vld [vmem:[%s0 + $0x80] sm:$0xff]
    %v38 = vld [vmem:[%s0 + $0x88] sm:$0xff]
    %v39 = vld [vmem:[%s0 + $0x90] sm:$0xff]
    %v40 = vld [vmem:[%s0 + $0x98] sm:$0xff]
    %v41 = vld [vmem:[%s0 + $0xa0] sm:$0xff]
    %v42 = vld [vmem:[%s0 + $0xa8] sm:$0xff]
    %v43 = vld [vmem:[%s0 + $0xb0] sm:$0xff]
    %v44 = vld [vmem:[%s0 + $0xb8] sm:$0xff]
    %v45 = vld [vmem:[%s0 + $0xc0] sm:$0xff]
    %v46 = vld [vmem:[%s0 + $0xc8] sm:$0xff]
    %v47 = vld [vmem:[%s0 + $0xd0] sm:$0xff]
    %v48 = vld [vmem:[%s0 + $0xd8] sm:$0xff]
    %v49 = vld [vmem:[%s0 + $0xe0] sm:$0xff]
    %v50 = vld [vmem:[%s0 + $0xe8] sm:$0xff]
    %v51 = vld [vmem:[%s0 + $0xf0] sm:$0xff]
    %v52 = vld [vmem:[%s0 + $0xf8] sm:$0xff]
    %v53 = vld [vmem:[%s0 + $0x100] sm:$0xff]
    %v54 = vld [vmem:[%s0 + $0x108] sm:$0xff]
    %v55 = vld [vmem:[%s0 + $0x110] sm:$0xff]
    %v56 = vld [vmem:[%s0 + $0x118] sm:$0xff]
    %v57 = vld [vmem:[%s0 + $0x120] sm:$0xff]
    %v58 = vld [vmem:[%s0 + $0x128] sm:$0xff]
    %v59 = vld [vmem:[%s0 + $0x130] sm:$0xff]
    %v60 = vld [vmem:[%s0 + $0x138] sm:$0xff]
    %v61 = vld [vmem:[%s0 + $0x140] sm:$0xff]
    %v62 = vld [vmem:[%s0 + $0x148] sm:$0xff]
    %v63 = vld [vmem:[%s0 + $0x150] sm:$0xff]
    %v64 = vld [vmem:[%s0 + $0x158] sm:$0xff]
    %v65 = vld [vmem:[%s0 + $0x160] sm:$0xff]
    %v66 = vld [vmem:[%s0 + $0x168] sm:$0xff]
    %v67 = vld [vmem:[%s0 + $0x170] sm:$0xff]
    %v68 = vld [vmem:[%s0 + $0x178] sm:$0xff]
    %v69 = vld [vmem:[%s0 + $0x180] sm:$0xff]
    %v70 = vld [vmem:[%s0 + $0x188] sm:$0xff]
    %v71 = vld [vmem:[%s0 + $0x190] sm:$0xff]
    %v72 = vld [vmem:[%s0 + $0x198] sm:$0xff]
    %v73 = vld [vmem:[%s0 + $0x1a0] sm:$0xff]
    %v74 = vld [vmem:[%s0 + $0x1a8] sm:$0xff]
    %v75 = vld [vmem:[%s0 + $0x1b0] sm:$0xff]
    %v76 = vld [vmem:[%s0 + $0x1b8] sm:$0xff]
    %v77 = vld [vmem:[%s0 + $0x1c0] sm:$0xff]
    %v78 = vld [vmem:[%s0 + $0x1c8] sm:$0xff]
    %v79 = vld [vmem:[%s0 + $0x1d0] sm:$0xff]
    %v80 = vld [vmem:[%s0 + $0x1d8] sm:$0xff]
    %v81 = vld [vmem:[%s0 + $0x1e0] sm:$0xff]
    %v82 = vld [vmem:[%s0 + $0x1e8] sm:$0xff]
    %v83 = vld [vmem:[%s0 + $0x1f0] sm:$0xff]
    %v84 = vld [vmem:[%s0 + $0x1f8] sm:$0xff]
    %v85 = vld [vmem:[%s0 + $0x200] sm:$0xff]
    %v86 = vld [vmem:[%s0 + $0x208] sm:$0xff]
    %v87 = vld [vmem:[%s0 + $0x210] sm:$0xff]
    %v88 = vld [vmem:[%s0 + $0x218] sm:$0xff]
    %v89 = vld [vmem:[%s0 + $0x220] sm:$0xff]
    %v90 = vld [vmem:[%s0 + $0x228] sm:$0xff]
    %v91 = vld [vmem:[%s0 + $0x230] sm:$0xff]
    %v92 = vld [vmem:[%s0 + $0x238] sm:$0xff]
    %v93 = vld [vmem:[%s1] sm:$0xff]
    %v94 = vld [vmem:[%s1 + $0x8] sm:$0xff]
    %v95 = vld [vmem:[%s1 + $0x10] sm:$0xff]
    %v96 = vld [vmem:[%s1 + $0x18] sm:$0xff]
    %v97 = vld [vmem:[%s1 + $0x20] sm:$0xff]
    %v98 = vld [vmem:[%s1 + $0x28] sm:$0xff]
    %v99 = vld [vmem:[%s1 + $0x30] sm:$0xff]
    %v100 = vld [vmem:[%s1 + $0x38] sm:$0xff]
    %v101 = vld [vmem:[%s1 + $0x40] sm:$0xff]
    %v102 = vld [vmem:[%s1 + $0x48] sm:$0xff]
    %v103 = vld [vmem:[%s1 + $0x50] sm:$0xff]
    %v104 = vld [vmem:[%s1 + $0x58] sm:$0xff]
    %v105 = vld [vmem:[%s1 + $0x60] sm:$0xff]
    %v106 = vld [vmem:[%s1 + $0x68] sm:$0xff]
    %v107 = vld [vmem:[%s1 + $0x70] sm:$0xff]
    %v108 = vld [vmem:[%s1 + $0x78] sm:$0xff]
    %v109 = vld [vmem:[%s1 + $0x80] sm:$0xff]
    %v110 = vld [vmem:[%s1 + $0x88] sm:$0xff]
    %v111 = vld [vmem:[%s1 + $0x90] sm:$0xff]
    %v112 = vld [vmem:[%s1 + $0x98] sm:$0xff]
    %v113 = vld [vmem:[%s1 + $0xa0] sm:$0xff]
    %v114 = vld [vmem:[%s1 + $0xa8] sm:$0xff]
    %v115 = vld [vmem:[%s1 + $0xb0] sm:$0xff]
    %v116 = vld [vmem:[%s1 + $0xb8] sm:$0xff]
    %v117 = vld [vmem:[%s1 + $0xc0] sm:$0xff]
    %v118 = vld [vmem:[%s1 + $0xc8] sm:$0xff]
    %v119 = vld [vmem:[%s1 + $0xd0] sm:$0xff]
    %v120 = vld [vmem:[%s1 + $0xd8] sm:$0xff]
    %v121 = vld [vmem:[%s1 + $0xe0] sm:$0xff]
    %v122 = vld [vmem:[%s1 + $0xe8] sm:$0xff]
    %v123 = vld [vmem:[%s1 + $0xf0] sm:$0xff]
    %v124 = vld [vmem:[%s1 + $0xf8] sm:$0xff]
    %v125 = vld [vmem:[%s1 + $0x100] sm:$0xff]
    %v126 = vld [vmem:[%s1 + $0x108] sm:$0xff]
    %v127 = vld [vmem:[%s1 + $0x110] sm:$0xff]
    %v128 = vld [vmem:[%s1 + $0x118] sm:$0xff]
    %v129 = vld [vmem:[%s1 + $0x120] sm:$0xff]
    %v130 = vld [vmem:[%s1 + $0x128] sm:$0xff]
    %v131 = vld [vmem:[%s1 + $0x130] sm:$0xff]
    %v132 = vld [vmem:[%s1 + $0x138] sm:$0xff]
    %v133 = vld [vmem:[%s1 + $0x140] sm:$0xff]
    %v134 = vld [vmem:[%s1 + $0x148] sm:$0xff]
    %v135 = vld [vmem:[%s1 + $0x150] sm:$0xff]
    %v136 = vld [vmem:[%s1 + $0x158] sm:$0xff]
    %v137 = vld [vmem:[%s1 + $0x160] sm:$0xff]
    %v138 = vld [vmem:[%s1 + $0x168] sm:$0xff]
    %v139 = vld [vmem:[%s1 + $0x170] sm:$0xff]
    %v140 = vld [vmem:[%s1 + $0x178] sm:$0xff]
    %v141 = vld [vmem:[%s1 + $0x180] sm:$0xff]
    %v142 = vld [vmem:[%s1 + $0x188] sm:$0xff]
    %v143 = vld [vmem:[%s1 + $0x190] sm:$0xff]
    %v144 = vld [vmem:[%s1 + $0x198] sm:$0xff]
    %v145 = vld [vmem:[%s1 + $0x1a0] sm:$0xff]
    %v146 = vld [vmem:[%s1 + $0x1a8] sm:$0xff]
    %v147 = vld [vmem:[%s1 + $0x1b0] sm:$0xff]
    %v148 = vld [vmem:[%s1 + $0x1b8] sm:$0xff]
    %v149 = vld [vmem:[%s1 + $0x1c0] sm:$0xff]
    %v150 = vld [vmem:[%s1 + $0x1c8] sm:$0xff]
    %v151 = vld [vmem:[%s1 + $0x1d0] sm:$0xff]
    %v152 = vld [vmem:[%s1 + $0x1d8] sm:$0xff]
    %v153 = vld [vmem:[%s1 + $0x1e0] sm:$0xff]
    %v154 = vld [vmem:[%s1 + $0x1e8] sm:$0xff]
    %v155 = vld [vmem:[%s1 + $0x1f0] sm:$0xff]
    %v156 = vld [vmem:[%s1 + $0x1f8] sm:$0xff]
    %v157 = vld [vmem:[%s1 + $0x200] sm:$0xff]
    %v158 = vld [vmem:[%s1 + $0x208] sm:$0xff]
    %v159 = vld [vmem:[%s1 + $0x210] sm:$0xff]
    %v160 = vld [vmem:[%s1 + $0x218] sm:$0xff]
    %v161 = vld [vmem:[%s1 + $0x220] sm:$0xff]
    %v162 = vld [vmem:[%s1 + $0x228] sm:$0xff]
    %v163 = vld [vmem:[%s1 + $0x230] sm:$0xff]
    %v164 = vld [vmem:[%s1 + $0x238] sm:$0xff]
    %v165 = vld [vmem:[%s2] sm:$0xff]
    %v166 = vld [vmem:[%s2 + $0x8] sm:$0xff]
    %v167 = vld [vmem:[%s2 + $0x10] sm:$0xff]
    %v168 = vld [vmem:[%s2 + $0x18] sm:$0xff]
    %v169 = vld [vmem:[%s2 + $0x20] sm:$0xff]
    %v170 = vld [vmem:[%s2 + $0x28] sm:$0xff]
    %v171 = vld [vmem:[%s2 + $0x30] sm:$0xff]
    %v172 = vld [vmem:[%s2 + $0x38] sm:$0xff]
    %v173 = vld [vmem:[%s2 + $0x40] sm:$0xff]
    %v174 = vld [vmem:[%s2 + $0x48] sm:$0xff]
    %v175 = vld [vmem:[%s2 + $0x50] sm:$0xff]
    %v176 = vld [vmem:[%s2 + $0x58] sm:$0xff]
    %v177 = vld [vmem:[%s2 + $0x60] sm:$0xff]
    %v178 = vld [vmem:[%s2 + $0x68] sm:$0xff]
    %v179 = vld [vmem:[%s2 + $0x70] sm:$0xff]
    %v180 = vld [vmem:[%s2 + $0x78] sm:$0xff]
    %v181 = vld [vmem:[%s2 + $0x80] sm:$0xff]
    %v182 = vld [vmem:[%s2 + $0x88] sm:$0xff]
    %v183 = vld [vmem:[%s2 + $0x90] sm:$0xff]
    %v184 = vld [vmem:[%s2 + $0x98] sm:$0xff]
    %v185 = vld [vmem:[%s2 + $0xa0] sm:$0xff]
    %v186 = vld [vmem:[%s2 + $0xa8] sm:$0xff]
    %v187 = vld [vmem:[%s2 + $0xb0] sm:$0xff]
    %v188 = vld [vmem:[%s2 + $0xb8] sm:$0xff]
    %v189 = vld [vmem:[%s2 + $0xc0] sm:$0xff]
    %v190 = vld [vmem:[%s2 + $0xc8] sm:$0xff]
    %v191 = vld [vmem:[%s2 + $0xd0] sm:$0xff]
    %v192 = vld [vmem:[%s2 + $0xd8] sm:$0xff]
    %v193 = vld [vmem:[%s2 + $0xe0] sm:$0xff]
    %v194 = vld [vmem:[%s2 + $0xe8] sm:$0xff]
    %v195 = vld [vmem:[%s2 + $0xf0] sm:$0xff]
    %v196 = vld [vmem:[%s2 + $0xf8] sm:$0xff]
    %v197 = vld [vmem:[%s2 + $0x100] sm:$0xff]
    %v198 = vld [vmem:[%s2 + $0x108] sm:$0xff]
    %v199 = vld [vmem:[%s2 + $0x110] sm:$0xff]
    %v200 = vld [vmem:[%s2 + $0x118] sm:$0xff]
    %v201 = vld [vmem:[%s2 + $0x120] sm:$0xff]
    %v202 = vld [vmem:[%s2 + $0x128] sm:$0xff]
    %v203 = vld [vmem:[%s2 + $0x130] sm:$0xff]
    %v204 = vld [vmem:[%s2 + $0x138] sm:$0xff]
    %v205 = vld [vmem:[%s2 + $0x140] sm:$0xff]
    %v206 = vld [vmem:[%s2 + $0x148] sm:$0xff]
    %v207 = vld [vmem:[%s2 + $0x150] sm:$0xff]
    %v208 = vld [vmem:[%s2 + $0x158] sm:$0xff]
    %v209 = vld [vmem:[%s2 + $0x160] sm:$0xff]
    %v210 = vld [vmem:[%s2 + $0x168] sm:$0xff]
    %v211 = vld [vmem:[%s2 + $0x170] sm:$0xff]
    %v212 = vld [vmem:[%s2 + $0x178] sm:$0xff]
    %v213 = vld [vmem:[%s2 + $0x180] sm:$0xff]
    %v214 = vld [vmem:[%s2 + $0x188] sm:$0xff]
    %v215 = vld [vmem:[%s2 + $0x190] sm:$0xff]
    %v216 = vld [vmem:[%s2 + $0x198] sm:$0xff]
    %v217 = vld [vmem:[%s2 + $0x1a0] sm:$0xff]
    %v218 = vld [vmem:[%s2 + $0x1a8] sm:$0xff]
    %v219 = vld [vmem:[%s2 + $0x1b0] sm:$0xff]
    %v220 = vld [vmem:[%s2 + $0x1b8] sm:$0xff]
    %v221 = vld [vmem:[%s2 + $0x1c0] sm:$0xff]
    %v222 = vld [vmem:[%s2 + $0x1c8] sm:$0xff]
    %v223 = vld [vmem:[%s2 + $0x1d0] sm:$0xff]
    %v224 = vld [vmem:[%s2 + $0x1d8] sm:$0xff]
    %v225 = vld [vmem:[%s2 + $0x1e0] sm:$0xff]
    %v226 = vld [vmem:[%s2 + $0x1e8] sm:$0xff]
    %v227 = vld [vmem:[%s2 + $0x1f0] sm:$0xff]
    %v228 = vld [vmem:[%s2 + $0x1f8] sm:$0xff]
    %v229 = vld [vmem:[%s2 + $0x200] sm:$0xff]
    %v230 = vld [vmem:[%s2 + $0x208] sm:$0xff]
    %v231 = vld [vmem:[%s2 + $0x210] sm:$0xff]
    %v232 = vld [vmem:[%s2 + $0x218] sm:$0xff]
    %v233 = vld [vmem:[%s2 + $0x220] sm:$0xff]
    %v234 = vld [vmem:[%s2 + $0x228] sm:$0xff]
    %v235 = vld [vmem:[%s2 + $0x230] sm:$0xff]
    %v236 = vld [vmem:[%s2 + $0x238] sm:$0xff]
    %v237 = vld [vmem:[%s3] sm:$0xf]
    %v238 = vrot.slane %v21, 1
    %v239 = vrot.slane %v22, 1
    %v240 = vrot.slane %v23, 1
    %v241 = vrot.slane %v24, 1
    %v242 = vrot.slane %v25, 1
    %v243 = vrot.slane %v26, 1
    %v244 = vrot.slane %v27, 1
    %v245 = vrot.slane %v28, 1
    %v246 = vrot.slane %v29, 1
    %v247 = vrot.slane %v30, 1
    %v248 = vrot.slane %v31, 1
    %v249 = vrot.slane %v32, 1
    %v250 = vrot.slane %v33, 1
    %v251 = vrot.slane %v34, 1
    %v252 = vrot.slane %v35, 1
    %v253 = vrot.slane %v36, 1
    %v254 = vrot.slane %v37, 1
    %v255 = vrot.slane %v38, 1
    %v256 = vrot.slane %v39, 1
    %v257 = vrot.slane %v40, 1
    %v258 = vrot.slane %v41, 1
    %v259 = vrot.slane %v42, 1
    %v260 = vrot.slane %v43, 1
    %v261 = vrot.slane %v44, 1
    %v262 = vrot.slane %v45, 1
    %v263 = vrot.slane %v46, 1
    %v264 = vrot.slane %v47, 1
    %v265 = vrot.slane %v48, 1
    %v266 = vrot.slane %v49, 1
    %v267 = vrot.slane %v50, 1
    %v268 = vrot.slane %v51, 1
    %v269 = vrot.slane %v52, 1
    %v270 = vrot.slane %v53, 1
    %v271 = vrot.slane %v54, 1
    %v272 = vrot.slane %v55, 1
    %v273 = vrot.slane %v56, 1
    %v274 = vrot.slane %v57, 1
    %v275 = vrot.slane %v58, 1
    %v276 = vrot.slane %v59, 1
    %v277 = vrot.slane %v60, 1
    %v278 = vrot.slane %v61, 1
    %v279 = vrot.slane %v62, 1
    %v280 = vrot.slane %v63, 1
    %v281 = vrot.slane %v64, 1
    %v282 = vrot.slane %v65, 1
    %v283 = vrot.slane %v66, 1
    %v284 = vrot.slane %v67, 1
    %v285 = vrot.slane %v68, 1
    %v286 = vrot.slane %v69, 1
    %v287 = vrot.slane %v70, 1
    %v288 = vrot.slane %v71, 1
    %v289 = vrot.slane %v72, 1
    %v290 = vrot.slane %v73, 1
    %v291 = vrot.slane %v74, 1
    %v292 = vrot.slane %v75, 1
    %v293 = vrot.slane %v76, 1
    %v294 = vrot.slane %v77, 1
    %v295 = vrot.slane %v78, 1
    %v296 = vrot.slane %v79, 1
    %v297 = vrot.slane %v80, 1
    %v298 = vrot.slane %v81, 1
    %v299 = vrot.slane %v82, 1
    %v300 = vrot.slane %v83, 1
    %v301 = vrot.slane %v84, 1
    %v302 = vrot.slane %v85, 1
    %v303 = vrot.slane %v86, 1
    %v304 = vrot.slane %v87, 1
    %v305 = vrot.slane %v88, 1
    %v306 = vrot.slane %v89, 1
    %v307 = vrot.slane %v90, 1
    %v308 = vrot.slane %v91, 1
    %v309 = vrot.slane %v92, 1
    %v310 = vlaneseq
    %v311 = vshrl.u32 %v310, 7
    %vm312 = vcmp.lt.s32.totalorder %v311, 7
    %v313 = vsel %vm312, %v308, %v309
    %v314 = vsel %vm312, %v307, %v308
    %v315 = vsel %vm312, %v306, %v307
    %v316 = vsel %vm312, %v305, %v306
    %v317 = vsel %vm312, %v304, %v305
    %v318 = vsel %vm312, %v303, %v304
    %v319 = vsel %vm312, %v302, %v303
    %v320 = vsel %vm312, %v301, %v302
    %v321 = vsel %vm312, %v300, %v301
    %v322 = vsel %vm312, %v299, %v300
    %v323 = vsel %vm312, %v298, %v299
    %v324 = vsel %vm312, %v297, %v298
    %v325 = vsel %vm312, %v296, %v297
    %v326 = vsel %vm312, %v295, %v296
    %v327 = vsel %vm312, %v294, %v295
    %v328 = vsel %vm312, %v293, %v294
    %v329 = vsel %vm312, %v292, %v293
    %v330 = vsel %vm312, %v291, %v292
    %v331 = vsel %vm312, %v290, %v291
    %v332 = vsel %vm312, %v289, %v290
    %v333 = vsel %vm312, %v288, %v289
    %v334 = vsel %vm312, %v287, %v288
    %v335 = vsel %vm312, %v286, %v287
    %v336 = vsel %vm312, %v285, %v286
    %v337 = vsel %vm312, %v284, %v285
    %v338 = vsel %vm312, %v283, %v284
    %v339 = vsel %vm312, %v282, %v283
    %v340 = vsel %vm312, %v281, %v282
    %v341 = vsel %vm312, %v280, %v281
    %v342 = vsel %vm312, %v279, %v280
    %v343 = vsel %vm312, %v278, %v279
    %v344 = vsel %vm312, %v277, %v278
    %v345 = vsel %vm312, %v276, %v277
    %v346 = vsel %vm312, %v275, %v276
    %v347 = vsel %vm312, %v274, %v275
    %v348 = vsel %vm312, %v273, %v274
    %v349 = vsel %vm312, %v272, %v273
    %v350 = vsel %vm312, %v271, %v272
    %v351 = vsel %vm312, %v270, %v271
    %v352 = vsel %vm312, %v269, %v270
    %v353 = vsel %vm312, %v268, %v269
    %v354 = vsel %vm312, %v267, %v268
    %v355 = vsel %vm312, %v266, %v267
    %v356 = vsel %vm312, %v265, %v266
    %v357 = vsel %vm312, %v264, %v265
    %v358 = vsel %vm312, %v263, %v264
    %v359 = vsel %vm312, %v262, %v263
    %v360 = vsel %vm312, %v261, %v262
    %v361 = vsel %vm312, %v260, %v261
    %v362 = vsel %vm312, %v259, %v260
    %v363 = vsel %vm312, %v258, %v259
    %v364 = vsel %vm312, %v257, %v258
    %v365 = vsel %vm312, %v256, %v257
    %v366 = vsel %vm312, %v255, %v256
    %v367 = vsel %vm312, %v254, %v255
    %v368 = vsel %vm312, %v253, %v254
    %v369 = vsel %vm312, %v252, %v253
    %v370 = vsel %vm312, %v251, %v252
    %v371 = vsel %vm312, %v250, %v251
    %v372 = vsel %vm312, %v249, %v250
    %v373 = vsel %vm312, %v248, %v249
    %v374 = vsel %vm312, %v247, %v248
    %v375 = vsel %vm312, %v246, %v247
    %v376 = vsel %vm312, %v245, %v246
    %v377 = vsel %vm312, %v244, %v245
    %v378 = vsel %vm312, %v243, %v244
    %v379 = vsel %vm312, %v242, %v243
    %v380 = vsel %vm312, %v241, %v242
    %v381 = vsel %vm312, %v240, %v241
    %v382 = vsel %vm312, %v239, %v240
    %v383 = vsel %vm312, %v238, %v239
    %v384 = vsel %vm312, %v309, %v238
    %s385 = scalar_lea.vmem %s3, 4
    %v386 = vld [vmem:[%s385] sm:$0xf]
    %vm387 = vcmask 31744
    %v389 = vsel %vm387, %v383, 0
    %v392 = vsel %vm387, %v382, 0
    %v395 = vsel %vm387, %v381, 0
    %v398 = vsel %vm387, %v380, 0
    %v401 = vsel %vm387, %v379, 0
    %v404 = vsel %vm387, %v378, 0
    %v407 = vsel %vm387, %v377, 0
    %v410 = vsel %vm387, %v376, 0
    %v413 = vsel %vm387, %v375, 0
    %v416 = vsel %vm387, %v374, 0
    %v419 = vsel %vm387, %v373, 0
    %v422 = vsel %vm387, %v372, 0
    %v425 = vsel %vm387, %v371, 0
    %v428 = vsel %vm387, %v370, 0
    %v431 = vsel %vm387, %v369, 0
    %v434 = vsel %vm387, %v368, 0
    %v437 = vsel %vm387, %v367, 0
    %v440 = vsel %vm387, %v366, 0
    %v443 = vsel %vm387, %v365, 0
    %v446 = vsel %vm387, %v364, 0
    %v449 = vsel %vm387, %v363, 0
    %v452 = vsel %vm387, %v362, 0
    %v455 = vsel %vm387, %v361, 0
    %v458 = vsel %vm387, %v360, 0
    %v461 = vsel %vm387, %v359, 0
    %v464 = vsel %vm387, %v358, 0
    %v467 = vsel %vm387, %v357, 0
    %v470 = vsel %vm387, %v356, 0
    %v473 = vsel %vm387, %v355, 0
    %v476 = vsel %vm387, %v354, 0
    %v479 = vsel %vm387, %v353, 0
    %v482 = vsel %vm387, %v352, 0
    %v485 = vsel %vm387, %v351, 0
    %v488 = vsel %vm387, %v350, 0
    %v491 = vsel %vm387, %v349, 0
    %v494 = vsel %vm387, %v348, 0
    %v497 = vsel %vm387, %v347, 0
    %v500 = vsel %vm387, %v346, 0
    %v503 = vsel %vm387, %v345, 0
    %v506 = vsel %vm387, %v344, 0
    %v509 = vsel %vm387, %v343, 0
    %v512 = vsel %vm387, %v342, 0
    %v515 = vsel %vm387, %v341, 0
    %v518 = vsel %vm387, %v340, 0
    %v521 = vsel %vm387, %v339, 0
    %v524 = vsel %vm387, %v338, 0
    %v527 = vsel %vm387, %v337, 0
    %v530 = vsel %vm387, %v336, 0
    %v533 = vsel %vm387, %v335, 0
    %v536 = vsel %vm387, %v334, 0
    %v539 = vsel %vm387, %v333, 0
    %v542 = vsel %vm387, %v332, 0
    %v545 = vsel %vm387, %v331, 0
    %v548 = vsel %vm387, %v330, 0
    %v551 = vsel %vm387, %v329, 0
    %v554 = vsel %vm387, %v328, 0
    %v557 = vsel %vm387, %v327, 0
    %v560 = vsel %vm387, %v326, 0
    %v563 = vsel %vm387, %v325, 0
    %v566 = vsel %vm387, %v324, 0
    %v569 = vsel %vm387, %v323, 0
    %v572 = vsel %vm387, %v322, 0
    %v575 = vsel %vm387, %v321, 0
    %v578 = vsel %vm387, %v320, 0
    %v581 = vsel %vm387, %v319, 0
    %v584 = vsel %vm387, %v318, 0
    %v587 = vsel %vm387, %v317, 0
    %v590 = vsel %vm387, %v316, 0
    %v593 = vsel %vm387, %v315, 0
    %v596 = vsel %vm387, %v314, 0
    %v599 = vsel %vm387, %v313, 0
    %v602 = vsel %vm387, %v384, 0
    %vm604 = vcmask 1043456
    %v606 = vsel %vm604, %v386, 0
    %608 = vmatprep.subr.mxu0 0.0
    %609 = vmatpush1.msra.mxu0 0.0
    %610 = vmatprep.subr.mxu0 0.0
    %611 = vmatpush1.msra.mxu0 0.0
    %612 = vmatprep.subr.mxu0 0.0
    %613 = vmatpush1.msra.mxu0 0.0
    %614 = vmatprep.subr.mxu0 0.0
    %615 = vmatpush1.msra.mxu0 0.0
    %616 = vmatprep.subr.mxu0 0.0
    %617 = vmatpush1.msra.mxu0 0.0
    %618 = vmatprep.subr.mxu0 0.0
    %619 = vmatpush1.msra.mxu0 0.0
    %620 = vmatprep.subr.mxu0 0.0
    %621 = vmatpush1.msra.mxu0 0.0
    %622 = vmatprep.subr.mxu0 0.0
    %623 = vmatpush1.msra.mxu0 0.0
    %624 = vmatprep.subr.mxu0 0.0
    %625 = vmatpush1.msra.mxu0 0.0
    %626 = vmatprep.subr.mxu0 0.0
    %627 = vmatpush1.msra.mxu0 0.0
    %628 = vmatprep.subr.mxu0 0.0
    %629 = vmatpush1.msra.mxu0 0.0
    %630 = vmatprep.subr.mxu0 0.0
    %631 = vmatpush1.msra.mxu0 0.0
    %632 = vmatprep.subr.mxu0 0.0
    %633 = vmatpush1.msra.mxu0 0.0
    %634 = vmatprep.subr.mxu0 0.0
    %635 = vmatpush1.msra.mxu0 0.0
    %636 = vmatprep.subr.mxu0 0.0
    %637 = vmatpush1.msra.mxu0 0.0
    %638 = vmatprep.subr.mxu0 0.0
    %639 = vmatpush1.msra.mxu0 %v606
    %640 = vmatprep.subr.mxu0 0.0
    %641 = vmatpush2.msra.mxu0 0.0
    %642 = vmatprep.subr.mxu0 0.0
    %643 = vmatpush2.msra.mxu0 0.0
    %644 = vmatprep.subr.mxu0 0.0
    %645 = vmatpush2.msra.mxu0 0.0
    %646 = vmatprep.subr.mxu0 0.0
    %647 = vmatpush2.msra.mxu0 0.0
    %648 = vmatprep.subr.mxu0 0.0
    %649 = vmatpush2.msra.mxu0 0.0
    %650 = vmatprep.subr.mxu0 0.0
    %651 = vmatpush2.msra.mxu0 0.0
    %652 = vmatprep.subr.mxu0 0.0
    %653 = vmatpush2.msra.mxu0 0.0
    %654 = vmatprep.subr.mxu0 0.0
    %655 = vmatpush2.msra.mxu0 0.0
    %656 = vmatprep.subr.mxu0 0.0
    %657 = vmatpush2.msra.mxu0 0.0
    %658 = vmatprep.subr.mxu0 0.0
    %659 = vmatpush2.msra.mxu0 0.0
    %660 = vmatprep.subr.mxu0 0.0
    %661 = vmatpush2.msra.mxu0 0.0
    %662 = vmatprep.subr.mxu0 0.0
    %663 = vmatpush2.msra.mxu0 0.0
    %664 = vmatprep.subr.mxu0 0.0
    %665 = vmatpush2.msra.mxu0 0.0
    %666 = vmatprep.subr.mxu0 0.0
    %667 = vmatpush2.msra.mxu0 0.0
    %668 = vmatprep.subr.mxu0 0.0
    %669 = vmatpush2.msra.mxu0 0.0
    %670 = vmatprep.subr.mxu0 0.0
    %671 = vmatpush2.msra.mxu0 0.0
    %672 = vmatprep.mubr.f32.mxu0 0.0
    %673 = vmatmul.mubr.f32.gmra.mxu0 %v389
    %v674 = vpop.f32.mrf.mxu0
    %v675 = vadd.f32 0.0, %v674
    %v676 = vpop.f32.mrf.mxu0
    %677 = vmatprep.mubr.f32.mxu0 0.0
    %678 = vmatmul.mubr.f32.gmra.mxu0 %v392
    %v679 = vpop.f32.mrf.mxu0
    %v680 = vadd.f32 0.0, %v679
    %v681 = vpop.f32.mrf.mxu0
    %682 = vmatprep.mubr.f32.mxu0 0.0
    %683 = vmatmul.mubr.f32.gmra.mxu0 %v395
    %v684 = vpop.f32.mrf.mxu0
    %v685 = vadd.f32 0.0, %v684
    %v686 = vpop.f32.mrf.mxu0
    %687 = vmatprep.mubr.f32.mxu0 0.0
    %688 = vmatmul.mubr.f32.gmra.mxu0 %v398
    %v689 = vpop.f32.mrf.mxu0
    %v690 = vadd.f32 0.0, %v689
    %v691 = vpop.f32.mrf.mxu0
    %692 = vmatprep.mubr.f32.mxu0 0.0
    %693 = vmatmul.mubr.f32.gmra.mxu0 %v401
    %v694 = vpop.f32.mrf.mxu0
    %v695 = vadd.f32 0.0, %v694
    %v696 = vpop.f32.mrf.mxu0
    %697 = vmatprep.mubr.f32.mxu0 0.0
    %698 = vmatmul.mubr.f32.gmra.mxu0 %v404
    %v699 = vpop.f32.mrf.mxu0
    %v700 = vadd.f32 0.0, %v699
    %v701 = vpop.f32.mrf.mxu0
    %702 = vmatprep.mubr.f32.mxu0 0.0
    %703 = vmatmul.mubr.f32.gmra.mxu0 %v407
    %v704 = vpop.f32.mrf.mxu0
    %v705 = vadd.f32 0.0, %v704
    %v706 = vpop.f32.mrf.mxu0
    %707 = vmatprep.mubr.f32.mxu0 0.0
    %708 = vmatmul.mubr.f32.gmra.mxu0 %v410
    %v709 = vpop.f32.mrf.mxu0
    %v710 = vadd.f32 0.0, %v709
    %v711 = vpop.f32.mrf.mxu0
    %712 = vmatprep.mubr.f32.mxu0 0.0
    %713 = vmatmul.mubr.f32.gmra.mxu0 %v413
    %v714 = vpop.f32.mrf.mxu0
    %v715 = vadd.f32 0.0, %v714
    %v716 = vpop.f32.mrf.mxu0
    %717 = vmatprep.mubr.f32.mxu0 0.0
    %718 = vmatmul.mubr.f32.gmra.mxu0 %v416
    %v719 = vpop.f32.mrf.mxu0
    %v720 = vadd.f32 0.0, %v719
    %v721 = vpop.f32.mrf.mxu0
    %722 = vmatprep.mubr.f32.mxu0 0.0
    %723 = vmatmul.mubr.f32.gmra.mxu0 %v419
    %v724 = vpop.f32.mrf.mxu0
    %v725 = vadd.f32 0.0, %v724
    %v726 = vpop.f32.mrf.mxu0
    %727 = vmatprep.mubr.f32.mxu0 0.0
    %728 = vmatmul.mubr.f32.gmra.mxu0 %v422
    %v729 = vpop.f32.mrf.mxu0
    %v730 = vadd.f32 0.0, %v729
    %v731 = vpop.f32.mrf.mxu0
    %732 = vmatprep.mubr.f32.mxu0 0.0
    %733 = vmatmul.mubr.f32.gmra.mxu0 %v425
    %v734 = vpop.f32.mrf.mxu0
    %v735 = vadd.f32 0.0, %v734
    %v736 = vpop.f32.mrf.mxu0
    %737 = vmatprep.mubr.f32.mxu0 0.0
    %738 = vmatmul.mubr.f32.gmra.mxu0 %v428
    %v739 = vpop.f32.mrf.mxu0
    %v740 = vadd.f32 0.0, %v739
    %v741 = vpop.f32.mrf.mxu0
    %742 = vmatprep.mubr.f32.mxu0 0.0
    %743 = vmatmul.mubr.f32.gmra.mxu0 %v431
    %v744 = vpop.f32.mrf.mxu0
    %v745 = vadd.f32 0.0, %v744
    %v746 = vpop.f32.mrf.mxu0
    %747 = vmatprep.mubr.f32.mxu0 0.0
    %748 = vmatmul.mubr.f32.gmra.mxu0 %v434
    %v749 = vpop.f32.mrf.mxu0
    %v750 = vadd.f32 0.0, %v749
    %v751 = vpop.f32.mrf.mxu0
    %752 = vmatprep.mubr.f32.mxu0 0.0
    %753 = vmatmul.mubr.f32.gmra.mxu0 %v437
    %v754 = vpop.f32.mrf.mxu0
    %v755 = vadd.f32 0.0, %v754
    %v756 = vpop.f32.mrf.mxu0
    %757 = vmatprep.mubr.f32.mxu0 0.0
    %758 = vmatmul.mubr.f32.gmra.mxu0 %v440
    %v759 = vpop.f32.mrf.mxu0
    %v760 = vadd.f32 0.0, %v759
    %v761 = vpop.f32.mrf.mxu0
    %762 = vmatprep.mubr.f32.mxu0 0.0
    %763 = vmatmul.mubr.f32.gmra.mxu0 %v443
    %v764 = vpop.f32.mrf.mxu0
    %v765 = vadd.f32 0.0, %v764
    %v766 = vpop.f32.mrf.mxu0
    %767 = vmatprep.mubr.f32.mxu0 0.0
    %768 = vmatmul.mubr.f32.gmra.mxu0 %v446
    %v769 = vpop.f32.mrf.mxu0
    %v770 = vadd.f32 0.0, %v769
    %v771 = vpop.f32.mrf.mxu0
    %772 = vmatprep.mubr.f32.mxu0 0.0
    %773 = vmatmul.mubr.f32.gmra.mxu0 %v449
    %v774 = vpop.f32.mrf.mxu0
    %v775 = vadd.f32 0.0, %v774
    %v776 = vpop.f32.mrf.mxu0
    %777 = vmatprep.mubr.f32.mxu0 0.0
    %778 = vmatmul.mubr.f32.gmra.mxu0 %v452
    %v779 = vpop.f32.mrf.mxu0
    %v780 = vadd.f32 0.0, %v779
    %v781 = vpop.f32.mrf.mxu0
    %782 = vmatprep.mubr.f32.mxu0 0.0
    %783 = vmatmul.mubr.f32.gmra.mxu0 %v455
    %v784 = vpop.f32.mrf.mxu0
    %v785 = vadd.f32 0.0, %v784
    %v786 = vpop.f32.mrf.mxu0
    %787 = vmatprep.mubr.f32.mxu0 0.0
    %788 = vmatmul.mubr.f32.gmra.mxu0 %v458
    %v789 = vpop.f32.mrf.mxu0
    %v790 = vadd.f32 0.0, %v789
    %v791 = vpop.f32.mrf.mxu0
    %792 = vmatprep.mubr.f32.mxu0 0.0
    %793 = vmatmul.mubr.f32.gmra.mxu0 %v461
    %v794 = vpop.f32.mrf.mxu0
    %v795 = vadd.f32 0.0, %v794
    %v796 = vpop.f32.mrf.mxu0
    %797 = vmatprep.mubr.f32.mxu0 0.0
    %798 = vmatmul.mubr.f32.gmra.mxu0 %v464
    %v799 = vpop.f32.mrf.mxu0
    %v800 = vadd.f32 0.0, %v799
    %v801 = vpop.f32.mrf.mxu0
    %802 = vmatprep.mubr.f32.mxu0 0.0
    %803 = vmatmul.mubr.f32.gmra.mxu0 %v467
    %v804 = vpop.f32.mrf.mxu0
    %v805 = vadd.f32 0.0, %v804
    %v806 = vpop.f32.mrf.mxu0
    %807 = vmatprep.mubr.f32.mxu0 0.0
    %808 = vmatmul.mubr.f32.gmra.mxu0 %v470
    %v809 = vpop.f32.mrf.mxu0
    %v810 = vadd.f32 0.0, %v809
    %v811 = vpop.f32.mrf.mxu0
    %812 = vmatprep.mubr.f32.mxu0 0.0
    %813 = vmatmul.mubr.f32.gmra.mxu0 %v473
    %v814 = vpop.f32.mrf.mxu0
    %v815 = vadd.f32 0.0, %v814
    %v816 = vpop.f32.mrf.mxu0
    %817 = vmatprep.mubr.f32.mxu0 0.0
    %818 = vmatmul.mubr.f32.gmra.mxu0 %v476
    %v819 = vpop.f32.mrf.mxu0
    %v820 = vadd.f32 0.0, %v819
    %v821 = vpop.f32.mrf.mxu0
    %822 = vmatprep.mubr.f32.mxu0 0.0
    %823 = vmatmul.mubr.f32.gmra.mxu0 %v479
    %v824 = vpop.f32.mrf.mxu0
    %v825 = vadd.f32 0.0, %v824
    %v826 = vpop.f32.mrf.mxu0
    %827 = vmatprep.mubr.f32.mxu0 0.0
    %828 = vmatmul.mubr.f32.gmra.mxu0 %v482
    %v829 = vpop.f32.mrf.mxu0
    %v830 = vadd.f32 0.0, %v829
    %v831 = vpop.f32.mrf.mxu0
    %832 = vmatprep.mubr.f32.mxu0 0.0
    %833 = vmatmul.mubr.f32.gmra.mxu0 %v485
    %v834 = vpop.f32.mrf.mxu0
    %v835 = vadd.f32 0.0, %v834
    %v836 = vpop.f32.mrf.mxu0
    %837 = vmatprep.mubr.f32.mxu0 0.0
    %838 = vmatmul.mubr.f32.gmra.mxu0 %v488
    %v839 = vpop.f32.mrf.mxu0
    %v840 = vadd.f32 0.0, %v839
    %v841 = vpop.f32.mrf.mxu0
    %842 = vmatprep.mubr.f32.mxu0 0.0
    %843 = vmatmul.mubr.f32.gmra.mxu0 %v491
    %v844 = vpop.f32.mrf.mxu0
    %v845 = vadd.f32 0.0, %v844
    %v846 = vpop.f32.mrf.mxu0
    %847 = vmatprep.mubr.f32.mxu0 0.0
    %848 = vmatmul.mubr.f32.gmra.mxu0 %v494
    %v849 = vpop.f32.mrf.mxu0
    %v850 = vadd.f32 0.0, %v849
    %v851 = vpop.f32.mrf.mxu0
    %852 = vmatprep.mubr.f32.mxu0 0.0
    %853 = vmatmul.mubr.f32.gmra.mxu0 %v497
    %v854 = vpop.f32.mrf.mxu0
    %v855 = vadd.f32 0.0, %v854
    %v856 = vpop.f32.mrf.mxu0
    %857 = vmatprep.mubr.f32.mxu0 0.0
    %858 = vmatmul.mubr.f32.gmra.mxu0 %v500
    %v859 = vpop.f32.mrf.mxu0
    %v860 = vadd.f32 0.0, %v859
    %v861 = vpop.f32.mrf.mxu0
    %862 = vmatprep.mubr.f32.mxu0 0.0
    %863 = vmatmul.mubr.f32.gmra.mxu0 %v503
    %v864 = vpop.f32.mrf.mxu0
    %v865 = vadd.f32 0.0, %v864
    %v866 = vpop.f32.mrf.mxu0
    %867 = vmatprep.mubr.f32.mxu0 0.0
    %868 = vmatmul.mubr.f32.gmra.mxu0 %v506
    %v869 = vpop.f32.mrf.mxu0
    %v870 = vadd.f32 0.0, %v869
    %v871 = vpop.f32.mrf.mxu0
    %872 = vmatprep.mubr.f32.mxu0 0.0
    %873 = vmatmul.mubr.f32.gmra.mxu0 %v509
    %v874 = vpop.f32.mrf.mxu0
    %v875 = vadd.f32 0.0, %v874
    %v876 = vpop.f32.mrf.mxu0
    %877 = vmatprep.mubr.f32.mxu0 0.0
    %878 = vmatmul.mubr.f32.gmra.mxu0 %v512
    %v879 = vpop.f32.mrf.mxu0
    %v880 = vadd.f32 0.0, %v879
    %v881 = vpop.f32.mrf.mxu0
    %882 = vmatprep.mubr.f32.mxu0 0.0
    %883 = vmatmul.mubr.f32.gmra.mxu0 %v515
    %v884 = vpop.f32.mrf.mxu0
    %v885 = vadd.f32 0.0, %v884
    %v886 = vpop.f32.mrf.mxu0
    %887 = vmatprep.mubr.f32.mxu0 0.0
    %888 = vmatmul.mubr.f32.gmra.mxu0 %v518
    %v889 = vpop.f32.mrf.mxu0
    %v890 = vadd.f32 0.0, %v889
    %v891 = vpop.f32.mrf.mxu0
    %892 = vmatprep.mubr.f32.mxu0 0.0
    %893 = vmatmul.mubr.f32.gmra.mxu0 %v521
    %v894 = vpop.f32.mrf.mxu0
    %v895 = vadd.f32 0.0, %v894
    %v896 = vpop.f32.mrf.mxu0
    %897 = vmatprep.mubr.f32.mxu0 0.0
    %898 = vmatmul.mubr.f32.gmra.mxu0 %v524
    %v899 = vpop.f32.mrf.mxu0
    %v900 = vadd.f32 0.0, %v899
    %v901 = vpop.f32.mrf.mxu0
    %902 = vmatprep.mubr.f32.mxu0 0.0
    %903 = vmatmul.mubr.f32.gmra.mxu0 %v527
    %v904 = vpop.f32.mrf.mxu0
    %v905 = vadd.f32 0.0, %v904
    %v906 = vpop.f32.mrf.mxu0
    %907 = vmatprep.mubr.f32.mxu0 0.0
    %908 = vmatmul.mubr.f32.gmra.mxu0 %v530
    %v909 = vpop.f32.mrf.mxu0
    %v910 = vadd.f32 0.0, %v909
    %v911 = vpop.f32.mrf.mxu0
    %912 = vmatprep.mubr.f32.mxu0 0.0
    %913 = vmatmul.mubr.f32.gmra.mxu0 %v533
    %v914 = vpop.f32.mrf.mxu0
    %v915 = vadd.f32 0.0, %v914
    %v916 = vpop.f32.mrf.mxu0
    %917 = vmatprep.mubr.f32.mxu0 0.0
    %918 = vmatmul.mubr.f32.gmra.mxu0 %v536
    %v919 = vpop.f32.mrf.mxu0
    %v920 = vadd.f32 0.0, %v919
    %v921 = vpop.f32.mrf.mxu0
    %922 = vmatprep.mubr.f32.mxu0 0.0
    %923 = vmatmul.mubr.f32.gmra.mxu0 %v539
    %v924 = vpop.f32.mrf.mxu0
    %v925 = vadd.f32 0.0, %v924
    %v926 = vpop.f32.mrf.mxu0
    %927 = vmatprep.mubr.f32.mxu0 0.0
    %928 = vmatmul.mubr.f32.gmra.mxu0 %v542
    %v929 = vpop.f32.mrf.mxu0
    %v930 = vadd.f32 0.0, %v929
    %v931 = vpop.f32.mrf.mxu0
    %932 = vmatprep.mubr.f32.mxu0 0.0
    %933 = vmatmul.mubr.f32.gmra.mxu0 %v545
    %v934 = vpop.f32.mrf.mxu0
    %v935 = vadd.f32 0.0, %v934
    %v936 = vpop.f32.mrf.mxu0
    %937 = vmatprep.mubr.f32.mxu0 0.0
    %938 = vmatmul.mubr.f32.gmra.mxu0 %v548
    %v939 = vpop.f32.mrf.mxu0
    %v940 = vadd.f32 0.0, %v939
    %v941 = vpop.f32.mrf.mxu0
    %942 = vmatprep.mubr.f32.mxu0 0.0
    %943 = vmatmul.mubr.f32.gmra.mxu0 %v551
    %v944 = vpop.f32.mrf.mxu0
    %v945 = vadd.f32 0.0, %v944
    %v946 = vpop.f32.mrf.mxu0
    %947 = vmatprep.mubr.f32.mxu0 0.0
    %948 = vmatmul.mubr.f32.gmra.mxu0 %v554
    %v949 = vpop.f32.mrf.mxu0
    %v950 = vadd.f32 0.0, %v949
    %v951 = vpop.f32.mrf.mxu0
    %952 = vmatprep.mubr.f32.mxu0 0.0
    %953 = vmatmul.mubr.f32.gmra.mxu0 %v557
    %v954 = vpop.f32.mrf.mxu0
    %v955 = vadd.f32 0.0, %v954
    %v956 = vpop.f32.mrf.mxu0
    %957 = vmatprep.mubr.f32.mxu0 0.0
    %958 = vmatmul.mubr.f32.gmra.mxu0 %v560
    %v959 = vpop.f32.mrf.mxu0
    %v960 = vadd.f32 0.0, %v959
    %v961 = vpop.f32.mrf.mxu0
    %962 = vmatprep.mubr.f32.mxu0 0.0
    %963 = vmatmul.mubr.f32.gmra.mxu0 %v563
    %v964 = vpop.f32.mrf.mxu0
    %v965 = vadd.f32 0.0, %v964
    %v966 = vpop.f32.mrf.mxu0
    %967 = vmatprep.mubr.f32.mxu0 0.0
    %968 = vmatmul.mubr.f32.gmra.mxu0 %v566
    %v969 = vpop.f32.mrf.mxu0
    %v970 = vadd.f32 0.0, %v969
    %v971 = vpop.f32.mrf.mxu0
    %972 = vmatprep.mubr.f32.mxu0 0.0
    %973 = vmatmul.mubr.f32.gmra.mxu0 %v569
    %v974 = vpop.f32.mrf.mxu0
    %v975 = vadd.f32 0.0, %v974
    %v976 = vpop.f32.mrf.mxu0
    %977 = vmatprep.mubr.f32.mxu0 0.0
    %978 = vmatmul.mubr.f32.gmra.mxu0 %v572
    %v979 = vpop.f32.mrf.mxu0
    %v980 = vadd.f32 0.0, %v979
    %v981 = vpop.f32.mrf.mxu0
    %982 = vmatprep.mubr.f32.mxu0 0.0
    %983 = vmatmul.mubr.f32.gmra.mxu0 %v575
    %v984 = vpop.f32.mrf.mxu0
    %v985 = vadd.f32 0.0, %v984
    %v986 = vpop.f32.mrf.mxu0
    %987 = vmatprep.mubr.f32.mxu0 0.0
    %988 = vmatmul.mubr.f32.gmra.mxu0 %v578
    %v989 = vpop.f32.mrf.mxu0
    %v990 = vadd.f32 0.0, %v989
    %v991 = vpop.f32.mrf.mxu0
    %992 = vmatprep.mubr.f32.mxu0 0.0
    %993 = vmatmul.mubr.f32.gmra.mxu0 %v581
    %v994 = vpop.f32.mrf.mxu0
    %v995 = vadd.f32 0.0, %v994
    %v996 = vpop.f32.mrf.mxu0
    %997 = vmatprep.mubr.f32.mxu0 0.0
    %998 = vmatmul.mubr.f32.gmra.mxu0 %v584
    %v999 = vpop.f32.mrf.mxu0
    %v1000 = vadd.f32 0.0, %v999
    %v1001 = vpop.f32.mrf.mxu0
    %1002 = vmatprep.mubr.f32.mxu0 0.0
    %1003 = vmatmul.mubr.f32.gmra.mxu0 %v587
    %v1004 = vpop.f32.mrf.mxu0
    %v1005 = vadd.f32 0.0, %v1004
    %v1006 = vpop.f32.mrf.mxu0
    %1007 = vmatprep.mubr.f32.mxu0 0.0
    %1008 = vmatmul.mubr.f32.gmra.mxu0 %v590
    %v1009 = vpop.f32.mrf.mxu0
    %v1010 = vadd.f32 0.0, %v1009
    %v1011 = vpop.f32.mrf.mxu0
    %1012 = vmatprep.mubr.f32.mxu0 0.0
    %1013 = vmatmul.mubr.f32.gmra.mxu0 %v593
    %v1014 = vpop.f32.mrf.mxu0
    %v1015 = vadd.f32 0.0, %v1014
    %v1016 = vpop.f32.mrf.mxu0
    %1017 = vmatprep.mubr.f32.mxu0 0.0
    %1018 = vmatmul.mubr.f32.gmra.mxu0 %v596
    %v1019 = vpop.f32.mrf.mxu0
    %v1020 = vadd.f32 0.0, %v1019
    %v1021 = vpop.f32.mrf.mxu0
    %1022 = vmatprep.mubr.f32.mxu0 0.0
    %1023 = vmatmul.mubr.f32.gmra.mxu0 %v599
    %v1024 = vpop.f32.mrf.mxu0
    %v1025 = vadd.f32 0.0, %v1024
    %v1026 = vpop.f32.mrf.mxu0
    %1027 = vmatprep.mubr.f32.mxu0 0.0
    %1028 = vmatmul.mubr.f32.gmra.mxu0 %v602
    %v1029 = vpop.f32.mrf.mxu0
    %v1030 = vadd.f32 0.0, %v1029
    %v1031 = vpop.f32.mrf.mxu0
    %1032 = vdwg.mxu0
    %v1034 = vsel %vm387, %v21, 0
    %v1037 = vsel %vm387, %v22, 0
    %v1040 = vsel %vm387, %v23, 0
    %v1043 = vsel %vm387, %v24, 0
    %v1046 = vsel %vm387, %v25, 0
    %v1049 = vsel %vm387, %v26, 0
    %v1052 = vsel %vm387, %v27, 0
    %v1055 = vsel %vm387, %v28, 0
    %v1058 = vsel %vm387, %v29, 0
    %v1061 = vsel %vm387, %v30, 0
    %v1064 = vsel %vm387, %v31, 0
    %v1067 = vsel %vm387, %v32, 0
    %v1070 = vsel %vm387, %v33, 0
    %v1073 = vsel %vm387, %v34, 0
    %v1076 = vsel %vm387, %v35, 0
    %v1079 = vsel %vm387, %v36, 0
    %v1082 = vsel %vm387, %v37, 0
    %v1085 = vsel %vm387, %v38, 0
    %v1088 = vsel %vm387, %v39, 0
    %v1091 = vsel %vm387, %v40, 0
    %v1094 = vsel %vm387, %v41, 0
    %v1097 = vsel %vm387, %v42, 0
    %v1100 = vsel %vm387, %v43, 0
    %v1103 = vsel %vm387, %v44, 0
    %v1106 = vsel %vm387, %v45, 0
    %v1109 = vsel %vm387, %v46, 0
    %v1112 = vsel %vm387, %v47, 0
    %v1115 = vsel %vm387, %v48, 0
    %v1118 = vsel %vm387, %v49, 0
    %v1121 = vsel %vm387, %v50, 0
    %v1124 = vsel %vm387, %v51, 0
    %v1127 = vsel %vm387, %v52, 0
    %v1130 = vsel %vm387, %v53, 0
    %v1133 = vsel %vm387, %v54, 0
    %v1136 = vsel %vm387, %v55, 0
    %v1139 = vsel %vm387, %v56, 0
    %v1142 = vsel %vm387, %v57, 0
    %v1145 = vsel %vm387, %v58, 0
    %v1148 = vsel %vm387, %v59, 0
    %v1151 = vsel %vm387, %v60, 0
    %v1154 = vsel %vm387, %v61, 0
    %v1157 = vsel %vm387, %v62, 0
    %v1160 = vsel %vm387, %v63, 0
    %v1163 = vsel %vm387, %v64, 0
    %v1166 = vsel %vm387, %v65, 0
    %v1169 = vsel %vm387, %v66, 0
    %v1172 = vsel %vm387, %v67, 0
    %v1175 = vsel %vm387, %v68, 0
    %v1178 = vsel %vm387, %v69, 0
    %v1181 = vsel %vm387, %v70, 0
    %v1184 = vsel %vm387, %v71, 0
    %v1187 = vsel %vm387, %v72, 0
    %v1190 = vsel %vm387, %v73, 0
    %v1193 = vsel %vm387, %v74, 0
    %v1196 = vsel %vm387, %v75, 0
    %v1199 = vsel %vm387, %v76, 0
    %v1202 = vsel %vm387, %v77, 0
    %v1205 = vsel %vm387, %v78, 0
    %v1208 = vsel %vm387, %v79, 0
    %v1211 = vsel %vm387, %v80, 0
    %v1214 = vsel %vm387, %v81, 0
    %v1217 = vsel %vm387, %v82, 0
    %v1220 = vsel %vm387, %v83, 0
    %v1223 = vsel %vm387, %v84, 0
    %v1226 = vsel %vm387, %v85, 0
    %v1229 = vsel %vm387, %v86, 0
    %v1232 = vsel %vm387, %v87, 0
    %v1235 = vsel %vm387, %v88, 0
    %v1238 = vsel %vm387, %v89, 0
    %v1241 = vsel %vm387, %v90, 0
    %v1244 = vsel %vm387, %v91, 0
    %v1247 = vsel %vm387, %v92, 0
    %v1250 = vsel %vm604, %v237, 0
    %1252 = vmatprep.subr.mxu0 0.0
    %1253 = vmatpush1.msra.mxu0 0.0
    %1254 = vmatprep.subr.mxu0 0.0
    %1255 = vmatpush1.msra.mxu0 0.0
    %1256 = vmatprep.subr.mxu0 0.0
    %1257 = vmatpush1.msra.mxu0 0.0
    %1258 = vmatprep.subr.mxu0 0.0
    %1259 = vmatpush1.msra.mxu0 0.0
    %1260 = vmatprep.subr.mxu0 0.0
    %1261 = vmatpush1.msra.mxu0 0.0
    %1262 = vmatprep.subr.mxu0 0.0
    %1263 = vmatpush1.msra.mxu0 0.0
    %1264 = vmatprep.subr.mxu0 0.0
    %1265 = vmatpush1.msra.mxu0 0.0
    %1266 = vmatprep.subr.mxu0 0.0
    %1267 = vmatpush1.msra.mxu0 0.0
    %1268 = vmatprep.subr.mxu0 0.0
    %1269 = vmatpush1.msra.mxu0 0.0
    %1270 = vmatprep.subr.mxu0 0.0
    %1271 = vmatpush1.msra.mxu0 0.0
    %1272 = vmatprep.subr.mxu0 0.0
    %1273 = vmatpush1.msra.mxu0 0.0
    %1274 = vmatprep.subr.mxu0 0.0
    %1275 = vmatpush1.msra.mxu0 0.0
    %1276 = vmatprep.subr.mxu0 0.0
    %1277 = vmatpush1.msra.mxu0 0.0
    %1278 = vmatprep.subr.mxu0 0.0
    %1279 = vmatpush1.msra.mxu0 0.0
    %1280 = vmatprep.subr.mxu0 0.0
    %1281 = vmatpush1.msra.mxu0 0.0
    %1282 = vmatprep.subr.mxu0 0.0
    %1283 = vmatpush1.msra.mxu0 %v1250
    %1284 = vmatprep.subr.mxu0 0.0
    %1285 = vmatpush2.msra.mxu0 0.0
    %1286 = vmatprep.subr.mxu0 0.0
    %1287 = vmatpush2.msra.mxu0 0.0
    %1288 = vmatprep.subr.mxu0 0.0
    %1289 = vmatpush2.msra.mxu0 0.0
    %1290 = vmatprep.subr.mxu0 0.0
    %1291 = vmatpush2.msra.mxu0 0.0
    %1292 = vmatprep.subr.mxu0 0.0
    %1293 = vmatpush2.msra.mxu0 0.0
    %1294 = vmatprep.subr.mxu0 0.0
    %1295 = vmatpush2.msra.mxu0 0.0
    %1296 = vmatprep.subr.mxu0 0.0
    %1297 = vmatpush2.msra.mxu0 0.0
    %1298 = vmatprep.subr.mxu0 0.0
    %1299 = vmatpush2.msra.mxu0 0.0
    %1300 = vmatprep.subr.mxu0 0.0
    %1301 = vmatpush2.msra.mxu0 0.0
    %1302 = vmatprep.subr.mxu0 0.0
    %1303 = vmatpush2.msra.mxu0 0.0
    %1304 = vmatprep.subr.mxu0 0.0
    %1305 = vmatpush2.msra.mxu0 0.0
    %1306 = vmatprep.subr.mxu0 0.0
    %1307 = vmatpush2.msra.mxu0 0.0
    %1308 = vmatprep.subr.mxu0 0.0
    %1309 = vmatpush2.msra.mxu0 0.0
    %1310 = vmatprep.subr.mxu0 0.0
    %1311 = vmatpush2.msra.mxu0 0.0
    %1312 = vmatprep.subr.mxu0 0.0
    %1313 = vmatpush2.msra.mxu0 0.0
    %1314 = vmatprep.subr.mxu0 0.0
    %1315 = vmatpush2.msra.mxu0 0.0
    %1316 = vmatprep.mubr.f32.mxu0 0.0
    %1317 = vmatmul.mubr.f32.gmra.mxu0 %v1034
    %v1318 = vpop.f32.mrf.mxu0
    %v1319 = vadd.f32 %v675, %v1318
    %v1320 = vpop.f32.mrf.mxu0
    %1321 = vmatprep.mubr.f32.mxu0 0.0
    %1322 = vmatmul.mubr.f32.gmra.mxu0 %v1037
    %v1323 = vpop.f32.mrf.mxu0
    %v1324 = vadd.f32 %v680, %v1323
    %v1325 = vpop.f32.mrf.mxu0
    %1326 = vmatprep.mubr.f32.mxu0 0.0
    %1327 = vmatmul.mubr.f32.gmra.mxu0 %v1040
    %v1328 = vpop.f32.mrf.mxu0
    %v1329 = vadd.f32 %v685, %v1328
    %v1330 = vpop.f32.mrf.mxu0
    %1331 = vmatprep.mubr.f32.mxu0 0.0
    %1332 = vmatmul.mubr.f32.gmra.mxu0 %v1043
    %v1333 = vpop.f32.mrf.mxu0
    %v1334 = vadd.f32 %v690, %v1333
    %v1335 = vpop.f32.mrf.mxu0
    %1336 = vmatprep.mubr.f32.mxu0 0.0
    %1337 = vmatmul.mubr.f32.gmra.mxu0 %v1046
    %v1338 = vpop.f32.mrf.mxu0
    %v1339 = vadd.f32 %v695, %v1338
    %v1340 = vpop.f32.mrf.mxu0
    %1341 = vmatprep.mubr.f32.mxu0 0.0
    %1342 = vmatmul.mubr.f32.gmra.mxu0 %v1049
    %v1343 = vpop.f32.mrf.mxu0
    %v1344 = vadd.f32 %v700, %v1343
    %v1345 = vpop.f32.mrf.mxu0
    %1346 = vmatprep.mubr.f32.mxu0 0.0
    %1347 = vmatmul.mubr.f32.gmra.mxu0 %v1052
    %v1348 = vpop.f32.mrf.mxu0
    %v1349 = vadd.f32 %v705, %v1348
    %v1350 = vpop.f32.mrf.mxu0
    %1351 = vmatprep.mubr.f32.mxu0 0.0
    %1352 = vmatmul.mubr.f32.gmra.mxu0 %v1055
    %v1353 = vpop.f32.mrf.mxu0
    %v1354 = vadd.f32 %v710, %v1353
    %v1355 = vpop.f32.mrf.mxu0
    %1356 = vmatprep.mubr.f32.mxu0 0.0
    %1357 = vmatmul.mubr.f32.gmra.mxu0 %v1058
    %v1358 = vpop.f32.mrf.mxu0
    %v1359 = vadd.f32 %v715, %v1358
    %v1360 = vpop.f32.mrf.mxu0
    %1361 = vmatprep.mubr.f32.mxu0 0.0
    %1362 = vmatmul.mubr.f32.gmra.mxu0 %v1061
    %v1363 = vpop.f32.mrf.mxu0
    %v1364 = vadd.f32 %v720, %v1363
    %v1365 = vpop.f32.mrf.mxu0
    %1366 = vmatprep.mubr.f32.mxu0 0.0
    %1367 = vmatmul.mubr.f32.gmra.mxu0 %v1064
    %v1368 = vpop.f32.mrf.mxu0
    %v1369 = vadd.f32 %v725, %v1368
    %v1370 = vpop.f32.mrf.mxu0
    %1371 = vmatprep.mubr.f32.mxu0 0.0
    %1372 = vmatmul.mubr.f32.gmra.mxu0 %v1067
    %v1373 = vpop.f32.mrf.mxu0
    %v1374 = vadd.f32 %v730, %v1373
    %v1375 = vpop.f32.mrf.mxu0
    %1376 = vmatprep.mubr.f32.mxu0 0.0
    %1377 = vmatmul.mubr.f32.gmra.mxu0 %v1070
    %v1378 = vpop.f32.mrf.mxu0
    %v1379 = vadd.f32 %v735, %v1378
    %v1380 = vpop.f32.mrf.mxu0
    %1381 = vmatprep.mubr.f32.mxu0 0.0
    %1382 = vmatmul.mubr.f32.gmra.mxu0 %v1073
    %v1383 = vpop.f32.mrf.mxu0
    %v1384 = vadd.f32 %v740, %v1383
    %v1385 = vpop.f32.mrf.mxu0
    %1386 = vmatprep.mubr.f32.mxu0 0.0
    %1387 = vmatmul.mubr.f32.gmra.mxu0 %v1076
    %v1388 = vpop.f32.mrf.mxu0
    %v1389 = vadd.f32 %v745, %v1388
    %v1390 = vpop.f32.mrf.mxu0
    %1391 = vmatprep.mubr.f32.mxu0 0.0
    %1392 = vmatmul.mubr.f32.gmra.mxu0 %v1079
    %v1393 = vpop.f32.mrf.mxu0
    %v1394 = vadd.f32 %v750, %v1393
    %v1395 = vpop.f32.mrf.mxu0
    %1396 = vmatprep.mubr.f32.mxu0 0.0
    %1397 = vmatmul.mubr.f32.gmra.mxu0 %v1082
    %v1398 = vpop.f32.mrf.mxu0
    %v1399 = vadd.f32 %v755, %v1398
    %v1400 = vpop.f32.mrf.mxu0
    %1401 = vmatprep.mubr.f32.mxu0 0.0
    %1402 = vmatmul.mubr.f32.gmra.mxu0 %v1085
    %v1403 = vpop.f32.mrf.mxu0
    %v1404 = vadd.f32 %v760, %v1403
    %v1405 = vpop.f32.mrf.mxu0
    %1406 = vmatprep.mubr.f32.mxu0 0.0
    %1407 = vmatmul.mubr.f32.gmra.mxu0 %v1088
    %v1408 = vpop.f32.mrf.mxu0
    %v1409 = vadd.f32 %v765, %v1408
    %v1410 = vpop.f32.mrf.mxu0
    %1411 = vmatprep.mubr.f32.mxu0 0.0
    %1412 = vmatmul.mubr.f32.gmra.mxu0 %v1091
    %v1413 = vpop.f32.mrf.mxu0
    %v1414 = vadd.f32 %v770, %v1413
    %v1415 = vpop.f32.mrf.mxu0
    %1416 = vmatprep.mubr.f32.mxu0 0.0
    %1417 = vmatmul.mubr.f32.gmra.mxu0 %v1094
    %v1418 = vpop.f32.mrf.mxu0
    %v1419 = vadd.f32 %v775, %v1418
    %v1420 = vpop.f32.mrf.mxu0
    %1421 = vmatprep.mubr.f32.mxu0 0.0
    %1422 = vmatmul.mubr.f32.gmra.mxu0 %v1097
    %v1423 = vpop.f32.mrf.mxu0
    %v1424 = vadd.f32 %v780, %v1423
    %v1425 = vpop.f32.mrf.mxu0
    %1426 = vmatprep.mubr.f32.mxu0 0.0
    %1427 = vmatmul.mubr.f32.gmra.mxu0 %v1100
    %v1428 = vpop.f32.mrf.mxu0
    %v1429 = vadd.f32 %v785, %v1428
    %v1430 = vpop.f32.mrf.mxu0
    %1431 = vmatprep.mubr.f32.mxu0 0.0
    %1432 = vmatmul.mubr.f32.gmra.mxu0 %v1103
    %v1433 = vpop.f32.mrf.mxu0
    %v1434 = vadd.f32 %v790, %v1433
    %v1435 = vpop.f32.mrf.mxu0
    %1436 = vmatprep.mubr.f32.mxu0 0.0
    %1437 = vmatmul.mubr.f32.gmra.mxu0 %v1106
    %v1438 = vpop.f32.mrf.mxu0
    %v1439 = vadd.f32 %v795, %v1438
    %v1440 = vpop.f32.mrf.mxu0
    %1441 = vmatprep.mubr.f32.mxu0 0.0
    %1442 = vmatmul.mubr.f32.gmra.mxu0 %v1109
    %v1443 = vpop.f32.mrf.mxu0
    %v1444 = vadd.f32 %v800, %v1443
    %v1445 = vpop.f32.mrf.mxu0
    %1446 = vmatprep.mubr.f32.mxu0 0.0
    %1447 = vmatmul.mubr.f32.gmra.mxu0 %v1112
    %v1448 = vpop.f32.mrf.mxu0
    %v1449 = vadd.f32 %v805, %v1448
    %v1450 = vpop.f32.mrf.mxu0
    %1451 = vmatprep.mubr.f32.mxu0 0.0
    %1452 = vmatmul.mubr.f32.gmra.mxu0 %v1115
    %v1453 = vpop.f32.mrf.mxu0
    %v1454 = vadd.f32 %v810, %v1453
    %v1455 = vpop.f32.mrf.mxu0
    %1456 = vmatprep.mubr.f32.mxu0 0.0
    %1457 = vmatmul.mubr.f32.gmra.mxu0 %v1118
    %v1458 = vpop.f32.mrf.mxu0
    %v1459 = vadd.f32 %v815, %v1458
    %v1460 = vpop.f32.mrf.mxu0
    %1461 = vmatprep.mubr.f32.mxu0 0.0
    %1462 = vmatmul.mubr.f32.gmra.mxu0 %v1121
    %v1463 = vpop.f32.mrf.mxu0
    %v1464 = vadd.f32 %v820, %v1463
    %v1465 = vpop.f32.mrf.mxu0
    %1466 = vmatprep.mubr.f32.mxu0 0.0
    %1467 = vmatmul.mubr.f32.gmra.mxu0 %v1124
    %v1468 = vpop.f32.mrf.mxu0
    %v1469 = vadd.f32 %v825, %v1468
    %v1470 = vpop.f32.mrf.mxu0
    %1471 = vmatprep.mubr.f32.mxu0 0.0
    %1472 = vmatmul.mubr.f32.gmra.mxu0 %v1127
    %v1473 = vpop.f32.mrf.mxu0
    %v1474 = vadd.f32 %v830, %v1473
    %v1475 = vpop.f32.mrf.mxu0
    %1476 = vmatprep.mubr.f32.mxu0 0.0
    %1477 = vmatmul.mubr.f32.gmra.mxu0 %v1130
    %v1478 = vpop.f32.mrf.mxu0
    %v1479 = vadd.f32 %v835, %v1478
    %v1480 = vpop.f32.mrf.mxu0
    %1481 = vmatprep.mubr.f32.mxu0 0.0
    %1482 = vmatmul.mubr.f32.gmra.mxu0 %v1133
    %v1483 = vpop.f32.mrf.mxu0
    %v1484 = vadd.f32 %v840, %v1483
    %v1485 = vpop.f32.mrf.mxu0
    %1486 = vmatprep.mubr.f32.mxu0 0.0
    %1487 = vmatmul.mubr.f32.gmra.mxu0 %v1136
    %v1488 = vpop.f32.mrf.mxu0
    %v1489 = vadd.f32 %v845, %v1488
    %v1490 = vpop.f32.mrf.mxu0
    %1491 = vmatprep.mubr.f32.mxu0 0.0
    %1492 = vmatmul.mubr.f32.gmra.mxu0 %v1139
    %v1493 = vpop.f32.mrf.mxu0
    %v1494 = vadd.f32 %v850, %v1493
    %v1495 = vpop.f32.mrf.mxu0
    %1496 = vmatprep.mubr.f32.mxu0 0.0
    %1497 = vmatmul.mubr.f32.gmra.mxu0 %v1142
    %v1498 = vpop.f32.mrf.mxu0
    %v1499 = vadd.f32 %v855, %v1498
    %v1500 = vpop.f32.mrf.mxu0
    %1501 = vmatprep.mubr.f32.mxu0 0.0
    %1502 = vmatmul.mubr.f32.gmra.mxu0 %v1145
    %v1503 = vpop.f32.mrf.mxu0
    %v1504 = vadd.f32 %v860, %v1503
    %v1505 = vpop.f32.mrf.mxu0
    %1506 = vmatprep.mubr.f32.mxu0 0.0
    %1507 = vmatmul.mubr.f32.gmra.mxu0 %v1148
    %v1508 = vpop.f32.mrf.mxu0
    %v1509 = vadd.f32 %v865, %v1508
    %v1510 = vpop.f32.mrf.mxu0
    %1511 = vmatprep.mubr.f32.mxu0 0.0
    %1512 = vmatmul.mubr.f32.gmra.mxu0 %v1151
    %v1513 = vpop.f32.mrf.mxu0
    %v1514 = vadd.f32 %v870, %v1513
    %v1515 = vpop.f32.mrf.mxu0
    %1516 = vmatprep.mubr.f32.mxu0 0.0
    %1517 = vmatmul.mubr.f32.gmra.mxu0 %v1154
    %v1518 = vpop.f32.mrf.mxu0
    %v1519 = vadd.f32 %v875, %v1518
    %v1520 = vpop.f32.mrf.mxu0
    %1521 = vmatprep.mubr.f32.mxu0 0.0
    %1522 = vmatmul.mubr.f32.gmra.mxu0 %v1157
    %v1523 = vpop.f32.mrf.mxu0
    %v1524 = vadd.f32 %v880, %v1523
    %v1525 = vpop.f32.mrf.mxu0
    %1526 = vmatprep.mubr.f32.mxu0 0.0
    %1527 = vmatmul.mubr.f32.gmra.mxu0 %v1160
    %v1528 = vpop.f32.mrf.mxu0
    %v1529 = vadd.f32 %v885, %v1528
    %v1530 = vpop.f32.mrf.mxu0
    %1531 = vmatprep.mubr.f32.mxu0 0.0
    %1532 = vmatmul.mubr.f32.gmra.mxu0 %v1163
    %v1533 = vpop.f32.mrf.mxu0
    %v1534 = vadd.f32 %v890, %v1533
    %v1535 = vpop.f32.mrf.mxu0
    %1536 = vmatprep.mubr.f32.mxu0 0.0
    %1537 = vmatmul.mubr.f32.gmra.mxu0 %v1166
    %v1538 = vpop.f32.mrf.mxu0
    %v1539 = vadd.f32 %v895, %v1538
    %v1540 = vpop.f32.mrf.mxu0
    %1541 = vmatprep.mubr.f32.mxu0 0.0
    %1542 = vmatmul.mubr.f32.gmra.mxu0 %v1169
    %v1543 = vpop.f32.mrf.mxu0
    %v1544 = vadd.f32 %v900, %v1543
    %v1545 = vpop.f32.mrf.mxu0
    %1546 = vmatprep.mubr.f32.mxu0 0.0
    %1547 = vmatmul.mubr.f32.gmra.mxu0 %v1172
    %v1548 = vpop.f32.mrf.mxu0
    %v1549 = vadd.f32 %v905, %v1548
    %v1550 = vpop.f32.mrf.mxu0
    %1551 = vmatprep.mubr.f32.mxu0 0.0
    %1552 = vmatmul.mubr.f32.gmra.mxu0 %v1175
    %v1553 = vpop.f32.mrf.mxu0
    %v1554 = vadd.f32 %v910, %v1553
    %v1555 = vpop.f32.mrf.mxu0
    %1556 = vmatprep.mubr.f32.mxu0 0.0
    %1557 = vmatmul.mubr.f32.gmra.mxu0 %v1178
    %v1558 = vpop.f32.mrf.mxu0
    %v1559 = vadd.f32 %v915, %v1558
    %v1560 = vpop.f32.mrf.mxu0
    %1561 = vmatprep.mubr.f32.mxu0 0.0
    %1562 = vmatmul.mubr.f32.gmra.mxu0 %v1181
    %v1563 = vpop.f32.mrf.mxu0
    %v1564 = vadd.f32 %v920, %v1563
    %v1565 = vpop.f32.mrf.mxu0
    %1566 = vmatprep.mubr.f32.mxu0 0.0
    %1567 = vmatmul.mubr.f32.gmra.mxu0 %v1184
    %v1568 = vpop.f32.mrf.mxu0
    %v1569 = vadd.f32 %v925, %v1568
    %v1570 = vpop.f32.mrf.mxu0
    %1571 = vmatprep.mubr.f32.mxu0 0.0
    %1572 = vmatmul.mubr.f32.gmra.mxu0 %v1187
    %v1573 = vpop.f32.mrf.mxu0
    %v1574 = vadd.f32 %v930, %v1573
    %v1575 = vpop.f32.mrf.mxu0
    %1576 = vmatprep.mubr.f32.mxu0 0.0
    %1577 = vmatmul.mubr.f32.gmra.mxu0 %v1190
    %v1578 = vpop.f32.mrf.mxu0
    %v1579 = vadd.f32 %v935, %v1578
    %v1580 = vpop.f32.mrf.mxu0
    %1581 = vmatprep.mubr.f32.mxu0 0.0
    %1582 = vmatmul.mubr.f32.gmra.mxu0 %v1193
    %v1583 = vpop.f32.mrf.mxu0
    %v1584 = vadd.f32 %v940, %v1583
    %v1585 = vpop.f32.mrf.mxu0
    %1586 = vmatprep.mubr.f32.mxu0 0.0
    %1587 = vmatmul.mubr.f32.gmra.mxu0 %v1196
    %v1588 = vpop.f32.mrf.mxu0
    %v1589 = vadd.f32 %v945, %v1588
    %v1590 = vpop.f32.mrf.mxu0
    %1591 = vmatprep.mubr.f32.mxu0 0.0
    %1592 = vmatmul.mubr.f32.gmra.mxu0 %v1199
    %v1593 = vpop.f32.mrf.mxu0
    %v1594 = vadd.f32 %v950, %v1593
    %v1595 = vpop.f32.mrf.mxu0
    %1596 = vmatprep.mubr.f32.mxu0 0.0
    %1597 = vmatmul.mubr.f32.gmra.mxu0 %v1202
    %v1598 = vpop.f32.mrf.mxu0
    %v1599 = vadd.f32 %v955, %v1598
    %v1600 = vpop.f32.mrf.mxu0
    %1601 = vmatprep.mubr.f32.mxu0 0.0
    %1602 = vmatmul.mubr.f32.gmra.mxu0 %v1205
    %v1603 = vpop.f32.mrf.mxu0
    %v1604 = vadd.f32 %v960, %v1603
    %v1605 = vpop.f32.mrf.mxu0
    %1606 = vmatprep.mubr.f32.mxu0 0.0
    %1607 = vmatmul.mubr.f32.gmra.mxu0 %v1208
    %v1608 = vpop.f32.mrf.mxu0
    %v1609 = vadd.f32 %v965, %v1608
    %v1610 = vpop.f32.mrf.mxu0
    %1611 = vmatprep.mubr.f32.mxu0 0.0
    %1612 = vmatmul.mubr.f32.gmra.mxu0 %v1211
    %v1613 = vpop.f32.mrf.mxu0
    %v1614 = vadd.f32 %v970, %v1613
    %v1615 = vpop.f32.mrf.mxu0
    %1616 = vmatprep.mubr.f32.mxu0 0.0
    %1617 = vmatmul.mubr.f32.gmra.mxu0 %v1214
    %v1618 = vpop.f32.mrf.mxu0
    %v1619 = vadd.f32 %v975, %v1618
    %v1620 = vpop.f32.mrf.mxu0
    %1621 = vmatprep.mubr.f32.mxu0 0.0
    %1622 = vmatmul.mubr.f32.gmra.mxu0 %v1217
    %v1623 = vpop.f32.mrf.mxu0
    %v1624 = vadd.f32 %v980, %v1623
    %v1625 = vpop.f32.mrf.mxu0
    %1626 = vmatprep.mubr.f32.mxu0 0.0
    %1627 = vmatmul.mubr.f32.gmra.mxu0 %v1220
    %v1628 = vpop.f32.mrf.mxu0
    %v1629 = vadd.f32 %v985, %v1628
    %v1630 = vpop.f32.mrf.mxu0
    %1631 = vmatprep.mubr.f32.mxu0 0.0
    %1632 = vmatmul.mubr.f32.gmra.mxu0 %v1223
    %v1633 = vpop.f32.mrf.mxu0
    %v1634 = vadd.f32 %v990, %v1633
    %v1635 = vpop.f32.mrf.mxu0
    %1636 = vmatprep.mubr.f32.mxu0 0.0
    %1637 = vmatmul.mubr.f32.gmra.mxu0 %v1226
    %v1638 = vpop.f32.mrf.mxu0
    %v1639 = vadd.f32 %v995, %v1638
    %v1640 = vpop.f32.mrf.mxu0
    %1641 = vmatprep.mubr.f32.mxu0 0.0
    %1642 = vmatmul.mubr.f32.gmra.mxu0 %v1229
    %v1643 = vpop.f32.mrf.mxu0
    %v1644 = vadd.f32 %v1000, %v1643
    %v1645 = vpop.f32.mrf.mxu0
    %1646 = vmatprep.mubr.f32.mxu0 0.0
    %1647 = vmatmul.mubr.f32.gmra.mxu0 %v1232
    %v1648 = vpop.f32.mrf.mxu0
    %v1649 = vadd.f32 %v1005, %v1648
    %v1650 = vpop.f32.mrf.mxu0
    %1651 = vmatprep.mubr.f32.mxu0 0.0
    %1652 = vmatmul.mubr.f32.gmra.mxu0 %v1235
    %v1653 = vpop.f32.mrf.mxu0
    %v1654 = vadd.f32 %v1010, %v1653
    %v1655 = vpop.f32.mrf.mxu0
    %1656 = vmatprep.mubr.f32.mxu0 0.0
    %1657 = vmatmul.mubr.f32.gmra.mxu0 %v1238
    %v1658 = vpop.f32.mrf.mxu0
    %v1659 = vadd.f32 %v1015, %v1658
    %v1660 = vpop.f32.mrf.mxu0
    %1661 = vmatprep.mubr.f32.mxu0 0.0
    %1662 = vmatmul.mubr.f32.gmra.mxu0 %v1241
    %v1663 = vpop.f32.mrf.mxu0
    %v1664 = vadd.f32 %v1020, %v1663
    %v1665 = vpop.f32.mrf.mxu0
    %1666 = vmatprep.mubr.f32.mxu0 0.0
    %1667 = vmatmul.mubr.f32.gmra.mxu0 %v1244
    %v1668 = vpop.f32.mrf.mxu0
    %v1669 = vadd.f32 %v1025, %v1668
    %v1670 = vpop.f32.mrf.mxu0
    %1671 = vmatprep.mubr.f32.mxu0 0.0
    %1672 = vmatmul.mubr.f32.gmra.mxu0 %v1247
    %v1673 = vpop.f32.mrf.mxu0
    %v1674 = vadd.f32 %v1030, %v1673
    %v1675 = vpop.f32.mrf.mxu0
    %1676 = vdwg.mxu0
    %v1677 = vrot.slane %v21, 2
    %v1678 = vrot.slane %v22, 2
    %v1679 = vrot.slane %v23, 2
    %v1680 = vrot.slane %v24, 2
    %v1681 = vrot.slane %v25, 2
    %v1682 = vrot.slane %v26, 2
    %v1683 = vrot.slane %v27, 2
    %v1684 = vrot.slane %v28, 2
    %v1685 = vrot.slane %v29, 2
    %v1686 = vrot.slane %v30, 2
    %v1687 = vrot.slane %v31, 2
    %v1688 = vrot.slane %v32, 2
    %v1689 = vrot.slane %v33, 2
    %v1690 = vrot.slane %v34, 2
    %v1691 = vrot.slane %v35, 2
    %v1692 = vrot.slane %v36, 2
    %v1693 = vrot.slane %v37, 2
    %v1694 = vrot.slane %v38, 2
    %v1695 = vrot.slane %v39, 2
    %v1696 = vrot.slane %v40, 2
    %v1697 = vrot.slane %v41, 2
    %v1698 = vrot.slane %v42, 2
    %v1699 = vrot.slane %v43, 2
    %v1700 = vrot.slane %v44, 2
    %v1701 = vrot.slane %v45, 2
    %v1702 = vrot.slane %v46, 2
    %v1703 = vrot.slane %v47, 2
    %v1704 = vrot.slane %v48, 2
    %v1705 = vrot.slane %v49, 2
    %v1706 = vrot.slane %v50, 2
    %v1707 = vrot.slane %v51, 2
    %v1708 = vrot.slane %v52, 2
    %v1709 = vrot.slane %v53, 2
    %v1710 = vrot.slane %v54, 2
    %v1711 = vrot.slane %v55, 2
    %v1712 = vrot.slane %v56, 2
    %v1713 = vrot.slane %v57, 2
    %v1714 = vrot.slane %v58, 2
    %v1715 = vrot.slane %v59, 2
    %v1716 = vrot.slane %v60, 2
    %v1717 = vrot.slane %v61, 2
    %v1718 = vrot.slane %v62, 2
    %v1719 = vrot.slane %v63, 2
    %v1720 = vrot.slane %v64, 2
    %v1721 = vrot.slane %v65, 2
    %v1722 = vrot.slane %v66, 2
    %v1723 = vrot.slane %v67, 2
    %v1724 = vrot.slane %v68, 2
    %v1725 = vrot.slane %v69, 2
    %v1726 = vrot.slane %v70, 2
    %v1727 = vrot.slane %v71, 2
    %v1728 = vrot.slane %v72, 2
    %v1729 = vrot.slane %v73, 2
    %v1730 = vrot.slane %v74, 2
    %v1731 = vrot.slane %v75, 2
    %v1732 = vrot.slane %v76, 2
    %v1733 = vrot.slane %v77, 2
    %v1734 = vrot.slane %v78, 2
    %v1735 = vrot.slane %v79, 2
    %v1736 = vrot.slane %v80, 2
    %v1737 = vrot.slane %v81, 2
    %v1738 = vrot.slane %v82, 2
    %v1739 = vrot.slane %v83, 2
    %v1740 = vrot.slane %v84, 2
    %v1741 = vrot.slane %v85, 2
    %v1742 = vrot.slane %v86, 2
    %v1743 = vrot.slane %v87, 2
    %v1744 = vrot.slane %v88, 2
    %v1745 = vrot.slane %v89, 2
    %v1746 = vrot.slane %v90, 2
    %v1747 = vrot.slane %v91, 2
    %v1748 = vrot.slane %v92, 2
    %vm1749 = vcmp.lt.s32.totalorder %v311, 6
    %v1750 = vsel %vm1749, %v1747, %v1748
    %v1751 = vsel %vm1749, %v1746, %v1747
    %v1752 = vsel %vm1749, %v1745, %v1746
    %v1753 = vsel %vm1749, %v1744, %v1745
    %v1754 = vsel %vm1749, %v1743, %v1744
    %v1755 = vsel %vm1749, %v1742, %v1743
    %v1756 = vsel %vm1749, %v1741, %v1742
    %v1757 = vsel %vm1749, %v1740, %v1741
    %v1758 = vsel %vm1749, %v1739, %v1740
    %v1759 = vsel %vm1749, %v1738, %v1739
    %v1760 = vsel %vm1749, %v1737, %v1738
    %v1761 = vsel %vm1749, %v1736, %v1737
    %v1762 = vsel %vm1749, %v1735, %v1736
    %v1763 = vsel %vm1749, %v1734, %v1735
    %v1764 = vsel %vm1749, %v1733, %v1734
    %v1765 = vsel %vm1749, %v1732, %v1733
    %v1766 = vsel %vm1749, %v1731, %v1732
    %v1767 = vsel %vm1749, %v1730, %v1731
    %v1768 = vsel %vm1749, %v1729, %v1730
    %v1769 = vsel %vm1749, %v1728, %v1729
    %v1770 = vsel %vm1749, %v1727, %v1728
    %v1771 = vsel %vm1749, %v1726, %v1727
    %v1772 = vsel %vm1749, %v1725, %v1726
    %v1773 = vsel %vm1749, %v1724, %v1725
    %v1774 = vsel %vm1749, %v1723, %v1724
    %v1775 = vsel %vm1749, %v1722, %v1723
    %v1776 = vsel %vm1749, %v1721, %v1722
    %v1777 = vsel %vm1749, %v1720, %v1721
    %v1778 = vsel %vm1749, %v1719, %v1720
    %v1779 = vsel %vm1749, %v1718, %v1719
    %v1780 = vsel %vm1749, %v1717, %v1718
    %v1781 = vsel %vm1749, %v1716, %v1717
    %v1782 = vsel %vm1749, %v1715, %v1716
    %v1783 = vsel %vm1749, %v1714, %v1715
    %v1784 = vsel %vm1749, %v1713, %v1714
    %v1785 = vsel %vm1749, %v1712, %v1713
    %v1786 = vsel %vm1749, %v1711, %v1712
    %v1787 = vsel %vm1749, %v1710, %v1711
    %v1788 = vsel %vm1749, %v1709, %v1710
    %v1789 = vsel %vm1749, %v1708, %v1709
    %v1790 = vsel %vm1749, %v1707, %v1708
    %v1791 = vsel %vm1749, %v1706, %v1707
    %v1792 = vsel %vm1749, %v1705, %v1706
    %v1793 = vsel %vm1749, %v1704, %v1705
    %v1794 = vsel %vm1749, %v1703, %v1704
    %v1795 = vsel %vm1749, %v1702, %v1703
    %v1796 = vsel %vm1749, %v1701, %v1702
    %v1797 = vsel %vm1749, %v1700, %v1701
    %v1798 = vsel %vm1749, %v1699, %v1700
    %v1799 = vsel %vm1749, %v1698, %v1699
    %v1800 = vsel %vm1749, %v1697, %v1698
    %v1801 = vsel %vm1749, %v1696, %v1697
    %v1802 = vsel %vm1749, %v1695, %v1696
    %v1803 = vsel %vm1749, %v1694, %v1695
    %v1804 = vsel %vm1749, %v1693, %v1694
    %v1805 = vsel %vm1749, %v1692, %v1693
    %v1806 = vsel %vm1749, %v1691, %v1692
    %v1807 = vsel %vm1749, %v1690, %v1691
    %v1808 = vsel %vm1749, %v1689, %v1690
    %v1809 = vsel %vm1749, %v1688, %v1689
    %v1810 = vsel %vm1749, %v1687, %v1688
    %v1811 = vsel %vm1749, %v1686, %v1687
    %v1812 = vsel %vm1749, %v1685, %v1686
    %v1813 = vsel %vm1749, %v1684, %v1685
    %v1814 = vsel %vm1749, %v1683, %v1684
    %v1815 = vsel %vm1749, %v1682, %v1683
    %v1816 = vsel %vm1749, %v1681, %v1682
    %v1817 = vsel %vm1749, %v1680, %v1681
    %v1818 = vsel %vm1749, %v1679, %v1680
    %v1819 = vsel %vm1749, %v1678, %v1679
    %v1820 = vsel %vm1749, %v1677, %v1678
    %v1821 = vsel %vm1749, %v1748, %v1677
    %s1822 = scalar_lea.vmem %s3, 8
    %v1823 = vld [vmem:[%s1822] sm:$0xf]
    %v1825 = vsel %vm387, %v1820, 0
    %v1828 = vsel %vm387, %v1819, 0
    %v1831 = vsel %vm387, %v1818, 0
    %v1834 = vsel %vm387, %v1817, 0
    %v1837 = vsel %vm387, %v1816, 0
    %v1840 = vsel %vm387, %v1815, 0
    %v1843 = vsel %vm387, %v1814, 0
    %v1846 = vsel %vm387, %v1813, 0
    %v1849 = vsel %vm387, %v1812, 0
    %v1852 = vsel %vm387, %v1811, 0
    %v1855 = vsel %vm387, %v1810, 0
    %v1858 = vsel %vm387, %v1809, 0
    %v1861 = vsel %vm387, %v1808, 0
    %v1864 = vsel %vm387, %v1807, 0
    %v1867 = vsel %vm387, %v1806, 0
    %v1870 = vsel %vm387, %v1805, 0
    %v1873 = vsel %vm387, %v1804, 0
    %v1876 = vsel %vm387, %v1803, 0
    %v1879 = vsel %vm387, %v1802, 0
    %v1882 = vsel %vm387, %v1801, 0
    %v1885 = vsel %vm387, %v1800, 0
    %v1888 = vsel %vm387, %v1799, 0
    %v1891 = vsel %vm387, %v1798, 0
    %v1894 = vsel %vm387, %v1797, 0
    %v1897 = vsel %vm387, %v1796, 0
    %v1900 = vsel %vm387, %v1795, 0
    %v1903 = vsel %vm387, %v1794, 0
    %v1906 = vsel %vm387, %v1793, 0
    %v1909 = vsel %vm387, %v1792, 0
    %v1912 = vsel %vm387, %v1791, 0
    %v1915 = vsel %vm387, %v1790, 0
    %v1918 = vsel %vm387, %v1789, 0
    %v1921 = vsel %vm387, %v1788, 0
    %v1924 = vsel %vm387, %v1787, 0
    %v1927 = vsel %vm387, %v1786, 0
    %v1930 = vsel %vm387, %v1785, 0
    %v1933 = vsel %vm387, %v1784, 0
    %v1936 = vsel %vm387, %v1783, 0
    %v1939 = vsel %vm387, %v1782, 0
    %v1942 = vsel %vm387, %v1781, 0
    %v1945 = vsel %vm387, %v1780, 0
    %v1948 = vsel %vm387, %v1779, 0
    %v1951 = vsel %vm387, %v1778, 0
    %v1954 = vsel %vm387, %v1777, 0
    %v1957 = vsel %vm387, %v1776, 0
    %v1960 = vsel %vm387, %v1775, 0
    %v1963 = vsel %vm387, %v1774, 0
    %v1966 = vsel %vm387, %v1773, 0
    %v1969 = vsel %vm387, %v1772, 0
    %v1972 = vsel %vm387, %v1771, 0
    %v1975 = vsel %vm387, %v1770, 0
    %v1978 = vsel %vm387, %v1769, 0
    %v1981 = vsel %vm387, %v1768, 0
    %v1984 = vsel %vm387, %v1767, 0
    %v1987 = vsel %vm387, %v1766, 0
    %v1990 = vsel %vm387, %v1765, 0
    %v1993 = vsel %vm387, %v1764, 0
    %v1996 = vsel %vm387, %v1763, 0
    %v1999 = vsel %vm387, %v1762, 0
    %v2002 = vsel %vm387, %v1761, 0
    %v2005 = vsel %vm387, %v1760, 0
    %v2008 = vsel %vm387, %v1759, 0
    %v2011 = vsel %vm387, %v1758, 0
    %v2014 = vsel %vm387, %v1757, 0
    %v2017 = vsel %vm387, %v1756, 0
    %v2020 = vsel %vm387, %v1755, 0
    %v2023 = vsel %vm387, %v1754, 0
    %v2026 = vsel %vm387, %v1753, 0
    %v2029 = vsel %vm387, %v1752, 0
    %v2032 = vsel %vm387, %v1751, 0
    %v2035 = vsel %vm387, %v1750, 0
    %v2038 = vsel %vm387, %v1821, 0
    %v2041 = vsel %vm604, %v1823, 0
    %2043 = vmatprep.subr.mxu0 0.0
    %2044 = vmatpush1.msra.mxu0 0.0
    %2045 = vmatprep.subr.mxu0 0.0
    %2046 = vmatpush1.msra.mxu0 0.0
    %2047 = vmatprep.subr.mxu0 0.0
    %2048 = vmatpush1.msra.mxu0 0.0
    %2049 = vmatprep.subr.mxu0 0.0
    %2050 = vmatpush1.msra.mxu0 0.0
    %2051 = vmatprep.subr.mxu0 0.0
    %2052 = vmatpush1.msra.mxu0 0.0
    %2053 = vmatprep.subr.mxu0 0.0
    %2054 = vmatpush1.msra.mxu0 0.0
    %2055 = vmatprep.subr.mxu0 0.0
    %2056 = vmatpush1.msra.mxu0 0.0
    %2057 = vmatprep.subr.mxu0 0.0
    %2058 = vmatpush1.msra.mxu0 0.0
    %2059 = vmatprep.subr.mxu0 0.0
    %2060 = vmatpush1.msra.mxu0 0.0
    %2061 = vmatprep.subr.mxu0 0.0
    %2062 = vmatpush1.msra.mxu0 0.0
    %2063 = vmatprep.subr.mxu0 0.0
    %2064 = vmatpush1.msra.mxu0 0.0
    %2065 = vmatprep.subr.mxu0 0.0
    %2066 = vmatpush1.msra.mxu0 0.0
    %2067 = vmatprep.subr.mxu0 0.0
    %2068 = vmatpush1.msra.mxu0 0.0
    %2069 = vmatprep.subr.mxu0 0.0
    %2070 = vmatpush1.msra.mxu0 0.0
    %2071 = vmatprep.subr.mxu0 0.0
    %2072 = vmatpush1.msra.mxu0 0.0
    %2073 = vmatprep.subr.mxu0 0.0
    %2074 = vmatpush1.msra.mxu0 %v2041
    %2075 = vmatprep.subr.mxu0 0.0
    %2076 = vmatpush2.msra.mxu0 0.0
    %2077 = vmatprep.subr.mxu0 0.0
    %2078 = vmatpush2.msra.mxu0 0.0
    %2079 = vmatprep.subr.mxu0 0.0
    %2080 = vmatpush2.msra.mxu0 0.0
    %2081 = vmatprep.subr.mxu0 0.0
    %2082 = vmatpush2.msra.mxu0 0.0
    %2083 = vmatprep.subr.mxu0 0.0
    %2084 = vmatpush2.msra.mxu0 0.0
    %2085 = vmatprep.subr.mxu0 0.0
    %2086 = vmatpush2.msra.mxu0 0.0
    %2087 = vmatprep.subr.mxu0 0.0
    %2088 = vmatpush2.msra.mxu0 0.0
    %2089 = vmatprep.subr.mxu0 0.0
    %2090 = vmatpush2.msra.mxu0 0.0
    %2091 = vmatprep.subr.mxu0 0.0
    %2092 = vmatpush2.msra.mxu0 0.0
    %2093 = vmatprep.subr.mxu0 0.0
    %2094 = vmatpush2.msra.mxu0 0.0
    %2095 = vmatprep.subr.mxu0 0.0
    %2096 = vmatpush2.msra.mxu0 0.0
    %2097 = vmatprep.subr.mxu0 0.0
    %2098 = vmatpush2.msra.mxu0 0.0
    %2099 = vmatprep.subr.mxu0 0.0
    %2100 = vmatpush2.msra.mxu0 0.0
    %2101 = vmatprep.subr.mxu0 0.0
    %2102 = vmatpush2.msra.mxu0 0.0
    %2103 = vmatprep.subr.mxu0 0.0
    %2104 = vmatpush2.msra.mxu0 0.0
    %2105 = vmatprep.subr.mxu0 0.0
    %2106 = vmatpush2.msra.mxu0 0.0
    %2107 = vmatprep.mubr.f32.mxu0 0.0
    %2108 = vmatmul.mubr.f32.gmra.mxu0 %v1825
    %v2109 = vpop.f32.mrf.mxu0
    %v2110 = vadd.f32 0.0, %v2109
    %v2111 = vpop.f32.mrf.mxu0
    %2112 = vmatprep.mubr.f32.mxu0 0.0
    %2113 = vmatmul.mubr.f32.gmra.mxu0 %v1828
    %v2114 = vpop.f32.mrf.mxu0
    %v2115 = vadd.f32 0.0, %v2114
    %v2116 = vpop.f32.mrf.mxu0
    %2117 = vmatprep.mubr.f32.mxu0 0.0
    %2118 = vmatmul.mubr.f32.gmra.mxu0 %v1831
    %v2119 = vpop.f32.mrf.mxu0
    %v2120 = vadd.f32 0.0, %v2119
    %v2121 = vpop.f32.mrf.mxu0
    %2122 = vmatprep.mubr.f32.mxu0 0.0
    %2123 = vmatmul.mubr.f32.gmra.mxu0 %v1834
    %v2124 = vpop.f32.mrf.mxu0
    %v2125 = vadd.f32 0.0, %v2124
    %v2126 = vpop.f32.mrf.mxu0
    %2127 = vmatprep.mubr.f32.mxu0 0.0
    %2128 = vmatmul.mubr.f32.gmra.mxu0 %v1837
    %v2129 = vpop.f32.mrf.mxu0
    %v2130 = vadd.f32 0.0, %v2129
    %v2131 = vpop.f32.mrf.mxu0
    %2132 = vmatprep.mubr.f32.mxu0 0.0
    %2133 = vmatmul.mubr.f32.gmra.mxu0 %v1840
    %v2134 = vpop.f32.mrf.mxu0
    %v2135 = vadd.f32 0.0, %v2134
    %v2136 = vpop.f32.mrf.mxu0
    %2137 = vmatprep.mubr.f32.mxu0 0.0
    %2138 = vmatmul.mubr.f32.gmra.mxu0 %v1843
    %v2139 = vpop.f32.mrf.mxu0
    %v2140 = vadd.f32 0.0, %v2139
    %v2141 = vpop.f32.mrf.mxu0
    %2142 = vmatprep.mubr.f32.mxu0 0.0
    %2143 = vmatmul.mubr.f32.gmra.mxu0 %v1846
    %v2144 = vpop.f32.mrf.mxu0
    %v2145 = vadd.f32 0.0, %v2144
    %v2146 = vpop.f32.mrf.mxu0
    %2147 = vmatprep.mubr.f32.mxu0 0.0
    %2148 = vmatmul.mubr.f32.gmra.mxu0 %v1849
    %v2149 = vpop.f32.mrf.mxu0
    %v2150 = vadd.f32 0.0, %v2149
    %v2151 = vpop.f32.mrf.mxu0
    %2152 = vmatprep.mubr.f32.mxu0 0.0
    %2153 = vmatmul.mubr.f32.gmra.mxu0 %v1852
    %v2154 = vpop.f32.mrf.mxu0
    %v2155 = vadd.f32 0.0, %v2154
    %v2156 = vpop.f32.mrf.mxu0
    %2157 = vmatprep.mubr.f32.mxu0 0.0
    %2158 = vmatmul.mubr.f32.gmra.mxu0 %v1855
    %v2159 = vpop.f32.mrf.mxu0
    %v2160 = vadd.f32 0.0, %v2159
    %v2161 = vpop.f32.mrf.mxu0
    %2162 = vmatprep.mubr.f32.mxu0 0.0
    %2163 = vmatmul.mubr.f32.gmra.mxu0 %v1858
    %v2164 = vpop.f32.mrf.mxu0
    %v2165 = vadd.f32 0.0, %v2164
    %v2166 = vpop.f32.mrf.mxu0
    %2167 = vmatprep.mubr.f32.mxu0 0.0
    %2168 = vmatmul.mubr.f32.gmra.mxu0 %v1861
    %v2169 = vpop.f32.mrf.mxu0
    %v2170 = vadd.f32 0.0, %v2169
    %v2171 = vpop.f32.mrf.mxu0
    %2172 = vmatprep.mubr.f32.mxu0 0.0
    %2173 = vmatmul.mubr.f32.gmra.mxu0 %v1864
    %v2174 = vpop.f32.mrf.mxu0
    %v2175 = vadd.f32 0.0, %v2174
    %v2176 = vpop.f32.mrf.mxu0
    %2177 = vmatprep.mubr.f32.mxu0 0.0
    %2178 = vmatmul.mubr.f32.gmra.mxu0 %v1867
    %v2179 = vpop.f32.mrf.mxu0
    %v2180 = vadd.f32 0.0, %v2179
    %v2181 = vpop.f32.mrf.mxu0
    %2182 = vmatprep.mubr.f32.mxu0 0.0
    %2183 = vmatmul.mubr.f32.gmra.mxu0 %v1870
    %v2184 = vpop.f32.mrf.mxu0
    %v2185 = vadd.f32 0.0, %v2184
    %v2186 = vpop.f32.mrf.mxu0
    %2187 = vmatprep.mubr.f32.mxu0 0.0
    %2188 = vmatmul.mubr.f32.gmra.mxu0 %v1873
    %v2189 = vpop.f32.mrf.mxu0
    %v2190 = vadd.f32 0.0, %v2189
    %v2191 = vpop.f32.mrf.mxu0
    %2192 = vmatprep.mubr.f32.mxu0 0.0
    %2193 = vmatmul.mubr.f32.gmra.mxu0 %v1876
    %v2194 = vpop.f32.mrf.mxu0
    %v2195 = vadd.f32 0.0, %v2194
    %v2196 = vpop.f32.mrf.mxu0
    %2197 = vmatprep.mubr.f32.mxu0 0.0
    %2198 = vmatmul.mubr.f32.gmra.mxu0 %v1879
    %v2199 = vpop.f32.mrf.mxu0
    %v2200 = vadd.f32 0.0, %v2199
    %v2201 = vpop.f32.mrf.mxu0
    %2202 = vmatprep.mubr.f32.mxu0 0.0
    %2203 = vmatmul.mubr.f32.gmra.mxu0 %v1882
    %v2204 = vpop.f32.mrf.mxu0
    %v2205 = vadd.f32 0.0, %v2204
    %v2206 = vpop.f32.mrf.mxu0
    %2207 = vmatprep.mubr.f32.mxu0 0.0
    %2208 = vmatmul.mubr.f32.gmra.mxu0 %v1885
    %v2209 = vpop.f32.mrf.mxu0
    %v2210 = vadd.f32 0.0, %v2209
    %v2211 = vpop.f32.mrf.mxu0
    %2212 = vmatprep.mubr.f32.mxu0 0.0
    %2213 = vmatmul.mubr.f32.gmra.mxu0 %v1888
    %v2214 = vpop.f32.mrf.mxu0
    %v2215 = vadd.f32 0.0, %v2214
    %v2216 = vpop.f32.mrf.mxu0
    %2217 = vmatprep.mubr.f32.mxu0 0.0
    %2218 = vmatmul.mubr.f32.gmra.mxu0 %v1891
    %v2219 = vpop.f32.mrf.mxu0
    %v2220 = vadd.f32 0.0, %v2219
    %v2221 = vpop.f32.mrf.mxu0
    %2222 = vmatprep.mubr.f32.mxu0 0.0
    %2223 = vmatmul.mubr.f32.gmra.mxu0 %v1894
    %v2224 = vpop.f32.mrf.mxu0
    %v2225 = vadd.f32 0.0, %v2224
    %v2226 = vpop.f32.mrf.mxu0
    %2227 = vmatprep.mubr.f32.mxu0 0.0
    %2228 = vmatmul.mubr.f32.gmra.mxu0 %v1897
    %v2229 = vpop.f32.mrf.mxu0
    %v2230 = vadd.f32 0.0, %v2229
    %v2231 = vpop.f32.mrf.mxu0
    %2232 = vmatprep.mubr.f32.mxu0 0.0
    %2233 = vmatmul.mubr.f32.gmra.mxu0 %v1900
    %v2234 = vpop.f32.mrf.mxu0
    %v2235 = vadd.f32 0.0, %v2234
    %v2236 = vpop.f32.mrf.mxu0
    %2237 = vmatprep.mubr.f32.mxu0 0.0
    %2238 = vmatmul.mubr.f32.gmra.mxu0 %v1903
    %v2239 = vpop.f32.mrf.mxu0
    %v2240 = vadd.f32 0.0, %v2239
    %v2241 = vpop.f32.mrf.mxu0
    %2242 = vmatprep.mubr.f32.mxu0 0.0
    %2243 = vmatmul.mubr.f32.gmra.mxu0 %v1906
    %v2244 = vpop.f32.mrf.mxu0
    %v2245 = vadd.f32 0.0, %v2244
    %v2246 = vpop.f32.mrf.mxu0
    %2247 = vmatprep.mubr.f32.mxu0 0.0
    %2248 = vmatmul.mubr.f32.gmra.mxu0 %v1909
    %v2249 = vpop.f32.mrf.mxu0
    %v2250 = vadd.f32 0.0, %v2249
    %v2251 = vpop.f32.mrf.mxu0
    %2252 = vmatprep.mubr.f32.mxu0 0.0
    %2253 = vmatmul.mubr.f32.gmra.mxu0 %v1912
    %v2254 = vpop.f32.mrf.mxu0
    %v2255 = vadd.f32 0.0, %v2254
    %v2256 = vpop.f32.mrf.mxu0
    %2257 = vmatprep.mubr.f32.mxu0 0.0
    %2258 = vmatmul.mubr.f32.gmra.mxu0 %v1915
    %v2259 = vpop.f32.mrf.mxu0
    %v2260 = vadd.f32 0.0, %v2259
    %v2261 = vpop.f32.mrf.mxu0
    %2262 = vmatprep.mubr.f32.mxu0 0.0
    %2263 = vmatmul.mubr.f32.gmra.mxu0 %v1918
    %v2264 = vpop.f32.mrf.mxu0
    %v2265 = vadd.f32 0.0, %v2264
    %v2266 = vpop.f32.mrf.mxu0
    %2267 = vmatprep.mubr.f32.mxu0 0.0
    %2268 = vmatmul.mubr.f32.gmra.mxu0 %v1921
    %v2269 = vpop.f32.mrf.mxu0
    %v2270 = vadd.f32 0.0, %v2269
    %v2271 = vpop.f32.mrf.mxu0
    %2272 = vmatprep.mubr.f32.mxu0 0.0
    %2273 = vmatmul.mubr.f32.gmra.mxu0 %v1924
    %v2274 = vpop.f32.mrf.mxu0
    %v2275 = vadd.f32 0.0, %v2274
    %v2276 = vpop.f32.mrf.mxu0
    %2277 = vmatprep.mubr.f32.mxu0 0.0
    %2278 = vmatmul.mubr.f32.gmra.mxu0 %v1927
    %v2279 = vpop.f32.mrf.mxu0
    %v2280 = vadd.f32 0.0, %v2279
    %v2281 = vpop.f32.mrf.mxu0
    %2282 = vmatprep.mubr.f32.mxu0 0.0
    %2283 = vmatmul.mubr.f32.gmra.mxu0 %v1930
    %v2284 = vpop.f32.mrf.mxu0
    %v2285 = vadd.f32 0.0, %v2284
    %v2286 = vpop.f32.mrf.mxu0
    %2287 = vmatprep.mubr.f32.mxu0 0.0
    %2288 = vmatmul.mubr.f32.gmra.mxu0 %v1933
    %v2289 = vpop.f32.mrf.mxu0
    %v2290 = vadd.f32 0.0, %v2289
    %v2291 = vpop.f32.mrf.mxu0
    %2292 = vmatprep.mubr.f32.mxu0 0.0
    %2293 = vmatmul.mubr.f32.gmra.mxu0 %v1936
    %v2294 = vpop.f32.mrf.mxu0
    %v2295 = vadd.f32 0.0, %v2294
    %v2296 = vpop.f32.mrf.mxu0
    %2297 = vmatprep.mubr.f32.mxu0 0.0
    %2298 = vmatmul.mubr.f32.gmra.mxu0 %v1939
    %v2299 = vpop.f32.mrf.mxu0
    %v2300 = vadd.f32 0.0, %v2299
    %v2301 = vpop.f32.mrf.mxu0
    %2302 = vmatprep.mubr.f32.mxu0 0.0
    %2303 = vmatmul.mubr.f32.gmra.mxu0 %v1942
    %v2304 = vpop.f32.mrf.mxu0
    %v2305 = vadd.f32 0.0, %v2304
    %v2306 = vpop.f32.mrf.mxu0
    %2307 = vmatprep.mubr.f32.mxu0 0.0
    %2308 = vmatmul.mubr.f32.gmra.mxu0 %v1945
    %v2309 = vpop.f32.mrf.mxu0
    %v2310 = vadd.f32 0.0, %v2309
    %v2311 = vpop.f32.mrf.mxu0
    %2312 = vmatprep.mubr.f32.mxu0 0.0
    %2313 = vmatmul.mubr.f32.gmra.mxu0 %v1948
    %v2314 = vpop.f32.mrf.mxu0
    %v2315 = vadd.f32 0.0, %v2314
    %v2316 = vpop.f32.mrf.mxu0
    %2317 = vmatprep.mubr.f32.mxu0 0.0
    %2318 = vmatmul.mubr.f32.gmra.mxu0 %v1951
    %v2319 = vpop.f32.mrf.mxu0
    %v2320 = vadd.f32 0.0, %v2319
    %v2321 = vpop.f32.mrf.mxu0
    %2322 = vmatprep.mubr.f32.mxu0 0.0
    %2323 = vmatmul.mubr.f32.gmra.mxu0 %v1954
    %v2324 = vpop.f32.mrf.mxu0
    %v2325 = vadd.f32 0.0, %v2324
    %v2326 = vpop.f32.mrf.mxu0
    %2327 = vmatprep.mubr.f32.mxu0 0.0
    %2328 = vmatmul.mubr.f32.gmra.mxu0 %v1957
    %v2329 = vpop.f32.mrf.mxu0
    %v2330 = vadd.f32 0.0, %v2329
    %v2331 = vpop.f32.mrf.mxu0
    %2332 = vmatprep.mubr.f32.mxu0 0.0
    %2333 = vmatmul.mubr.f32.gmra.mxu0 %v1960
    %v2334 = vpop.f32.mrf.mxu0
    %v2335 = vadd.f32 0.0, %v2334
    %v2336 = vpop.f32.mrf.mxu0
    %2337 = vmatprep.mubr.f32.mxu0 0.0
    %2338 = vmatmul.mubr.f32.gmra.mxu0 %v1963
    %v2339 = vpop.f32.mrf.mxu0
    %v2340 = vadd.f32 0.0, %v2339
    %v2341 = vpop.f32.mrf.mxu0
    %2342 = vmatprep.mubr.f32.mxu0 0.0
    %2343 = vmatmul.mubr.f32.gmra.mxu0 %v1966
    %v2344 = vpop.f32.mrf.mxu0
    %v2345 = vadd.f32 0.0, %v2344
    %v2346 = vpop.f32.mrf.mxu0
    %2347 = vmatprep.mubr.f32.mxu0 0.0
    %2348 = vmatmul.mubr.f32.gmra.mxu0 %v1969
    %v2349 = vpop.f32.mrf.mxu0
    %v2350 = vadd.f32 0.0, %v2349
    %v2351 = vpop.f32.mrf.mxu0
    %2352 = vmatprep.mubr.f32.mxu0 0.0
    %2353 = vmatmul.mubr.f32.gmra.mxu0 %v1972
    %v2354 = vpop.f32.mrf.mxu0
    %v2355 = vadd.f32 0.0, %v2354
    %v2356 = vpop.f32.mrf.mxu0
    %2357 = vmatprep.mubr.f32.mxu0 0.0
    %2358 = vmatmul.mubr.f32.gmra.mxu0 %v1975
    %v2359 = vpop.f32.mrf.mxu0
    %v2360 = vadd.f32 0.0, %v2359
    %v2361 = vpop.f32.mrf.mxu0
    %2362 = vmatprep.mubr.f32.mxu0 0.0
    %2363 = vmatmul.mubr.f32.gmra.mxu0 %v1978
    %v2364 = vpop.f32.mrf.mxu0
    %v2365 = vadd.f32 0.0, %v2364
    %v2366 = vpop.f32.mrf.mxu0
    %2367 = vmatprep.mubr.f32.mxu0 0.0
    %2368 = vmatmul.mubr.f32.gmra.mxu0 %v1981
    %v2369 = vpop.f32.mrf.mxu0
    %v2370 = vadd.f32 0.0, %v2369
    %v2371 = vpop.f32.mrf.mxu0
    %2372 = vmatprep.mubr.f32.mxu0 0.0
    %2373 = vmatmul.mubr.f32.gmra.mxu0 %v1984
    %v2374 = vpop.f32.mrf.mxu0
    %v2375 = vadd.f32 0.0, %v2374
    %v2376 = vpop.f32.mrf.mxu0
    %2377 = vmatprep.mubr.f32.mxu0 0.0
    %2378 = vmatmul.mubr.f32.gmra.mxu0 %v1987
    %v2379 = vpop.f32.mrf.mxu0
    %v2380 = vadd.f32 0.0, %v2379
    %v2381 = vpop.f32.mrf.mxu0
    %2382 = vmatprep.mubr.f32.mxu0 0.0
    %2383 = vmatmul.mubr.f32.gmra.mxu0 %v1990
    %v2384 = vpop.f32.mrf.mxu0
    %v2385 = vadd.f32 0.0, %v2384
    %v2386 = vpop.f32.mrf.mxu0
    %2387 = vmatprep.mubr.f32.mxu0 0.0
    %2388 = vmatmul.mubr.f32.gmra.mxu0 %v1993
    %v2389 = vpop.f32.mrf.mxu0
    %v2390 = vadd.f32 0.0, %v2389
    %v2391 = vpop.f32.mrf.mxu0
    %2392 = vmatprep.mubr.f32.mxu0 0.0
    %2393 = vmatmul.mubr.f32.gmra.mxu0 %v1996
    %v2394 = vpop.f32.mrf.mxu0
    %v2395 = vadd.f32 0.0, %v2394
    %v2396 = vpop.f32.mrf.mxu0
    %2397 = vmatprep.mubr.f32.mxu0 0.0
    %2398 = vmatmul.mubr.f32.gmra.mxu0 %v1999
    %v2399 = vpop.f32.mrf.mxu0
    %v2400 = vadd.f32 0.0, %v2399
    %v2401 = vpop.f32.mrf.mxu0
    %2402 = vmatprep.mubr.f32.mxu0 0.0
    %2403 = vmatmul.mubr.f32.gmra.mxu0 %v2002
    %v2404 = vpop.f32.mrf.mxu0
    %v2405 = vadd.f32 0.0, %v2404
    %v2406 = vpop.f32.mrf.mxu0
    %2407 = vmatprep.mubr.f32.mxu0 0.0
    %2408 = vmatmul.mubr.f32.gmra.mxu0 %v2005
    %v2409 = vpop.f32.mrf.mxu0
    %v2410 = vadd.f32 0.0, %v2409
    %v2411 = vpop.f32.mrf.mxu0
    %2412 = vmatprep.mubr.f32.mxu0 0.0
    %2413 = vmatmul.mubr.f32.gmra.mxu0 %v2008
    %v2414 = vpop.f32.mrf.mxu0
    %v2415 = vadd.f32 0.0, %v2414
    %v2416 = vpop.f32.mrf.mxu0
    %2417 = vmatprep.mubr.f32.mxu0 0.0
    %2418 = vmatmul.mubr.f32.gmra.mxu0 %v2011
    %v2419 = vpop.f32.mrf.mxu0
    %v2420 = vadd.f32 0.0, %v2419
    %v2421 = vpop.f32.mrf.mxu0
    %2422 = vmatprep.mubr.f32.mxu0 0.0
    %2423 = vmatmul.mubr.f32.gmra.mxu0 %v2014
    %v2424 = vpop.f32.mrf.mxu0
    %v2425 = vadd.f32 0.0, %v2424
    %v2426 = vpop.f32.mrf.mxu0
    %2427 = vmatprep.mubr.f32.mxu0 0.0
    %2428 = vmatmul.mubr.f32.gmra.mxu0 %v2017
    %v2429 = vpop.f32.mrf.mxu0
    %v2430 = vadd.f32 0.0, %v2429
    %v2431 = vpop.f32.mrf.mxu0
    %2432 = vmatprep.mubr.f32.mxu0 0.0
    %2433 = vmatmul.mubr.f32.gmra.mxu0 %v2020
    %v2434 = vpop.f32.mrf.mxu0
    %v2435 = vadd.f32 0.0, %v2434
    %v2436 = vpop.f32.mrf.mxu0
    %2437 = vmatprep.mubr.f32.mxu0 0.0
    %2438 = vmatmul.mubr.f32.gmra.mxu0 %v2023
    %v2439 = vpop.f32.mrf.mxu0
    %v2440 = vadd.f32 0.0, %v2439
    %v2441 = vpop.f32.mrf.mxu0
    %2442 = vmatprep.mubr.f32.mxu0 0.0
    %2443 = vmatmul.mubr.f32.gmra.mxu0 %v2026
    %v2444 = vpop.f32.mrf.mxu0
    %v2445 = vadd.f32 0.0, %v2444
    %v2446 = vpop.f32.mrf.mxu0
    %2447 = vmatprep.mubr.f32.mxu0 0.0
    %2448 = vmatmul.mubr.f32.gmra.mxu0 %v2029
    %v2449 = vpop.f32.mrf.mxu0
    %v2450 = vadd.f32 0.0, %v2449
    %v2451 = vpop.f32.mrf.mxu0
    %2452 = vmatprep.mubr.f32.mxu0 0.0
    %2453 = vmatmul.mubr.f32.gmra.mxu0 %v2032
    %v2454 = vpop.f32.mrf.mxu0
    %v2455 = vadd.f32 0.0, %v2454
    %v2456 = vpop.f32.mrf.mxu0
    %2457 = vmatprep.mubr.f32.mxu0 0.0
    %2458 = vmatmul.mubr.f32.gmra.mxu0 %v2035
    %v2459 = vpop.f32.mrf.mxu0
    %v2460 = vadd.f32 0.0, %v2459
    %v2461 = vpop.f32.mrf.mxu0
    %2462 = vmatprep.mubr.f32.mxu0 0.0
    %2463 = vmatmul.mubr.f32.gmra.mxu0 %v2038
    %v2464 = vpop.f32.mrf.mxu0
    %v2465 = vadd.f32 0.0, %v2464
    %v2466 = vpop.f32.mrf.mxu0
    %2467 = vdwg.mxu0
    %v2468 = vadd.f32 %v1319, %v2110
    %v2469 = vadd.f32 %v1324, %v2115
    %v2470 = vadd.f32 %v1329, %v2120
    %v2471 = vadd.f32 %v1334, %v2125
    %v2472 = vadd.f32 %v1339, %v2130
    %v2473 = vadd.f32 %v1344, %v2135
    %v2474 = vadd.f32 %v1349, %v2140
    %v2475 = vadd.f32 %v1354, %v2145
    %v2476 = vadd.f32 %v1359, %v2150
    %v2477 = vadd.f32 %v1364, %v2155
    %v2478 = vadd.f32 %v1369, %v2160
    %v2479 = vadd.f32 %v1374, %v2165
    %v2480 = vadd.f32 %v1379, %v2170
    %v2481 = vadd.f32 %v1384, %v2175
    %v2482 = vadd.f32 %v1389, %v2180
    %v2483 = vadd.f32 %v1394, %v2185
    %v2484 = vadd.f32 %v1399, %v2190
    %v2485 = vadd.f32 %v1404, %v2195
    %v2486 = vadd.f32 %v1409, %v2200
    %v2487 = vadd.f32 %v1414, %v2205
    %v2488 = vadd.f32 %v1419, %v2210
    %v2489 = vadd.f32 %v1424, %v2215
    %v2490 = vadd.f32 %v1429, %v2220
    %v2491 = vadd.f32 %v1434, %v2225
    %v2492 = vadd.f32 %v1439, %v2230
    %v2493 = vadd.f32 %v1444, %v2235
    %v2494 = vadd.f32 %v1449, %v2240
    %v2495 = vadd.f32 %v1454, %v2245
    %v2496 = vadd.f32 %v1459, %v2250
    %v2497 = vadd.f32 %v1464, %v2255
    %v2498 = vadd.f32 %v1469, %v2260
    %v2499 = vadd.f32 %v1474, %v2265
    %v2500 = vadd.f32 %v1479, %v2270
    %v2501 = vadd.f32 %v1484, %v2275
    %v2502 = vadd.f32 %v1489, %v2280
    %v2503 = vadd.f32 %v1494, %v2285
    %v2504 = vadd.f32 %v1499, %v2290
    %v2505 = vadd.f32 %v1504, %v2295
    %v2506 = vadd.f32 %v1509, %v2300
    %v2507 = vadd.f32 %v1514, %v2305
    %v2508 = vadd.f32 %v1519, %v2310
    %v2509 = vadd.f32 %v1524, %v2315
    %v2510 = vadd.f32 %v1529, %v2320
    %v2511 = vadd.f32 %v1534, %v2325
    %v2512 = vadd.f32 %v1539, %v2330
    %v2513 = vadd.f32 %v1544, %v2335
    %v2514 = vadd.f32 %v1549, %v2340
    %v2515 = vadd.f32 %v1554, %v2345
    %v2516 = vadd.f32 %v1559, %v2350
    %v2517 = vadd.f32 %v1564, %v2355
    %v2518 = vadd.f32 %v1569, %v2360
    %v2519 = vadd.f32 %v1574, %v2365
    %v2520 = vadd.f32 %v1579, %v2370
    %v2521 = vadd.f32 %v1584, %v2375
    %v2522 = vadd.f32 %v1589, %v2380
    %v2523 = vadd.f32 %v1594, %v2385
    %v2524 = vadd.f32 %v1599, %v2390
    %v2525 = vadd.f32 %v1604, %v2395
    %v2526 = vadd.f32 %v1609, %v2400
    %v2527 = vadd.f32 %v1614, %v2405
    %v2528 = vadd.f32 %v1619, %v2410
    %v2529 = vadd.f32 %v1624, %v2415
    %v2530 = vadd.f32 %v1629, %v2420
    %v2531 = vadd.f32 %v1634, %v2425
    %v2532 = vadd.f32 %v1639, %v2430
    %v2533 = vadd.f32 %v1644, %v2435
    %v2534 = vadd.f32 %v1649, %v2440
    %v2535 = vadd.f32 %v1654, %v2445
    %v2536 = vadd.f32 %v1659, %v2450
    %v2537 = vadd.f32 %v1664, %v2455
    %v2538 = vadd.f32 %v1669, %v2460
    %v2539 = vadd.f32 %v1674, %v2465
    %s2540 = scalar_lea.vmem %s3, 12
    %v2541 = vld [vmem:[%s2540] sm:$0xf]
    %v2543 = vsel %vm387, %v93, 0
    %v2546 = vsel %vm387, %v94, 0
    %v2549 = vsel %vm387, %v95, 0
    %v2552 = vsel %vm387, %v96, 0
    %v2555 = vsel %vm387, %v97, 0
    %v2558 = vsel %vm387, %v98, 0
    %v2561 = vsel %vm387, %v99, 0
    %v2564 = vsel %vm387, %v100, 0
    %v2567 = vsel %vm387, %v101, 0
    %v2570 = vsel %vm387, %v102, 0
    %v2573 = vsel %vm387, %v103, 0
    %v2576 = vsel %vm387, %v104, 0
    %v2579 = vsel %vm387, %v105, 0
    %v2582 = vsel %vm387, %v106, 0
    %v2585 = vsel %vm387, %v107, 0
    %v2588 = vsel %vm387, %v108, 0
    %v2591 = vsel %vm387, %v109, 0
    %v2594 = vsel %vm387, %v110, 0
    %v2597 = vsel %vm387, %v111, 0
    %v2600 = vsel %vm387, %v112, 0
    %v2603 = vsel %vm387, %v113, 0
    %v2606 = vsel %vm387, %v114, 0
    %v2609 = vsel %vm387, %v115, 0
    %v2612 = vsel %vm387, %v116, 0
    %v2615 = vsel %vm387, %v117, 0
    %v2618 = vsel %vm387, %v118, 0
    %v2621 = vsel %vm387, %v119, 0
    %v2624 = vsel %vm387, %v120, 0
    %v2627 = vsel %vm387, %v121, 0
    %v2630 = vsel %vm387, %v122, 0
    %v2633 = vsel %vm387, %v123, 0
    %v2636 = vsel %vm387, %v124, 0
    %v2639 = vsel %vm387, %v125, 0
    %v2642 = vsel %vm387, %v126, 0
    %v2645 = vsel %vm387, %v127, 0
    %v2648 = vsel %vm387, %v128, 0
    %v2651 = vsel %vm387, %v129, 0
    %v2654 = vsel %vm387, %v130, 0
    %v2657 = vsel %vm387, %v131, 0
    %v2660 = vsel %vm387, %v132, 0
    %v2663 = vsel %vm387, %v133, 0
    %v2666 = vsel %vm387, %v134, 0
    %v2669 = vsel %vm387, %v135, 0
    %v2672 = vsel %vm387, %v136, 0
    %v2675 = vsel %vm387, %v137, 0
    %v2678 = vsel %vm387, %v138, 0
    %v2681 = vsel %vm387, %v139, 0
    %v2684 = vsel %vm387, %v140, 0
    %v2687 = vsel %vm387, %v141, 0
    %v2690 = vsel %vm387, %v142, 0
    %v2693 = vsel %vm387, %v143, 0
    %v2696 = vsel %vm387, %v144, 0
    %v2699 = vsel %vm387, %v145, 0
    %v2702 = vsel %vm387, %v146, 0
    %v2705 = vsel %vm387, %v147, 0
    %v2708 = vsel %vm387, %v148, 0
    %v2711 = vsel %vm387, %v149, 0
    %v2714 = vsel %vm387, %v150, 0
    %v2717 = vsel %vm387, %v151, 0
    %v2720 = vsel %vm387, %v152, 0
    %v2723 = vsel %vm387, %v153, 0
    %v2726 = vsel %vm387, %v154, 0
    %v2729 = vsel %vm387, %v155, 0
    %v2732 = vsel %vm387, %v156, 0
    %v2735 = vsel %vm387, %v157, 0
    %v2738 = vsel %vm387, %v158, 0
    %v2741 = vsel %vm387, %v159, 0
    %v2744 = vsel %vm387, %v160, 0
    %v2747 = vsel %vm387, %v161, 0
    %v2750 = vsel %vm387, %v162, 0
    %v2753 = vsel %vm387, %v163, 0
    %v2756 = vsel %vm387, %v164, 0
    %v2759 = vsel %vm604, %v2541, 0
    %2761 = vmatprep.subr.mxu0 0.0
    %2762 = vmatpush1.msra.mxu0 0.0
    %2763 = vmatprep.subr.mxu0 0.0
    %2764 = vmatpush1.msra.mxu0 0.0
    %2765 = vmatprep.subr.mxu0 0.0
    %2766 = vmatpush1.msra.mxu0 0.0
    %2767 = vmatprep.subr.mxu0 0.0
    %2768 = vmatpush1.msra.mxu0 0.0
    %2769 = vmatprep.subr.mxu0 0.0
    %2770 = vmatpush1.msra.mxu0 0.0
    %2771 = vmatprep.subr.mxu0 0.0
    %2772 = vmatpush1.msra.mxu0 0.0
    %2773 = vmatprep.subr.mxu0 0.0
    %2774 = vmatpush1.msra.mxu0 0.0
    %2775 = vmatprep.subr.mxu0 0.0
    %2776 = vmatpush1.msra.mxu0 0.0
    %2777 = vmatprep.subr.mxu0 0.0
    %2778 = vmatpush1.msra.mxu0 0.0
    %2779 = vmatprep.subr.mxu0 0.0
    %2780 = vmatpush1.msra.mxu0 0.0
    %2781 = vmatprep.subr.mxu0 0.0
    %2782 = vmatpush1.msra.mxu0 0.0
    %2783 = vmatprep.subr.mxu0 0.0
    %2784 = vmatpush1.msra.mxu0 0.0
    %2785 = vmatprep.subr.mxu0 0.0
    %2786 = vmatpush1.msra.mxu0 0.0
    %2787 = vmatprep.subr.mxu0 0.0
    %2788 = vmatpush1.msra.mxu0 0.0
    %2789 = vmatprep.subr.mxu0 0.0
    %2790 = vmatpush1.msra.mxu0 0.0
    %2791 = vmatprep.subr.mxu0 0.0
    %2792 = vmatpush1.msra.mxu0 %v2759
    %2793 = vmatprep.subr.mxu0 0.0
    %2794 = vmatpush2.msra.mxu0 0.0
    %2795 = vmatprep.subr.mxu0 0.0
    %2796 = vmatpush2.msra.mxu0 0.0
    %2797 = vmatprep.subr.mxu0 0.0
    %2798 = vmatpush2.msra.mxu0 0.0
    %2799 = vmatprep.subr.mxu0 0.0
    %2800 = vmatpush2.msra.mxu0 0.0
    %2801 = vmatprep.subr.mxu0 0.0
    %2802 = vmatpush2.msra.mxu0 0.0
    %2803 = vmatprep.subr.mxu0 0.0
    %2804 = vmatpush2.msra.mxu0 0.0
    %2805 = vmatprep.subr.mxu0 0.0
    %2806 = vmatpush2.msra.mxu0 0.0
    %2807 = vmatprep.subr.mxu0 0.0
    %2808 = vmatpush2.msra.mxu0 0.0
    %2809 = vmatprep.subr.mxu0 0.0
    %2810 = vmatpush2.msra.mxu0 0.0
    %2811 = vmatprep.subr.mxu0 0.0
    %2812 = vmatpush2.msra.mxu0 0.0
    %2813 = vmatprep.subr.mxu0 0.0
    %2814 = vmatpush2.msra.mxu0 0.0
    %2815 = vmatprep.subr.mxu0 0.0
    %2816 = vmatpush2.msra.mxu0 0.0
    %2817 = vmatprep.subr.mxu0 0.0
    %2818 = vmatpush2.msra.mxu0 0.0
    %2819 = vmatprep.subr.mxu0 0.0
    %2820 = vmatpush2.msra.mxu0 0.0
    %2821 = vmatprep.subr.mxu0 0.0
    %2822 = vmatpush2.msra.mxu0 0.0
    %2823 = vmatprep.subr.mxu0 0.0
    %2824 = vmatpush2.msra.mxu0 0.0
    %2825 = vmatprep.mubr.f32.mxu0 0.0
    %2826 = vmatmul.mubr.f32.gmra.mxu0 %v2543
    %v2827 = vpop.f32.mrf.mxu0
    %v2828 = vadd.f32 0.0, %v2827
    %v2829 = vpop.f32.mrf.mxu0
    %2830 = vmatprep.mubr.f32.mxu0 0.0
    %2831 = vmatmul.mubr.f32.gmra.mxu0 %v2546
    %v2832 = vpop.f32.mrf.mxu0
    %v2833 = vadd.f32 0.0, %v2832
    %v2834 = vpop.f32.mrf.mxu0
    %2835 = vmatprep.mubr.f32.mxu0 0.0
    %2836 = vmatmul.mubr.f32.gmra.mxu0 %v2549
    %v2837 = vpop.f32.mrf.mxu0
    %v2838 = vadd.f32 0.0, %v2837
    %v2839 = vpop.f32.mrf.mxu0
    %2840 = vmatprep.mubr.f32.mxu0 0.0
    %2841 = vmatmul.mubr.f32.gmra.mxu0 %v2552
    %v2842 = vpop.f32.mrf.mxu0
    %v2843 = vadd.f32 0.0, %v2842
    %v2844 = vpop.f32.mrf.mxu0
    %2845 = vmatprep.mubr.f32.mxu0 0.0
    %2846 = vmatmul.mubr.f32.gmra.mxu0 %v2555
    %v2847 = vpop.f32.mrf.mxu0
    %v2848 = vadd.f32 0.0, %v2847
    %v2849 = vpop.f32.mrf.mxu0
    %2850 = vmatprep.mubr.f32.mxu0 0.0
    %2851 = vmatmul.mubr.f32.gmra.mxu0 %v2558
    %v2852 = vpop.f32.mrf.mxu0
    %v2853 = vadd.f32 0.0, %v2852
    %v2854 = vpop.f32.mrf.mxu0
    %2855 = vmatprep.mubr.f32.mxu0 0.0
    %2856 = vmatmul.mubr.f32.gmra.mxu0 %v2561
    %v2857 = vpop.f32.mrf.mxu0
    %v2858 = vadd.f32 0.0, %v2857
    %v2859 = vpop.f32.mrf.mxu0
    %2860 = vmatprep.mubr.f32.mxu0 0.0
    %2861 = vmatmul.mubr.f32.gmra.mxu0 %v2564
    %v2862 = vpop.f32.mrf.mxu0
    %v2863 = vadd.f32 0.0, %v2862
    %v2864 = vpop.f32.mrf.mxu0
    %2865 = vmatprep.mubr.f32.mxu0 0.0
    %2866 = vmatmul.mubr.f32.gmra.mxu0 %v2567
    %v2867 = vpop.f32.mrf.mxu0
    %v2868 = vadd.f32 0.0, %v2867
    %v2869 = vpop.f32.mrf.mxu0
    %2870 = vmatprep.mubr.f32.mxu0 0.0
    %2871 = vmatmul.mubr.f32.gmra.mxu0 %v2570
    %v2872 = vpop.f32.mrf.mxu0
    %v2873 = vadd.f32 0.0, %v2872
    %v2874 = vpop.f32.mrf.mxu0
    %2875 = vmatprep.mubr.f32.mxu0 0.0
    %2876 = vmatmul.mubr.f32.gmra.mxu0 %v2573
    %v2877 = vpop.f32.mrf.mxu0
    %v2878 = vadd.f32 0.0, %v2877
    %v2879 = vpop.f32.mrf.mxu0
    %2880 = vmatprep.mubr.f32.mxu0 0.0
    %2881 = vmatmul.mubr.f32.gmra.mxu0 %v2576
    %v2882 = vpop.f32.mrf.mxu0
    %v2883 = vadd.f32 0.0, %v2882
    %v2884 = vpop.f32.mrf.mxu0
    %2885 = vmatprep.mubr.f32.mxu0 0.0
    %2886 = vmatmul.mubr.f32.gmra.mxu0 %v2579
    %v2887 = vpop.f32.mrf.mxu0
    %v2888 = vadd.f32 0.0, %v2887
    %v2889 = vpop.f32.mrf.mxu0
    %2890 = vmatprep.mubr.f32.mxu0 0.0
    %2891 = vmatmul.mubr.f32.gmra.mxu0 %v2582
    %v2892 = vpop.f32.mrf.mxu0
    %v2893 = vadd.f32 0.0, %v2892
    %v2894 = vpop.f32.mrf.mxu0
    %2895 = vmatprep.mubr.f32.mxu0 0.0
    %2896 = vmatmul.mubr.f32.gmra.mxu0 %v2585
    %v2897 = vpop.f32.mrf.mxu0
    %v2898 = vadd.f32 0.0, %v2897
    %v2899 = vpop.f32.mrf.mxu0
    %2900 = vmatprep.mubr.f32.mxu0 0.0
    %2901 = vmatmul.mubr.f32.gmra.mxu0 %v2588
    %v2902 = vpop.f32.mrf.mxu0
    %v2903 = vadd.f32 0.0, %v2902
    %v2904 = vpop.f32.mrf.mxu0
    %2905 = vmatprep.mubr.f32.mxu0 0.0
    %2906 = vmatmul.mubr.f32.gmra.mxu0 %v2591
    %v2907 = vpop.f32.mrf.mxu0
    %v2908 = vadd.f32 0.0, %v2907
    %v2909 = vpop.f32.mrf.mxu0
    %2910 = vmatprep.mubr.f32.mxu0 0.0
    %2911 = vmatmul.mubr.f32.gmra.mxu0 %v2594
    %v2912 = vpop.f32.mrf.mxu0
    %v2913 = vadd.f32 0.0, %v2912
    %v2914 = vpop.f32.mrf.mxu0
    %2915 = vmatprep.mubr.f32.mxu0 0.0
    %2916 = vmatmul.mubr.f32.gmra.mxu0 %v2597
    %v2917 = vpop.f32.mrf.mxu0
    %v2918 = vadd.f32 0.0, %v2917
    %v2919 = vpop.f32.mrf.mxu0
    %2920 = vmatprep.mubr.f32.mxu0 0.0
    %2921 = vmatmul.mubr.f32.gmra.mxu0 %v2600
    %v2922 = vpop.f32.mrf.mxu0
    %v2923 = vadd.f32 0.0, %v2922
    %v2924 = vpop.f32.mrf.mxu0
    %2925 = vmatprep.mubr.f32.mxu0 0.0
    %2926 = vmatmul.mubr.f32.gmra.mxu0 %v2603
    %v2927 = vpop.f32.mrf.mxu0
    %v2928 = vadd.f32 0.0, %v2927
    %v2929 = vpop.f32.mrf.mxu0
    %2930 = vmatprep.mubr.f32.mxu0 0.0
    %2931 = vmatmul.mubr.f32.gmra.mxu0 %v2606
    %v2932 = vpop.f32.mrf.mxu0
    %v2933 = vadd.f32 0.0, %v2932
    %v2934 = vpop.f32.mrf.mxu0
    %2935 = vmatprep.mubr.f32.mxu0 0.0
    %2936 = vmatmul.mubr.f32.gmra.mxu0 %v2609
    %v2937 = vpop.f32.mrf.mxu0
    %v2938 = vadd.f32 0.0, %v2937
    %v2939 = vpop.f32.mrf.mxu0
    %2940 = vmatprep.mubr.f32.mxu0 0.0
    %2941 = vmatmul.mubr.f32.gmra.mxu0 %v2612
    %v2942 = vpop.f32.mrf.mxu0
    %v2943 = vadd.f32 0.0, %v2942
    %v2944 = vpop.f32.mrf.mxu0
    %2945 = vmatprep.mubr.f32.mxu0 0.0
    %2946 = vmatmul.mubr.f32.gmra.mxu0 %v2615
    %v2947 = vpop.f32.mrf.mxu0
    %v2948 = vadd.f32 0.0, %v2947
    %v2949 = vpop.f32.mrf.mxu0
    %2950 = vmatprep.mubr.f32.mxu0 0.0
    %2951 = vmatmul.mubr.f32.gmra.mxu0 %v2618
    %v2952 = vpop.f32.mrf.mxu0
    %v2953 = vadd.f32 0.0, %v2952
    %v2954 = vpop.f32.mrf.mxu0
    %2955 = vmatprep.mubr.f32.mxu0 0.0
    %2956 = vmatmul.mubr.f32.gmra.mxu0 %v2621
    %v2957 = vpop.f32.mrf.mxu0
    %v2958 = vadd.f32 0.0, %v2957
    %v2959 = vpop.f32.mrf.mxu0
    %2960 = vmatprep.mubr.f32.mxu0 0.0
    %2961 = vmatmul.mubr.f32.gmra.mxu0 %v2624
    %v2962 = vpop.f32.mrf.mxu0
    %v2963 = vadd.f32 0.0, %v2962
    %v2964 = vpop.f32.mrf.mxu0
    %2965 = vmatprep.mubr.f32.mxu0 0.0
    %2966 = vmatmul.mubr.f32.gmra.mxu0 %v2627
    %v2967 = vpop.f32.mrf.mxu0
    %v2968 = vadd.f32 0.0, %v2967
    %v2969 = vpop.f32.mrf.mxu0
    %2970 = vmatprep.mubr.f32.mxu0 0.0
    %2971 = vmatmul.mubr.f32.gmra.mxu0 %v2630
    %v2972 = vpop.f32.mrf.mxu0
    %v2973 = vadd.f32 0.0, %v2972
    %v2974 = vpop.f32.mrf.mxu0
    %2975 = vmatprep.mubr.f32.mxu0 0.0
    %2976 = vmatmul.mubr.f32.gmra.mxu0 %v2633
    %v2977 = vpop.f32.mrf.mxu0
    %v2978 = vadd.f32 0.0, %v2977
    %v2979 = vpop.f32.mrf.mxu0
    %2980 = vmatprep.mubr.f32.mxu0 0.0
    %2981 = vmatmul.mubr.f32.gmra.mxu0 %v2636
    %v2982 = vpop.f32.mrf.mxu0
    %v2983 = vadd.f32 0.0, %v2982
    %v2984 = vpop.f32.mrf.mxu0
    %2985 = vmatprep.mubr.f32.mxu0 0.0
    %2986 = vmatmul.mubr.f32.gmra.mxu0 %v2639
    %v2987 = vpop.f32.mrf.mxu0
    %v2988 = vadd.f32 0.0, %v2987
    %v2989 = vpop.f32.mrf.mxu0
    %2990 = vmatprep.mubr.f32.mxu0 0.0
    %2991 = vmatmul.mubr.f32.gmra.mxu0 %v2642
    %v2992 = vpop.f32.mrf.mxu0
    %v2993 = vadd.f32 0.0, %v2992
    %v2994 = vpop.f32.mrf.mxu0
    %2995 = vmatprep.mubr.f32.mxu0 0.0
    %2996 = vmatmul.mubr.f32.gmra.mxu0 %v2645
    %v2997 = vpop.f32.mrf.mxu0
    %v2998 = vadd.f32 0.0, %v2997
    %v2999 = vpop.f32.mrf.mxu0
    %3000 = vmatprep.mubr.f32.mxu0 0.0
    %3001 = vmatmul.mubr.f32.gmra.mxu0 %v2648
    %v3002 = vpop.f32.mrf.mxu0
    %v3003 = vadd.f32 0.0, %v3002
    %v3004 = vpop.f32.mrf.mxu0
    %3005 = vmatprep.mubr.f32.mxu0 0.0
    %3006 = vmatmul.mubr.f32.gmra.mxu0 %v2651
    %v3007 = vpop.f32.mrf.mxu0
    %v3008 = vadd.f32 0.0, %v3007
    %v3009 = vpop.f32.mrf.mxu0
    %3010 = vmatprep.mubr.f32.mxu0 0.0
    %3011 = vmatmul.mubr.f32.gmra.mxu0 %v2654
    %v3012 = vpop.f32.mrf.mxu0
    %v3013 = vadd.f32 0.0, %v3012
    %v3014 = vpop.f32.mrf.mxu0
    %3015 = vmatprep.mubr.f32.mxu0 0.0
    %3016 = vmatmul.mubr.f32.gmra.mxu0 %v2657
    %v3017 = vpop.f32.mrf.mxu0
    %v3018 = vadd.f32 0.0, %v3017
    %v3019 = vpop.f32.mrf.mxu0
    %3020 = vmatprep.mubr.f32.mxu0 0.0
    %3021 = vmatmul.mubr.f32.gmra.mxu0 %v2660
    %v3022 = vpop.f32.mrf.mxu0
    %v3023 = vadd.f32 0.0, %v3022
    %v3024 = vpop.f32.mrf.mxu0
    %3025 = vmatprep.mubr.f32.mxu0 0.0
    %3026 = vmatmul.mubr.f32.gmra.mxu0 %v2663
    %v3027 = vpop.f32.mrf.mxu0
    %v3028 = vadd.f32 0.0, %v3027
    %v3029 = vpop.f32.mrf.mxu0
    %3030 = vmatprep.mubr.f32.mxu0 0.0
    %3031 = vmatmul.mubr.f32.gmra.mxu0 %v2666
    %v3032 = vpop.f32.mrf.mxu0
    %v3033 = vadd.f32 0.0, %v3032
    %v3034 = vpop.f32.mrf.mxu0
    %3035 = vmatprep.mubr.f32.mxu0 0.0
    %3036 = vmatmul.mubr.f32.gmra.mxu0 %v2669
    %v3037 = vpop.f32.mrf.mxu0
    %v3038 = vadd.f32 0.0, %v3037
    %v3039 = vpop.f32.mrf.mxu0
    %3040 = vmatprep.mubr.f32.mxu0 0.0
    %3041 = vmatmul.mubr.f32.gmra.mxu0 %v2672
    %v3042 = vpop.f32.mrf.mxu0
    %v3043 = vadd.f32 0.0, %v3042
    %v3044 = vpop.f32.mrf.mxu0
    %3045 = vmatprep.mubr.f32.mxu0 0.0
    %3046 = vmatmul.mubr.f32.gmra.mxu0 %v2675
    %v3047 = vpop.f32.mrf.mxu0
    %v3048 = vadd.f32 0.0, %v3047
    %v3049 = vpop.f32.mrf.mxu0
    %3050 = vmatprep.mubr.f32.mxu0 0.0
    %3051 = vmatmul.mubr.f32.gmra.mxu0 %v2678
    %v3052 = vpop.f32.mrf.mxu0
    %v3053 = vadd.f32 0.0, %v3052
    %v3054 = vpop.f32.mrf.mxu0
    %3055 = vmatprep.mubr.f32.mxu0 0.0
    %3056 = vmatmul.mubr.f32.gmra.mxu0 %v2681
    %v3057 = vpop.f32.mrf.mxu0
    %v3058 = vadd.f32 0.0, %v3057
    %v3059 = vpop.f32.mrf.mxu0
    %3060 = vmatprep.mubr.f32.mxu0 0.0
    %3061 = vmatmul.mubr.f32.gmra.mxu0 %v2684
    %v3062 = vpop.f32.mrf.mxu0
    %v3063 = vadd.f32 0.0, %v3062
    %v3064 = vpop.f32.mrf.mxu0
    %3065 = vmatprep.mubr.f32.mxu0 0.0
    %3066 = vmatmul.mubr.f32.gmra.mxu0 %v2687
    %v3067 = vpop.f32.mrf.mxu0
    %v3068 = vadd.f32 0.0, %v3067
    %v3069 = vpop.f32.mrf.mxu0
    %3070 = vmatprep.mubr.f32.mxu0 0.0
    %3071 = vmatmul.mubr.f32.gmra.mxu0 %v2690
    %v3072 = vpop.f32.mrf.mxu0
    %v3073 = vadd.f32 0.0, %v3072
    %v3074 = vpop.f32.mrf.mxu0
    %3075 = vmatprep.mubr.f32.mxu0 0.0
    %3076 = vmatmul.mubr.f32.gmra.mxu0 %v2693
    %v3077 = vpop.f32.mrf.mxu0
    %v3078 = vadd.f32 0.0, %v3077
    %v3079 = vpop.f32.mrf.mxu0
    %3080 = vmatprep.mubr.f32.mxu0 0.0
    %3081 = vmatmul.mubr.f32.gmra.mxu0 %v2696
    %v3082 = vpop.f32.mrf.mxu0
    %v3083 = vadd.f32 0.0, %v3082
    %v3084 = vpop.f32.mrf.mxu0
    %3085 = vmatprep.mubr.f32.mxu0 0.0
    %3086 = vmatmul.mubr.f32.gmra.mxu0 %v2699
    %v3087 = vpop.f32.mrf.mxu0
    %v3088 = vadd.f32 0.0, %v3087
    %v3089 = vpop.f32.mrf.mxu0
    %3090 = vmatprep.mubr.f32.mxu0 0.0
    %3091 = vmatmul.mubr.f32.gmra.mxu0 %v2702
    %v3092 = vpop.f32.mrf.mxu0
    %v3093 = vadd.f32 0.0, %v3092
    %v3094 = vpop.f32.mrf.mxu0
    %3095 = vmatprep.mubr.f32.mxu0 0.0
    %3096 = vmatmul.mubr.f32.gmra.mxu0 %v2705
    %v3097 = vpop.f32.mrf.mxu0
    %v3098 = vadd.f32 0.0, %v3097
    %v3099 = vpop.f32.mrf.mxu0
    %3100 = vmatprep.mubr.f32.mxu0 0.0
    %3101 = vmatmul.mubr.f32.gmra.mxu0 %v2708
    %v3102 = vpop.f32.mrf.mxu0
    %v3103 = vadd.f32 0.0, %v3102
    %v3104 = vpop.f32.mrf.mxu0
    %3105 = vmatprep.mubr.f32.mxu0 0.0
    %3106 = vmatmul.mubr.f32.gmra.mxu0 %v2711
    %v3107 = vpop.f32.mrf.mxu0
    %v3108 = vadd.f32 0.0, %v3107
    %v3109 = vpop.f32.mrf.mxu0
    %3110 = vmatprep.mubr.f32.mxu0 0.0
    %3111 = vmatmul.mubr.f32.gmra.mxu0 %v2714
    %v3112 = vpop.f32.mrf.mxu0
    %v3113 = vadd.f32 0.0, %v3112
    %v3114 = vpop.f32.mrf.mxu0
    %3115 = vmatprep.mubr.f32.mxu0 0.0
    %3116 = vmatmul.mubr.f32.gmra.mxu0 %v2717
    %v3117 = vpop.f32.mrf.mxu0
    %v3118 = vadd.f32 0.0, %v3117
    %v3119 = vpop.f32.mrf.mxu0
    %3120 = vmatprep.mubr.f32.mxu0 0.0
    %3121 = vmatmul.mubr.f32.gmra.mxu0 %v2720
    %v3122 = vpop.f32.mrf.mxu0
    %v3123 = vadd.f32 0.0, %v3122
    %v3124 = vpop.f32.mrf.mxu0
    %3125 = vmatprep.mubr.f32.mxu0 0.0
    %3126 = vmatmul.mubr.f32.gmra.mxu0 %v2723
    %v3127 = vpop.f32.mrf.mxu0
    %v3128 = vadd.f32 0.0, %v3127
    %v3129 = vpop.f32.mrf.mxu0
    %3130 = vmatprep.mubr.f32.mxu0 0.0
    %3131 = vmatmul.mubr.f32.gmra.mxu0 %v2726
    %v3132 = vpop.f32.mrf.mxu0
    %v3133 = vadd.f32 0.0, %v3132
    %v3134 = vpop.f32.mrf.mxu0
    %3135 = vmatprep.mubr.f32.mxu0 0.0
    %3136 = vmatmul.mubr.f32.gmra.mxu0 %v2729
    %v3137 = vpop.f32.mrf.mxu0
    %v3138 = vadd.f32 0.0, %v3137
    %v3139 = vpop.f32.mrf.mxu0
    %3140 = vmatprep.mubr.f32.mxu0 0.0
    %3141 = vmatmul.mubr.f32.gmra.mxu0 %v2732
    %v3142 = vpop.f32.mrf.mxu0
    %v3143 = vadd.f32 0.0, %v3142
    %v3144 = vpop.f32.mrf.mxu0
    %3145 = vmatprep.mubr.f32.mxu0 0.0
    %3146 = vmatmul.mubr.f32.gmra.mxu0 %v2735
    %v3147 = vpop.f32.mrf.mxu0
    %v3148 = vadd.f32 0.0, %v3147
    %v3149 = vpop.f32.mrf.mxu0
    %3150 = vmatprep.mubr.f32.mxu0 0.0
    %3151 = vmatmul.mubr.f32.gmra.mxu0 %v2738
    %v3152 = vpop.f32.mrf.mxu0
    %v3153 = vadd.f32 0.0, %v3152
    %v3154 = vpop.f32.mrf.mxu0
    %3155 = vmatprep.mubr.f32.mxu0 0.0
    %3156 = vmatmul.mubr.f32.gmra.mxu0 %v2741
    %v3157 = vpop.f32.mrf.mxu0
    %v3158 = vadd.f32 0.0, %v3157
    %v3159 = vpop.f32.mrf.mxu0
    %3160 = vmatprep.mubr.f32.mxu0 0.0
    %3161 = vmatmul.mubr.f32.gmra.mxu0 %v2744
    %v3162 = vpop.f32.mrf.mxu0
    %v3163 = vadd.f32 0.0, %v3162
    %v3164 = vpop.f32.mrf.mxu0
    %3165 = vmatprep.mubr.f32.mxu0 0.0
    %3166 = vmatmul.mubr.f32.gmra.mxu0 %v2747
    %v3167 = vpop.f32.mrf.mxu0
    %v3168 = vadd.f32 0.0, %v3167
    %v3169 = vpop.f32.mrf.mxu0
    %3170 = vmatprep.mubr.f32.mxu0 0.0
    %3171 = vmatmul.mubr.f32.gmra.mxu0 %v2750
    %v3172 = vpop.f32.mrf.mxu0
    %v3173 = vadd.f32 0.0, %v3172
    %v3174 = vpop.f32.mrf.mxu0
    %3175 = vmatprep.mubr.f32.mxu0 0.0
    %3176 = vmatmul.mubr.f32.gmra.mxu0 %v2753
    %v3177 = vpop.f32.mrf.mxu0
    %v3178 = vadd.f32 0.0, %v3177
    %v3179 = vpop.f32.mrf.mxu0
    %3180 = vmatprep.mubr.f32.mxu0 0.0
    %3181 = vmatmul.mubr.f32.gmra.mxu0 %v2756
    %v3182 = vpop.f32.mrf.mxu0
    %v3183 = vadd.f32 0.0, %v3182
    %v3184 = vpop.f32.mrf.mxu0
    %3185 = vdwg.mxu0
    %v3186 = vadd.f32 %v2468, %v2828
    %v3187 = vadd.f32 %v2469, %v2833
    %v3188 = vadd.f32 %v2470, %v2838
    %v3189 = vadd.f32 %v2471, %v2843
    %v3190 = vadd.f32 %v2472, %v2848
    %v3191 = vadd.f32 %v2473, %v2853
    %v3192 = vadd.f32 %v2474, %v2858
    %v3193 = vadd.f32 %v2475, %v2863
    %v3194 = vadd.f32 %v2476, %v2868
    %v3195 = vadd.f32 %v2477, %v2873
    %v3196 = vadd.f32 %v2478, %v2878
    %v3197 = vadd.f32 %v2479, %v2883
    %v3198 = vadd.f32 %v2480, %v2888
    %v3199 = vadd.f32 %v2481, %v2893
    %v3200 = vadd.f32 %v2482, %v2898
    %v3201 = vadd.f32 %v2483, %v2903
    %v3202 = vadd.f32 %v2484, %v2908
    %v3203 = vadd.f32 %v2485, %v2913
    %v3204 = vadd.f32 %v2486, %v2918
    %v3205 = vadd.f32 %v2487, %v2923
    %v3206 = vadd.f32 %v2488, %v2928
    %v3207 = vadd.f32 %v2489, %v2933
    %v3208 = vadd.f32 %v2490, %v2938
    %v3209 = vadd.f32 %v2491, %v2943
    %v3210 = vadd.f32 %v2492, %v2948
    %v3211 = vadd.f32 %v2493, %v2953
    %v3212 = vadd.f32 %v2494, %v2958
    %v3213 = vadd.f32 %v2495, %v2963
    %v3214 = vadd.f32 %v2496, %v2968
    %v3215 = vadd.f32 %v2497, %v2973
    %v3216 = vadd.f32 %v2498, %v2978
    %v3217 = vadd.f32 %v2499, %v2983
    %v3218 = vadd.f32 %v2500, %v2988
    %v3219 = vadd.f32 %v2501, %v2993
    %v3220 = vadd.f32 %v2502, %v2998
    %v3221 = vadd.f32 %v2503, %v3003
    %v3222 = vadd.f32 %v2504, %v3008
    %v3223 = vadd.f32 %v2505, %v3013
    %v3224 = vadd.f32 %v2506, %v3018
    %v3225 = vadd.f32 %v2507, %v3023
    %v3226 = vadd.f32 %v2508, %v3028
    %v3227 = vadd.f32 %v2509, %v3033
    %v3228 = vadd.f32 %v2510, %v3038
    %v3229 = vadd.f32 %v2511, %v3043
    %v3230 = vadd.f32 %v2512, %v3048
    %v3231 = vadd.f32 %v2513, %v3053
    %v3232 = vadd.f32 %v2514, %v3058
    %v3233 = vadd.f32 %v2515, %v3063
    %v3234 = vadd.f32 %v2516, %v3068
    %v3235 = vadd.f32 %v2517, %v3073
    %v3236 = vadd.f32 %v2518, %v3078
    %v3237 = vadd.f32 %v2519, %v3083
    %v3238 = vadd.f32 %v2520, %v3088
    %v3239 = vadd.f32 %v2521, %v3093
    %v3240 = vadd.f32 %v2522, %v3098
    %v3241 = vadd.f32 %v2523, %v3103
    %v3242 = vadd.f32 %v2524, %v3108
    %v3243 = vadd.f32 %v2525, %v3113
    %v3244 = vadd.f32 %v2526, %v3118
    %v3245 = vadd.f32 %v2527, %v3123
    %v3246 = vadd.f32 %v2528, %v3128
    %v3247 = vadd.f32 %v2529, %v3133
    %v3248 = vadd.f32 %v2530, %v3138
    %v3249 = vadd.f32 %v2531, %v3143
    %v3250 = vadd.f32 %v2532, %v3148
    %v3251 = vadd.f32 %v2533, %v3153
    %v3252 = vadd.f32 %v2534, %v3158
    %v3253 = vadd.f32 %v2535, %v3163
    %v3254 = vadd.f32 %v2536, %v3168
    %v3255 = vadd.f32 %v2537, %v3173
    %v3256 = vadd.f32 %v2538, %v3178
    %v3257 = vadd.f32 %v2539, %v3183
    %v3258 = vrot.slane %v93, 1
    %v3259 = vrot.slane %v94, 1
    %v3260 = vrot.slane %v95, 1
    %v3261 = vrot.slane %v96, 1
    %v3262 = vrot.slane %v97, 1
    %v3263 = vrot.slane %v98, 1
    %v3264 = vrot.slane %v99, 1
    %v3265 = vrot.slane %v100, 1
    %v3266 = vrot.slane %v101, 1
    %v3267 = vrot.slane %v102, 1
    %v3268 = vrot.slane %v103, 1
    %v3269 = vrot.slane %v104, 1
    %v3270 = vrot.slane %v105, 1
    %v3271 = vrot.slane %v106, 1
    %v3272 = vrot.slane %v107, 1
    %v3273 = vrot.slane %v108, 1
    %v3274 = vrot.slane %v109, 1
    %v3275 = vrot.slane %v110, 1
    %v3276 = vrot.slane %v111, 1
    %v3277 = vrot.slane %v112, 1
    %v3278 = vrot.slane %v113, 1
    %v3279 = vrot.slane %v114, 1
    %v3280 = vrot.slane %v115, 1
    %v3281 = vrot.slane %v116, 1
    %v3282 = vrot.slane %v117, 1
    %v3283 = vrot.slane %v118, 1
    %v3284 = vrot.slane %v119, 1
    %v3285 = vrot.slane %v120, 1
    %v3286 = vrot.slane %v121, 1
    %v3287 = vrot.slane %v122, 1
    %v3288 = vrot.slane %v123, 1
    %v3289 = vrot.slane %v124, 1
    %v3290 = vrot.slane %v125, 1
    %v3291 = vrot.slane %v126, 1
    %v3292 = vrot.slane %v127, 1
    %v3293 = vrot.slane %v128, 1
    %v3294 = vrot.slane %v129, 1
    %v3295 = vrot.slane %v130, 1
    %v3296 = vrot.slane %v131, 1
    %v3297 = vrot.slane %v132, 1
    %v3298 = vrot.slane %v133, 1
    %v3299 = vrot.slane %v134, 1
    %v3300 = vrot.slane %v135, 1
    %v3301 = vrot.slane %v136, 1
    %v3302 = vrot.slane %v137, 1
    %v3303 = vrot.slane %v138, 1
    %v3304 = vrot.slane %v139, 1
    %v3305 = vrot.slane %v140, 1
    %v3306 = vrot.slane %v141, 1
    %v3307 = vrot.slane %v142, 1
    %v3308 = vrot.slane %v143, 1
    %v3309 = vrot.slane %v144, 1
    %v3310 = vrot.slane %v145, 1
    %v3311 = vrot.slane %v146, 1
    %v3312 = vrot.slane %v147, 1
    %v3313 = vrot.slane %v148, 1
    %v3314 = vrot.slane %v149, 1
    %v3315 = vrot.slane %v150, 1
    %v3316 = vrot.slane %v151, 1
    %v3317 = vrot.slane %v152, 1
    %v3318 = vrot.slane %v153, 1
    %v3319 = vrot.slane %v154, 1
    %v3320 = vrot.slane %v155, 1
    %v3321 = vrot.slane %v156, 1
    %v3322 = vrot.slane %v157, 1
    %v3323 = vrot.slane %v158, 1
    %v3324 = vrot.slane %v159, 1
    %v3325 = vrot.slane %v160, 1
    %v3326 = vrot.slane %v161, 1
    %v3327 = vrot.slane %v162, 1
    %v3328 = vrot.slane %v163, 1
    %v3329 = vrot.slane %v164, 1
    %v3330 = vsel %vm312, %v3328, %v3329
    %v3331 = vsel %vm312, %v3327, %v3328
    %v3332 = vsel %vm312, %v3326, %v3327
    %v3333 = vsel %vm312, %v3325, %v3326
    %v3334 = vsel %vm312, %v3324, %v3325
    %v3335 = vsel %vm312, %v3323, %v3324
    %v3336 = vsel %vm312, %v3322, %v3323
    %v3337 = vsel %vm312, %v3321, %v3322
    %v3338 = vsel %vm312, %v3320, %v3321
    %v3339 = vsel %vm312, %v3319, %v3320
    %v3340 = vsel %vm312, %v3318, %v3319
    %v3341 = vsel %vm312, %v3317, %v3318
    %v3342 = vsel %vm312, %v3316, %v3317
    %v3343 = vsel %vm312, %v3315, %v3316
    %v3344 = vsel %vm312, %v3314, %v3315
    %v3345 = vsel %vm312, %v3313, %v3314
    %v3346 = vsel %vm312, %v3312, %v3313
    %v3347 = vsel %vm312, %v3311, %v3312
    %v3348 = vsel %vm312, %v3310, %v3311
    %v3349 = vsel %vm312, %v3309, %v3310
    %v3350 = vsel %vm312, %v3308, %v3309
    %v3351 = vsel %vm312, %v3307, %v3308
    %v3352 = vsel %vm312, %v3306, %v3307
    %v3353 = vsel %vm312, %v3305, %v3306
    %v3354 = vsel %vm312, %v3304, %v3305
    %v3355 = vsel %vm312, %v3303, %v3304
    %v3356 = vsel %vm312, %v3302, %v3303
    %v3357 = vsel %vm312, %v3301, %v3302
    %v3358 = vsel %vm312, %v3300, %v3301
    %v3359 = vsel %vm312, %v3299, %v3300
    %v3360 = vsel %vm312, %v3298, %v3299
    %v3361 = vsel %vm312, %v3297, %v3298
    %v3362 = vsel %vm312, %v3296, %v3297
    %v3363 = vsel %vm312, %v3295, %v3296
    %v3364 = vsel %vm312, %v3294, %v3295
    %v3365 = vsel %vm312, %v3293, %v3294
    %v3366 = vsel %vm312, %v3292, %v3293
    %v3367 = vsel %vm312, %v3291, %v3292
    %v3368 = vsel %vm312, %v3290, %v3291
    %v3369 = vsel %vm312, %v3289, %v3290
    %v3370 = vsel %vm312, %v3288, %v3289
    %v3371 = vsel %vm312, %v3287, %v3288
    %v3372 = vsel %vm312, %v3286, %v3287
    %v3373 = vsel %vm312, %v3285, %v3286
    %v3374 = vsel %vm312, %v3284, %v3285
    %v3375 = vsel %vm312, %v3283, %v3284
    %v3376 = vsel %vm312, %v3282, %v3283
    %v3377 = vsel %vm312, %v3281, %v3282
    %v3378 = vsel %vm312, %v3280, %v3281
    %v3379 = vsel %vm312, %v3279, %v3280
    %v3380 = vsel %vm312, %v3278, %v3279
    %v3381 = vsel %vm312, %v3277, %v3278
    %v3382 = vsel %vm312, %v3276, %v3277
    %v3383 = vsel %vm312, %v3275, %v3276
    %v3384 = vsel %vm312, %v3274, %v3275
    %v3385 = vsel %vm312, %v3273, %v3274
    %v3386 = vsel %vm312, %v3272, %v3273
    %v3387 = vsel %vm312, %v3271, %v3272
    %v3388 = vsel %vm312, %v3270, %v3271
    %v3389 = vsel %vm312, %v3269, %v3270
    %v3390 = vsel %vm312, %v3268, %v3269
    %v3391 = vsel %vm312, %v3267, %v3268
    %v3392 = vsel %vm312, %v3266, %v3267
    %v3393 = vsel %vm312, %v3265, %v3266
    %v3394 = vsel %vm312, %v3264, %v3265
    %v3395 = vsel %vm312, %v3263, %v3264
    %v3396 = vsel %vm312, %v3262, %v3263
    %v3397 = vsel %vm312, %v3261, %v3262
    %v3398 = vsel %vm312, %v3260, %v3261
    %v3399 = vsel %vm312, %v3259, %v3260
    %v3400 = vsel %vm312, %v3258, %v3259
    %v3401 = vsel %vm312, %v3329, %v3258
    %s3402 = scalar_lea.vmem %s3, 16
    %v3403 = vld [vmem:[%s3402] sm:$0xf]
    %v3405 = vsel %vm387, %v3400, 0
    %v3408 = vsel %vm387, %v3399, 0
    %v3411 = vsel %vm387, %v3398, 0
    %v3414 = vsel %vm387, %v3397, 0
    %v3417 = vsel %vm387, %v3396, 0
    %v3420 = vsel %vm387, %v3395, 0
    %v3423 = vsel %vm387, %v3394, 0
    %v3426 = vsel %vm387, %v3393, 0
    %v3429 = vsel %vm387, %v3392, 0
    %v3432 = vsel %vm387, %v3391, 0
    %v3435 = vsel %vm387, %v3390, 0
    %v3438 = vsel %vm387, %v3389, 0
    %v3441 = vsel %vm387, %v3388, 0
    %v3444 = vsel %vm387, %v3387, 0
    %v3447 = vsel %vm387, %v3386, 0
    %v3450 = vsel %vm387, %v3385, 0
    %v3453 = vsel %vm387, %v3384, 0
    %v3456 = vsel %vm387, %v3383, 0
    %v3459 = vsel %vm387, %v3382, 0
    %v3462 = vsel %vm387, %v3381, 0
    %v3465 = vsel %vm387, %v3380, 0
    %v3468 = vsel %vm387, %v3379, 0
    %v3471 = vsel %vm387, %v3378, 0
    %v3474 = vsel %vm387, %v3377, 0
    %v3477 = vsel %vm387, %v3376, 0
    %v3480 = vsel %vm387, %v3375, 0
    %v3483 = vsel %vm387, %v3374, 0
    %v3486 = vsel %vm387, %v3373, 0
    %v3489 = vsel %vm387, %v3372, 0
    %v3492 = vsel %vm387, %v3371, 0
    %v3495 = vsel %vm387, %v3370, 0
    %v3498 = vsel %vm387, %v3369, 0
    %v3501 = vsel %vm387, %v3368, 0
    %v3504 = vsel %vm387, %v3367, 0
    %v3507 = vsel %vm387, %v3366, 0
    %v3510 = vsel %vm387, %v3365, 0
    %v3513 = vsel %vm387, %v3364, 0
    %v3516 = vsel %vm387, %v3363, 0
    %v3519 = vsel %vm387, %v3362, 0
    %v3522 = vsel %vm387, %v3361, 0
    %v3525 = vsel %vm387, %v3360, 0
    %v3528 = vsel %vm387, %v3359, 0
    %v3531 = vsel %vm387, %v3358, 0
    %v3534 = vsel %vm387, %v3357, 0
    %v3537 = vsel %vm387, %v3356, 0
    %v3540 = vsel %vm387, %v3355, 0
    %v3543 = vsel %vm387, %v3354, 0
    %v3546 = vsel %vm387, %v3353, 0
    %v3549 = vsel %vm387, %v3352, 0
    %v3552 = vsel %vm387, %v3351, 0
    %v3555 = vsel %vm387, %v3350, 0
    %v3558 = vsel %vm387, %v3349, 0
    %v3561 = vsel %vm387, %v3348, 0
    %v3564 = vsel %vm387, %v3347, 0
    %v3567 = vsel %vm387, %v3346, 0
    %v3570 = vsel %vm387, %v3345, 0
    %v3573 = vsel %vm387, %v3344, 0
    %v3576 = vsel %vm387, %v3343, 0
    %v3579 = vsel %vm387, %v3342, 0
    %v3582 = vsel %vm387, %v3341, 0
    %v3585 = vsel %vm387, %v3340, 0
    %v3588 = vsel %vm387, %v3339, 0
    %v3591 = vsel %vm387, %v3338, 0
    %v3594 = vsel %vm387, %v3337, 0
    %v3597 = vsel %vm387, %v3336, 0
    %v3600 = vsel %vm387, %v3335, 0
    %v3603 = vsel %vm387, %v3334, 0
    %v3606 = vsel %vm387, %v3333, 0
    %v3609 = vsel %vm387, %v3332, 0
    %v3612 = vsel %vm387, %v3331, 0
    %v3615 = vsel %vm387, %v3330, 0
    %v3618 = vsel %vm387, %v3401, 0
    %v3621 = vsel %vm604, %v3403, 0
    %3623 = vmatprep.subr.mxu0 0.0
    %3624 = vmatpush1.msra.mxu0 0.0
    %3625 = vmatprep.subr.mxu0 0.0
    %3626 = vmatpush1.msra.mxu0 0.0
    %3627 = vmatprep.subr.mxu0 0.0
    %3628 = vmatpush1.msra.mxu0 0.0
    %3629 = vmatprep.subr.mxu0 0.0
    %3630 = vmatpush1.msra.mxu0 0.0
    %3631 = vmatprep.subr.mxu0 0.0
    %3632 = vmatpush1.msra.mxu0 0.0
    %3633 = vmatprep.subr.mxu0 0.0
    %3634 = vmatpush1.msra.mxu0 0.0
    %3635 = vmatprep.subr.mxu0 0.0
    %3636 = vmatpush1.msra.mxu0 0.0
    %3637 = vmatprep.subr.mxu0 0.0
    %3638 = vmatpush1.msra.mxu0 0.0
    %3639 = vmatprep.subr.mxu0 0.0
    %3640 = vmatpush1.msra.mxu0 0.0
    %3641 = vmatprep.subr.mxu0 0.0
    %3642 = vmatpush1.msra.mxu0 0.0
    %3643 = vmatprep.subr.mxu0 0.0
    %3644 = vmatpush1.msra.mxu0 0.0
    %3645 = vmatprep.subr.mxu0 0.0
    %3646 = vmatpush1.msra.mxu0 0.0
    %3647 = vmatprep.subr.mxu0 0.0
    %3648 = vmatpush1.msra.mxu0 0.0
    %3649 = vmatprep.subr.mxu0 0.0
    %3650 = vmatpush1.msra.mxu0 0.0
    %3651 = vmatprep.subr.mxu0 0.0
    %3652 = vmatpush1.msra.mxu0 0.0
    %3653 = vmatprep.subr.mxu0 0.0
    %3654 = vmatpush1.msra.mxu0 %v3621
    %3655 = vmatprep.subr.mxu0 0.0
    %3656 = vmatpush2.msra.mxu0 0.0
    %3657 = vmatprep.subr.mxu0 0.0
    %3658 = vmatpush2.msra.mxu0 0.0
    %3659 = vmatprep.subr.mxu0 0.0
    %3660 = vmatpush2.msra.mxu0 0.0
    %3661 = vmatprep.subr.mxu0 0.0
    %3662 = vmatpush2.msra.mxu0 0.0
    %3663 = vmatprep.subr.mxu0 0.0
    %3664 = vmatpush2.msra.mxu0 0.0
    %3665 = vmatprep.subr.mxu0 0.0
    %3666 = vmatpush2.msra.mxu0 0.0
    %3667 = vmatprep.subr.mxu0 0.0
    %3668 = vmatpush2.msra.mxu0 0.0
    %3669 = vmatprep.subr.mxu0 0.0
    %3670 = vmatpush2.msra.mxu0 0.0
    %3671 = vmatprep.subr.mxu0 0.0
    %3672 = vmatpush2.msra.mxu0 0.0
    %3673 = vmatprep.subr.mxu0 0.0
    %3674 = vmatpush2.msra.mxu0 0.0
    %3675 = vmatprep.subr.mxu0 0.0
    %3676 = vmatpush2.msra.mxu0 0.0
    %3677 = vmatprep.subr.mxu0 0.0
    %3678 = vmatpush2.msra.mxu0 0.0
    %3679 = vmatprep.subr.mxu0 0.0
    %3680 = vmatpush2.msra.mxu0 0.0
    %3681 = vmatprep.subr.mxu0 0.0
    %3682 = vmatpush2.msra.mxu0 0.0
    %3683 = vmatprep.subr.mxu0 0.0
    %3684 = vmatpush2.msra.mxu0 0.0
    %3685 = vmatprep.subr.mxu0 0.0
    %3686 = vmatpush2.msra.mxu0 0.0
    %3687 = vmatprep.mubr.f32.mxu0 0.0
    %3688 = vmatmul.mubr.f32.gmra.mxu0 %v3405
    %v3689 = vpop.f32.mrf.mxu0
    %v3690 = vadd.f32 0.0, %v3689
    %v3691 = vpop.f32.mrf.mxu0
    %3692 = vmatprep.mubr.f32.mxu0 0.0
    %3693 = vmatmul.mubr.f32.gmra.mxu0 %v3408
    %v3694 = vpop.f32.mrf.mxu0
    %v3695 = vadd.f32 0.0, %v3694
    %v3696 = vpop.f32.mrf.mxu0
    %3697 = vmatprep.mubr.f32.mxu0 0.0
    %3698 = vmatmul.mubr.f32.gmra.mxu0 %v3411
    %v3699 = vpop.f32.mrf.mxu0
    %v3700 = vadd.f32 0.0, %v3699
    %v3701 = vpop.f32.mrf.mxu0
    %3702 = vmatprep.mubr.f32.mxu0 0.0
    %3703 = vmatmul.mubr.f32.gmra.mxu0 %v3414
    %v3704 = vpop.f32.mrf.mxu0
    %v3705 = vadd.f32 0.0, %v3704
    %v3706 = vpop.f32.mrf.mxu0
    %3707 = vmatprep.mubr.f32.mxu0 0.0
    %3708 = vmatmul.mubr.f32.gmra.mxu0 %v3417
    %v3709 = vpop.f32.mrf.mxu0
    %v3710 = vadd.f32 0.0, %v3709
    %v3711 = vpop.f32.mrf.mxu0
    %3712 = vmatprep.mubr.f32.mxu0 0.0
    %3713 = vmatmul.mubr.f32.gmra.mxu0 %v3420
    %v3714 = vpop.f32.mrf.mxu0
    %v3715 = vadd.f32 0.0, %v3714
    %v3716 = vpop.f32.mrf.mxu0
    %3717 = vmatprep.mubr.f32.mxu0 0.0
    %3718 = vmatmul.mubr.f32.gmra.mxu0 %v3423
    %v3719 = vpop.f32.mrf.mxu0
    %v3720 = vadd.f32 0.0, %v3719
    %v3721 = vpop.f32.mrf.mxu0
    %3722 = vmatprep.mubr.f32.mxu0 0.0
    %3723 = vmatmul.mubr.f32.gmra.mxu0 %v3426
    %v3724 = vpop.f32.mrf.mxu0
    %v3725 = vadd.f32 0.0, %v3724
    %v3726 = vpop.f32.mrf.mxu0
    %3727 = vmatprep.mubr.f32.mxu0 0.0
    %3728 = vmatmul.mubr.f32.gmra.mxu0 %v3429
    %v3729 = vpop.f32.mrf.mxu0
    %v3730 = vadd.f32 0.0, %v3729
    %v3731 = vpop.f32.mrf.mxu0
    %3732 = vmatprep.mubr.f32.mxu0 0.0
    %3733 = vmatmul.mubr.f32.gmra.mxu0 %v3432
    %v3734 = vpop.f32.mrf.mxu0
    %v3735 = vadd.f32 0.0, %v3734
    %v3736 = vpop.f32.mrf.mxu0
    %3737 = vmatprep.mubr.f32.mxu0 0.0
    %3738 = vmatmul.mubr.f32.gmra.mxu0 %v3435
    %v3739 = vpop.f32.mrf.mxu0
    %v3740 = vadd.f32 0.0, %v3739
    %v3741 = vpop.f32.mrf.mxu0
    %3742 = vmatprep.mubr.f32.mxu0 0.0
    %3743 = vmatmul.mubr.f32.gmra.mxu0 %v3438
    %v3744 = vpop.f32.mrf.mxu0
    %v3745 = vadd.f32 0.0, %v3744
    %v3746 = vpop.f32.mrf.mxu0
    %3747 = vmatprep.mubr.f32.mxu0 0.0
    %3748 = vmatmul.mubr.f32.gmra.mxu0 %v3441
    %v3749 = vpop.f32.mrf.mxu0
    %v3750 = vadd.f32 0.0, %v3749
    %v3751 = vpop.f32.mrf.mxu0
    %3752 = vmatprep.mubr.f32.mxu0 0.0
    %3753 = vmatmul.mubr.f32.gmra.mxu0 %v3444
    %v3754 = vpop.f32.mrf.mxu0
    %v3755 = vadd.f32 0.0, %v3754
    %v3756 = vpop.f32.mrf.mxu0
    %3757 = vmatprep.mubr.f32.mxu0 0.0
    %3758 = vmatmul.mubr.f32.gmra.mxu0 %v3447
    %v3759 = vpop.f32.mrf.mxu0
    %v3760 = vadd.f32 0.0, %v3759
    %v3761 = vpop.f32.mrf.mxu0
    %3762 = vmatprep.mubr.f32.mxu0 0.0
    %3763 = vmatmul.mubr.f32.gmra.mxu0 %v3450
    %v3764 = vpop.f32.mrf.mxu0
    %v3765 = vadd.f32 0.0, %v3764
    %v3766 = vpop.f32.mrf.mxu0
    %3767 = vmatprep.mubr.f32.mxu0 0.0
    %3768 = vmatmul.mubr.f32.gmra.mxu0 %v3453
    %v3769 = vpop.f32.mrf.mxu0
    %v3770 = vadd.f32 0.0, %v3769
    %v3771 = vpop.f32.mrf.mxu0
    %3772 = vmatprep.mubr.f32.mxu0 0.0
    %3773 = vmatmul.mubr.f32.gmra.mxu0 %v3456
    %v3774 = vpop.f32.mrf.mxu0
    %v3775 = vadd.f32 0.0, %v3774
    %v3776 = vpop.f32.mrf.mxu0
    %3777 = vmatprep.mubr.f32.mxu0 0.0
    %3778 = vmatmul.mubr.f32.gmra.mxu0 %v3459
    %v3779 = vpop.f32.mrf.mxu0
    %v3780 = vadd.f32 0.0, %v3779
    %v3781 = vpop.f32.mrf.mxu0
    %3782 = vmatprep.mubr.f32.mxu0 0.0
    %3783 = vmatmul.mubr.f32.gmra.mxu0 %v3462
    %v3784 = vpop.f32.mrf.mxu0
    %v3785 = vadd.f32 0.0, %v3784
    %v3786 = vpop.f32.mrf.mxu0
    %3787 = vmatprep.mubr.f32.mxu0 0.0
    %3788 = vmatmul.mubr.f32.gmra.mxu0 %v3465
    %v3789 = vpop.f32.mrf.mxu0
    %v3790 = vadd.f32 0.0, %v3789
    %v3791 = vpop.f32.mrf.mxu0
    %3792 = vmatprep.mubr.f32.mxu0 0.0
    %3793 = vmatmul.mubr.f32.gmra.mxu0 %v3468
    %v3794 = vpop.f32.mrf.mxu0
    %v3795 = vadd.f32 0.0, %v3794
    %v3796 = vpop.f32.mrf.mxu0
    %3797 = vmatprep.mubr.f32.mxu0 0.0
    %3798 = vmatmul.mubr.f32.gmra.mxu0 %v3471
    %v3799 = vpop.f32.mrf.mxu0
    %v3800 = vadd.f32 0.0, %v3799
    %v3801 = vpop.f32.mrf.mxu0
    %3802 = vmatprep.mubr.f32.mxu0 0.0
    %3803 = vmatmul.mubr.f32.gmra.mxu0 %v3474
    %v3804 = vpop.f32.mrf.mxu0
    %v3805 = vadd.f32 0.0, %v3804
    %v3806 = vpop.f32.mrf.mxu0
    %3807 = vmatprep.mubr.f32.mxu0 0.0
    %3808 = vmatmul.mubr.f32.gmra.mxu0 %v3477
    %v3809 = vpop.f32.mrf.mxu0
    %v3810 = vadd.f32 0.0, %v3809
    %v3811 = vpop.f32.mrf.mxu0
    %3812 = vmatprep.mubr.f32.mxu0 0.0
    %3813 = vmatmul.mubr.f32.gmra.mxu0 %v3480
    %v3814 = vpop.f32.mrf.mxu0
    %v3815 = vadd.f32 0.0, %v3814
    %v3816 = vpop.f32.mrf.mxu0
    %3817 = vmatprep.mubr.f32.mxu0 0.0
    %3818 = vmatmul.mubr.f32.gmra.mxu0 %v3483
    %v3819 = vpop.f32.mrf.mxu0
    %v3820 = vadd.f32 0.0, %v3819
    %v3821 = vpop.f32.mrf.mxu0
    %3822 = vmatprep.mubr.f32.mxu0 0.0
    %3823 = vmatmul.mubr.f32.gmra.mxu0 %v3486
    %v3824 = vpop.f32.mrf.mxu0
    %v3825 = vadd.f32 0.0, %v3824
    %v3826 = vpop.f32.mrf.mxu0
    %3827 = vmatprep.mubr.f32.mxu0 0.0
    %3828 = vmatmul.mubr.f32.gmra.mxu0 %v3489
    %v3829 = vpop.f32.mrf.mxu0
    %v3830 = vadd.f32 0.0, %v3829
    %v3831 = vpop.f32.mrf.mxu0
    %3832 = vmatprep.mubr.f32.mxu0 0.0
    %3833 = vmatmul.mubr.f32.gmra.mxu0 %v3492
    %v3834 = vpop.f32.mrf.mxu0
    %v3835 = vadd.f32 0.0, %v3834
    %v3836 = vpop.f32.mrf.mxu0
    %3837 = vmatprep.mubr.f32.mxu0 0.0
    %3838 = vmatmul.mubr.f32.gmra.mxu0 %v3495
    %v3839 = vpop.f32.mrf.mxu0
    %v3840 = vadd.f32 0.0, %v3839
    %v3841 = vpop.f32.mrf.mxu0
    %3842 = vmatprep.mubr.f32.mxu0 0.0
    %3843 = vmatmul.mubr.f32.gmra.mxu0 %v3498
    %v3844 = vpop.f32.mrf.mxu0
    %v3845 = vadd.f32 0.0, %v3844
    %v3846 = vpop.f32.mrf.mxu0
    %3847 = vmatprep.mubr.f32.mxu0 0.0
    %3848 = vmatmul.mubr.f32.gmra.mxu0 %v3501
    %v3849 = vpop.f32.mrf.mxu0
    %v3850 = vadd.f32 0.0, %v3849
    %v3851 = vpop.f32.mrf.mxu0
    %3852 = vmatprep.mubr.f32.mxu0 0.0
    %3853 = vmatmul.mubr.f32.gmra.mxu0 %v3504
    %v3854 = vpop.f32.mrf.mxu0
    %v3855 = vadd.f32 0.0, %v3854
    %v3856 = vpop.f32.mrf.mxu0
    %3857 = vmatprep.mubr.f32.mxu0 0.0
    %3858 = vmatmul.mubr.f32.gmra.mxu0 %v3507
    %v3859 = vpop.f32.mrf.mxu0
    %v3860 = vadd.f32 0.0, %v3859
    %v3861 = vpop.f32.mrf.mxu0
    %3862 = vmatprep.mubr.f32.mxu0 0.0
    %3863 = vmatmul.mubr.f32.gmra.mxu0 %v3510
    %v3864 = vpop.f32.mrf.mxu0
    %v3865 = vadd.f32 0.0, %v3864
    %v3866 = vpop.f32.mrf.mxu0
    %3867 = vmatprep.mubr.f32.mxu0 0.0
    %3868 = vmatmul.mubr.f32.gmra.mxu0 %v3513
    %v3869 = vpop.f32.mrf.mxu0
    %v3870 = vadd.f32 0.0, %v3869
    %v3871 = vpop.f32.mrf.mxu0
    %3872 = vmatprep.mubr.f32.mxu0 0.0
    %3873 = vmatmul.mubr.f32.gmra.mxu0 %v3516
    %v3874 = vpop.f32.mrf.mxu0
    %v3875 = vadd.f32 0.0, %v3874
    %v3876 = vpop.f32.mrf.mxu0
    %3877 = vmatprep.mubr.f32.mxu0 0.0
    %3878 = vmatmul.mubr.f32.gmra.mxu0 %v3519
    %v3879 = vpop.f32.mrf.mxu0
    %v3880 = vadd.f32 0.0, %v3879
    %v3881 = vpop.f32.mrf.mxu0
    %3882 = vmatprep.mubr.f32.mxu0 0.0
    %3883 = vmatmul.mubr.f32.gmra.mxu0 %v3522
    %v3884 = vpop.f32.mrf.mxu0
    %v3885 = vadd.f32 0.0, %v3884
    %v3886 = vpop.f32.mrf.mxu0
    %3887 = vmatprep.mubr.f32.mxu0 0.0
    %3888 = vmatmul.mubr.f32.gmra.mxu0 %v3525
    %v3889 = vpop.f32.mrf.mxu0
    %v3890 = vadd.f32 0.0, %v3889
    %v3891 = vpop.f32.mrf.mxu0
    %3892 = vmatprep.mubr.f32.mxu0 0.0
    %3893 = vmatmul.mubr.f32.gmra.mxu0 %v3528
    %v3894 = vpop.f32.mrf.mxu0
    %v3895 = vadd.f32 0.0, %v3894
    %v3896 = vpop.f32.mrf.mxu0
    %3897 = vmatprep.mubr.f32.mxu0 0.0
    %3898 = vmatmul.mubr.f32.gmra.mxu0 %v3531
    %v3899 = vpop.f32.mrf.mxu0
    %v3900 = vadd.f32 0.0, %v3899
    %v3901 = vpop.f32.mrf.mxu0
    %3902 = vmatprep.mubr.f32.mxu0 0.0
    %3903 = vmatmul.mubr.f32.gmra.mxu0 %v3534
    %v3904 = vpop.f32.mrf.mxu0
    %v3905 = vadd.f32 0.0, %v3904
    %v3906 = vpop.f32.mrf.mxu0
    %3907 = vmatprep.mubr.f32.mxu0 0.0
    %3908 = vmatmul.mubr.f32.gmra.mxu0 %v3537
    %v3909 = vpop.f32.mrf.mxu0
    %v3910 = vadd.f32 0.0, %v3909
    %v3911 = vpop.f32.mrf.mxu0
    %3912 = vmatprep.mubr.f32.mxu0 0.0
    %3913 = vmatmul.mubr.f32.gmra.mxu0 %v3540
    %v3914 = vpop.f32.mrf.mxu0
    %v3915 = vadd.f32 0.0, %v3914
    %v3916 = vpop.f32.mrf.mxu0
    %3917 = vmatprep.mubr.f32.mxu0 0.0
    %3918 = vmatmul.mubr.f32.gmra.mxu0 %v3543
    %v3919 = vpop.f32.mrf.mxu0
    %v3920 = vadd.f32 0.0, %v3919
    %v3921 = vpop.f32.mrf.mxu0
    %3922 = vmatprep.mubr.f32.mxu0 0.0
    %3923 = vmatmul.mubr.f32.gmra.mxu0 %v3546
    %v3924 = vpop.f32.mrf.mxu0
    %v3925 = vadd.f32 0.0, %v3924
    %v3926 = vpop.f32.mrf.mxu0
    %3927 = vmatprep.mubr.f32.mxu0 0.0
    %3928 = vmatmul.mubr.f32.gmra.mxu0 %v3549
    %v3929 = vpop.f32.mrf.mxu0
    %v3930 = vadd.f32 0.0, %v3929
    %v3931 = vpop.f32.mrf.mxu0
    %3932 = vmatprep.mubr.f32.mxu0 0.0
    %3933 = vmatmul.mubr.f32.gmra.mxu0 %v3552
    %v3934 = vpop.f32.mrf.mxu0
    %v3935 = vadd.f32 0.0, %v3934
    %v3936 = vpop.f32.mrf.mxu0
    %3937 = vmatprep.mubr.f32.mxu0 0.0
    %3938 = vmatmul.mubr.f32.gmra.mxu0 %v3555
    %v3939 = vpop.f32.mrf.mxu0
    %v3940 = vadd.f32 0.0, %v3939
    %v3941 = vpop.f32.mrf.mxu0
    %3942 = vmatprep.mubr.f32.mxu0 0.0
    %3943 = vmatmul.mubr.f32.gmra.mxu0 %v3558
    %v3944 = vpop.f32.mrf.mxu0
    %v3945 = vadd.f32 0.0, %v3944
    %v3946 = vpop.f32.mrf.mxu0
    %3947 = vmatprep.mubr.f32.mxu0 0.0
    %3948 = vmatmul.mubr.f32.gmra.mxu0 %v3561
    %v3949 = vpop.f32.mrf.mxu0
    %v3950 = vadd.f32 0.0, %v3949
    %v3951 = vpop.f32.mrf.mxu0
    %3952 = vmatprep.mubr.f32.mxu0 0.0
    %3953 = vmatmul.mubr.f32.gmra.mxu0 %v3564
    %v3954 = vpop.f32.mrf.mxu0
    %v3955 = vadd.f32 0.0, %v3954
    %v3956 = vpop.f32.mrf.mxu0
    %3957 = vmatprep.mubr.f32.mxu0 0.0
    %3958 = vmatmul.mubr.f32.gmra.mxu0 %v3567
    %v3959 = vpop.f32.mrf.mxu0
    %v3960 = vadd.f32 0.0, %v3959
    %v3961 = vpop.f32.mrf.mxu0
    %3962 = vmatprep.mubr.f32.mxu0 0.0
    %3963 = vmatmul.mubr.f32.gmra.mxu0 %v3570
    %v3964 = vpop.f32.mrf.mxu0
    %v3965 = vadd.f32 0.0, %v3964
    %v3966 = vpop.f32.mrf.mxu0
    %3967 = vmatprep.mubr.f32.mxu0 0.0
    %3968 = vmatmul.mubr.f32.gmra.mxu0 %v3573
    %v3969 = vpop.f32.mrf.mxu0
    %v3970 = vadd.f32 0.0, %v3969
    %v3971 = vpop.f32.mrf.mxu0
    %3972 = vmatprep.mubr.f32.mxu0 0.0
    %3973 = vmatmul.mubr.f32.gmra.mxu0 %v3576
    %v3974 = vpop.f32.mrf.mxu0
    %v3975 = vadd.f32 0.0, %v3974
    %v3976 = vpop.f32.mrf.mxu0
    %3977 = vmatprep.mubr.f32.mxu0 0.0
    %3978 = vmatmul.mubr.f32.gmra.mxu0 %v3579
    %v3979 = vpop.f32.mrf.mxu0
    %v3980 = vadd.f32 0.0, %v3979
    %v3981 = vpop.f32.mrf.mxu0
    %3982 = vmatprep.mubr.f32.mxu0 0.0
    %3983 = vmatmul.mubr.f32.gmra.mxu0 %v3582
    %v3984 = vpop.f32.mrf.mxu0
    %v3985 = vadd.f32 0.0, %v3984
    %v3986 = vpop.f32.mrf.mxu0
    %3987 = vmatprep.mubr.f32.mxu0 0.0
    %3988 = vmatmul.mubr.f32.gmra.mxu0 %v3585
    %v3989 = vpop.f32.mrf.mxu0
    %v3990 = vadd.f32 0.0, %v3989
    %v3991 = vpop.f32.mrf.mxu0
    %3992 = vmatprep.mubr.f32.mxu0 0.0
    %3993 = vmatmul.mubr.f32.gmra.mxu0 %v3588
    %v3994 = vpop.f32.mrf.mxu0
    %v3995 = vadd.f32 0.0, %v3994
    %v3996 = vpop.f32.mrf.mxu0
    %3997 = vmatprep.mubr.f32.mxu0 0.0
    %3998 = vmatmul.mubr.f32.gmra.mxu0 %v3591
    %v3999 = vpop.f32.mrf.mxu0
    %v4000 = vadd.f32 0.0, %v3999
    %v4001 = vpop.f32.mrf.mxu0
    %4002 = vmatprep.mubr.f32.mxu0 0.0
    %4003 = vmatmul.mubr.f32.gmra.mxu0 %v3594
    %v4004 = vpop.f32.mrf.mxu0
    %v4005 = vadd.f32 0.0, %v4004
    %v4006 = vpop.f32.mrf.mxu0
    %4007 = vmatprep.mubr.f32.mxu0 0.0
    %4008 = vmatmul.mubr.f32.gmra.mxu0 %v3597
    %v4009 = vpop.f32.mrf.mxu0
    %v4010 = vadd.f32 0.0, %v4009
    %v4011 = vpop.f32.mrf.mxu0
    %4012 = vmatprep.mubr.f32.mxu0 0.0
    %4013 = vmatmul.mubr.f32.gmra.mxu0 %v3600
    %v4014 = vpop.f32.mrf.mxu0
    %v4015 = vadd.f32 0.0, %v4014
    %v4016 = vpop.f32.mrf.mxu0
    %4017 = vmatprep.mubr.f32.mxu0 0.0
    %4018 = vmatmul.mubr.f32.gmra.mxu0 %v3603
    %v4019 = vpop.f32.mrf.mxu0
    %v4020 = vadd.f32 0.0, %v4019
    %v4021 = vpop.f32.mrf.mxu0
    %4022 = vmatprep.mubr.f32.mxu0 0.0
    %4023 = vmatmul.mubr.f32.gmra.mxu0 %v3606
    %v4024 = vpop.f32.mrf.mxu0
    %v4025 = vadd.f32 0.0, %v4024
    %v4026 = vpop.f32.mrf.mxu0
    %4027 = vmatprep.mubr.f32.mxu0 0.0
    %4028 = vmatmul.mubr.f32.gmra.mxu0 %v3609
    %v4029 = vpop.f32.mrf.mxu0
    %v4030 = vadd.f32 0.0, %v4029
    %v4031 = vpop.f32.mrf.mxu0
    %4032 = vmatprep.mubr.f32.mxu0 0.0
    %4033 = vmatmul.mubr.f32.gmra.mxu0 %v3612
    %v4034 = vpop.f32.mrf.mxu0
    %v4035 = vadd.f32 0.0, %v4034
    %v4036 = vpop.f32.mrf.mxu0
    %4037 = vmatprep.mubr.f32.mxu0 0.0
    %4038 = vmatmul.mubr.f32.gmra.mxu0 %v3615
    %v4039 = vpop.f32.mrf.mxu0
    %v4040 = vadd.f32 0.0, %v4039
    %v4041 = vpop.f32.mrf.mxu0
    %4042 = vmatprep.mubr.f32.mxu0 0.0
    %4043 = vmatmul.mubr.f32.gmra.mxu0 %v3618
    %v4044 = vpop.f32.mrf.mxu0
    %v4045 = vadd.f32 0.0, %v4044
    %v4046 = vpop.f32.mrf.mxu0
    %4047 = vdwg.mxu0
    %v4048 = vadd.f32 %v3186, %v3690
    %v4049 = vadd.f32 %v3187, %v3695
    %v4050 = vadd.f32 %v3188, %v3700
    %v4051 = vadd.f32 %v3189, %v3705
    %v4052 = vadd.f32 %v3190, %v3710
    %v4053 = vadd.f32 %v3191, %v3715
    %v4054 = vadd.f32 %v3192, %v3720
    %v4055 = vadd.f32 %v3193, %v3725
    %v4056 = vadd.f32 %v3194, %v3730
    %v4057 = vadd.f32 %v3195, %v3735
    %v4058 = vadd.f32 %v3196, %v3740
    %v4059 = vadd.f32 %v3197, %v3745
    %v4060 = vadd.f32 %v3198, %v3750
    %v4061 = vadd.f32 %v3199, %v3755
    %v4062 = vadd.f32 %v3200, %v3760
    %v4063 = vadd.f32 %v3201, %v3765
    %v4064 = vadd.f32 %v3202, %v3770
    %v4065 = vadd.f32 %v3203, %v3775
    %v4066 = vadd.f32 %v3204, %v3780
    %v4067 = vadd.f32 %v3205, %v3785
    %v4068 = vadd.f32 %v3206, %v3790
    %v4069 = vadd.f32 %v3207, %v3795
    %v4070 = vadd.f32 %v3208, %v3800
    %v4071 = vadd.f32 %v3209, %v3805
    %v4072 = vadd.f32 %v3210, %v3810
    %v4073 = vadd.f32 %v3211, %v3815
    %v4074 = vadd.f32 %v3212, %v3820
    %v4075 = vadd.f32 %v3213, %v3825
    %v4076 = vadd.f32 %v3214, %v3830
    %v4077 = vadd.f32 %v3215, %v3835
    %v4078 = vadd.f32 %v3216, %v3840
    %v4079 = vadd.f32 %v3217, %v3845
    %v4080 = vadd.f32 %v3218, %v3850
    %v4081 = vadd.f32 %v3219, %v3855
    %v4082 = vadd.f32 %v3220, %v3860
    %v4083 = vadd.f32 %v3221, %v3865
    %v4084 = vadd.f32 %v3222, %v3870
    %v4085 = vadd.f32 %v3223, %v3875
    %v4086 = vadd.f32 %v3224, %v3880
    %v4087 = vadd.f32 %v3225, %v3885
    %v4088 = vadd.f32 %v3226, %v3890
    %v4089 = vadd.f32 %v3227, %v3895
    %v4090 = vadd.f32 %v3228, %v3900
    %v4091 = vadd.f32 %v3229, %v3905
    %v4092 = vadd.f32 %v3230, %v3910
    %v4093 = vadd.f32 %v3231, %v3915
    %v4094 = vadd.f32 %v3232, %v3920
    %v4095 = vadd.f32 %v3233, %v3925
    %v4096 = vadd.f32 %v3234, %v3930
    %v4097 = vadd.f32 %v3235, %v3935
    %v4098 = vadd.f32 %v3236, %v3940
    %v4099 = vadd.f32 %v3237, %v3945
    %v4100 = vadd.f32 %v3238, %v3950
    %v4101 = vadd.f32 %v3239, %v3955
    %v4102 = vadd.f32 %v3240, %v3960
    %v4103 = vadd.f32 %v3241, %v3965
    %v4104 = vadd.f32 %v3242, %v3970
    %v4105 = vadd.f32 %v3243, %v3975
    %v4106 = vadd.f32 %v3244, %v3980
    %v4107 = vadd.f32 %v3245, %v3985
    %v4108 = vadd.f32 %v3246, %v3990
    %v4109 = vadd.f32 %v3247, %v3995
    %v4110 = vadd.f32 %v3248, %v4000
    %v4111 = vadd.f32 %v3249, %v4005
    %v4112 = vadd.f32 %v3250, %v4010
    %v4113 = vadd.f32 %v3251, %v4015
    %v4114 = vadd.f32 %v3252, %v4020
    %v4115 = vadd.f32 %v3253, %v4025
    %v4116 = vadd.f32 %v3254, %v4030
    %v4117 = vadd.f32 %v3255, %v4035
    %v4118 = vadd.f32 %v3256, %v4040
    %v4119 = vadd.f32 %v3257, %v4045
    %v4120 = vrot.slane %v93, 2
    %v4121 = vrot.slane %v94, 2
    %v4122 = vrot.slane %v95, 2
    %v4123 = vrot.slane %v96, 2
    %v4124 = vrot.slane %v97, 2
    %v4125 = vrot.slane %v98, 2
    %v4126 = vrot.slane %v99, 2
    %v4127 = vrot.slane %v100, 2
    %v4128 = vrot.slane %v101, 2
    %v4129 = vrot.slane %v102, 2
    %v4130 = vrot.slane %v103, 2
    %v4131 = vrot.slane %v104, 2
    %v4132 = vrot.slane %v105, 2
    %v4133 = vrot.slane %v106, 2
    %v4134 = vrot.slane %v107, 2
    %v4135 = vrot.slane %v108, 2
    %v4136 = vrot.slane %v109, 2
    %v4137 = vrot.slane %v110, 2
    %v4138 = vrot.slane %v111, 2
    %v4139 = vrot.slane %v112, 2
    %v4140 = vrot.slane %v113, 2
    %v4141 = vrot.slane %v114, 2
    %v4142 = vrot.slane %v115, 2
    %v4143 = vrot.slane %v116, 2
    %v4144 = vrot.slane %v117, 2
    %v4145 = vrot.slane %v118, 2
    %v4146 = vrot.slane %v119, 2
    %v4147 = vrot.slane %v120, 2
    %v4148 = vrot.slane %v121, 2
    %v4149 = vrot.slane %v122, 2
    %v4150 = vrot.slane %v123, 2
    %v4151 = vrot.slane %v124, 2
    %v4152 = vrot.slane %v125, 2
    %v4153 = vrot.slane %v126, 2
    %v4154 = vrot.slane %v127, 2
    %v4155 = vrot.slane %v128, 2
    %v4156 = vrot.slane %v129, 2
    %v4157 = vrot.slane %v130, 2
    %v4158 = vrot.slane %v131, 2
    %v4159 = vrot.slane %v132, 2
    %v4160 = vrot.slane %v133, 2
    %v4161 = vrot.slane %v134, 2
    %v4162 = vrot.slane %v135, 2
    %v4163 = vrot.slane %v136, 2
    %v4164 = vrot.slane %v137, 2
    %v4165 = vrot.slane %v138, 2
    %v4166 = vrot.slane %v139, 2
    %v4167 = vrot.slane %v140, 2
    %v4168 = vrot.slane %v141, 2
    %v4169 = vrot.slane %v142, 2
    %v4170 = vrot.slane %v143, 2
    %v4171 = vrot.slane %v144, 2
    %v4172 = vrot.slane %v145, 2
    %v4173 = vrot.slane %v146, 2
    %v4174 = vrot.slane %v147, 2
    %v4175 = vrot.slane %v148, 2
    %v4176 = vrot.slane %v149, 2
    %v4177 = vrot.slane %v150, 2
    %v4178 = vrot.slane %v151, 2
    %v4179 = vrot.slane %v152, 2
    %v4180 = vrot.slane %v153, 2
    %v4181 = vrot.slane %v154, 2
    %v4182 = vrot.slane %v155, 2
    %v4183 = vrot.slane %v156, 2
    %v4184 = vrot.slane %v157, 2
    %v4185 = vrot.slane %v158, 2
    %v4186 = vrot.slane %v159, 2
    %v4187 = vrot.slane %v160, 2
    %v4188 = vrot.slane %v161, 2
    %v4189 = vrot.slane %v162, 2
    %v4190 = vrot.slane %v163, 2
    %v4191 = vrot.slane %v164, 2
    %v4192 = vsel %vm1749, %v4190, %v4191
    %v4193 = vsel %vm1749, %v4189, %v4190
    %v4194 = vsel %vm1749, %v4188, %v4189
    %v4195 = vsel %vm1749, %v4187, %v4188
    %v4196 = vsel %vm1749, %v4186, %v4187
    %v4197 = vsel %vm1749, %v4185, %v4186
    %v4198 = vsel %vm1749, %v4184, %v4185
    %v4199 = vsel %vm1749, %v4183, %v4184
    %v4200 = vsel %vm1749, %v4182, %v4183
    %v4201 = vsel %vm1749, %v4181, %v4182
    %v4202 = vsel %vm1749, %v4180, %v4181
    %v4203 = vsel %vm1749, %v4179, %v4180
    %v4204 = vsel %vm1749, %v4178, %v4179
    %v4205 = vsel %vm1749, %v4177, %v4178
    %v4206 = vsel %vm1749, %v4176, %v4177
    %v4207 = vsel %vm1749, %v4175, %v4176
    %v4208 = vsel %vm1749, %v4174, %v4175
    %v4209 = vsel %vm1749, %v4173, %v4174
    %v4210 = vsel %vm1749, %v4172, %v4173
    %v4211 = vsel %vm1749, %v4171, %v4172
    %v4212 = vsel %vm1749, %v4170, %v4171
    %v4213 = vsel %vm1749, %v4169, %v4170
    %v4214 = vsel %vm1749, %v4168, %v4169
    %v4215 = vsel %vm1749, %v4167, %v4168
    %v4216 = vsel %vm1749, %v4166, %v4167
    %v4217 = vsel %vm1749, %v4165, %v4166
    %v4218 = vsel %vm1749, %v4164, %v4165
    %v4219 = vsel %vm1749, %v4163, %v4164
    %v4220 = vsel %vm1749, %v4162, %v4163
    %v4221 = vsel %vm1749, %v4161, %v4162
    %v4222 = vsel %vm1749, %v4160, %v4161
    %v4223 = vsel %vm1749, %v4159, %v4160
    %v4224 = vsel %vm1749, %v4158, %v4159
    %v4225 = vsel %vm1749, %v4157, %v4158
    %v4226 = vsel %vm1749, %v4156, %v4157
    %v4227 = vsel %vm1749, %v4155, %v4156
    %v4228 = vsel %vm1749, %v4154, %v4155
    %v4229 = vsel %vm1749, %v4153, %v4154
    %v4230 = vsel %vm1749, %v4152, %v4153
    %v4231 = vsel %vm1749, %v4151, %v4152
    %v4232 = vsel %vm1749, %v4150, %v4151
    %v4233 = vsel %vm1749, %v4149, %v4150
    %v4234 = vsel %vm1749, %v4148, %v4149
    %v4235 = vsel %vm1749, %v4147, %v4148
    %v4236 = vsel %vm1749, %v4146, %v4147
    %v4237 = vsel %vm1749, %v4145, %v4146
    %v4238 = vsel %vm1749, %v4144, %v4145
    %v4239 = vsel %vm1749, %v4143, %v4144
    %v4240 = vsel %vm1749, %v4142, %v4143
    %v4241 = vsel %vm1749, %v4141, %v4142
    %v4242 = vsel %vm1749, %v4140, %v4141
    %v4243 = vsel %vm1749, %v4139, %v4140
    %v4244 = vsel %vm1749, %v4138, %v4139
    %v4245 = vsel %vm1749, %v4137, %v4138
    %v4246 = vsel %vm1749, %v4136, %v4137
    %v4247 = vsel %vm1749, %v4135, %v4136
    %v4248 = vsel %vm1749, %v4134, %v4135
    %v4249 = vsel %vm1749, %v4133, %v4134
    %v4250 = vsel %vm1749, %v4132, %v4133
    %v4251 = vsel %vm1749, %v4131, %v4132
    %v4252 = vsel %vm1749, %v4130, %v4131
    %v4253 = vsel %vm1749, %v4129, %v4130
    %v4254 = vsel %vm1749, %v4128, %v4129
    %v4255 = vsel %vm1749, %v4127, %v4128
    %v4256 = vsel %vm1749, %v4126, %v4127
    %v4257 = vsel %vm1749, %v4125, %v4126
    %v4258 = vsel %vm1749, %v4124, %v4125
    %v4259 = vsel %vm1749, %v4123, %v4124
    %v4260 = vsel %vm1749, %v4122, %v4123
    %v4261 = vsel %vm1749, %v4121, %v4122
    %v4262 = vsel %vm1749, %v4120, %v4121
    %v4263 = vsel %vm1749, %v4191, %v4120
    %s4264 = scalar_lea.vmem %s3, 20
    %v4265 = vld [vmem:[%s4264] sm:$0xf]
    %v4267 = vsel %vm387, %v4262, 0
    %v4270 = vsel %vm387, %v4261, 0
    %v4273 = vsel %vm387, %v4260, 0
    %v4276 = vsel %vm387, %v4259, 0
    %v4279 = vsel %vm387, %v4258, 0
    %v4282 = vsel %vm387, %v4257, 0
    %v4285 = vsel %vm387, %v4256, 0
    %v4288 = vsel %vm387, %v4255, 0
    %v4291 = vsel %vm387, %v4254, 0
    %v4294 = vsel %vm387, %v4253, 0
    %v4297 = vsel %vm387, %v4252, 0
    %v4300 = vsel %vm387, %v4251, 0
    %v4303 = vsel %vm387, %v4250, 0
    %v4306 = vsel %vm387, %v4249, 0
    %v4309 = vsel %vm387, %v4248, 0
    %v4312 = vsel %vm387, %v4247, 0
    %v4315 = vsel %vm387, %v4246, 0
    %v4318 = vsel %vm387, %v4245, 0
    %v4321 = vsel %vm387, %v4244, 0
    %v4324 = vsel %vm387, %v4243, 0
    %v4327 = vsel %vm387, %v4242, 0
    %v4330 = vsel %vm387, %v4241, 0
    %v4333 = vsel %vm387, %v4240, 0
    %v4336 = vsel %vm387, %v4239, 0
    %v4339 = vsel %vm387, %v4238, 0
    %v4342 = vsel %vm387, %v4237, 0
    %v4345 = vsel %vm387, %v4236, 0
    %v4348 = vsel %vm387, %v4235, 0
    %v4351 = vsel %vm387, %v4234, 0
    %v4354 = vsel %vm387, %v4233, 0
    %v4357 = vsel %vm387, %v4232, 0
    %v4360 = vsel %vm387, %v4231, 0
    %v4363 = vsel %vm387, %v4230, 0
    %v4366 = vsel %vm387, %v4229, 0
    %v4369 = vsel %vm387, %v4228, 0
    %v4372 = vsel %vm387, %v4227, 0
    %v4375 = vsel %vm387, %v4226, 0
    %v4378 = vsel %vm387, %v4225, 0
    %v4381 = vsel %vm387, %v4224, 0
    %v4384 = vsel %vm387, %v4223, 0
    %v4387 = vsel %vm387, %v4222, 0
    %v4390 = vsel %vm387, %v4221, 0
    %v4393 = vsel %vm387, %v4220, 0
    %v4396 = vsel %vm387, %v4219, 0
    %v4399 = vsel %vm387, %v4218, 0
    %v4402 = vsel %vm387, %v4217, 0
    %v4405 = vsel %vm387, %v4216, 0
    %v4408 = vsel %vm387, %v4215, 0
    %v4411 = vsel %vm387, %v4214, 0
    %v4414 = vsel %vm387, %v4213, 0
    %v4417 = vsel %vm387, %v4212, 0
    %v4420 = vsel %vm387, %v4211, 0
    %v4423 = vsel %vm387, %v4210, 0
    %v4426 = vsel %vm387, %v4209, 0
    %v4429 = vsel %vm387, %v4208, 0
    %v4432 = vsel %vm387, %v4207, 0
    %v4435 = vsel %vm387, %v4206, 0
    %v4438 = vsel %vm387, %v4205, 0
    %v4441 = vsel %vm387, %v4204, 0
    %v4444 = vsel %vm387, %v4203, 0
    %v4447 = vsel %vm387, %v4202, 0
    %v4450 = vsel %vm387, %v4201, 0
    %v4453 = vsel %vm387, %v4200, 0
    %v4456 = vsel %vm387, %v4199, 0
    %v4459 = vsel %vm387, %v4198, 0
    %v4462 = vsel %vm387, %v4197, 0
    %v4465 = vsel %vm387, %v4196, 0
    %v4468 = vsel %vm387, %v4195, 0
    %v4471 = vsel %vm387, %v4194, 0
    %v4474 = vsel %vm387, %v4193, 0
    %v4477 = vsel %vm387, %v4192, 0
    %v4480 = vsel %vm387, %v4263, 0
    %v4483 = vsel %vm604, %v4265, 0
    %4485 = vmatprep.subr.mxu0 0.0
    %4486 = vmatpush1.msra.mxu0 0.0
    %4487 = vmatprep.subr.mxu0 0.0
    %4488 = vmatpush1.msra.mxu0 0.0
    %4489 = vmatprep.subr.mxu0 0.0
    %4490 = vmatpush1.msra.mxu0 0.0
    %4491 = vmatprep.subr.mxu0 0.0
    %4492 = vmatpush1.msra.mxu0 0.0
    %4493 = vmatprep.subr.mxu0 0.0
    %4494 = vmatpush1.msra.mxu0 0.0
    %4495 = vmatprep.subr.mxu0 0.0
    %4496 = vmatpush1.msra.mxu0 0.0
    %4497 = vmatprep.subr.mxu0 0.0
    %4498 = vmatpush1.msra.mxu0 0.0
    %4499 = vmatprep.subr.mxu0 0.0
    %4500 = vmatpush1.msra.mxu0 0.0
    %4501 = vmatprep.subr.mxu0 0.0
    %4502 = vmatpush1.msra.mxu0 0.0
    %4503 = vmatprep.subr.mxu0 0.0
    %4504 = vmatpush1.msra.mxu0 0.0
    %4505 = vmatprep.subr.mxu0 0.0
    %4506 = vmatpush1.msra.mxu0 0.0
    %4507 = vmatprep.subr.mxu0 0.0
    %4508 = vmatpush1.msra.mxu0 0.0
    %4509 = vmatprep.subr.mxu0 0.0
    %4510 = vmatpush1.msra.mxu0 0.0
    %4511 = vmatprep.subr.mxu0 0.0
    %4512 = vmatpush1.msra.mxu0 0.0
    %4513 = vmatprep.subr.mxu0 0.0
    %4514 = vmatpush1.msra.mxu0 0.0
    %4515 = vmatprep.subr.mxu0 0.0
    %4516 = vmatpush1.msra.mxu0 %v4483
    %4517 = vmatprep.subr.mxu0 0.0
    %4518 = vmatpush2.msra.mxu0 0.0
    %4519 = vmatprep.subr.mxu0 0.0
    %4520 = vmatpush2.msra.mxu0 0.0
    %4521 = vmatprep.subr.mxu0 0.0
    %4522 = vmatpush2.msra.mxu0 0.0
    %4523 = vmatprep.subr.mxu0 0.0
    %4524 = vmatpush2.msra.mxu0 0.0
    %4525 = vmatprep.subr.mxu0 0.0
    %4526 = vmatpush2.msra.mxu0 0.0
    %4527 = vmatprep.subr.mxu0 0.0
    %4528 = vmatpush2.msra.mxu0 0.0
    %4529 = vmatprep.subr.mxu0 0.0
    %4530 = vmatpush2.msra.mxu0 0.0
    %4531 = vmatprep.subr.mxu0 0.0
    %4532 = vmatpush2.msra.mxu0 0.0
    %4533 = vmatprep.subr.mxu0 0.0
    %4534 = vmatpush2.msra.mxu0 0.0
    %4535 = vmatprep.subr.mxu0 0.0
    %4536 = vmatpush2.msra.mxu0 0.0
    %4537 = vmatprep.subr.mxu0 0.0
    %4538 = vmatpush2.msra.mxu0 0.0
    %4539 = vmatprep.subr.mxu0 0.0
    %4540 = vmatpush2.msra.mxu0 0.0
    %4541 = vmatprep.subr.mxu0 0.0
    %4542 = vmatpush2.msra.mxu0 0.0
    %4543 = vmatprep.subr.mxu0 0.0
    %4544 = vmatpush2.msra.mxu0 0.0
    %4545 = vmatprep.subr.mxu0 0.0
    %4546 = vmatpush2.msra.mxu0 0.0
    %4547 = vmatprep.subr.mxu0 0.0
    %4548 = vmatpush2.msra.mxu0 0.0
    %4549 = vmatprep.mubr.f32.mxu0 0.0
    %4550 = vmatmul.mubr.f32.gmra.mxu0 %v4267
    %v4551 = vpop.f32.mrf.mxu0
    %v4552 = vadd.f32 0.0, %v4551
    %v4553 = vpop.f32.mrf.mxu0
    %4554 = vmatprep.mubr.f32.mxu0 0.0
    %4555 = vmatmul.mubr.f32.gmra.mxu0 %v4270
    %v4556 = vpop.f32.mrf.mxu0
    %v4557 = vadd.f32 0.0, %v4556
    %v4558 = vpop.f32.mrf.mxu0
    %4559 = vmatprep.mubr.f32.mxu0 0.0
    %4560 = vmatmul.mubr.f32.gmra.mxu0 %v4273
    %v4561 = vpop.f32.mrf.mxu0
    %v4562 = vadd.f32 0.0, %v4561
    %v4563 = vpop.f32.mrf.mxu0
    %4564 = vmatprep.mubr.f32.mxu0 0.0
    %4565 = vmatmul.mubr.f32.gmra.mxu0 %v4276
    %v4566 = vpop.f32.mrf.mxu0
    %v4567 = vadd.f32 0.0, %v4566
    %v4568 = vpop.f32.mrf.mxu0
    %4569 = vmatprep.mubr.f32.mxu0 0.0
    %4570 = vmatmul.mubr.f32.gmra.mxu0 %v4279
    %v4571 = vpop.f32.mrf.mxu0
    %v4572 = vadd.f32 0.0, %v4571
    %v4573 = vpop.f32.mrf.mxu0
    %4574 = vmatprep.mubr.f32.mxu0 0.0
    %4575 = vmatmul.mubr.f32.gmra.mxu0 %v4282
    %v4576 = vpop.f32.mrf.mxu0
    %v4577 = vadd.f32 0.0, %v4576
    %v4578 = vpop.f32.mrf.mxu0
    %4579 = vmatprep.mubr.f32.mxu0 0.0
    %4580 = vmatmul.mubr.f32.gmra.mxu0 %v4285
    %v4581 = vpop.f32.mrf.mxu0
    %v4582 = vadd.f32 0.0, %v4581
    %v4583 = vpop.f32.mrf.mxu0
    %4584 = vmatprep.mubr.f32.mxu0 0.0
    %4585 = vmatmul.mubr.f32.gmra.mxu0 %v4288
    %v4586 = vpop.f32.mrf.mxu0
    %v4587 = vadd.f32 0.0, %v4586
    %v4588 = vpop.f32.mrf.mxu0
    %4589 = vmatprep.mubr.f32.mxu0 0.0
    %4590 = vmatmul.mubr.f32.gmra.mxu0 %v4291
    %v4591 = vpop.f32.mrf.mxu0
    %v4592 = vadd.f32 0.0, %v4591
    %v4593 = vpop.f32.mrf.mxu0
    %4594 = vmatprep.mubr.f32.mxu0 0.0
    %4595 = vmatmul.mubr.f32.gmra.mxu0 %v4294
    %v4596 = vpop.f32.mrf.mxu0
    %v4597 = vadd.f32 0.0, %v4596
    %v4598 = vpop.f32.mrf.mxu0
    %4599 = vmatprep.mubr.f32.mxu0 0.0
    %4600 = vmatmul.mubr.f32.gmra.mxu0 %v4297
    %v4601 = vpop.f32.mrf.mxu0
    %v4602 = vadd.f32 0.0, %v4601
    %v4603 = vpop.f32.mrf.mxu0
    %4604 = vmatprep.mubr.f32.mxu0 0.0
    %4605 = vmatmul.mubr.f32.gmra.mxu0 %v4300
    %v4606 = vpop.f32.mrf.mxu0
    %v4607 = vadd.f32 0.0, %v4606
    %v4608 = vpop.f32.mrf.mxu0
    %4609 = vmatprep.mubr.f32.mxu0 0.0
    %4610 = vmatmul.mubr.f32.gmra.mxu0 %v4303
    %v4611 = vpop.f32.mrf.mxu0
    %v4612 = vadd.f32 0.0, %v4611
    %v4613 = vpop.f32.mrf.mxu0
    %4614 = vmatprep.mubr.f32.mxu0 0.0
    %4615 = vmatmul.mubr.f32.gmra.mxu0 %v4306
    %v4616 = vpop.f32.mrf.mxu0
    %v4617 = vadd.f32 0.0, %v4616
    %v4618 = vpop.f32.mrf.mxu0
    %4619 = vmatprep.mubr.f32.mxu0 0.0
    %4620 = vmatmul.mubr.f32.gmra.mxu0 %v4309
    %v4621 = vpop.f32.mrf.mxu0
    %v4622 = vadd.f32 0.0, %v4621
    %v4623 = vpop.f32.mrf.mxu0
    %4624 = vmatprep.mubr.f32.mxu0 0.0
    %4625 = vmatmul.mubr.f32.gmra.mxu0 %v4312
    %v4626 = vpop.f32.mrf.mxu0
    %v4627 = vadd.f32 0.0, %v4626
    %v4628 = vpop.f32.mrf.mxu0
    %4629 = vmatprep.mubr.f32.mxu0 0.0
    %4630 = vmatmul.mubr.f32.gmra.mxu0 %v4315
    %v4631 = vpop.f32.mrf.mxu0
    %v4632 = vadd.f32 0.0, %v4631
    %v4633 = vpop.f32.mrf.mxu0
    %4634 = vmatprep.mubr.f32.mxu0 0.0
    %4635 = vmatmul.mubr.f32.gmra.mxu0 %v4318
    %v4636 = vpop.f32.mrf.mxu0
    %v4637 = vadd.f32 0.0, %v4636
    %v4638 = vpop.f32.mrf.mxu0
    %4639 = vmatprep.mubr.f32.mxu0 0.0
    %4640 = vmatmul.mubr.f32.gmra.mxu0 %v4321
    %v4641 = vpop.f32.mrf.mxu0
    %v4642 = vadd.f32 0.0, %v4641
    %v4643 = vpop.f32.mrf.mxu0
    %4644 = vmatprep.mubr.f32.mxu0 0.0
    %4645 = vmatmul.mubr.f32.gmra.mxu0 %v4324
    %v4646 = vpop.f32.mrf.mxu0
    %v4647 = vadd.f32 0.0, %v4646
    %v4648 = vpop.f32.mrf.mxu0
    %4649 = vmatprep.mubr.f32.mxu0 0.0
    %4650 = vmatmul.mubr.f32.gmra.mxu0 %v4327
    %v4651 = vpop.f32.mrf.mxu0
    %v4652 = vadd.f32 0.0, %v4651
    %v4653 = vpop.f32.mrf.mxu0
    %4654 = vmatprep.mubr.f32.mxu0 0.0
    %4655 = vmatmul.mubr.f32.gmra.mxu0 %v4330
    %v4656 = vpop.f32.mrf.mxu0
    %v4657 = vadd.f32 0.0, %v4656
    %v4658 = vpop.f32.mrf.mxu0
    %4659 = vmatprep.mubr.f32.mxu0 0.0
    %4660 = vmatmul.mubr.f32.gmra.mxu0 %v4333
    %v4661 = vpop.f32.mrf.mxu0
    %v4662 = vadd.f32 0.0, %v4661
    %v4663 = vpop.f32.mrf.mxu0
    %4664 = vmatprep.mubr.f32.mxu0 0.0
    %4665 = vmatmul.mubr.f32.gmra.mxu0 %v4336
    %v4666 = vpop.f32.mrf.mxu0
    %v4667 = vadd.f32 0.0, %v4666
    %v4668 = vpop.f32.mrf.mxu0
    %4669 = vmatprep.mubr.f32.mxu0 0.0
    %4670 = vmatmul.mubr.f32.gmra.mxu0 %v4339
    %v4671 = vpop.f32.mrf.mxu0
    %v4672 = vadd.f32 0.0, %v4671
    %v4673 = vpop.f32.mrf.mxu0
    %4674 = vmatprep.mubr.f32.mxu0 0.0
    %4675 = vmatmul.mubr.f32.gmra.mxu0 %v4342
    %v4676 = vpop.f32.mrf.mxu0
    %v4677 = vadd.f32 0.0, %v4676
    %v4678 = vpop.f32.mrf.mxu0
    %4679 = vmatprep.mubr.f32.mxu0 0.0
    %4680 = vmatmul.mubr.f32.gmra.mxu0 %v4345
    %v4681 = vpop.f32.mrf.mxu0
    %v4682 = vadd.f32 0.0, %v4681
    %v4683 = vpop.f32.mrf.mxu0
    %4684 = vmatprep.mubr.f32.mxu0 0.0
    %4685 = vmatmul.mubr.f32.gmra.mxu0 %v4348
    %v4686 = vpop.f32.mrf.mxu0
    %v4687 = vadd.f32 0.0, %v4686
    %v4688 = vpop.f32.mrf.mxu0
    %4689 = vmatprep.mubr.f32.mxu0 0.0
    %4690 = vmatmul.mubr.f32.gmra.mxu0 %v4351
    %v4691 = vpop.f32.mrf.mxu0
    %v4692 = vadd.f32 0.0, %v4691
    %v4693 = vpop.f32.mrf.mxu0
    %4694 = vmatprep.mubr.f32.mxu0 0.0
    %4695 = vmatmul.mubr.f32.gmra.mxu0 %v4354
    %v4696 = vpop.f32.mrf.mxu0
    %v4697 = vadd.f32 0.0, %v4696
    %v4698 = vpop.f32.mrf.mxu0
    %4699 = vmatprep.mubr.f32.mxu0 0.0
    %4700 = vmatmul.mubr.f32.gmra.mxu0 %v4357
    %v4701 = vpop.f32.mrf.mxu0
    %v4702 = vadd.f32 0.0, %v4701
    %v4703 = vpop.f32.mrf.mxu0
    %4704 = vmatprep.mubr.f32.mxu0 0.0
    %4705 = vmatmul.mubr.f32.gmra.mxu0 %v4360
    %v4706 = vpop.f32.mrf.mxu0
    %v4707 = vadd.f32 0.0, %v4706
    %v4708 = vpop.f32.mrf.mxu0
    %4709 = vmatprep.mubr.f32.mxu0 0.0
    %4710 = vmatmul.mubr.f32.gmra.mxu0 %v4363
    %v4711 = vpop.f32.mrf.mxu0
    %v4712 = vadd.f32 0.0, %v4711
    %v4713 = vpop.f32.mrf.mxu0
    %4714 = vmatprep.mubr.f32.mxu0 0.0
    %4715 = vmatmul.mubr.f32.gmra.mxu0 %v4366
    %v4716 = vpop.f32.mrf.mxu0
    %v4717 = vadd.f32 0.0, %v4716
    %v4718 = vpop.f32.mrf.mxu0
    %4719 = vmatprep.mubr.f32.mxu0 0.0
    %4720 = vmatmul.mubr.f32.gmra.mxu0 %v4369
    %v4721 = vpop.f32.mrf.mxu0
    %v4722 = vadd.f32 0.0, %v4721
    %v4723 = vpop.f32.mrf.mxu0
    %4724 = vmatprep.mubr.f32.mxu0 0.0
    %4725 = vmatmul.mubr.f32.gmra.mxu0 %v4372
    %v4726 = vpop.f32.mrf.mxu0
    %v4727 = vadd.f32 0.0, %v4726
    %v4728 = vpop.f32.mrf.mxu0
    %4729 = vmatprep.mubr.f32.mxu0 0.0
    %4730 = vmatmul.mubr.f32.gmra.mxu0 %v4375
    %v4731 = vpop.f32.mrf.mxu0
    %v4732 = vadd.f32 0.0, %v4731
    %v4733 = vpop.f32.mrf.mxu0
    %4734 = vmatprep.mubr.f32.mxu0 0.0
    %4735 = vmatmul.mubr.f32.gmra.mxu0 %v4378
    %v4736 = vpop.f32.mrf.mxu0
    %v4737 = vadd.f32 0.0, %v4736
    %v4738 = vpop.f32.mrf.mxu0
    %4739 = vmatprep.mubr.f32.mxu0 0.0
    %4740 = vmatmul.mubr.f32.gmra.mxu0 %v4381
    %v4741 = vpop.f32.mrf.mxu0
    %v4742 = vadd.f32 0.0, %v4741
    %v4743 = vpop.f32.mrf.mxu0
    %4744 = vmatprep.mubr.f32.mxu0 0.0
    %4745 = vmatmul.mubr.f32.gmra.mxu0 %v4384
    %v4746 = vpop.f32.mrf.mxu0
    %v4747 = vadd.f32 0.0, %v4746
    %v4748 = vpop.f32.mrf.mxu0
    %4749 = vmatprep.mubr.f32.mxu0 0.0
    %4750 = vmatmul.mubr.f32.gmra.mxu0 %v4387
    %v4751 = vpop.f32.mrf.mxu0
    %v4752 = vadd.f32 0.0, %v4751
    %v4753 = vpop.f32.mrf.mxu0
    %4754 = vmatprep.mubr.f32.mxu0 0.0
    %4755 = vmatmul.mubr.f32.gmra.mxu0 %v4390
    %v4756 = vpop.f32.mrf.mxu0
    %v4757 = vadd.f32 0.0, %v4756
    %v4758 = vpop.f32.mrf.mxu0
    %4759 = vmatprep.mubr.f32.mxu0 0.0
    %4760 = vmatmul.mubr.f32.gmra.mxu0 %v4393
    %v4761 = vpop.f32.mrf.mxu0
    %v4762 = vadd.f32 0.0, %v4761
    %v4763 = vpop.f32.mrf.mxu0
    %4764 = vmatprep.mubr.f32.mxu0 0.0
    %4765 = vmatmul.mubr.f32.gmra.mxu0 %v4396
    %v4766 = vpop.f32.mrf.mxu0
    %v4767 = vadd.f32 0.0, %v4766
    %v4768 = vpop.f32.mrf.mxu0
    %4769 = vmatprep.mubr.f32.mxu0 0.0
    %4770 = vmatmul.mubr.f32.gmra.mxu0 %v4399
    %v4771 = vpop.f32.mrf.mxu0
    %v4772 = vadd.f32 0.0, %v4771
    %v4773 = vpop.f32.mrf.mxu0
    %4774 = vmatprep.mubr.f32.mxu0 0.0
    %4775 = vmatmul.mubr.f32.gmra.mxu0 %v4402
    %v4776 = vpop.f32.mrf.mxu0
    %v4777 = vadd.f32 0.0, %v4776
    %v4778 = vpop.f32.mrf.mxu0
    %4779 = vmatprep.mubr.f32.mxu0 0.0
    %4780 = vmatmul.mubr.f32.gmra.mxu0 %v4405
    %v4781 = vpop.f32.mrf.mxu0
    %v4782 = vadd.f32 0.0, %v4781
    %v4783 = vpop.f32.mrf.mxu0
    %4784 = vmatprep.mubr.f32.mxu0 0.0
    %4785 = vmatmul.mubr.f32.gmra.mxu0 %v4408
    %v4786 = vpop.f32.mrf.mxu0
    %v4787 = vadd.f32 0.0, %v4786
    %v4788 = vpop.f32.mrf.mxu0
    %4789 = vmatprep.mubr.f32.mxu0 0.0
    %4790 = vmatmul.mubr.f32.gmra.mxu0 %v4411
    %v4791 = vpop.f32.mrf.mxu0
    %v4792 = vadd.f32 0.0, %v4791
    %v4793 = vpop.f32.mrf.mxu0
    %4794 = vmatprep.mubr.f32.mxu0 0.0
    %4795 = vmatmul.mubr.f32.gmra.mxu0 %v4414
    %v4796 = vpop.f32.mrf.mxu0
    %v4797 = vadd.f32 0.0, %v4796
    %v4798 = vpop.f32.mrf.mxu0
    %4799 = vmatprep.mubr.f32.mxu0 0.0
    %4800 = vmatmul.mubr.f32.gmra.mxu0 %v4417
    %v4801 = vpop.f32.mrf.mxu0
    %v4802 = vadd.f32 0.0, %v4801
    %v4803 = vpop.f32.mrf.mxu0
    %4804 = vmatprep.mubr.f32.mxu0 0.0
    %4805 = vmatmul.mubr.f32.gmra.mxu0 %v4420
    %v4806 = vpop.f32.mrf.mxu0
    %v4807 = vadd.f32 0.0, %v4806
    %v4808 = vpop.f32.mrf.mxu0
    %4809 = vmatprep.mubr.f32.mxu0 0.0
    %4810 = vmatmul.mubr.f32.gmra.mxu0 %v4423
    %v4811 = vpop.f32.mrf.mxu0
    %v4812 = vadd.f32 0.0, %v4811
    %v4813 = vpop.f32.mrf.mxu0
    %4814 = vmatprep.mubr.f32.mxu0 0.0
    %4815 = vmatmul.mubr.f32.gmra.mxu0 %v4426
    %v4816 = vpop.f32.mrf.mxu0
    %v4817 = vadd.f32 0.0, %v4816
    %v4818 = vpop.f32.mrf.mxu0
    %4819 = vmatprep.mubr.f32.mxu0 0.0
    %4820 = vmatmul.mubr.f32.gmra.mxu0 %v4429
    %v4821 = vpop.f32.mrf.mxu0
    %v4822 = vadd.f32 0.0, %v4821
    %v4823 = vpop.f32.mrf.mxu0
    %4824 = vmatprep.mubr.f32.mxu0 0.0
    %4825 = vmatmul.mubr.f32.gmra.mxu0 %v4432
    %v4826 = vpop.f32.mrf.mxu0
    %v4827 = vadd.f32 0.0, %v4826
    %v4828 = vpop.f32.mrf.mxu0
    %4829 = vmatprep.mubr.f32.mxu0 0.0
    %4830 = vmatmul.mubr.f32.gmra.mxu0 %v4435
    %v4831 = vpop.f32.mrf.mxu0
    %v4832 = vadd.f32 0.0, %v4831
    %v4833 = vpop.f32.mrf.mxu0
    %4834 = vmatprep.mubr.f32.mxu0 0.0
    %4835 = vmatmul.mubr.f32.gmra.mxu0 %v4438
    %v4836 = vpop.f32.mrf.mxu0
    %v4837 = vadd.f32 0.0, %v4836
    %v4838 = vpop.f32.mrf.mxu0
    %4839 = vmatprep.mubr.f32.mxu0 0.0
    %4840 = vmatmul.mubr.f32.gmra.mxu0 %v4441
    %v4841 = vpop.f32.mrf.mxu0
    %v4842 = vadd.f32 0.0, %v4841
    %v4843 = vpop.f32.mrf.mxu0
    %4844 = vmatprep.mubr.f32.mxu0 0.0
    %4845 = vmatmul.mubr.f32.gmra.mxu0 %v4444
    %v4846 = vpop.f32.mrf.mxu0
    %v4847 = vadd.f32 0.0, %v4846
    %v4848 = vpop.f32.mrf.mxu0
    %4849 = vmatprep.mubr.f32.mxu0 0.0
    %4850 = vmatmul.mubr.f32.gmra.mxu0 %v4447
    %v4851 = vpop.f32.mrf.mxu0
    %v4852 = vadd.f32 0.0, %v4851
    %v4853 = vpop.f32.mrf.mxu0
    %4854 = vmatprep.mubr.f32.mxu0 0.0
    %4855 = vmatmul.mubr.f32.gmra.mxu0 %v4450
    %v4856 = vpop.f32.mrf.mxu0
    %v4857 = vadd.f32 0.0, %v4856
    %v4858 = vpop.f32.mrf.mxu0
    %4859 = vmatprep.mubr.f32.mxu0 0.0
    %4860 = vmatmul.mubr.f32.gmra.mxu0 %v4453
    %v4861 = vpop.f32.mrf.mxu0
    %v4862 = vadd.f32 0.0, %v4861
    %v4863 = vpop.f32.mrf.mxu0
    %4864 = vmatprep.mubr.f32.mxu0 0.0
    %4865 = vmatmul.mubr.f32.gmra.mxu0 %v4456
    %v4866 = vpop.f32.mrf.mxu0
    %v4867 = vadd.f32 0.0, %v4866
    %v4868 = vpop.f32.mrf.mxu0
    %4869 = vmatprep.mubr.f32.mxu0 0.0
    %4870 = vmatmul.mubr.f32.gmra.mxu0 %v4459
    %v4871 = vpop.f32.mrf.mxu0
    %v4872 = vadd.f32 0.0, %v4871
    %v4873 = vpop.f32.mrf.mxu0
    %4874 = vmatprep.mubr.f32.mxu0 0.0
    %4875 = vmatmul.mubr.f32.gmra.mxu0 %v4462
    %v4876 = vpop.f32.mrf.mxu0
    %v4877 = vadd.f32 0.0, %v4876
    %v4878 = vpop.f32.mrf.mxu0
    %4879 = vmatprep.mubr.f32.mxu0 0.0
    %4880 = vmatmul.mubr.f32.gmra.mxu0 %v4465
    %v4881 = vpop.f32.mrf.mxu0
    %v4882 = vadd.f32 0.0, %v4881
    %v4883 = vpop.f32.mrf.mxu0
    %4884 = vmatprep.mubr.f32.mxu0 0.0
    %4885 = vmatmul.mubr.f32.gmra.mxu0 %v4468
    %v4886 = vpop.f32.mrf.mxu0
    %v4887 = vadd.f32 0.0, %v4886
    %v4888 = vpop.f32.mrf.mxu0
    %4889 = vmatprep.mubr.f32.mxu0 0.0
    %4890 = vmatmul.mubr.f32.gmra.mxu0 %v4471
    %v4891 = vpop.f32.mrf.mxu0
    %v4892 = vadd.f32 0.0, %v4891
    %v4893 = vpop.f32.mrf.mxu0
    %4894 = vmatprep.mubr.f32.mxu0 0.0
    %4895 = vmatmul.mubr.f32.gmra.mxu0 %v4474
    %v4896 = vpop.f32.mrf.mxu0
    %v4897 = vadd.f32 0.0, %v4896
    %v4898 = vpop.f32.mrf.mxu0
    %4899 = vmatprep.mubr.f32.mxu0 0.0
    %4900 = vmatmul.mubr.f32.gmra.mxu0 %v4477
    %v4901 = vpop.f32.mrf.mxu0
    %v4902 = vadd.f32 0.0, %v4901
    %v4903 = vpop.f32.mrf.mxu0
    %4904 = vmatprep.mubr.f32.mxu0 0.0
    %4905 = vmatmul.mubr.f32.gmra.mxu0 %v4480
    %v4906 = vpop.f32.mrf.mxu0
    %v4907 = vadd.f32 0.0, %v4906
    %v4908 = vpop.f32.mrf.mxu0
    %4909 = vdwg.mxu0
    %v4910 = vadd.f32 %v4048, %v4552
    %v4911 = vadd.f32 %v4049, %v4557
    %v4912 = vadd.f32 %v4050, %v4562
    %v4913 = vadd.f32 %v4051, %v4567
    %v4914 = vadd.f32 %v4052, %v4572
    %v4915 = vadd.f32 %v4053, %v4577
    %v4916 = vadd.f32 %v4054, %v4582
    %v4917 = vadd.f32 %v4055, %v4587
    %v4918 = vadd.f32 %v4056, %v4592
    %v4919 = vadd.f32 %v4057, %v4597
    %v4920 = vadd.f32 %v4058, %v4602
    %v4921 = vadd.f32 %v4059, %v4607
    %v4922 = vadd.f32 %v4060, %v4612
    %v4923 = vadd.f32 %v4061, %v4617
    %v4924 = vadd.f32 %v4062, %v4622
    %v4925 = vadd.f32 %v4063, %v4627
    %v4926 = vadd.f32 %v4064, %v4632
    %v4927 = vadd.f32 %v4065, %v4637
    %v4928 = vadd.f32 %v4066, %v4642
    %v4929 = vadd.f32 %v4067, %v4647
    %v4930 = vadd.f32 %v4068, %v4652
    %v4931 = vadd.f32 %v4069, %v4657
    %v4932 = vadd.f32 %v4070, %v4662
    %v4933 = vadd.f32 %v4071, %v4667
    %v4934 = vadd.f32 %v4072, %v4672
    %v4935 = vadd.f32 %v4073, %v4677
    %v4936 = vadd.f32 %v4074, %v4682
    %v4937 = vadd.f32 %v4075, %v4687
    %v4938 = vadd.f32 %v4076, %v4692
    %v4939 = vadd.f32 %v4077, %v4697
    %v4940 = vadd.f32 %v4078, %v4702
    %v4941 = vadd.f32 %v4079, %v4707
    %v4942 = vadd.f32 %v4080, %v4712
    %v4943 = vadd.f32 %v4081, %v4717
    %v4944 = vadd.f32 %v4082, %v4722
    %v4945 = vadd.f32 %v4083, %v4727
    %v4946 = vadd.f32 %v4084, %v4732
    %v4947 = vadd.f32 %v4085, %v4737
    %v4948 = vadd.f32 %v4086, %v4742
    %v4949 = vadd.f32 %v4087, %v4747
    %v4950 = vadd.f32 %v4088, %v4752
    %v4951 = vadd.f32 %v4089, %v4757
    %v4952 = vadd.f32 %v4090, %v4762
    %v4953 = vadd.f32 %v4091, %v4767
    %v4954 = vadd.f32 %v4092, %v4772
    %v4955 = vadd.f32 %v4093, %v4777
    %v4956 = vadd.f32 %v4094, %v4782
    %v4957 = vadd.f32 %v4095, %v4787
    %v4958 = vadd.f32 %v4096, %v4792
    %v4959 = vadd.f32 %v4097, %v4797
    %v4960 = vadd.f32 %v4098, %v4802
    %v4961 = vadd.f32 %v4099, %v4807
    %v4962 = vadd.f32 %v4100, %v4812
    %v4963 = vadd.f32 %v4101, %v4817
    %v4964 = vadd.f32 %v4102, %v4822
    %v4965 = vadd.f32 %v4103, %v4827
    %v4966 = vadd.f32 %v4104, %v4832
    %v4967 = vadd.f32 %v4105, %v4837
    %v4968 = vadd.f32 %v4106, %v4842
    %v4969 = vadd.f32 %v4107, %v4847
    %v4970 = vadd.f32 %v4108, %v4852
    %v4971 = vadd.f32 %v4109, %v4857
    %v4972 = vadd.f32 %v4110, %v4862
    %v4973 = vadd.f32 %v4111, %v4867
    %v4974 = vadd.f32 %v4112, %v4872
    %v4975 = vadd.f32 %v4113, %v4877
    %v4976 = vadd.f32 %v4114, %v4882
    %v4977 = vadd.f32 %v4115, %v4887
    %v4978 = vadd.f32 %v4116, %v4892
    %v4979 = vadd.f32 %v4117, %v4897
    %v4980 = vadd.f32 %v4118, %v4902
    %v4981 = vadd.f32 %v4119, %v4907
    %s4982 = scalar_lea.vmem %s3, 24
    %v4983 = vld [vmem:[%s4982] sm:$0xf]
    %v4985 = vsel %vm387, %v165, 0
    %v4988 = vsel %vm387, %v166, 0
    %v4991 = vsel %vm387, %v167, 0
    %v4994 = vsel %vm387, %v168, 0
    %v4997 = vsel %vm387, %v169, 0
    %v5000 = vsel %vm387, %v170, 0
    %v5003 = vsel %vm387, %v171, 0
    %v5006 = vsel %vm387, %v172, 0
    %v5009 = vsel %vm387, %v173, 0
    %v5012 = vsel %vm387, %v174, 0
    %v5015 = vsel %vm387, %v175, 0
    %v5018 = vsel %vm387, %v176, 0
    %v5021 = vsel %vm387, %v177, 0
    %v5024 = vsel %vm387, %v178, 0
    %v5027 = vsel %vm387, %v179, 0
    %v5030 = vsel %vm387, %v180, 0
    %v5033 = vsel %vm387, %v181, 0
    %v5036 = vsel %vm387, %v182, 0
    %v5039 = vsel %vm387, %v183, 0
    %v5042 = vsel %vm387, %v184, 0
    %v5045 = vsel %vm387, %v185, 0
    %v5048 = vsel %vm387, %v186, 0
    %v5051 = vsel %vm387, %v187, 0
    %v5054 = vsel %vm387, %v188, 0
    %v5057 = vsel %vm387, %v189, 0
    %v5060 = vsel %vm387, %v190, 0
    %v5063 = vsel %vm387, %v191, 0
    %v5066 = vsel %vm387, %v192, 0
    %v5069 = vsel %vm387, %v193, 0
    %v5072 = vsel %vm387, %v194, 0
    %v5075 = vsel %vm387, %v195, 0
    %v5078 = vsel %vm387, %v196, 0
    %v5081 = vsel %vm387, %v197, 0
    %v5084 = vsel %vm387, %v198, 0
    %v5087 = vsel %vm387, %v199, 0
    %v5090 = vsel %vm387, %v200, 0
    %v5093 = vsel %vm387, %v201, 0
    %v5096 = vsel %vm387, %v202, 0
    %v5099 = vsel %vm387, %v203, 0
    %v5102 = vsel %vm387, %v204, 0
    %v5105 = vsel %vm387, %v205, 0
    %v5108 = vsel %vm387, %v206, 0
    %v5111 = vsel %vm387, %v207, 0
    %v5114 = vsel %vm387, %v208, 0
    %v5117 = vsel %vm387, %v209, 0
    %v5120 = vsel %vm387, %v210, 0
    %v5123 = vsel %vm387, %v211, 0
    %v5126 = vsel %vm387, %v212, 0
    %v5129 = vsel %vm387, %v213, 0
    %v5132 = vsel %vm387, %v214, 0
    %v5135 = vsel %vm387, %v215, 0
    %v5138 = vsel %vm387, %v216, 0
    %v5141 = vsel %vm387, %v217, 0
    %v5144 = vsel %vm387, %v218, 0
    %v5147 = vsel %vm387, %v219, 0
    %v5150 = vsel %vm387, %v220, 0
    %v5153 = vsel %vm387, %v221, 0
    %v5156 = vsel %vm387, %v222, 0
    %v5159 = vsel %vm387, %v223, 0
    %v5162 = vsel %vm387, %v224, 0
    %v5165 = vsel %vm387, %v225, 0
    %v5168 = vsel %vm387, %v226, 0
    %v5171 = vsel %vm387, %v227, 0
    %v5174 = vsel %vm387, %v228, 0
    %v5177 = vsel %vm387, %v229, 0
    %v5180 = vsel %vm387, %v230, 0
    %v5183 = vsel %vm387, %v231, 0
    %v5186 = vsel %vm387, %v232, 0
    %v5189 = vsel %vm387, %v233, 0
    %v5192 = vsel %vm387, %v234, 0
    %v5195 = vsel %vm387, %v235, 0
    %v5198 = vsel %vm387, %v236, 0
    %v5201 = vsel %vm604, %v4983, 0
    %5203 = vmatprep.subr.mxu0 0.0
    %5204 = vmatpush1.msra.mxu0 0.0
    %5205 = vmatprep.subr.mxu0 0.0
    %5206 = vmatpush1.msra.mxu0 0.0
    %5207 = vmatprep.subr.mxu0 0.0
    %5208 = vmatpush1.msra.mxu0 0.0
    %5209 = vmatprep.subr.mxu0 0.0
    %5210 = vmatpush1.msra.mxu0 0.0
    %5211 = vmatprep.subr.mxu0 0.0
    %5212 = vmatpush1.msra.mxu0 0.0
    %5213 = vmatprep.subr.mxu0 0.0
    %5214 = vmatpush1.msra.mxu0 0.0
    %5215 = vmatprep.subr.mxu0 0.0
    %5216 = vmatpush1.msra.mxu0 0.0
    %5217 = vmatprep.subr.mxu0 0.0
    %5218 = vmatpush1.msra.mxu0 0.0
    %5219 = vmatprep.subr.mxu0 0.0
    %5220 = vmatpush1.msra.mxu0 0.0
    %5221 = vmatprep.subr.mxu0 0.0
    %5222 = vmatpush1.msra.mxu0 0.0
    %5223 = vmatprep.subr.mxu0 0.0
    %5224 = vmatpush1.msra.mxu0 0.0
    %5225 = vmatprep.subr.mxu0 0.0
    %5226 = vmatpush1.msra.mxu0 0.0
    %5227 = vmatprep.subr.mxu0 0.0
    %5228 = vmatpush1.msra.mxu0 0.0
    %5229 = vmatprep.subr.mxu0 0.0
    %5230 = vmatpush1.msra.mxu0 0.0
    %5231 = vmatprep.subr.mxu0 0.0
    %5232 = vmatpush1.msra.mxu0 0.0
    %5233 = vmatprep.subr.mxu0 0.0
    %5234 = vmatpush1.msra.mxu0 %v5201
    %5235 = vmatprep.subr.mxu0 0.0
    %5236 = vmatpush2.msra.mxu0 0.0
    %5237 = vmatprep.subr.mxu0 0.0
    %5238 = vmatpush2.msra.mxu0 0.0
    %5239 = vmatprep.subr.mxu0 0.0
    %5240 = vmatpush2.msra.mxu0 0.0
    %5241 = vmatprep.subr.mxu0 0.0
    %5242 = vmatpush2.msra.mxu0 0.0
    %5243 = vmatprep.subr.mxu0 0.0
    %5244 = vmatpush2.msra.mxu0 0.0
    %5245 = vmatprep.subr.mxu0 0.0
    %5246 = vmatpush2.msra.mxu0 0.0
    %5247 = vmatprep.subr.mxu0 0.0
    %5248 = vmatpush2.msra.mxu0 0.0
    %5249 = vmatprep.subr.mxu0 0.0
    %5250 = vmatpush2.msra.mxu0 0.0
    %5251 = vmatprep.subr.mxu0 0.0
    %5252 = vmatpush2.msra.mxu0 0.0
    %5253 = vmatprep.subr.mxu0 0.0
    %5254 = vmatpush2.msra.mxu0 0.0
    %5255 = vmatprep.subr.mxu0 0.0
    %5256 = vmatpush2.msra.mxu0 0.0
    %5257 = vmatprep.subr.mxu0 0.0
    %5258 = vmatpush2.msra.mxu0 0.0
    %5259 = vmatprep.subr.mxu0 0.0
    %5260 = vmatpush2.msra.mxu0 0.0
    %5261 = vmatprep.subr.mxu0 0.0
    %5262 = vmatpush2.msra.mxu0 0.0
    %5263 = vmatprep.subr.mxu0 0.0
    %5264 = vmatpush2.msra.mxu0 0.0
    %5265 = vmatprep.subr.mxu0 0.0
    %5266 = vmatpush2.msra.mxu0 0.0
    %5267 = vmatprep.mubr.f32.mxu0 0.0
    %5268 = vmatmul.mubr.f32.gmra.mxu0 %v4985
    %v5269 = vpop.f32.mrf.mxu0
    %v5270 = vadd.f32 0.0, %v5269
    %v5271 = vpop.f32.mrf.mxu0
    %5272 = vmatprep.mubr.f32.mxu0 0.0
    %5273 = vmatmul.mubr.f32.gmra.mxu0 %v4988
    %v5274 = vpop.f32.mrf.mxu0
    %v5275 = vadd.f32 0.0, %v5274
    %v5276 = vpop.f32.mrf.mxu0
    %5277 = vmatprep.mubr.f32.mxu0 0.0
    %5278 = vmatmul.mubr.f32.gmra.mxu0 %v4991
    %v5279 = vpop.f32.mrf.mxu0
    %v5280 = vadd.f32 0.0, %v5279
    %v5281 = vpop.f32.mrf.mxu0
    %5282 = vmatprep.mubr.f32.mxu0 0.0
    %5283 = vmatmul.mubr.f32.gmra.mxu0 %v4994
    %v5284 = vpop.f32.mrf.mxu0
    %v5285 = vadd.f32 0.0, %v5284
    %v5286 = vpop.f32.mrf.mxu0
    %5287 = vmatprep.mubr.f32.mxu0 0.0
    %5288 = vmatmul.mubr.f32.gmra.mxu0 %v4997
    %v5289 = vpop.f32.mrf.mxu0
    %v5290 = vadd.f32 0.0, %v5289
    %v5291 = vpop.f32.mrf.mxu0
    %5292 = vmatprep.mubr.f32.mxu0 0.0
    %5293 = vmatmul.mubr.f32.gmra.mxu0 %v5000
    %v5294 = vpop.f32.mrf.mxu0
    %v5295 = vadd.f32 0.0, %v5294
    %v5296 = vpop.f32.mrf.mxu0
    %5297 = vmatprep.mubr.f32.mxu0 0.0
    %5298 = vmatmul.mubr.f32.gmra.mxu0 %v5003
    %v5299 = vpop.f32.mrf.mxu0
    %v5300 = vadd.f32 0.0, %v5299
    %v5301 = vpop.f32.mrf.mxu0
    %5302 = vmatprep.mubr.f32.mxu0 0.0
    %5303 = vmatmul.mubr.f32.gmra.mxu0 %v5006
    %v5304 = vpop.f32.mrf.mxu0
    %v5305 = vadd.f32 0.0, %v5304
    %v5306 = vpop.f32.mrf.mxu0
    %5307 = vmatprep.mubr.f32.mxu0 0.0
    %5308 = vmatmul.mubr.f32.gmra.mxu0 %v5009
    %v5309 = vpop.f32.mrf.mxu0
    %v5310 = vadd.f32 0.0, %v5309
    %v5311 = vpop.f32.mrf.mxu0
    %5312 = vmatprep.mubr.f32.mxu0 0.0
    %5313 = vmatmul.mubr.f32.gmra.mxu0 %v5012
    %v5314 = vpop.f32.mrf.mxu0
    %v5315 = vadd.f32 0.0, %v5314
    %v5316 = vpop.f32.mrf.mxu0
    %5317 = vmatprep.mubr.f32.mxu0 0.0
    %5318 = vmatmul.mubr.f32.gmra.mxu0 %v5015
    %v5319 = vpop.f32.mrf.mxu0
    %v5320 = vadd.f32 0.0, %v5319
    %v5321 = vpop.f32.mrf.mxu0
    %5322 = vmatprep.mubr.f32.mxu0 0.0
    %5323 = vmatmul.mubr.f32.gmra.mxu0 %v5018
    %v5324 = vpop.f32.mrf.mxu0
    %v5325 = vadd.f32 0.0, %v5324
    %v5326 = vpop.f32.mrf.mxu0
    %5327 = vmatprep.mubr.f32.mxu0 0.0
    %5328 = vmatmul.mubr.f32.gmra.mxu0 %v5021
    %v5329 = vpop.f32.mrf.mxu0
    %v5330 = vadd.f32 0.0, %v5329
    %v5331 = vpop.f32.mrf.mxu0
    %5332 = vmatprep.mubr.f32.mxu0 0.0
    %5333 = vmatmul.mubr.f32.gmra.mxu0 %v5024
    %v5334 = vpop.f32.mrf.mxu0
    %v5335 = vadd.f32 0.0, %v5334
    %v5336 = vpop.f32.mrf.mxu0
    %5337 = vmatprep.mubr.f32.mxu0 0.0
    %5338 = vmatmul.mubr.f32.gmra.mxu0 %v5027
    %v5339 = vpop.f32.mrf.mxu0
    %v5340 = vadd.f32 0.0, %v5339
    %v5341 = vpop.f32.mrf.mxu0
    %5342 = vmatprep.mubr.f32.mxu0 0.0
    %5343 = vmatmul.mubr.f32.gmra.mxu0 %v5030
    %v5344 = vpop.f32.mrf.mxu0
    %v5345 = vadd.f32 0.0, %v5344
    %v5346 = vpop.f32.mrf.mxu0
    %5347 = vmatprep.mubr.f32.mxu0 0.0
    %5348 = vmatmul.mubr.f32.gmra.mxu0 %v5033
    %v5349 = vpop.f32.mrf.mxu0
    %v5350 = vadd.f32 0.0, %v5349
    %v5351 = vpop.f32.mrf.mxu0
    %5352 = vmatprep.mubr.f32.mxu0 0.0
    %5353 = vmatmul.mubr.f32.gmra.mxu0 %v5036
    %v5354 = vpop.f32.mrf.mxu0
    %v5355 = vadd.f32 0.0, %v5354
    %v5356 = vpop.f32.mrf.mxu0
    %5357 = vmatprep.mubr.f32.mxu0 0.0
    %5358 = vmatmul.mubr.f32.gmra.mxu0 %v5039
    %v5359 = vpop.f32.mrf.mxu0
    %v5360 = vadd.f32 0.0, %v5359
    %v5361 = vpop.f32.mrf.mxu0
    %5362 = vmatprep.mubr.f32.mxu0 0.0
    %5363 = vmatmul.mubr.f32.gmra.mxu0 %v5042
    %v5364 = vpop.f32.mrf.mxu0
    %v5365 = vadd.f32 0.0, %v5364
    %v5366 = vpop.f32.mrf.mxu0
    %5367 = vmatprep.mubr.f32.mxu0 0.0
    %5368 = vmatmul.mubr.f32.gmra.mxu0 %v5045
    %v5369 = vpop.f32.mrf.mxu0
    %v5370 = vadd.f32 0.0, %v5369
    %v5371 = vpop.f32.mrf.mxu0
    %5372 = vmatprep.mubr.f32.mxu0 0.0
    %5373 = vmatmul.mubr.f32.gmra.mxu0 %v5048
    %v5374 = vpop.f32.mrf.mxu0
    %v5375 = vadd.f32 0.0, %v5374
    %v5376 = vpop.f32.mrf.mxu0
    %5377 = vmatprep.mubr.f32.mxu0 0.0
    %5378 = vmatmul.mubr.f32.gmra.mxu0 %v5051
    %v5379 = vpop.f32.mrf.mxu0
    %v5380 = vadd.f32 0.0, %v5379
    %v5381 = vpop.f32.mrf.mxu0
    %5382 = vmatprep.mubr.f32.mxu0 0.0
    %5383 = vmatmul.mubr.f32.gmra.mxu0 %v5054
    %v5384 = vpop.f32.mrf.mxu0
    %v5385 = vadd.f32 0.0, %v5384
    %v5386 = vpop.f32.mrf.mxu0
    %5387 = vmatprep.mubr.f32.mxu0 0.0
    %5388 = vmatmul.mubr.f32.gmra.mxu0 %v5057
    %v5389 = vpop.f32.mrf.mxu0
    %v5390 = vadd.f32 0.0, %v5389
    %v5391 = vpop.f32.mrf.mxu0
    %5392 = vmatprep.mubr.f32.mxu0 0.0
    %5393 = vmatmul.mubr.f32.gmra.mxu0 %v5060
    %v5394 = vpop.f32.mrf.mxu0
    %v5395 = vadd.f32 0.0, %v5394
    %v5396 = vpop.f32.mrf.mxu0
    %5397 = vmatprep.mubr.f32.mxu0 0.0
    %5398 = vmatmul.mubr.f32.gmra.mxu0 %v5063
    %v5399 = vpop.f32.mrf.mxu0
    %v5400 = vadd.f32 0.0, %v5399
    %v5401 = vpop.f32.mrf.mxu0
    %5402 = vmatprep.mubr.f32.mxu0 0.0
    %5403 = vmatmul.mubr.f32.gmra.mxu0 %v5066
    %v5404 = vpop.f32.mrf.mxu0
    %v5405 = vadd.f32 0.0, %v5404
    %v5406 = vpop.f32.mrf.mxu0
    %5407 = vmatprep.mubr.f32.mxu0 0.0
    %5408 = vmatmul.mubr.f32.gmra.mxu0 %v5069
    %v5409 = vpop.f32.mrf.mxu0
    %v5410 = vadd.f32 0.0, %v5409
    %v5411 = vpop.f32.mrf.mxu0
    %5412 = vmatprep.mubr.f32.mxu0 0.0
    %5413 = vmatmul.mubr.f32.gmra.mxu0 %v5072
    %v5414 = vpop.f32.mrf.mxu0
    %v5415 = vadd.f32 0.0, %v5414
    %v5416 = vpop.f32.mrf.mxu0
    %5417 = vmatprep.mubr.f32.mxu0 0.0
    %5418 = vmatmul.mubr.f32.gmra.mxu0 %v5075
    %v5419 = vpop.f32.mrf.mxu0
    %v5420 = vadd.f32 0.0, %v5419
    %v5421 = vpop.f32.mrf.mxu0
    %5422 = vmatprep.mubr.f32.mxu0 0.0
    %5423 = vmatmul.mubr.f32.gmra.mxu0 %v5078
    %v5424 = vpop.f32.mrf.mxu0
    %v5425 = vadd.f32 0.0, %v5424
    %v5426 = vpop.f32.mrf.mxu0
    %5427 = vmatprep.mubr.f32.mxu0 0.0
    %5428 = vmatmul.mubr.f32.gmra.mxu0 %v5081
    %v5429 = vpop.f32.mrf.mxu0
    %v5430 = vadd.f32 0.0, %v5429
    %v5431 = vpop.f32.mrf.mxu0
    %5432 = vmatprep.mubr.f32.mxu0 0.0
    %5433 = vmatmul.mubr.f32.gmra.mxu0 %v5084
    %v5434 = vpop.f32.mrf.mxu0
    %v5435 = vadd.f32 0.0, %v5434
    %v5436 = vpop.f32.mrf.mxu0
    %5437 = vmatprep.mubr.f32.mxu0 0.0
    %5438 = vmatmul.mubr.f32.gmra.mxu0 %v5087
    %v5439 = vpop.f32.mrf.mxu0
    %v5440 = vadd.f32 0.0, %v5439
    %v5441 = vpop.f32.mrf.mxu0
    %5442 = vmatprep.mubr.f32.mxu0 0.0
    %5443 = vmatmul.mubr.f32.gmra.mxu0 %v5090
    %v5444 = vpop.f32.mrf.mxu0
    %v5445 = vadd.f32 0.0, %v5444
    %v5446 = vpop.f32.mrf.mxu0
    %5447 = vmatprep.mubr.f32.mxu0 0.0
    %5448 = vmatmul.mubr.f32.gmra.mxu0 %v5093
    %v5449 = vpop.f32.mrf.mxu0
    %v5450 = vadd.f32 0.0, %v5449
    %v5451 = vpop.f32.mrf.mxu0
    %5452 = vmatprep.mubr.f32.mxu0 0.0
    %5453 = vmatmul.mubr.f32.gmra.mxu0 %v5096
    %v5454 = vpop.f32.mrf.mxu0
    %v5455 = vadd.f32 0.0, %v5454
    %v5456 = vpop.f32.mrf.mxu0
    %5457 = vmatprep.mubr.f32.mxu0 0.0
    %5458 = vmatmul.mubr.f32.gmra.mxu0 %v5099
    %v5459 = vpop.f32.mrf.mxu0
    %v5460 = vadd.f32 0.0, %v5459
    %v5461 = vpop.f32.mrf.mxu0
    %5462 = vmatprep.mubr.f32.mxu0 0.0
    %5463 = vmatmul.mubr.f32.gmra.mxu0 %v5102
    %v5464 = vpop.f32.mrf.mxu0
    %v5465 = vadd.f32 0.0, %v5464
    %v5466 = vpop.f32.mrf.mxu0
    %5467 = vmatprep.mubr.f32.mxu0 0.0
    %5468 = vmatmul.mubr.f32.gmra.mxu0 %v5105
    %v5469 = vpop.f32.mrf.mxu0
    %v5470 = vadd.f32 0.0, %v5469
    %v5471 = vpop.f32.mrf.mxu0
    %5472 = vmatprep.mubr.f32.mxu0 0.0
    %5473 = vmatmul.mubr.f32.gmra.mxu0 %v5108
    %v5474 = vpop.f32.mrf.mxu0
    %v5475 = vadd.f32 0.0, %v5474
    %v5476 = vpop.f32.mrf.mxu0
    %5477 = vmatprep.mubr.f32.mxu0 0.0
    %5478 = vmatmul.mubr.f32.gmra.mxu0 %v5111
    %v5479 = vpop.f32.mrf.mxu0
    %v5480 = vadd.f32 0.0, %v5479
    %v5481 = vpop.f32.mrf.mxu0
    %5482 = vmatprep.mubr.f32.mxu0 0.0
    %5483 = vmatmul.mubr.f32.gmra.mxu0 %v5114
    %v5484 = vpop.f32.mrf.mxu0
    %v5485 = vadd.f32 0.0, %v5484
    %v5486 = vpop.f32.mrf.mxu0
    %5487 = vmatprep.mubr.f32.mxu0 0.0
    %5488 = vmatmul.mubr.f32.gmra.mxu0 %v5117
    %v5489 = vpop.f32.mrf.mxu0
    %v5490 = vadd.f32 0.0, %v5489
    %v5491 = vpop.f32.mrf.mxu0
    %5492 = vmatprep.mubr.f32.mxu0 0.0
    %5493 = vmatmul.mubr.f32.gmra.mxu0 %v5120
    %v5494 = vpop.f32.mrf.mxu0
    %v5495 = vadd.f32 0.0, %v5494
    %v5496 = vpop.f32.mrf.mxu0
    %5497 = vmatprep.mubr.f32.mxu0 0.0
    %5498 = vmatmul.mubr.f32.gmra.mxu0 %v5123
    %v5499 = vpop.f32.mrf.mxu0
    %v5500 = vadd.f32 0.0, %v5499
    %v5501 = vpop.f32.mrf.mxu0
    %5502 = vmatprep.mubr.f32.mxu0 0.0
    %5503 = vmatmul.mubr.f32.gmra.mxu0 %v5126
    %v5504 = vpop.f32.mrf.mxu0
    %v5505 = vadd.f32 0.0, %v5504
    %v5506 = vpop.f32.mrf.mxu0
    %5507 = vmatprep.mubr.f32.mxu0 0.0
    %5508 = vmatmul.mubr.f32.gmra.mxu0 %v5129
    %v5509 = vpop.f32.mrf.mxu0
    %v5510 = vadd.f32 0.0, %v5509
    %v5511 = vpop.f32.mrf.mxu0
    %5512 = vmatprep.mubr.f32.mxu0 0.0
    %5513 = vmatmul.mubr.f32.gmra.mxu0 %v5132
    %v5514 = vpop.f32.mrf.mxu0
    %v5515 = vadd.f32 0.0, %v5514
    %v5516 = vpop.f32.mrf.mxu0
    %5517 = vmatprep.mubr.f32.mxu0 0.0
    %5518 = vmatmul.mubr.f32.gmra.mxu0 %v5135
    %v5519 = vpop.f32.mrf.mxu0
    %v5520 = vadd.f32 0.0, %v5519
    %v5521 = vpop.f32.mrf.mxu0
    %5522 = vmatprep.mubr.f32.mxu0 0.0
    %5523 = vmatmul.mubr.f32.gmra.mxu0 %v5138
    %v5524 = vpop.f32.mrf.mxu0
    %v5525 = vadd.f32 0.0, %v5524
    %v5526 = vpop.f32.mrf.mxu0
    %5527 = vmatprep.mubr.f32.mxu0 0.0
    %5528 = vmatmul.mubr.f32.gmra.mxu0 %v5141
    %v5529 = vpop.f32.mrf.mxu0
    %v5530 = vadd.f32 0.0, %v5529
    %v5531 = vpop.f32.mrf.mxu0
    %5532 = vmatprep.mubr.f32.mxu0 0.0
    %5533 = vmatmul.mubr.f32.gmra.mxu0 %v5144
    %v5534 = vpop.f32.mrf.mxu0
    %v5535 = vadd.f32 0.0, %v5534
    %v5536 = vpop.f32.mrf.mxu0
    %5537 = vmatprep.mubr.f32.mxu0 0.0
    %5538 = vmatmul.mubr.f32.gmra.mxu0 %v5147
    %v5539 = vpop.f32.mrf.mxu0
    %v5540 = vadd.f32 0.0, %v5539
    %v5541 = vpop.f32.mrf.mxu0
    %5542 = vmatprep.mubr.f32.mxu0 0.0
    %5543 = vmatmul.mubr.f32.gmra.mxu0 %v5150
    %v5544 = vpop.f32.mrf.mxu0
    %v5545 = vadd.f32 0.0, %v5544
    %v5546 = vpop.f32.mrf.mxu0
    %5547 = vmatprep.mubr.f32.mxu0 0.0
    %5548 = vmatmul.mubr.f32.gmra.mxu0 %v5153
    %v5549 = vpop.f32.mrf.mxu0
    %v5550 = vadd.f32 0.0, %v5549
    %v5551 = vpop.f32.mrf.mxu0
    %5552 = vmatprep.mubr.f32.mxu0 0.0
    %5553 = vmatmul.mubr.f32.gmra.mxu0 %v5156
    %v5554 = vpop.f32.mrf.mxu0
    %v5555 = vadd.f32 0.0, %v5554
    %v5556 = vpop.f32.mrf.mxu0
    %5557 = vmatprep.mubr.f32.mxu0 0.0
    %5558 = vmatmul.mubr.f32.gmra.mxu0 %v5159
    %v5559 = vpop.f32.mrf.mxu0
    %v5560 = vadd.f32 0.0, %v5559
    %v5561 = vpop.f32.mrf.mxu0
    %5562 = vmatprep.mubr.f32.mxu0 0.0
    %5563 = vmatmul.mubr.f32.gmra.mxu0 %v5162
    %v5564 = vpop.f32.mrf.mxu0
    %v5565 = vadd.f32 0.0, %v5564
    %v5566 = vpop.f32.mrf.mxu0
    %5567 = vmatprep.mubr.f32.mxu0 0.0
    %5568 = vmatmul.mubr.f32.gmra.mxu0 %v5165
    %v5569 = vpop.f32.mrf.mxu0
    %v5570 = vadd.f32 0.0, %v5569
    %v5571 = vpop.f32.mrf.mxu0
    %5572 = vmatprep.mubr.f32.mxu0 0.0
    %5573 = vmatmul.mubr.f32.gmra.mxu0 %v5168
    %v5574 = vpop.f32.mrf.mxu0
    %v5575 = vadd.f32 0.0, %v5574
    %v5576 = vpop.f32.mrf.mxu0
    %5577 = vmatprep.mubr.f32.mxu0 0.0
    %5578 = vmatmul.mubr.f32.gmra.mxu0 %v5171
    %v5579 = vpop.f32.mrf.mxu0
    %v5580 = vadd.f32 0.0, %v5579
    %v5581 = vpop.f32.mrf.mxu0
    %5582 = vmatprep.mubr.f32.mxu0 0.0
    %5583 = vmatmul.mubr.f32.gmra.mxu0 %v5174
    %v5584 = vpop.f32.mrf.mxu0
    %v5585 = vadd.f32 0.0, %v5584
    %v5586 = vpop.f32.mrf.mxu0
    %5587 = vmatprep.mubr.f32.mxu0 0.0
    %5588 = vmatmul.mubr.f32.gmra.mxu0 %v5177
    %v5589 = vpop.f32.mrf.mxu0
    %v5590 = vadd.f32 0.0, %v5589
    %v5591 = vpop.f32.mrf.mxu0
    %5592 = vmatprep.mubr.f32.mxu0 0.0
    %5593 = vmatmul.mubr.f32.gmra.mxu0 %v5180
    %v5594 = vpop.f32.mrf.mxu0
    %v5595 = vadd.f32 0.0, %v5594
    %v5596 = vpop.f32.mrf.mxu0
    %5597 = vmatprep.mubr.f32.mxu0 0.0
    %5598 = vmatmul.mubr.f32.gmra.mxu0 %v5183
    %v5599 = vpop.f32.mrf.mxu0
    %v5600 = vadd.f32 0.0, %v5599
    %v5601 = vpop.f32.mrf.mxu0
    %5602 = vmatprep.mubr.f32.mxu0 0.0
    %5603 = vmatmul.mubr.f32.gmra.mxu0 %v5186
    %v5604 = vpop.f32.mrf.mxu0
    %v5605 = vadd.f32 0.0, %v5604
    %v5606 = vpop.f32.mrf.mxu0
    %5607 = vmatprep.mubr.f32.mxu0 0.0
    %5608 = vmatmul.mubr.f32.gmra.mxu0 %v5189
    %v5609 = vpop.f32.mrf.mxu0
    %v5610 = vadd.f32 0.0, %v5609
    %v5611 = vpop.f32.mrf.mxu0
    %5612 = vmatprep.mubr.f32.mxu0 0.0
    %5613 = vmatmul.mubr.f32.gmra.mxu0 %v5192
    %v5614 = vpop.f32.mrf.mxu0
    %v5615 = vadd.f32 0.0, %v5614
    %v5616 = vpop.f32.mrf.mxu0
    %5617 = vmatprep.mubr.f32.mxu0 0.0
    %5618 = vmatmul.mubr.f32.gmra.mxu0 %v5195
    %v5619 = vpop.f32.mrf.mxu0
    %v5620 = vadd.f32 0.0, %v5619
    %v5621 = vpop.f32.mrf.mxu0
    %5622 = vmatprep.mubr.f32.mxu0 0.0
    %5623 = vmatmul.mubr.f32.gmra.mxu0 %v5198
    %v5624 = vpop.f32.mrf.mxu0
    %v5625 = vadd.f32 0.0, %v5624
    %v5626 = vpop.f32.mrf.mxu0
    %5627 = vdwg.mxu0
    %v5628 = vadd.f32 %v4910, %v5270
    %v5629 = vadd.f32 %v4911, %v5275
    %v5630 = vadd.f32 %v4912, %v5280
    %v5631 = vadd.f32 %v4913, %v5285
    %v5632 = vadd.f32 %v4914, %v5290
    %v5633 = vadd.f32 %v4915, %v5295
    %v5634 = vadd.f32 %v4916, %v5300
    %v5635 = vadd.f32 %v4917, %v5305
    %v5636 = vadd.f32 %v4918, %v5310
    %v5637 = vadd.f32 %v4919, %v5315
    %v5638 = vadd.f32 %v4920, %v5320
    %v5639 = vadd.f32 %v4921, %v5325
    %v5640 = vadd.f32 %v4922, %v5330
    %v5641 = vadd.f32 %v4923, %v5335
    %v5642 = vadd.f32 %v4924, %v5340
    %v5643 = vadd.f32 %v4925, %v5345
    %v5644 = vadd.f32 %v4926, %v5350
    %v5645 = vadd.f32 %v4927, %v5355
    %v5646 = vadd.f32 %v4928, %v5360
    %v5647 = vadd.f32 %v4929, %v5365
    %v5648 = vadd.f32 %v4930, %v5370
    %v5649 = vadd.f32 %v4931, %v5375
    %v5650 = vadd.f32 %v4932, %v5380
    %v5651 = vadd.f32 %v4933, %v5385
    %v5652 = vadd.f32 %v4934, %v5390
    %v5653 = vadd.f32 %v4935, %v5395
    %v5654 = vadd.f32 %v4936, %v5400
    %v5655 = vadd.f32 %v4937, %v5405
    %v5656 = vadd.f32 %v4938, %v5410
    %v5657 = vadd.f32 %v4939, %v5415
    %v5658 = vadd.f32 %v4940, %v5420
    %v5659 = vadd.f32 %v4941, %v5425
    %v5660 = vadd.f32 %v4942, %v5430
    %v5661 = vadd.f32 %v4943, %v5435
    %v5662 = vadd.f32 %v4944, %v5440
    %v5663 = vadd.f32 %v4945, %v5445
    %v5664 = vadd.f32 %v4946, %v5450
    %v5665 = vadd.f32 %v4947, %v5455
    %v5666 = vadd.f32 %v4948, %v5460
    %v5667 = vadd.f32 %v4949, %v5465
    %v5668 = vadd.f32 %v4950, %v5470
    %v5669 = vadd.f32 %v4951, %v5475
    %v5670 = vadd.f32 %v4952, %v5480
    %v5671 = vadd.f32 %v4953, %v5485
    %v5672 = vadd.f32 %v4954, %v5490
    %v5673 = vadd.f32 %v4955, %v5495
    %v5674 = vadd.f32 %v4956, %v5500
    %v5675 = vadd.f32 %v4957, %v5505
    %v5676 = vadd.f32 %v4958, %v5510
    %v5677 = vadd.f32 %v4959, %v5515
    %v5678 = vadd.f32 %v4960, %v5520
    %v5679 = vadd.f32 %v4961, %v5525
    %v5680 = vadd.f32 %v4962, %v5530
    %v5681 = vadd.f32 %v4963, %v5535
    %v5682 = vadd.f32 %v4964, %v5540
    %v5683 = vadd.f32 %v4965, %v5545
    %v5684 = vadd.f32 %v4966, %v5550
    %v5685 = vadd.f32 %v4967, %v5555
    %v5686 = vadd.f32 %v4968, %v5560
    %v5687 = vadd.f32 %v4969, %v5565
    %v5688 = vadd.f32 %v4970, %v5570
    %v5689 = vadd.f32 %v4971, %v5575
    %v5690 = vadd.f32 %v4972, %v5580
    %v5691 = vadd.f32 %v4973, %v5585
    %v5692 = vadd.f32 %v4974, %v5590
    %v5693 = vadd.f32 %v4975, %v5595
    %v5694 = vadd.f32 %v4976, %v5600
    %v5695 = vadd.f32 %v4977, %v5605
    %v5696 = vadd.f32 %v4978, %v5610
    %v5697 = vadd.f32 %v4979, %v5615
    %v5698 = vadd.f32 %v4980, %v5620
    %v5699 = vadd.f32 %v4981, %v5625
    %v5700 = vrot.slane %v165, 1
    %v5701 = vrot.slane %v166, 1
    %v5702 = vrot.slane %v167, 1
    %v5703 = vrot.slane %v168, 1
    %v5704 = vrot.slane %v169, 1
    %v5705 = vrot.slane %v170, 1
    %v5706 = vrot.slane %v171, 1
    %v5707 = vrot.slane %v172, 1
    %v5708 = vrot.slane %v173, 1
    %v5709 = vrot.slane %v174, 1
    %v5710 = vrot.slane %v175, 1
    %v5711 = vrot.slane %v176, 1
    %v5712 = vrot.slane %v177, 1
    %v5713 = vrot.slane %v178, 1
    %v5714 = vrot.slane %v179, 1
    %v5715 = vrot.slane %v180, 1
    %v5716 = vrot.slane %v181, 1
    %v5717 = vrot.slane %v182, 1
    %v5718 = vrot.slane %v183, 1
    %v5719 = vrot.slane %v184, 1
    %v5720 = vrot.slane %v185, 1
    %v5721 = vrot.slane %v186, 1
    %v5722 = vrot.slane %v187, 1
    %v5723 = vrot.slane %v188, 1
    %v5724 = vrot.slane %v189, 1
    %v5725 = vrot.slane %v190, 1
    %v5726 = vrot.slane %v191, 1
    %v5727 = vrot.slane %v192, 1
    %v5728 = vrot.slane %v193, 1
    %v5729 = vrot.slane %v194, 1
    %v5730 = vrot.slane %v195, 1
    %v5731 = vrot.slane %v196, 1
    %v5732 = vrot.slane %v197, 1
    %v5733 = vrot.slane %v198, 1
    %v5734 = vrot.slane %v199, 1
    %v5735 = vrot.slane %v200, 1
    %v5736 = vrot.slane %v201, 1
    %v5737 = vrot.slane %v202, 1
    %v5738 = vrot.slane %v203, 1
    %v5739 = vrot.slane %v204, 1
    %v5740 = vrot.slane %v205, 1
    %v5741 = vrot.slane %v206, 1
    %v5742 = vrot.slane %v207, 1
    %v5743 = vrot.slane %v208, 1
    %v5744 = vrot.slane %v209, 1
    %v5745 = vrot.slane %v210, 1
    %v5746 = vrot.slane %v211, 1
    %v5747 = vrot.slane %v212, 1
    %v5748 = vrot.slane %v213, 1
    %v5749 = vrot.slane %v214, 1
    %v5750 = vrot.slane %v215, 1
    %v5751 = vrot.slane %v216, 1
    %v5752 = vrot.slane %v217, 1
    %v5753 = vrot.slane %v218, 1
    %v5754 = vrot.slane %v219, 1
    %v5755 = vrot.slane %v220, 1
    %v5756 = vrot.slane %v221, 1
    %v5757 = vrot.slane %v222, 1
    %v5758 = vrot.slane %v223, 1
    %v5759 = vrot.slane %v224, 1
    %v5760 = vrot.slane %v225, 1
    %v5761 = vrot.slane %v226, 1
    %v5762 = vrot.slane %v227, 1
    %v5763 = vrot.slane %v228, 1
    %v5764 = vrot.slane %v229, 1
    %v5765 = vrot.slane %v230, 1
    %v5766 = vrot.slane %v231, 1
    %v5767 = vrot.slane %v232, 1
    %v5768 = vrot.slane %v233, 1
    %v5769 = vrot.slane %v234, 1
    %v5770 = vrot.slane %v235, 1
    %v5771 = vrot.slane %v236, 1
    %v5772 = vsel %vm312, %v5770, %v5771
    %v5773 = vsel %vm312, %v5769, %v5770
    %v5774 = vsel %vm312, %v5768, %v5769
    %v5775 = vsel %vm312, %v5767, %v5768
    %v5776 = vsel %vm312, %v5766, %v5767
    %v5777 = vsel %vm312, %v5765, %v5766
    %v5778 = vsel %vm312, %v5764, %v5765
    %v5779 = vsel %vm312, %v5763, %v5764
    %v5780 = vsel %vm312, %v5762, %v5763
    %v5781 = vsel %vm312, %v5761, %v5762
    %v5782 = vsel %vm312, %v5760, %v5761
    %v5783 = vsel %vm312, %v5759, %v5760
    %v5784 = vsel %vm312, %v5758, %v5759
    %v5785 = vsel %vm312, %v5757, %v5758
    %v5786 = vsel %vm312, %v5756, %v5757
    %v5787 = vsel %vm312, %v5755, %v5756
    %v5788 = vsel %vm312, %v5754, %v5755
    %v5789 = vsel %vm312, %v5753, %v5754
    %v5790 = vsel %vm312, %v5752, %v5753
    %v5791 = vsel %vm312, %v5751, %v5752
    %v5792 = vsel %vm312, %v5750, %v5751
    %v5793 = vsel %vm312, %v5749, %v5750
    %v5794 = vsel %vm312, %v5748, %v5749
    %v5795 = vsel %vm312, %v5747, %v5748
    %v5796 = vsel %vm312, %v5746, %v5747
    %v5797 = vsel %vm312, %v5745, %v5746
    %v5798 = vsel %vm312, %v5744, %v5745
    %v5799 = vsel %vm312, %v5743, %v5744
    %v5800 = vsel %vm312, %v5742, %v5743
    %v5801 = vsel %vm312, %v5741, %v5742
    %v5802 = vsel %vm312, %v5740, %v5741
    %v5803 = vsel %vm312, %v5739, %v5740
    %v5804 = vsel %vm312, %v5738, %v5739
    %v5805 = vsel %vm312, %v5737, %v5738
    %v5806 = vsel %vm312, %v5736, %v5737
    %v5807 = vsel %vm312, %v5735, %v5736
    %v5808 = vsel %vm312, %v5734, %v5735
    %v5809 = vsel %vm312, %v5733, %v5734
    %v5810 = vsel %vm312, %v5732, %v5733
    %v5811 = vsel %vm312, %v5731, %v5732
    %v5812 = vsel %vm312, %v5730, %v5731
    %v5813 = vsel %vm312, %v5729, %v5730
    %v5814 = vsel %vm312, %v5728, %v5729
    %v5815 = vsel %vm312, %v5727, %v5728
    %v5816 = vsel %vm312, %v5726, %v5727
    %v5817 = vsel %vm312, %v5725, %v5726
    %v5818 = vsel %vm312, %v5724, %v5725
    %v5819 = vsel %vm312, %v5723, %v5724
    %v5820 = vsel %vm312, %v5722, %v5723
    %v5821 = vsel %vm312, %v5721, %v5722
    %v5822 = vsel %vm312, %v5720, %v5721
    %v5823 = vsel %vm312, %v5719, %v5720
    %v5824 = vsel %vm312, %v5718, %v5719
    %v5825 = vsel %vm312, %v5717, %v5718
    %v5826 = vsel %vm312, %v5716, %v5717
    %v5827 = vsel %vm312, %v5715, %v5716
    %v5828 = vsel %vm312, %v5714, %v5715
    %v5829 = vsel %vm312, %v5713, %v5714
    %v5830 = vsel %vm312, %v5712, %v5713
    %v5831 = vsel %vm312, %v5711, %v5712
    %v5832 = vsel %vm312, %v5710, %v5711
    %v5833 = vsel %vm312, %v5709, %v5710
    %v5834 = vsel %vm312, %v5708, %v5709
    %v5835 = vsel %vm312, %v5707, %v5708
    %v5836 = vsel %vm312, %v5706, %v5707
    %v5837 = vsel %vm312, %v5705, %v5706
    %v5838 = vsel %vm312, %v5704, %v5705
    %v5839 = vsel %vm312, %v5703, %v5704
    %v5840 = vsel %vm312, %v5702, %v5703
    %v5841 = vsel %vm312, %v5701, %v5702
    %v5842 = vsel %vm312, %v5700, %v5701
    %v5843 = vsel %vm312, %v5771, %v5700
    %s5844 = scalar_lea.vmem %s3, 28
    %v5845 = vld [vmem:[%s5844] sm:$0xf]
    %v5847 = vsel %vm387, %v5842, 0
    %v5850 = vsel %vm387, %v5841, 0
    %v5853 = vsel %vm387, %v5840, 0
    %v5856 = vsel %vm387, %v5839, 0
    %v5859 = vsel %vm387, %v5838, 0
    %v5862 = vsel %vm387, %v5837, 0
    %v5865 = vsel %vm387, %v5836, 0
    %v5868 = vsel %vm387, %v5835, 0
    %v5871 = vsel %vm387, %v5834, 0
    %v5874 = vsel %vm387, %v5833, 0
    %v5877 = vsel %vm387, %v5832, 0
    %v5880 = vsel %vm387, %v5831, 0
    %v5883 = vsel %vm387, %v5830, 0
    %v5886 = vsel %vm387, %v5829, 0
    %v5889 = vsel %vm387, %v5828, 0
    %v5892 = vsel %vm387, %v5827, 0
    %v5895 = vsel %vm387, %v5826, 0
    %v5898 = vsel %vm387, %v5825, 0
    %v5901 = vsel %vm387, %v5824, 0
    %v5904 = vsel %vm387, %v5823, 0
    %v5907 = vsel %vm387, %v5822, 0
    %v5910 = vsel %vm387, %v5821, 0
    %v5913 = vsel %vm387, %v5820, 0
    %v5916 = vsel %vm387, %v5819, 0
    %v5919 = vsel %vm387, %v5818, 0
    %v5922 = vsel %vm387, %v5817, 0
    %v5925 = vsel %vm387, %v5816, 0
    %v5928 = vsel %vm387, %v5815, 0
    %v5931 = vsel %vm387, %v5814, 0
    %v5934 = vsel %vm387, %v5813, 0
    %v5937 = vsel %vm387, %v5812, 0
    %v5940 = vsel %vm387, %v5811, 0
    %v5943 = vsel %vm387, %v5810, 0
    %v5946 = vsel %vm387, %v5809, 0
    %v5949 = vsel %vm387, %v5808, 0
    %v5952 = vsel %vm387, %v5807, 0
    %v5955 = vsel %vm387, %v5806, 0
    %v5958 = vsel %vm387, %v5805, 0
    %v5961 = vsel %vm387, %v5804, 0
    %v5964 = vsel %vm387, %v5803, 0
    %v5967 = vsel %vm387, %v5802, 0
    %v5970 = vsel %vm387, %v5801, 0
    %v5973 = vsel %vm387, %v5800, 0
    %v5976 = vsel %vm387, %v5799, 0
    %v5979 = vsel %vm387, %v5798, 0
    %v5982 = vsel %vm387, %v5797, 0
    %v5985 = vsel %vm387, %v5796, 0
    %v5988 = vsel %vm387, %v5795, 0
    %v5991 = vsel %vm387, %v5794, 0
    %v5994 = vsel %vm387, %v5793, 0
    %v5997 = vsel %vm387, %v5792, 0
    %v6000 = vsel %vm387, %v5791, 0
    %v6003 = vsel %vm387, %v5790, 0
    %v6006 = vsel %vm387, %v5789, 0
    %v6009 = vsel %vm387, %v5788, 0
    %v6012 = vsel %vm387, %v5787, 0
    %v6015 = vsel %vm387, %v5786, 0
    %v6018 = vsel %vm387, %v5785, 0
    %v6021 = vsel %vm387, %v5784, 0
    %v6024 = vsel %vm387, %v5783, 0
    %v6027 = vsel %vm387, %v5782, 0
    %v6030 = vsel %vm387, %v5781, 0
    %v6033 = vsel %vm387, %v5780, 0
    %v6036 = vsel %vm387, %v5779, 0
    %v6039 = vsel %vm387, %v5778, 0
    %v6042 = vsel %vm387, %v5777, 0
    %v6045 = vsel %vm387, %v5776, 0
    %v6048 = vsel %vm387, %v5775, 0
    %v6051 = vsel %vm387, %v5774, 0
    %v6054 = vsel %vm387, %v5773, 0
    %v6057 = vsel %vm387, %v5772, 0
    %v6060 = vsel %vm387, %v5843, 0
    %v6063 = vsel %vm604, %v5845, 0
    %6065 = vmatprep.subr.mxu0 0.0
    %6066 = vmatpush1.msra.mxu0 0.0
    %6067 = vmatprep.subr.mxu0 0.0
    %6068 = vmatpush1.msra.mxu0 0.0
    %6069 = vmatprep.subr.mxu0 0.0
    %6070 = vmatpush1.msra.mxu0 0.0
    %6071 = vmatprep.subr.mxu0 0.0
    %6072 = vmatpush1.msra.mxu0 0.0
    %6073 = vmatprep.subr.mxu0 0.0
    %6074 = vmatpush1.msra.mxu0 0.0
    %6075 = vmatprep.subr.mxu0 0.0
    %6076 = vmatpush1.msra.mxu0 0.0
    %6077 = vmatprep.subr.mxu0 0.0
    %6078 = vmatpush1.msra.mxu0 0.0
    %6079 = vmatprep.subr.mxu0 0.0
    %6080 = vmatpush1.msra.mxu0 0.0
    %6081 = vmatprep.subr.mxu0 0.0
    %6082 = vmatpush1.msra.mxu0 0.0
    %6083 = vmatprep.subr.mxu0 0.0
    %6084 = vmatpush1.msra.mxu0 0.0
    %6085 = vmatprep.subr.mxu0 0.0
    %6086 = vmatpush1.msra.mxu0 0.0
    %6087 = vmatprep.subr.mxu0 0.0
    %6088 = vmatpush1.msra.mxu0 0.0
    %6089 = vmatprep.subr.mxu0 0.0
    %6090 = vmatpush1.msra.mxu0 0.0
    %6091 = vmatprep.subr.mxu0 0.0
    %6092 = vmatpush1.msra.mxu0 0.0
    %6093 = vmatprep.subr.mxu0 0.0
    %6094 = vmatpush1.msra.mxu0 0.0
    %6095 = vmatprep.subr.mxu0 0.0
    %6096 = vmatpush1.msra.mxu0 %v6063
    %6097 = vmatprep.subr.mxu0 0.0
    %6098 = vmatpush2.msra.mxu0 0.0
    %6099 = vmatprep.subr.mxu0 0.0
    %6100 = vmatpush2.msra.mxu0 0.0
    %6101 = vmatprep.subr.mxu0 0.0
    %6102 = vmatpush2.msra.mxu0 0.0
    %6103 = vmatprep.subr.mxu0 0.0
    %6104 = vmatpush2.msra.mxu0 0.0
    %6105 = vmatprep.subr.mxu0 0.0
    %6106 = vmatpush2.msra.mxu0 0.0
    %6107 = vmatprep.subr.mxu0 0.0
    %6108 = vmatpush2.msra.mxu0 0.0
    %6109 = vmatprep.subr.mxu0 0.0
    %6110 = vmatpush2.msra.mxu0 0.0
    %6111 = vmatprep.subr.mxu0 0.0
    %6112 = vmatpush2.msra.mxu0 0.0
    %6113 = vmatprep.subr.mxu0 0.0
    %6114 = vmatpush2.msra.mxu0 0.0
    %6115 = vmatprep.subr.mxu0 0.0
    %6116 = vmatpush2.msra.mxu0 0.0
    %6117 = vmatprep.subr.mxu0 0.0
    %6118 = vmatpush2.msra.mxu0 0.0
    %6119 = vmatprep.subr.mxu0 0.0
    %6120 = vmatpush2.msra.mxu0 0.0
    %6121 = vmatprep.subr.mxu0 0.0
    %6122 = vmatpush2.msra.mxu0 0.0
    %6123 = vmatprep.subr.mxu0 0.0
    %6124 = vmatpush2.msra.mxu0 0.0
    %6125 = vmatprep.subr.mxu0 0.0
    %6126 = vmatpush2.msra.mxu0 0.0
    %6127 = vmatprep.subr.mxu0 0.0
    %6128 = vmatpush2.msra.mxu0 0.0
    %6129 = vmatprep.mubr.f32.mxu0 0.0
    %6130 = vmatmul.mubr.f32.gmra.mxu0 %v5847
    %v6131 = vpop.f32.mrf.mxu0
    %v6132 = vadd.f32 0.0, %v6131
    %v6133 = vpop.f32.mrf.mxu0
    %6134 = vmatprep.mubr.f32.mxu0 0.0
    %6135 = vmatmul.mubr.f32.gmra.mxu0 %v5850
    %v6136 = vpop.f32.mrf.mxu0
    %v6137 = vadd.f32 0.0, %v6136
    %v6138 = vpop.f32.mrf.mxu0
    %6139 = vmatprep.mubr.f32.mxu0 0.0
    %6140 = vmatmul.mubr.f32.gmra.mxu0 %v5853
    %v6141 = vpop.f32.mrf.mxu0
    %v6142 = vadd.f32 0.0, %v6141
    %v6143 = vpop.f32.mrf.mxu0
    %6144 = vmatprep.mubr.f32.mxu0 0.0
    %6145 = vmatmul.mubr.f32.gmra.mxu0 %v5856
    %v6146 = vpop.f32.mrf.mxu0
    %v6147 = vadd.f32 0.0, %v6146
    %v6148 = vpop.f32.mrf.mxu0
    %6149 = vmatprep.mubr.f32.mxu0 0.0
    %6150 = vmatmul.mubr.f32.gmra.mxu0 %v5859
    %v6151 = vpop.f32.mrf.mxu0
    %v6152 = vadd.f32 0.0, %v6151
    %v6153 = vpop.f32.mrf.mxu0
    %6154 = vmatprep.mubr.f32.mxu0 0.0
    %6155 = vmatmul.mubr.f32.gmra.mxu0 %v5862
    %v6156 = vpop.f32.mrf.mxu0
    %v6157 = vadd.f32 0.0, %v6156
    %v6158 = vpop.f32.mrf.mxu0
    %6159 = vmatprep.mubr.f32.mxu0 0.0
    %6160 = vmatmul.mubr.f32.gmra.mxu0 %v5865
    %v6161 = vpop.f32.mrf.mxu0
    %v6162 = vadd.f32 0.0, %v6161
    %v6163 = vpop.f32.mrf.mxu0
    %6164 = vmatprep.mubr.f32.mxu0 0.0
    %6165 = vmatmul.mubr.f32.gmra.mxu0 %v5868
    %v6166 = vpop.f32.mrf.mxu0
    %v6167 = vadd.f32 0.0, %v6166
    %v6168 = vpop.f32.mrf.mxu0
    %6169 = vmatprep.mubr.f32.mxu0 0.0
    %6170 = vmatmul.mubr.f32.gmra.mxu0 %v5871
    %v6171 = vpop.f32.mrf.mxu0
    %v6172 = vadd.f32 0.0, %v6171
    %v6173 = vpop.f32.mrf.mxu0
    %6174 = vmatprep.mubr.f32.mxu0 0.0
    %6175 = vmatmul.mubr.f32.gmra.mxu0 %v5874
    %v6176 = vpop.f32.mrf.mxu0
    %v6177 = vadd.f32 0.0, %v6176
    %v6178 = vpop.f32.mrf.mxu0
    %6179 = vmatprep.mubr.f32.mxu0 0.0
    %6180 = vmatmul.mubr.f32.gmra.mxu0 %v5877
    %v6181 = vpop.f32.mrf.mxu0
    %v6182 = vadd.f32 0.0, %v6181
    %v6183 = vpop.f32.mrf.mxu0
    %6184 = vmatprep.mubr.f32.mxu0 0.0
    %6185 = vmatmul.mubr.f32.gmra.mxu0 %v5880
    %v6186 = vpop.f32.mrf.mxu0
    %v6187 = vadd.f32 0.0, %v6186
    %v6188 = vpop.f32.mrf.mxu0
    %6189 = vmatprep.mubr.f32.mxu0 0.0
    %6190 = vmatmul.mubr.f32.gmra.mxu0 %v5883
    %v6191 = vpop.f32.mrf.mxu0
    %v6192 = vadd.f32 0.0, %v6191
    %v6193 = vpop.f32.mrf.mxu0
    %6194 = vmatprep.mubr.f32.mxu0 0.0
    %6195 = vmatmul.mubr.f32.gmra.mxu0 %v5886
    %v6196 = vpop.f32.mrf.mxu0
    %v6197 = vadd.f32 0.0, %v6196
    %v6198 = vpop.f32.mrf.mxu0
    %6199 = vmatprep.mubr.f32.mxu0 0.0
    %6200 = vmatmul.mubr.f32.gmra.mxu0 %v5889
    %v6201 = vpop.f32.mrf.mxu0
    %v6202 = vadd.f32 0.0, %v6201
    %v6203 = vpop.f32.mrf.mxu0
    %6204 = vmatprep.mubr.f32.mxu0 0.0
    %6205 = vmatmul.mubr.f32.gmra.mxu0 %v5892
    %v6206 = vpop.f32.mrf.mxu0
    %v6207 = vadd.f32 0.0, %v6206
    %v6208 = vpop.f32.mrf.mxu0
    %6209 = vmatprep.mubr.f32.mxu0 0.0
    %6210 = vmatmul.mubr.f32.gmra.mxu0 %v5895
    %v6211 = vpop.f32.mrf.mxu0
    %v6212 = vadd.f32 0.0, %v6211
    %v6213 = vpop.f32.mrf.mxu0
    %6214 = vmatprep.mubr.f32.mxu0 0.0
    %6215 = vmatmul.mubr.f32.gmra.mxu0 %v5898
    %v6216 = vpop.f32.mrf.mxu0
    %v6217 = vadd.f32 0.0, %v6216
    %v6218 = vpop.f32.mrf.mxu0
    %6219 = vmatprep.mubr.f32.mxu0 0.0
    %6220 = vmatmul.mubr.f32.gmra.mxu0 %v5901
    %v6221 = vpop.f32.mrf.mxu0
    %v6222 = vadd.f32 0.0, %v6221
    %v6223 = vpop.f32.mrf.mxu0
    %6224 = vmatprep.mubr.f32.mxu0 0.0
    %6225 = vmatmul.mubr.f32.gmra.mxu0 %v5904
    %v6226 = vpop.f32.mrf.mxu0
    %v6227 = vadd.f32 0.0, %v6226
    %v6228 = vpop.f32.mrf.mxu0
    %6229 = vmatprep.mubr.f32.mxu0 0.0
    %6230 = vmatmul.mubr.f32.gmra.mxu0 %v5907
    %v6231 = vpop.f32.mrf.mxu0
    %v6232 = vadd.f32 0.0, %v6231
    %v6233 = vpop.f32.mrf.mxu0
    %6234 = vmatprep.mubr.f32.mxu0 0.0
    %6235 = vmatmul.mubr.f32.gmra.mxu0 %v5910
    %v6236 = vpop.f32.mrf.mxu0
    %v6237 = vadd.f32 0.0, %v6236
    %v6238 = vpop.f32.mrf.mxu0
    %6239 = vmatprep.mubr.f32.mxu0 0.0
    %6240 = vmatmul.mubr.f32.gmra.mxu0 %v5913
    %v6241 = vpop.f32.mrf.mxu0
    %v6242 = vadd.f32 0.0, %v6241
    %v6243 = vpop.f32.mrf.mxu0
    %6244 = vmatprep.mubr.f32.mxu0 0.0
    %6245 = vmatmul.mubr.f32.gmra.mxu0 %v5916
    %v6246 = vpop.f32.mrf.mxu0
    %v6247 = vadd.f32 0.0, %v6246
    %v6248 = vpop.f32.mrf.mxu0
    %6249 = vmatprep.mubr.f32.mxu0 0.0
    %6250 = vmatmul.mubr.f32.gmra.mxu0 %v5919
    %v6251 = vpop.f32.mrf.mxu0
    %v6252 = vadd.f32 0.0, %v6251
    %v6253 = vpop.f32.mrf.mxu0
    %6254 = vmatprep.mubr.f32.mxu0 0.0
    %6255 = vmatmul.mubr.f32.gmra.mxu0 %v5922
    %v6256 = vpop.f32.mrf.mxu0
    %v6257 = vadd.f32 0.0, %v6256
    %v6258 = vpop.f32.mrf.mxu0
    %6259 = vmatprep.mubr.f32.mxu0 0.0
    %6260 = vmatmul.mubr.f32.gmra.mxu0 %v5925
    %v6261 = vpop.f32.mrf.mxu0
    %v6262 = vadd.f32 0.0, %v6261
    %v6263 = vpop.f32.mrf.mxu0
    %6264 = vmatprep.mubr.f32.mxu0 0.0
    %6265 = vmatmul.mubr.f32.gmra.mxu0 %v5928
    %v6266 = vpop.f32.mrf.mxu0
    %v6267 = vadd.f32 0.0, %v6266
    %v6268 = vpop.f32.mrf.mxu0
    %6269 = vmatprep.mubr.f32.mxu0 0.0
    %6270 = vmatmul.mubr.f32.gmra.mxu0 %v5931
    %v6271 = vpop.f32.mrf.mxu0
    %v6272 = vadd.f32 0.0, %v6271
    %v6273 = vpop.f32.mrf.mxu0
    %6274 = vmatprep.mubr.f32.mxu0 0.0
    %6275 = vmatmul.mubr.f32.gmra.mxu0 %v5934
    %v6276 = vpop.f32.mrf.mxu0
    %v6277 = vadd.f32 0.0, %v6276
    %v6278 = vpop.f32.mrf.mxu0
    %6279 = vmatprep.mubr.f32.mxu0 0.0
    %6280 = vmatmul.mubr.f32.gmra.mxu0 %v5937
    %v6281 = vpop.f32.mrf.mxu0
    %v6282 = vadd.f32 0.0, %v6281
    %v6283 = vpop.f32.mrf.mxu0
    %6284 = vmatprep.mubr.f32.mxu0 0.0
    %6285 = vmatmul.mubr.f32.gmra.mxu0 %v5940
    %v6286 = vpop.f32.mrf.mxu0
    %v6287 = vadd.f32 0.0, %v6286
    %v6288 = vpop.f32.mrf.mxu0
    %6289 = vmatprep.mubr.f32.mxu0 0.0
    %6290 = vmatmul.mubr.f32.gmra.mxu0 %v5943
    %v6291 = vpop.f32.mrf.mxu0
    %v6292 = vadd.f32 0.0, %v6291
    %v6293 = vpop.f32.mrf.mxu0
    %6294 = vmatprep.mubr.f32.mxu0 0.0
    %6295 = vmatmul.mubr.f32.gmra.mxu0 %v5946
    %v6296 = vpop.f32.mrf.mxu0
    %v6297 = vadd.f32 0.0, %v6296
    %v6298 = vpop.f32.mrf.mxu0
    %6299 = vmatprep.mubr.f32.mxu0 0.0
    %6300 = vmatmul.mubr.f32.gmra.mxu0 %v5949
    %v6301 = vpop.f32.mrf.mxu0
    %v6302 = vadd.f32 0.0, %v6301
    %v6303 = vpop.f32.mrf.mxu0
    %6304 = vmatprep.mubr.f32.mxu0 0.0
    %6305 = vmatmul.mubr.f32.gmra.mxu0 %v5952
    %v6306 = vpop.f32.mrf.mxu0
    %v6307 = vadd.f32 0.0, %v6306
    %v6308 = vpop.f32.mrf.mxu0
    %6309 = vmatprep.mubr.f32.mxu0 0.0
    %6310 = vmatmul.mubr.f32.gmra.mxu0 %v5955
    %v6311 = vpop.f32.mrf.mxu0
    %v6312 = vadd.f32 0.0, %v6311
    %v6313 = vpop.f32.mrf.mxu0
    %6314 = vmatprep.mubr.f32.mxu0 0.0
    %6315 = vmatmul.mubr.f32.gmra.mxu0 %v5958
    %v6316 = vpop.f32.mrf.mxu0
    %v6317 = vadd.f32 0.0, %v6316
    %v6318 = vpop.f32.mrf.mxu0
    %6319 = vmatprep.mubr.f32.mxu0 0.0
    %6320 = vmatmul.mubr.f32.gmra.mxu0 %v5961
    %v6321 = vpop.f32.mrf.mxu0
    %v6322 = vadd.f32 0.0, %v6321
    %v6323 = vpop.f32.mrf.mxu0
    %6324 = vmatprep.mubr.f32.mxu0 0.0
    %6325 = vmatmul.mubr.f32.gmra.mxu0 %v5964
    %v6326 = vpop.f32.mrf.mxu0
    %v6327 = vadd.f32 0.0, %v6326
    %v6328 = vpop.f32.mrf.mxu0
    %6329 = vmatprep.mubr.f32.mxu0 0.0
    %6330 = vmatmul.mubr.f32.gmra.mxu0 %v5967
    %v6331 = vpop.f32.mrf.mxu0
    %v6332 = vadd.f32 0.0, %v6331
    %v6333 = vpop.f32.mrf.mxu0
    %6334 = vmatprep.mubr.f32.mxu0 0.0
    %6335 = vmatmul.mubr.f32.gmra.mxu0 %v5970
    %v6336 = vpop.f32.mrf.mxu0
    %v6337 = vadd.f32 0.0, %v6336
    %v6338 = vpop.f32.mrf.mxu0
    %6339 = vmatprep.mubr.f32.mxu0 0.0
    %6340 = vmatmul.mubr.f32.gmra.mxu0 %v5973
    %v6341 = vpop.f32.mrf.mxu0
    %v6342 = vadd.f32 0.0, %v6341
    %v6343 = vpop.f32.mrf.mxu0
    %6344 = vmatprep.mubr.f32.mxu0 0.0
    %6345 = vmatmul.mubr.f32.gmra.mxu0 %v5976
    %v6346 = vpop.f32.mrf.mxu0
    %v6347 = vadd.f32 0.0, %v6346
    %v6348 = vpop.f32.mrf.mxu0
    %6349 = vmatprep.mubr.f32.mxu0 0.0
    %6350 = vmatmul.mubr.f32.gmra.mxu0 %v5979
    %v6351 = vpop.f32.mrf.mxu0
    %v6352 = vadd.f32 0.0, %v6351
    %v6353 = vpop.f32.mrf.mxu0
    %6354 = vmatprep.mubr.f32.mxu0 0.0
    %6355 = vmatmul.mubr.f32.gmra.mxu0 %v5982
    %v6356 = vpop.f32.mrf.mxu0
    %v6357 = vadd.f32 0.0, %v6356
    %v6358 = vpop.f32.mrf.mxu0
    %6359 = vmatprep.mubr.f32.mxu0 0.0
    %6360 = vmatmul.mubr.f32.gmra.mxu0 %v5985
    %v6361 = vpop.f32.mrf.mxu0
    %v6362 = vadd.f32 0.0, %v6361
    %v6363 = vpop.f32.mrf.mxu0
    %6364 = vmatprep.mubr.f32.mxu0 0.0
    %6365 = vmatmul.mubr.f32.gmra.mxu0 %v5988
    %v6366 = vpop.f32.mrf.mxu0
    %v6367 = vadd.f32 0.0, %v6366
    %v6368 = vpop.f32.mrf.mxu0
    %6369 = vmatprep.mubr.f32.mxu0 0.0
    %6370 = vmatmul.mubr.f32.gmra.mxu0 %v5991
    %v6371 = vpop.f32.mrf.mxu0
    %v6372 = vadd.f32 0.0, %v6371
    %v6373 = vpop.f32.mrf.mxu0
    %6374 = vmatprep.mubr.f32.mxu0 0.0
    %6375 = vmatmul.mubr.f32.gmra.mxu0 %v5994
    %v6376 = vpop.f32.mrf.mxu0
    %v6377 = vadd.f32 0.0, %v6376
    %v6378 = vpop.f32.mrf.mxu0
    %6379 = vmatprep.mubr.f32.mxu0 0.0
    %6380 = vmatmul.mubr.f32.gmra.mxu0 %v5997
    %v6381 = vpop.f32.mrf.mxu0
    %v6382 = vadd.f32 0.0, %v6381
    %v6383 = vpop.f32.mrf.mxu0
    %6384 = vmatprep.mubr.f32.mxu0 0.0
    %6385 = vmatmul.mubr.f32.gmra.mxu0 %v6000
    %v6386 = vpop.f32.mrf.mxu0
    %v6387 = vadd.f32 0.0, %v6386
    %v6388 = vpop.f32.mrf.mxu0
    %6389 = vmatprep.mubr.f32.mxu0 0.0
    %6390 = vmatmul.mubr.f32.gmra.mxu0 %v6003
    %v6391 = vpop.f32.mrf.mxu0
    %v6392 = vadd.f32 0.0, %v6391
    %v6393 = vpop.f32.mrf.mxu0
    %6394 = vmatprep.mubr.f32.mxu0 0.0
    %6395 = vmatmul.mubr.f32.gmra.mxu0 %v6006
    %v6396 = vpop.f32.mrf.mxu0
    %v6397 = vadd.f32 0.0, %v6396
    %v6398 = vpop.f32.mrf.mxu0
    %6399 = vmatprep.mubr.f32.mxu0 0.0
    %6400 = vmatmul.mubr.f32.gmra.mxu0 %v6009
    %v6401 = vpop.f32.mrf.mxu0
    %v6402 = vadd.f32 0.0, %v6401
    %v6403 = vpop.f32.mrf.mxu0
    %6404 = vmatprep.mubr.f32.mxu0 0.0
    %6405 = vmatmul.mubr.f32.gmra.mxu0 %v6012
    %v6406 = vpop.f32.mrf.mxu0
    %v6407 = vadd.f32 0.0, %v6406
    %v6408 = vpop.f32.mrf.mxu0
    %6409 = vmatprep.mubr.f32.mxu0 0.0
    %6410 = vmatmul.mubr.f32.gmra.mxu0 %v6015
    %v6411 = vpop.f32.mrf.mxu0
    %v6412 = vadd.f32 0.0, %v6411
    %v6413 = vpop.f32.mrf.mxu0
    %6414 = vmatprep.mubr.f32.mxu0 0.0
    %6415 = vmatmul.mubr.f32.gmra.mxu0 %v6018
    %v6416 = vpop.f32.mrf.mxu0
    %v6417 = vadd.f32 0.0, %v6416
    %v6418 = vpop.f32.mrf.mxu0
    %6419 = vmatprep.mubr.f32.mxu0 0.0
    %6420 = vmatmul.mubr.f32.gmra.mxu0 %v6021
    %v6421 = vpop.f32.mrf.mxu0
    %v6422 = vadd.f32 0.0, %v6421
    %v6423 = vpop.f32.mrf.mxu0
    %6424 = vmatprep.mubr.f32.mxu0 0.0
    %6425 = vmatmul.mubr.f32.gmra.mxu0 %v6024
    %v6426 = vpop.f32.mrf.mxu0
    %v6427 = vadd.f32 0.0, %v6426
    %v6428 = vpop.f32.mrf.mxu0
    %6429 = vmatprep.mubr.f32.mxu0 0.0
    %6430 = vmatmul.mubr.f32.gmra.mxu0 %v6027
    %v6431 = vpop.f32.mrf.mxu0
    %v6432 = vadd.f32 0.0, %v6431
    %v6433 = vpop.f32.mrf.mxu0
    %6434 = vmatprep.mubr.f32.mxu0 0.0
    %6435 = vmatmul.mubr.f32.gmra.mxu0 %v6030
    %v6436 = vpop.f32.mrf.mxu0
    %v6437 = vadd.f32 0.0, %v6436
    %v6438 = vpop.f32.mrf.mxu0
    %6439 = vmatprep.mubr.f32.mxu0 0.0
    %6440 = vmatmul.mubr.f32.gmra.mxu0 %v6033
    %v6441 = vpop.f32.mrf.mxu0
    %v6442 = vadd.f32 0.0, %v6441
    %v6443 = vpop.f32.mrf.mxu0
    %6444 = vmatprep.mubr.f32.mxu0 0.0
    %6445 = vmatmul.mubr.f32.gmra.mxu0 %v6036
    %v6446 = vpop.f32.mrf.mxu0
    %v6447 = vadd.f32 0.0, %v6446
    %v6448 = vpop.f32.mrf.mxu0
    %6449 = vmatprep.mubr.f32.mxu0 0.0
    %6450 = vmatmul.mubr.f32.gmra.mxu0 %v6039
    %v6451 = vpop.f32.mrf.mxu0
    %v6452 = vadd.f32 0.0, %v6451
    %v6453 = vpop.f32.mrf.mxu0
    %6454 = vmatprep.mubr.f32.mxu0 0.0
    %6455 = vmatmul.mubr.f32.gmra.mxu0 %v6042
    %v6456 = vpop.f32.mrf.mxu0
    %v6457 = vadd.f32 0.0, %v6456
    %v6458 = vpop.f32.mrf.mxu0
    %6459 = vmatprep.mubr.f32.mxu0 0.0
    %6460 = vmatmul.mubr.f32.gmra.mxu0 %v6045
    %v6461 = vpop.f32.mrf.mxu0
    %v6462 = vadd.f32 0.0, %v6461
    %v6463 = vpop.f32.mrf.mxu0
    %6464 = vmatprep.mubr.f32.mxu0 0.0
    %6465 = vmatmul.mubr.f32.gmra.mxu0 %v6048
    %v6466 = vpop.f32.mrf.mxu0
    %v6467 = vadd.f32 0.0, %v6466
    %v6468 = vpop.f32.mrf.mxu0
    %6469 = vmatprep.mubr.f32.mxu0 0.0
    %6470 = vmatmul.mubr.f32.gmra.mxu0 %v6051
    %v6471 = vpop.f32.mrf.mxu0
    %v6472 = vadd.f32 0.0, %v6471
    %v6473 = vpop.f32.mrf.mxu0
    %6474 = vmatprep.mubr.f32.mxu0 0.0
    %6475 = vmatmul.mubr.f32.gmra.mxu0 %v6054
    %v6476 = vpop.f32.mrf.mxu0
    %v6477 = vadd.f32 0.0, %v6476
    %v6478 = vpop.f32.mrf.mxu0
    %6479 = vmatprep.mubr.f32.mxu0 0.0
    %6480 = vmatmul.mubr.f32.gmra.mxu0 %v6057
    %v6481 = vpop.f32.mrf.mxu0
    %v6482 = vadd.f32 0.0, %v6481
    %v6483 = vpop.f32.mrf.mxu0
    %6484 = vmatprep.mubr.f32.mxu0 0.0
    %6485 = vmatmul.mubr.f32.gmra.mxu0 %v6060
    %v6486 = vpop.f32.mrf.mxu0
    %v6487 = vadd.f32 0.0, %v6486
    %v6488 = vpop.f32.mrf.mxu0
    %6489 = vdwg.mxu0
    %v6490 = vadd.f32 %v5628, %v6132
    %v6491 = vadd.f32 %v5629, %v6137
    %v6492 = vadd.f32 %v5630, %v6142
    %v6493 = vadd.f32 %v5631, %v6147
    %v6494 = vadd.f32 %v5632, %v6152
    %v6495 = vadd.f32 %v5633, %v6157
    %v6496 = vadd.f32 %v5634, %v6162
    %v6497 = vadd.f32 %v5635, %v6167
    %v6498 = vadd.f32 %v5636, %v6172
    %v6499 = vadd.f32 %v5637, %v6177
    %v6500 = vadd.f32 %v5638, %v6182
    %v6501 = vadd.f32 %v5639, %v6187
    %v6502 = vadd.f32 %v5640, %v6192
    %v6503 = vadd.f32 %v5641, %v6197
    %v6504 = vadd.f32 %v5642, %v6202
    %v6505 = vadd.f32 %v5643, %v6207
    %v6506 = vadd.f32 %v5644, %v6212
    %v6507 = vadd.f32 %v5645, %v6217
    %v6508 = vadd.f32 %v5646, %v6222
    %v6509 = vadd.f32 %v5647, %v6227
    %v6510 = vadd.f32 %v5648, %v6232
    %v6511 = vadd.f32 %v5649, %v6237
    %v6512 = vadd.f32 %v5650, %v6242
    %v6513 = vadd.f32 %v5651, %v6247
    %v6514 = vadd.f32 %v5652, %v6252
    %v6515 = vadd.f32 %v5653, %v6257
    %v6516 = vadd.f32 %v5654, %v6262
    %v6517 = vadd.f32 %v5655, %v6267
    %v6518 = vadd.f32 %v5656, %v6272
    %v6519 = vadd.f32 %v5657, %v6277
    %v6520 = vadd.f32 %v5658, %v6282
    %v6521 = vadd.f32 %v5659, %v6287
    %v6522 = vadd.f32 %v5660, %v6292
    %v6523 = vadd.f32 %v5661, %v6297
    %v6524 = vadd.f32 %v5662, %v6302
    %v6525 = vadd.f32 %v5663, %v6307
    %v6526 = vadd.f32 %v5664, %v6312
    %v6527 = vadd.f32 %v5665, %v6317
    %v6528 = vadd.f32 %v5666, %v6322
    %v6529 = vadd.f32 %v5667, %v6327
    %v6530 = vadd.f32 %v5668, %v6332
    %v6531 = vadd.f32 %v5669, %v6337
    %v6532 = vadd.f32 %v5670, %v6342
    %v6533 = vadd.f32 %v5671, %v6347
    %v6534 = vadd.f32 %v5672, %v6352
    %v6535 = vadd.f32 %v5673, %v6357
    %v6536 = vadd.f32 %v5674, %v6362
    %v6537 = vadd.f32 %v5675, %v6367
    %v6538 = vadd.f32 %v5676, %v6372
    %v6539 = vadd.f32 %v5677, %v6377
    %v6540 = vadd.f32 %v5678, %v6382
    %v6541 = vadd.f32 %v5679, %v6387
    %v6542 = vadd.f32 %v5680, %v6392
    %v6543 = vadd.f32 %v5681, %v6397
    %v6544 = vadd.f32 %v5682, %v6402
    %v6545 = vadd.f32 %v5683, %v6407
    %v6546 = vadd.f32 %v5684, %v6412
    %v6547 = vadd.f32 %v5685, %v6417
    %v6548 = vadd.f32 %v5686, %v6422
    %v6549 = vadd.f32 %v5687, %v6427
    %v6550 = vadd.f32 %v5688, %v6432
    %v6551 = vadd.f32 %v5689, %v6437
    %v6552 = vadd.f32 %v5690, %v6442
    %v6553 = vadd.f32 %v5691, %v6447
    %v6554 = vadd.f32 %v5692, %v6452
    %v6555 = vadd.f32 %v5693, %v6457
    %v6556 = vadd.f32 %v5694, %v6462
    %v6557 = vadd.f32 %v5695, %v6467
    %v6558 = vadd.f32 %v5696, %v6472
    %v6559 = vadd.f32 %v5697, %v6477
    %v6560 = vadd.f32 %v5698, %v6482
    %v6561 = vadd.f32 %v5699, %v6487
    %v6562 = vrot.slane %v165, 2
    %v6563 = vrot.slane %v166, 2
    %v6564 = vrot.slane %v167, 2
    %v6565 = vrot.slane %v168, 2
    %v6566 = vrot.slane %v169, 2
    %v6567 = vrot.slane %v170, 2
    %v6568 = vrot.slane %v171, 2
    %v6569 = vrot.slane %v172, 2
    %v6570 = vrot.slane %v173, 2
    %v6571 = vrot.slane %v174, 2
    %v6572 = vrot.slane %v175, 2
    %v6573 = vrot.slane %v176, 2
    %v6574 = vrot.slane %v177, 2
    %v6575 = vrot.slane %v178, 2
    %v6576 = vrot.slane %v179, 2
    %v6577 = vrot.slane %v180, 2
    %v6578 = vrot.slane %v181, 2
    %v6579 = vrot.slane %v182, 2
    %v6580 = vrot.slane %v183, 2
    %v6581 = vrot.slane %v184, 2
    %v6582 = vrot.slane %v185, 2
    %v6583 = vrot.slane %v186, 2
    %v6584 = vrot.slane %v187, 2
    %v6585 = vrot.slane %v188, 2
    %v6586 = vrot.slane %v189, 2
    %v6587 = vrot.slane %v190, 2
    %v6588 = vrot.slane %v191, 2
    %v6589 = vrot.slane %v192, 2
    %v6590 = vrot.slane %v193, 2
    %v6591 = vrot.slane %v194, 2
    %v6592 = vrot.slane %v195, 2
    %v6593 = vrot.slane %v196, 2
    %v6594 = vrot.slane %v197, 2
    %v6595 = vrot.slane %v198, 2
    %v6596 = vrot.slane %v199, 2
    %v6597 = vrot.slane %v200, 2
    %v6598 = vrot.slane %v201, 2
    %v6599 = vrot.slane %v202, 2
    %v6600 = vrot.slane %v203, 2
    %v6601 = vrot.slane %v204, 2
    %v6602 = vrot.slane %v205, 2
    %v6603 = vrot.slane %v206, 2
    %v6604 = vrot.slane %v207, 2
    %v6605 = vrot.slane %v208, 2
    %v6606 = vrot.slane %v209, 2
    %v6607 = vrot.slane %v210, 2
    %v6608 = vrot.slane %v211, 2
    %v6609 = vrot.slane %v212, 2
    %v6610 = vrot.slane %v213, 2
    %v6611 = vrot.slane %v214, 2
    %v6612 = vrot.slane %v215, 2
    %v6613 = vrot.slane %v216, 2
    %v6614 = vrot.slane %v217, 2
    %v6615 = vrot.slane %v218, 2
    %v6616 = vrot.slane %v219, 2
    %v6617 = vrot.slane %v220, 2
    %v6618 = vrot.slane %v221, 2
    %v6619 = vrot.slane %v222, 2
    %v6620 = vrot.slane %v223, 2
    %v6621 = vrot.slane %v224, 2
    %v6622 = vrot.slane %v225, 2
    %v6623 = vrot.slane %v226, 2
    %v6624 = vrot.slane %v227, 2
    %v6625 = vrot.slane %v228, 2
    %v6626 = vrot.slane %v229, 2
    %v6627 = vrot.slane %v230, 2
    %v6628 = vrot.slane %v231, 2
    %v6629 = vrot.slane %v232, 2
    %v6630 = vrot.slane %v233, 2
    %v6631 = vrot.slane %v234, 2
    %v6632 = vrot.slane %v235, 2
    %v6633 = vrot.slane %v236, 2
    %v6634 = vsel %vm1749, %v6632, %v6633
    %v6635 = vsel %vm1749, %v6631, %v6632
    %v6636 = vsel %vm1749, %v6630, %v6631
    %v6637 = vsel %vm1749, %v6629, %v6630
    %v6638 = vsel %vm1749, %v6628, %v6629
    %v6639 = vsel %vm1749, %v6627, %v6628
    %v6640 = vsel %vm1749, %v6626, %v6627
    %v6641 = vsel %vm1749, %v6625, %v6626
    %v6642 = vsel %vm1749, %v6624, %v6625
    %v6643 = vsel %vm1749, %v6623, %v6624
    %v6644 = vsel %vm1749, %v6622, %v6623
    %v6645 = vsel %vm1749, %v6621, %v6622
    %v6646 = vsel %vm1749, %v6620, %v6621
    %v6647 = vsel %vm1749, %v6619, %v6620
    %v6648 = vsel %vm1749, %v6618, %v6619
    %v6649 = vsel %vm1749, %v6617, %v6618
    %v6650 = vsel %vm1749, %v6616, %v6617
    %v6651 = vsel %vm1749, %v6615, %v6616
    %v6652 = vsel %vm1749, %v6614, %v6615
    %v6653 = vsel %vm1749, %v6613, %v6614
    %v6654 = vsel %vm1749, %v6612, %v6613
    %v6655 = vsel %vm1749, %v6611, %v6612
    %v6656 = vsel %vm1749, %v6610, %v6611
    %v6657 = vsel %vm1749, %v6609, %v6610
    %v6658 = vsel %vm1749, %v6608, %v6609
    %v6659 = vsel %vm1749, %v6607, %v6608
    %v6660 = vsel %vm1749, %v6606, %v6607
    %v6661 = vsel %vm1749, %v6605, %v6606
    %v6662 = vsel %vm1749, %v6604, %v6605
    %v6663 = vsel %vm1749, %v6603, %v6604
    %v6664 = vsel %vm1749, %v6602, %v6603
    %v6665 = vsel %vm1749, %v6601, %v6602
    %v6666 = vsel %vm1749, %v6600, %v6601
    %v6667 = vsel %vm1749, %v6599, %v6600
    %v6668 = vsel %vm1749, %v6598, %v6599
    %v6669 = vsel %vm1749, %v6597, %v6598
    %v6670 = vsel %vm1749, %v6596, %v6597
    %v6671 = vsel %vm1749, %v6595, %v6596
    %v6672 = vsel %vm1749, %v6594, %v6595
    %v6673 = vsel %vm1749, %v6593, %v6594
    %v6674 = vsel %vm1749, %v6592, %v6593
    %v6675 = vsel %vm1749, %v6591, %v6592
    %v6676 = vsel %vm1749, %v6590, %v6591
    %v6677 = vsel %vm1749, %v6589, %v6590
    %v6678 = vsel %vm1749, %v6588, %v6589
    %v6679 = vsel %vm1749, %v6587, %v6588
    %v6680 = vsel %vm1749, %v6586, %v6587
    %v6681 = vsel %vm1749, %v6585, %v6586
    %v6682 = vsel %vm1749, %v6584, %v6585
    %v6683 = vsel %vm1749, %v6583, %v6584
    %v6684 = vsel %vm1749, %v6582, %v6583
    %v6685 = vsel %vm1749, %v6581, %v6582
    %v6686 = vsel %vm1749, %v6580, %v6581
    %v6687 = vsel %vm1749, %v6579, %v6580
    %v6688 = vsel %vm1749, %v6578, %v6579
    %v6689 = vsel %vm1749, %v6577, %v6578
    %v6690 = vsel %vm1749, %v6576, %v6577
    %v6691 = vsel %vm1749, %v6575, %v6576
    %v6692 = vsel %vm1749, %v6574, %v6575
    %v6693 = vsel %vm1749, %v6573, %v6574
    %v6694 = vsel %vm1749, %v6572, %v6573
    %v6695 = vsel %vm1749, %v6571, %v6572
    %v6696 = vsel %vm1749, %v6570, %v6571
    %v6697 = vsel %vm1749, %v6569, %v6570
    %v6698 = vsel %vm1749, %v6568, %v6569
    %v6699 = vsel %vm1749, %v6567, %v6568
    %v6700 = vsel %vm1749, %v6566, %v6567
    %v6701 = vsel %vm1749, %v6565, %v6566
    %v6702 = vsel %vm1749, %v6564, %v6565
    %v6703 = vsel %vm1749, %v6563, %v6564
    %v6704 = vsel %vm1749, %v6562, %v6563
    %v6705 = vsel %vm1749, %v6633, %v6562
    %s6706 = scalar_lea.vmem %s3, 32
    %v6707 = vld [vmem:[%s6706] sm:$0xf]
    %v6709 = vsel %vm387, %v6704, 0
    %v6712 = vsel %vm387, %v6703, 0
    %v6715 = vsel %vm387, %v6702, 0
    %v6718 = vsel %vm387, %v6701, 0
    %v6721 = vsel %vm387, %v6700, 0
    %v6724 = vsel %vm387, %v6699, 0
    %v6727 = vsel %vm387, %v6698, 0
    %v6730 = vsel %vm387, %v6697, 0
    %v6733 = vsel %vm387, %v6696, 0
    %v6736 = vsel %vm387, %v6695, 0
    %v6739 = vsel %vm387, %v6694, 0
    %v6742 = vsel %vm387, %v6693, 0
    %v6745 = vsel %vm387, %v6692, 0
    %v6748 = vsel %vm387, %v6691, 0
    %v6751 = vsel %vm387, %v6690, 0
    %v6754 = vsel %vm387, %v6689, 0
    %v6757 = vsel %vm387, %v6688, 0
    %v6760 = vsel %vm387, %v6687, 0
    %v6763 = vsel %vm387, %v6686, 0
    %v6766 = vsel %vm387, %v6685, 0
    %v6769 = vsel %vm387, %v6684, 0
    %v6772 = vsel %vm387, %v6683, 0
    %v6775 = vsel %vm387, %v6682, 0
    %v6778 = vsel %vm387, %v6681, 0
    %v6781 = vsel %vm387, %v6680, 0
    %v6784 = vsel %vm387, %v6679, 0
    %v6787 = vsel %vm387, %v6678, 0
    %v6790 = vsel %vm387, %v6677, 0
    %v6793 = vsel %vm387, %v6676, 0
    %v6796 = vsel %vm387, %v6675, 0
    %v6799 = vsel %vm387, %v6674, 0
    %v6802 = vsel %vm387, %v6673, 0
    %v6805 = vsel %vm387, %v6672, 0
    %v6808 = vsel %vm387, %v6671, 0
    %v6811 = vsel %vm387, %v6670, 0
    %v6814 = vsel %vm387, %v6669, 0
    %v6817 = vsel %vm387, %v6668, 0
    %v6820 = vsel %vm387, %v6667, 0
    %v6823 = vsel %vm387, %v6666, 0
    %v6826 = vsel %vm387, %v6665, 0
    %v6829 = vsel %vm387, %v6664, 0
    %v6832 = vsel %vm387, %v6663, 0
    %v6835 = vsel %vm387, %v6662, 0
    %v6838 = vsel %vm387, %v6661, 0
    %v6841 = vsel %vm387, %v6660, 0
    %v6844 = vsel %vm387, %v6659, 0
    %v6847 = vsel %vm387, %v6658, 0
    %v6850 = vsel %vm387, %v6657, 0
    %v6853 = vsel %vm387, %v6656, 0
    %v6856 = vsel %vm387, %v6655, 0
    %v6859 = vsel %vm387, %v6654, 0
    %v6862 = vsel %vm387, %v6653, 0
    %v6865 = vsel %vm387, %v6652, 0
    %v6868 = vsel %vm387, %v6651, 0
    %v6871 = vsel %vm387, %v6650, 0
    %v6874 = vsel %vm387, %v6649, 0
    %v6877 = vsel %vm387, %v6648, 0
    %v6880 = vsel %vm387, %v6647, 0
    %v6883 = vsel %vm387, %v6646, 0
    %v6886 = vsel %vm387, %v6645, 0
    %v6889 = vsel %vm387, %v6644, 0
    %v6892 = vsel %vm387, %v6643, 0
    %v6895 = vsel %vm387, %v6642, 0
    %v6898 = vsel %vm387, %v6641, 0
    %v6901 = vsel %vm387, %v6640, 0
    %v6904 = vsel %vm387, %v6639, 0
    %v6907 = vsel %vm387, %v6638, 0
    %v6910 = vsel %vm387, %v6637, 0
    %v6913 = vsel %vm387, %v6636, 0
    %v6916 = vsel %vm387, %v6635, 0
    %v6919 = vsel %vm387, %v6634, 0
    %v6922 = vsel %vm387, %v6705, 0
    %v6925 = vsel %vm604, %v6707, 0
    %6927 = vmatprep.subr.mxu0 0.0
    %6928 = vmatpush1.msra.mxu0 0.0
    %6929 = vmatprep.subr.mxu0 0.0
    %6930 = vmatpush1.msra.mxu0 0.0
    %6931 = vmatprep.subr.mxu0 0.0
    %6932 = vmatpush1.msra.mxu0 0.0
    %6933 = vmatprep.subr.mxu0 0.0
    %6934 = vmatpush1.msra.mxu0 0.0
    %6935 = vmatprep.subr.mxu0 0.0
    %6936 = vmatpush1.msra.mxu0 0.0
    %6937 = vmatprep.subr.mxu0 0.0
    %6938 = vmatpush1.msra.mxu0 0.0
    %6939 = vmatprep.subr.mxu0 0.0
    %6940 = vmatpush1.msra.mxu0 0.0
    %6941 = vmatprep.subr.mxu0 0.0
    %6942 = vmatpush1.msra.mxu0 0.0
    %6943 = vmatprep.subr.mxu0 0.0
    %6944 = vmatpush1.msra.mxu0 0.0
    %6945 = vmatprep.subr.mxu0 0.0
    %6946 = vmatpush1.msra.mxu0 0.0
    %6947 = vmatprep.subr.mxu0 0.0
    %6948 = vmatpush1.msra.mxu0 0.0
    %6949 = vmatprep.subr.mxu0 0.0
    %6950 = vmatpush1.msra.mxu0 0.0
    %6951 = vmatprep.subr.mxu0 0.0
    %6952 = vmatpush1.msra.mxu0 0.0
    %6953 = vmatprep.subr.mxu0 0.0
    %6954 = vmatpush1.msra.mxu0 0.0
    %6955 = vmatprep.subr.mxu0 0.0
    %6956 = vmatpush1.msra.mxu0 0.0
    %6957 = vmatprep.subr.mxu0 0.0
    %6958 = vmatpush1.msra.mxu0 %v6925
    %6959 = vmatprep.subr.mxu0 0.0
    %6960 = vmatpush2.msra.mxu0 0.0
    %6961 = vmatprep.subr.mxu0 0.0
    %6962 = vmatpush2.msra.mxu0 0.0
    %6963 = vmatprep.subr.mxu0 0.0
    %6964 = vmatpush2.msra.mxu0 0.0
    %6965 = vmatprep.subr.mxu0 0.0
    %6966 = vmatpush2.msra.mxu0 0.0
    %6967 = vmatprep.subr.mxu0 0.0
    %6968 = vmatpush2.msra.mxu0 0.0
    %6969 = vmatprep.subr.mxu0 0.0
    %6970 = vmatpush2.msra.mxu0 0.0
    %6971 = vmatprep.subr.mxu0 0.0
    %6972 = vmatpush2.msra.mxu0 0.0
    %6973 = vmatprep.subr.mxu0 0.0
    %6974 = vmatpush2.msra.mxu0 0.0
    %6975 = vmatprep.subr.mxu0 0.0
    %6976 = vmatpush2.msra.mxu0 0.0
    %6977 = vmatprep.subr.mxu0 0.0
    %6978 = vmatpush2.msra.mxu0 0.0
    %6979 = vmatprep.subr.mxu0 0.0
    %6980 = vmatpush2.msra.mxu0 0.0
    %6981 = vmatprep.subr.mxu0 0.0
    %6982 = vmatpush2.msra.mxu0 0.0
    %6983 = vmatprep.subr.mxu0 0.0
    %6984 = vmatpush2.msra.mxu0 0.0
    %6985 = vmatprep.subr.mxu0 0.0
    %6986 = vmatpush2.msra.mxu0 0.0
    %6987 = vmatprep.subr.mxu0 0.0
    %6988 = vmatpush2.msra.mxu0 0.0
    %6989 = vmatprep.subr.mxu0 0.0
    %6990 = vmatpush2.msra.mxu0 0.0
    %6991 = vmatprep.mubr.f32.mxu0 0.0
    %6992 = vmatmul.mubr.f32.gmra.mxu0 %v6709
    %v6993 = vpop.f32.mrf.mxu0
    %v6994 = vadd.f32 0.0, %v6993
    %v6995 = vpop.f32.mrf.mxu0
    %6996 = vmatprep.mubr.f32.mxu0 0.0
    %6997 = vmatmul.mubr.f32.gmra.mxu0 %v6712
    %v6998 = vpop.f32.mrf.mxu0
    %v6999 = vadd.f32 0.0, %v6998
    %v7000 = vpop.f32.mrf.mxu0
    %7001 = vmatprep.mubr.f32.mxu0 0.0
    %7002 = vmatmul.mubr.f32.gmra.mxu0 %v6715
    %v7003 = vpop.f32.mrf.mxu0
    %v7004 = vadd.f32 0.0, %v7003
    %v7005 = vpop.f32.mrf.mxu0
    %7006 = vmatprep.mubr.f32.mxu0 0.0
    %7007 = vmatmul.mubr.f32.gmra.mxu0 %v6718
    %v7008 = vpop.f32.mrf.mxu0
    %v7009 = vadd.f32 0.0, %v7008
    %v7010 = vpop.f32.mrf.mxu0
    %7011 = vmatprep.mubr.f32.mxu0 0.0
    %7012 = vmatmul.mubr.f32.gmra.mxu0 %v6721
    %v7013 = vpop.f32.mrf.mxu0
    %v7014 = vadd.f32 0.0, %v7013
    %v7015 = vpop.f32.mrf.mxu0
    %7016 = vmatprep.mubr.f32.mxu0 0.0
    %7017 = vmatmul.mubr.f32.gmra.mxu0 %v6724
    %v7018 = vpop.f32.mrf.mxu0
    %v7019 = vadd.f32 0.0, %v7018
    %v7020 = vpop.f32.mrf.mxu0
    %7021 = vmatprep.mubr.f32.mxu0 0.0
    %7022 = vmatmul.mubr.f32.gmra.mxu0 %v6727
    %v7023 = vpop.f32.mrf.mxu0
    %v7024 = vadd.f32 0.0, %v7023
    %v7025 = vpop.f32.mrf.mxu0
    %7026 = vmatprep.mubr.f32.mxu0 0.0
    %7027 = vmatmul.mubr.f32.gmra.mxu0 %v6730
    %v7028 = vpop.f32.mrf.mxu0
    %v7029 = vadd.f32 0.0, %v7028
    %v7030 = vpop.f32.mrf.mxu0
    %7031 = vmatprep.mubr.f32.mxu0 0.0
    %7032 = vmatmul.mubr.f32.gmra.mxu0 %v6733
    %v7033 = vpop.f32.mrf.mxu0
    %v7034 = vadd.f32 0.0, %v7033
    %v7035 = vpop.f32.mrf.mxu0
    %7036 = vmatprep.mubr.f32.mxu0 0.0
    %7037 = vmatmul.mubr.f32.gmra.mxu0 %v6736
    %v7038 = vpop.f32.mrf.mxu0
    %v7039 = vadd.f32 0.0, %v7038
    %v7040 = vpop.f32.mrf.mxu0
    %7041 = vmatprep.mubr.f32.mxu0 0.0
    %7042 = vmatmul.mubr.f32.gmra.mxu0 %v6739
    %v7043 = vpop.f32.mrf.mxu0
    %v7044 = vadd.f32 0.0, %v7043
    %v7045 = vpop.f32.mrf.mxu0
    %7046 = vmatprep.mubr.f32.mxu0 0.0
    %7047 = vmatmul.mubr.f32.gmra.mxu0 %v6742
    %v7048 = vpop.f32.mrf.mxu0
    %v7049 = vadd.f32 0.0, %v7048
    %v7050 = vpop.f32.mrf.mxu0
    %7051 = vmatprep.mubr.f32.mxu0 0.0
    %7052 = vmatmul.mubr.f32.gmra.mxu0 %v6745
    %v7053 = vpop.f32.mrf.mxu0
    %v7054 = vadd.f32 0.0, %v7053
    %v7055 = vpop.f32.mrf.mxu0
    %7056 = vmatprep.mubr.f32.mxu0 0.0
    %7057 = vmatmul.mubr.f32.gmra.mxu0 %v6748
    %v7058 = vpop.f32.mrf.mxu0
    %v7059 = vadd.f32 0.0, %v7058
    %v7060 = vpop.f32.mrf.mxu0
    %7061 = vmatprep.mubr.f32.mxu0 0.0
    %7062 = vmatmul.mubr.f32.gmra.mxu0 %v6751
    %v7063 = vpop.f32.mrf.mxu0
    %v7064 = vadd.f32 0.0, %v7063
    %v7065 = vpop.f32.mrf.mxu0
    %7066 = vmatprep.mubr.f32.mxu0 0.0
    %7067 = vmatmul.mubr.f32.gmra.mxu0 %v6754
    %v7068 = vpop.f32.mrf.mxu0
    %v7069 = vadd.f32 0.0, %v7068
    %v7070 = vpop.f32.mrf.mxu0
    %7071 = vmatprep.mubr.f32.mxu0 0.0
    %7072 = vmatmul.mubr.f32.gmra.mxu0 %v6757
    %v7073 = vpop.f32.mrf.mxu0
    %v7074 = vadd.f32 0.0, %v7073
    %v7075 = vpop.f32.mrf.mxu0
    %7076 = vmatprep.mubr.f32.mxu0 0.0
    %7077 = vmatmul.mubr.f32.gmra.mxu0 %v6760
    %v7078 = vpop.f32.mrf.mxu0
    %v7079 = vadd.f32 0.0, %v7078
    %v7080 = vpop.f32.mrf.mxu0
    %7081 = vmatprep.mubr.f32.mxu0 0.0
    %7082 = vmatmul.mubr.f32.gmra.mxu0 %v6763
    %v7083 = vpop.f32.mrf.mxu0
    %v7084 = vadd.f32 0.0, %v7083
    %v7085 = vpop.f32.mrf.mxu0
    %7086 = vmatprep.mubr.f32.mxu0 0.0
    %7087 = vmatmul.mubr.f32.gmra.mxu0 %v6766
    %v7088 = vpop.f32.mrf.mxu0
    %v7089 = vadd.f32 0.0, %v7088
    %v7090 = vpop.f32.mrf.mxu0
    %7091 = vmatprep.mubr.f32.mxu0 0.0
    %7092 = vmatmul.mubr.f32.gmra.mxu0 %v6769
    %v7093 = vpop.f32.mrf.mxu0
    %v7094 = vadd.f32 0.0, %v7093
    %v7095 = vpop.f32.mrf.mxu0
    %7096 = vmatprep.mubr.f32.mxu0 0.0
    %7097 = vmatmul.mubr.f32.gmra.mxu0 %v6772
    %v7098 = vpop.f32.mrf.mxu0
    %v7099 = vadd.f32 0.0, %v7098
    %v7100 = vpop.f32.mrf.mxu0
    %7101 = vmatprep.mubr.f32.mxu0 0.0
    %7102 = vmatmul.mubr.f32.gmra.mxu0 %v6775
    %v7103 = vpop.f32.mrf.mxu0
    %v7104 = vadd.f32 0.0, %v7103
    %v7105 = vpop.f32.mrf.mxu0
    %7106 = vmatprep.mubr.f32.mxu0 0.0
    %7107 = vmatmul.mubr.f32.gmra.mxu0 %v6778
    %v7108 = vpop.f32.mrf.mxu0
    %v7109 = vadd.f32 0.0, %v7108
    %v7110 = vpop.f32.mrf.mxu0
    %7111 = vmatprep.mubr.f32.mxu0 0.0
    %7112 = vmatmul.mubr.f32.gmra.mxu0 %v6781
    %v7113 = vpop.f32.mrf.mxu0
    %v7114 = vadd.f32 0.0, %v7113
    %v7115 = vpop.f32.mrf.mxu0
    %7116 = vmatprep.mubr.f32.mxu0 0.0
    %7117 = vmatmul.mubr.f32.gmra.mxu0 %v6784
    %v7118 = vpop.f32.mrf.mxu0
    %v7119 = vadd.f32 0.0, %v7118
    %v7120 = vpop.f32.mrf.mxu0
    %7121 = vmatprep.mubr.f32.mxu0 0.0
    %7122 = vmatmul.mubr.f32.gmra.mxu0 %v6787
    %v7123 = vpop.f32.mrf.mxu0
    %v7124 = vadd.f32 0.0, %v7123
    %v7125 = vpop.f32.mrf.mxu0
    %7126 = vmatprep.mubr.f32.mxu0 0.0
    %7127 = vmatmul.mubr.f32.gmra.mxu0 %v6790
    %v7128 = vpop.f32.mrf.mxu0
    %v7129 = vadd.f32 0.0, %v7128
    %v7130 = vpop.f32.mrf.mxu0
    %7131 = vmatprep.mubr.f32.mxu0 0.0
    %7132 = vmatmul.mubr.f32.gmra.mxu0 %v6793
    %v7133 = vpop.f32.mrf.mxu0
    %v7134 = vadd.f32 0.0, %v7133
    %v7135 = vpop.f32.mrf.mxu0
    %7136 = vmatprep.mubr.f32.mxu0 0.0
    %7137 = vmatmul.mubr.f32.gmra.mxu0 %v6796
    %v7138 = vpop.f32.mrf.mxu0
    %v7139 = vadd.f32 0.0, %v7138
    %v7140 = vpop.f32.mrf.mxu0
    %7141 = vmatprep.mubr.f32.mxu0 0.0
    %7142 = vmatmul.mubr.f32.gmra.mxu0 %v6799
    %v7143 = vpop.f32.mrf.mxu0
    %v7144 = vadd.f32 0.0, %v7143
    %v7145 = vpop.f32.mrf.mxu0
    %7146 = vmatprep.mubr.f32.mxu0 0.0
    %7147 = vmatmul.mubr.f32.gmra.mxu0 %v6802
    %v7148 = vpop.f32.mrf.mxu0
    %v7149 = vadd.f32 0.0, %v7148
    %v7150 = vpop.f32.mrf.mxu0
    %7151 = vmatprep.mubr.f32.mxu0 0.0
    %7152 = vmatmul.mubr.f32.gmra.mxu0 %v6805
    %v7153 = vpop.f32.mrf.mxu0
    %v7154 = vadd.f32 0.0, %v7153
    %v7155 = vpop.f32.mrf.mxu0
    %7156 = vmatprep.mubr.f32.mxu0 0.0
    %7157 = vmatmul.mubr.f32.gmra.mxu0 %v6808
    %v7158 = vpop.f32.mrf.mxu0
    %v7159 = vadd.f32 0.0, %v7158
    %v7160 = vpop.f32.mrf.mxu0
    %7161 = vmatprep.mubr.f32.mxu0 0.0
    %7162 = vmatmul.mubr.f32.gmra.mxu0 %v6811
    %v7163 = vpop.f32.mrf.mxu0
    %v7164 = vadd.f32 0.0, %v7163
    %v7165 = vpop.f32.mrf.mxu0
    %7166 = vmatprep.mubr.f32.mxu0 0.0
    %7167 = vmatmul.mubr.f32.gmra.mxu0 %v6814
    %v7168 = vpop.f32.mrf.mxu0
    %v7169 = vadd.f32 0.0, %v7168
    %v7170 = vpop.f32.mrf.mxu0
    %7171 = vmatprep.mubr.f32.mxu0 0.0
    %7172 = vmatmul.mubr.f32.gmra.mxu0 %v6817
    %v7173 = vpop.f32.mrf.mxu0
    %v7174 = vadd.f32 0.0, %v7173
    %v7175 = vpop.f32.mrf.mxu0
    %7176 = vmatprep.mubr.f32.mxu0 0.0
    %7177 = vmatmul.mubr.f32.gmra.mxu0 %v6820
    %v7178 = vpop.f32.mrf.mxu0
    %v7179 = vadd.f32 0.0, %v7178
    %v7180 = vpop.f32.mrf.mxu0
    %7181 = vmatprep.mubr.f32.mxu0 0.0
    %7182 = vmatmul.mubr.f32.gmra.mxu0 %v6823
    %v7183 = vpop.f32.mrf.mxu0
    %v7184 = vadd.f32 0.0, %v7183
    %v7185 = vpop.f32.mrf.mxu0
    %7186 = vmatprep.mubr.f32.mxu0 0.0
    %7187 = vmatmul.mubr.f32.gmra.mxu0 %v6826
    %v7188 = vpop.f32.mrf.mxu0
    %v7189 = vadd.f32 0.0, %v7188
    %v7190 = vpop.f32.mrf.mxu0
    %7191 = vmatprep.mubr.f32.mxu0 0.0
    %7192 = vmatmul.mubr.f32.gmra.mxu0 %v6829
    %v7193 = vpop.f32.mrf.mxu0
    %v7194 = vadd.f32 0.0, %v7193
    %v7195 = vpop.f32.mrf.mxu0
    %7196 = vmatprep.mubr.f32.mxu0 0.0
    %7197 = vmatmul.mubr.f32.gmra.mxu0 %v6832
    %v7198 = vpop.f32.mrf.mxu0
    %v7199 = vadd.f32 0.0, %v7198
    %v7200 = vpop.f32.mrf.mxu0
    %7201 = vmatprep.mubr.f32.mxu0 0.0
    %7202 = vmatmul.mubr.f32.gmra.mxu0 %v6835
    %v7203 = vpop.f32.mrf.mxu0
    %v7204 = vadd.f32 0.0, %v7203
    %v7205 = vpop.f32.mrf.mxu0
    %7206 = vmatprep.mubr.f32.mxu0 0.0
    %7207 = vmatmul.mubr.f32.gmra.mxu0 %v6838
    %v7208 = vpop.f32.mrf.mxu0
    %v7209 = vadd.f32 0.0, %v7208
    %v7210 = vpop.f32.mrf.mxu0
    %7211 = vmatprep.mubr.f32.mxu0 0.0
    %7212 = vmatmul.mubr.f32.gmra.mxu0 %v6841
    %v7213 = vpop.f32.mrf.mxu0
    %v7214 = vadd.f32 0.0, %v7213
    %v7215 = vpop.f32.mrf.mxu0
    %7216 = vmatprep.mubr.f32.mxu0 0.0
    %7217 = vmatmul.mubr.f32.gmra.mxu0 %v6844
    %v7218 = vpop.f32.mrf.mxu0
    %v7219 = vadd.f32 0.0, %v7218
    %v7220 = vpop.f32.mrf.mxu0
    %7221 = vmatprep.mubr.f32.mxu0 0.0
    %7222 = vmatmul.mubr.f32.gmra.mxu0 %v6847
    %v7223 = vpop.f32.mrf.mxu0
    %v7224 = vadd.f32 0.0, %v7223
    %v7225 = vpop.f32.mrf.mxu0
    %7226 = vmatprep.mubr.f32.mxu0 0.0
    %7227 = vmatmul.mubr.f32.gmra.mxu0 %v6850
    %v7228 = vpop.f32.mrf.mxu0
    %v7229 = vadd.f32 0.0, %v7228
    %v7230 = vpop.f32.mrf.mxu0
    %7231 = vmatprep.mubr.f32.mxu0 0.0
    %7232 = vmatmul.mubr.f32.gmra.mxu0 %v6853
    %v7233 = vpop.f32.mrf.mxu0
    %v7234 = vadd.f32 0.0, %v7233
    %v7235 = vpop.f32.mrf.mxu0
    %7236 = vmatprep.mubr.f32.mxu0 0.0
    %7237 = vmatmul.mubr.f32.gmra.mxu0 %v6856
    %v7238 = vpop.f32.mrf.mxu0
    %v7239 = vadd.f32 0.0, %v7238
    %v7240 = vpop.f32.mrf.mxu0
    %7241 = vmatprep.mubr.f32.mxu0 0.0
    %7242 = vmatmul.mubr.f32.gmra.mxu0 %v6859
    %v7243 = vpop.f32.mrf.mxu0
    %v7244 = vadd.f32 0.0, %v7243
    %v7245 = vpop.f32.mrf.mxu0
    %7246 = vmatprep.mubr.f32.mxu0 0.0
    %7247 = vmatmul.mubr.f32.gmra.mxu0 %v6862
    %v7248 = vpop.f32.mrf.mxu0
    %v7249 = vadd.f32 0.0, %v7248
    %v7250 = vpop.f32.mrf.mxu0
    %7251 = vmatprep.mubr.f32.mxu0 0.0
    %7252 = vmatmul.mubr.f32.gmra.mxu0 %v6865
    %v7253 = vpop.f32.mrf.mxu0
    %v7254 = vadd.f32 0.0, %v7253
    %v7255 = vpop.f32.mrf.mxu0
    %7256 = vmatprep.mubr.f32.mxu0 0.0
    %7257 = vmatmul.mubr.f32.gmra.mxu0 %v6868
    %v7258 = vpop.f32.mrf.mxu0
    %v7259 = vadd.f32 0.0, %v7258
    %v7260 = vpop.f32.mrf.mxu0
    %7261 = vmatprep.mubr.f32.mxu0 0.0
    %7262 = vmatmul.mubr.f32.gmra.mxu0 %v6871
    %v7263 = vpop.f32.mrf.mxu0
    %v7264 = vadd.f32 0.0, %v7263
    %v7265 = vpop.f32.mrf.mxu0
    %7266 = vmatprep.mubr.f32.mxu0 0.0
    %7267 = vmatmul.mubr.f32.gmra.mxu0 %v6874
    %v7268 = vpop.f32.mrf.mxu0
    %v7269 = vadd.f32 0.0, %v7268
    %v7270 = vpop.f32.mrf.mxu0
    %7271 = vmatprep.mubr.f32.mxu0 0.0
    %7272 = vmatmul.mubr.f32.gmra.mxu0 %v6877
    %v7273 = vpop.f32.mrf.mxu0
    %v7274 = vadd.f32 0.0, %v7273
    %v7275 = vpop.f32.mrf.mxu0
    %7276 = vmatprep.mubr.f32.mxu0 0.0
    %7277 = vmatmul.mubr.f32.gmra.mxu0 %v6880
    %v7278 = vpop.f32.mrf.mxu0
    %v7279 = vadd.f32 0.0, %v7278
    %v7280 = vpop.f32.mrf.mxu0
    %7281 = vmatprep.mubr.f32.mxu0 0.0
    %7282 = vmatmul.mubr.f32.gmra.mxu0 %v6883
    %v7283 = vpop.f32.mrf.mxu0
    %v7284 = vadd.f32 0.0, %v7283
    %v7285 = vpop.f32.mrf.mxu0
    %7286 = vmatprep.mubr.f32.mxu0 0.0
    %7287 = vmatmul.mubr.f32.gmra.mxu0 %v6886
    %v7288 = vpop.f32.mrf.mxu0
    %v7289 = vadd.f32 0.0, %v7288
    %v7290 = vpop.f32.mrf.mxu0
    %7291 = vmatprep.mubr.f32.mxu0 0.0
    %7292 = vmatmul.mubr.f32.gmra.mxu0 %v6889
    %v7293 = vpop.f32.mrf.mxu0
    %v7294 = vadd.f32 0.0, %v7293
    %v7295 = vpop.f32.mrf.mxu0
    %7296 = vmatprep.mubr.f32.mxu0 0.0
    %7297 = vmatmul.mubr.f32.gmra.mxu0 %v6892
    %v7298 = vpop.f32.mrf.mxu0
    %v7299 = vadd.f32 0.0, %v7298
    %v7300 = vpop.f32.mrf.mxu0
    %7301 = vmatprep.mubr.f32.mxu0 0.0
    %7302 = vmatmul.mubr.f32.gmra.mxu0 %v6895
    %v7303 = vpop.f32.mrf.mxu0
    %v7304 = vadd.f32 0.0, %v7303
    %v7305 = vpop.f32.mrf.mxu0
    %7306 = vmatprep.mubr.f32.mxu0 0.0
    %7307 = vmatmul.mubr.f32.gmra.mxu0 %v6898
    %v7308 = vpop.f32.mrf.mxu0
    %v7309 = vadd.f32 0.0, %v7308
    %v7310 = vpop.f32.mrf.mxu0
    %7311 = vmatprep.mubr.f32.mxu0 0.0
    %7312 = vmatmul.mubr.f32.gmra.mxu0 %v6901
    %v7313 = vpop.f32.mrf.mxu0
    %v7314 = vadd.f32 0.0, %v7313
    %v7315 = vpop.f32.mrf.mxu0
    %7316 = vmatprep.mubr.f32.mxu0 0.0
    %7317 = vmatmul.mubr.f32.gmra.mxu0 %v6904
    %v7318 = vpop.f32.mrf.mxu0
    %v7319 = vadd.f32 0.0, %v7318
    %v7320 = vpop.f32.mrf.mxu0
    %7321 = vmatprep.mubr.f32.mxu0 0.0
    %7322 = vmatmul.mubr.f32.gmra.mxu0 %v6907
    %v7323 = vpop.f32.mrf.mxu0
    %v7324 = vadd.f32 0.0, %v7323
    %v7325 = vpop.f32.mrf.mxu0
    %7326 = vmatprep.mubr.f32.mxu0 0.0
    %7327 = vmatmul.mubr.f32.gmra.mxu0 %v6910
    %v7328 = vpop.f32.mrf.mxu0
    %v7329 = vadd.f32 0.0, %v7328
    %v7330 = vpop.f32.mrf.mxu0
    %7331 = vmatprep.mubr.f32.mxu0 0.0
    %7332 = vmatmul.mubr.f32.gmra.mxu0 %v6913
    %v7333 = vpop.f32.mrf.mxu0
    %v7334 = vadd.f32 0.0, %v7333
    %v7335 = vpop.f32.mrf.mxu0
    %7336 = vmatprep.mubr.f32.mxu0 0.0
    %7337 = vmatmul.mubr.f32.gmra.mxu0 %v6916
    %v7338 = vpop.f32.mrf.mxu0
    %v7339 = vadd.f32 0.0, %v7338
    %v7340 = vpop.f32.mrf.mxu0
    %7341 = vmatprep.mubr.f32.mxu0 0.0
    %7342 = vmatmul.mubr.f32.gmra.mxu0 %v6919
    %v7343 = vpop.f32.mrf.mxu0
    %v7344 = vadd.f32 0.0, %v7343
    %v7345 = vpop.f32.mrf.mxu0
    %7346 = vmatprep.mubr.f32.mxu0 0.0
    %7347 = vmatmul.mubr.f32.gmra.mxu0 %v6922
    %v7348 = vpop.f32.mrf.mxu0
    %v7349 = vadd.f32 0.0, %v7348
    %v7350 = vpop.f32.mrf.mxu0
    %7351 = vdwg.mxu0
    %v7352 = vadd.f32 %v6490, %v6994
    %v7353 = vadd.f32 %v6491, %v6999
    %v7354 = vadd.f32 %v6492, %v7004
    %v7355 = vadd.f32 %v6493, %v7009
    %v7356 = vadd.f32 %v6494, %v7014
    %v7357 = vadd.f32 %v6495, %v7019
    %v7358 = vadd.f32 %v6496, %v7024
    %v7359 = vadd.f32 %v6497, %v7029
    %v7360 = vadd.f32 %v6498, %v7034
    %v7361 = vadd.f32 %v6499, %v7039
    %v7362 = vadd.f32 %v6500, %v7044
    %v7363 = vadd.f32 %v6501, %v7049
    %v7364 = vadd.f32 %v6502, %v7054
    %v7365 = vadd.f32 %v6503, %v7059
    %v7366 = vadd.f32 %v6504, %v7064
    %v7367 = vadd.f32 %v6505, %v7069
    %v7368 = vadd.f32 %v6506, %v7074
    %v7369 = vadd.f32 %v6507, %v7079
    %v7370 = vadd.f32 %v6508, %v7084
    %v7371 = vadd.f32 %v6509, %v7089
    %v7372 = vadd.f32 %v6510, %v7094
    %v7373 = vadd.f32 %v6511, %v7099
    %v7374 = vadd.f32 %v6512, %v7104
    %v7375 = vadd.f32 %v6513, %v7109
    %v7376 = vadd.f32 %v6514, %v7114
    %v7377 = vadd.f32 %v6515, %v7119
    %v7378 = vadd.f32 %v6516, %v7124
    %v7379 = vadd.f32 %v6517, %v7129
    %v7380 = vadd.f32 %v6518, %v7134
    %v7381 = vadd.f32 %v6519, %v7139
    %v7382 = vadd.f32 %v6520, %v7144
    %v7383 = vadd.f32 %v6521, %v7149
    %v7384 = vadd.f32 %v6522, %v7154
    %v7385 = vadd.f32 %v6523, %v7159
    %v7386 = vadd.f32 %v6524, %v7164
    %v7387 = vadd.f32 %v6525, %v7169
    %v7388 = vadd.f32 %v6526, %v7174
    %v7389 = vadd.f32 %v6527, %v7179
    %v7390 = vadd.f32 %v6528, %v7184
    %v7391 = vadd.f32 %v6529, %v7189
    %v7392 = vadd.f32 %v6530, %v7194
    %v7393 = vadd.f32 %v6531, %v7199
    %v7394 = vadd.f32 %v6532, %v7204
    %v7395 = vadd.f32 %v6533, %v7209
    %v7396 = vadd.f32 %v6534, %v7214
    %v7397 = vadd.f32 %v6535, %v7219
    %v7398 = vadd.f32 %v6536, %v7224
    %v7399 = vadd.f32 %v6537, %v7229
    %v7400 = vadd.f32 %v6538, %v7234
    %v7401 = vadd.f32 %v6539, %v7239
    %v7402 = vadd.f32 %v6540, %v7244
    %v7403 = vadd.f32 %v6541, %v7249
    %v7404 = vadd.f32 %v6542, %v7254
    %v7405 = vadd.f32 %v6543, %v7259
    %v7406 = vadd.f32 %v6544, %v7264
    %v7407 = vadd.f32 %v6545, %v7269
    %v7408 = vadd.f32 %v6546, %v7274
    %v7409 = vadd.f32 %v6547, %v7279
    %v7410 = vadd.f32 %v6548, %v7284
    %v7411 = vadd.f32 %v6549, %v7289
    %v7412 = vadd.f32 %v6550, %v7294
    %v7413 = vadd.f32 %v6551, %v7299
    %v7414 = vadd.f32 %v6552, %v7304
    %v7415 = vadd.f32 %v6553, %v7309
    %v7416 = vadd.f32 %v6554, %v7314
    %v7417 = vadd.f32 %v6555, %v7319
    %v7418 = vadd.f32 %v6556, %v7324
    %v7419 = vadd.f32 %v6557, %v7329
    %v7420 = vadd.f32 %v6558, %v7334
    %v7421 = vadd.f32 %v6559, %v7339
    %v7422 = vadd.f32 %v6560, %v7344
    %v7423 = vadd.f32 %v6561, %v7349
    %v7424 = vadd.s32 %v311, 8
    %v7425 = vadd.s32 %v311, 16
    %v7426 = vadd.s32 %v311, 24
    %v7427 = vadd.s32 %v311, 32
    %v7428 = vadd.s32 %v311, 40
    %v7429 = vadd.s32 %v311, 48
    %v7430 = vadd.s32 %v311, 56
    %v7431 = vadd.s32 %v311, 64
    %v7432 = vadd.s32 %v311, 72
    %v7433 = vadd.s32 %v311, 80
    %v7434 = vadd.s32 %v311, 88
    %v7435 = vadd.s32 %v311, 96
    %v7436 = vadd.s32 %v311, 104
    %v7437 = vadd.s32 %v311, 112
    %v7438 = vadd.s32 %v311, 120
    %v7439 = vadd.s32 %v311, 128
    %v7440 = vadd.s32 %v311, 136
    %v7441 = vadd.s32 %v311, 144
    %v7442 = vadd.s32 %v311, 152
    %v7443 = vadd.s32 %v311, 160
    %v7444 = vadd.s32 %v311, 168
    %v7445 = vadd.s32 %v311, 176
    %v7446 = vadd.s32 %v311, 184
    %v7447 = vadd.s32 %v311, 192
    %v7448 = vadd.s32 %v311, 200
    %v7449 = vadd.s32 %v311, 208
    %v7450 = vadd.s32 %v311, 216
    %v7451 = vadd.s32 %v311, 224
    %v7452 = vadd.s32 %v311, 232
    %v7453 = vadd.s32 %v311, 240
    %v7454 = vadd.s32 %v311, 248
    %v7455 = vadd.s32 %v311, 256
    %v7456 = vadd.s32 %v311, 264
    %v7457 = vadd.s32 %v311, 272
    %v7458 = vadd.s32 %v311, 280
    %v7459 = vadd.s32 %v311, 288
    %v7460 = vadd.s32 %v311, 296
    %v7461 = vadd.s32 %v311, 304
    %v7462 = vadd.s32 %v311, 312
    %v7463 = vadd.s32 %v311, 320
    %v7464 = vadd.s32 %v311, 328
    %v7465 = vadd.s32 %v311, 336
    %v7466 = vadd.s32 %v311, 344
    %v7467 = vadd.s32 %v311, 352
    %v7468 = vadd.s32 %v311, 360
    %v7469 = vadd.s32 %v311, 368
    %v7470 = vadd.s32 %v311, 376
    %v7471 = vadd.s32 %v311, 384
    %v7472 = vadd.s32 %v311, 392
    %v7473 = vadd.s32 %v311, 400
    %v7474 = vadd.s32 %v311, 408
    %v7475 = vadd.s32 %v311, 416
    %v7476 = vadd.s32 %v311, 424
    %v7477 = vadd.s32 %v311, 432
    %v7478 = vadd.s32 %v311, 440
    %v7479 = vadd.s32 %v311, 448
    %v7480 = vadd.s32 %v311, 456
    %v7481 = vadd.s32 %v311, 464
    %v7482 = vadd.s32 %v311, 472
    %v7483 = vadd.s32 %v311, 480
    %v7484 = vadd.s32 %v311, 488
    %v7485 = vadd.s32 %v311, 496
    %v7486 = vadd.s32 %v311, 504
    %v7487 = vadd.s32 %v311, 512
    %v7488 = vadd.s32 %v311, 520
    %v7489 = vadd.s32 %v311, 528
    %v7490 = vadd.s32 %v311, 536
    %v7491 = vadd.s32 %v311, 544
    %v7492 = vadd.s32 %v311, 552
    %v7493 = vadd.s32 %v311, 560
    %v7494 = vadd.s32 %v311, 568
    %vm7495 = vcmp.lt.s32.totalorder %v311, 0
    %v7496 = vsub.s32 0, %v311
    %v7497 = vsel %vm7495, %v7496, %v311
    %v7498 = vmul.u32.u64.compose %v7497, 3817748708
    %v7499 = vextract.low.u32 %v7498
    %v7500 = vextract.high.u32 %v7498
    %v7501 = vshrl.u32 %v7500, 4
    %v7502 = vmul.u32 %v7501, 18
    %v7503 = vsub.s32 %v7497, %v7502
    %v7504 = vsub.s32 0, %v7503
    %v7505 = vsel %vm7495, %v7504, %v7503
    %vm7506 = vcmp.lt.s32.totalorder %v7424, 0
    %v7507 = vsub.s32 0, %v7424
    %v7508 = vsel %vm7506, %v7507, %v7424
    %v7509 = vmul.u32.u64.compose %v7508, 3817748708
    %v7510 = vextract.low.u32 %v7509
    %v7511 = vextract.high.u32 %v7509
    %v7512 = vshrl.u32 %v7511, 4
    %v7513 = vmul.u32 %v7512, 18
    %v7514 = vsub.s32 %v7508, %v7513
    %v7515 = vsub.s32 0, %v7514
    %v7516 = vsel %vm7506, %v7515, %v7514
    %vm7517 = vcmp.lt.s32.totalorder %v7425, 0
    %v7518 = vsub.s32 0, %v7425
    %v7519 = vsel %vm7517, %v7518, %v7425
    %v7520 = vmul.u32.u64.compose %v7519, 3817748708
    %v7521 = vextract.low.u32 %v7520
    %v7522 = vextract.high.u32 %v7520
    %v7523 = vshrl.u32 %v7522, 4
    %v7524 = vmul.u32 %v7523, 18
    %v7525 = vsub.s32 %v7519, %v7524
    %v7526 = vsub.s32 0, %v7525
    %v7527 = vsel %vm7517, %v7526, %v7525
    %vm7528 = vcmp.lt.s32.totalorder %v7426, 0
    %v7529 = vsub.s32 0, %v7426
    %v7530 = vsel %vm7528, %v7529, %v7426
    %v7531 = vmul.u32.u64.compose %v7530, 3817748708
    %v7532 = vextract.low.u32 %v7531
    %v7533 = vextract.high.u32 %v7531
    %v7534 = vshrl.u32 %v7533, 4
    %v7535 = vmul.u32 %v7534, 18
    %v7536 = vsub.s32 %v7530, %v7535
    %v7537 = vsub.s32 0, %v7536
    %v7538 = vsel %vm7528, %v7537, %v7536
    %vm7539 = vcmp.lt.s32.totalorder %v7427, 0
    %v7540 = vsub.s32 0, %v7427
    %v7541 = vsel %vm7539, %v7540, %v7427
    %v7542 = vmul.u32.u64.compose %v7541, 3817748708
    %v7543 = vextract.low.u32 %v7542
    %v7544 = vextract.high.u32 %v7542
    %v7545 = vshrl.u32 %v7544, 4
    %v7546 = vmul.u32 %v7545, 18
    %v7547 = vsub.s32 %v7541, %v7546
    %v7548 = vsub.s32 0, %v7547
    %v7549 = vsel %vm7539, %v7548, %v7547
    %vm7550 = vcmp.lt.s32.totalorder %v7428, 0
    %v7551 = vsub.s32 0, %v7428
    %v7552 = vsel %vm7550, %v7551, %v7428
    %v7553 = vmul.u32.u64.compose %v7552, 3817748708
    %v7554 = vextract.low.u32 %v7553
    %v7555 = vextract.high.u32 %v7553
    %v7556 = vshrl.u32 %v7555, 4
    %v7557 = vmul.u32 %v7556, 18
    %v7558 = vsub.s32 %v7552, %v7557
    %v7559 = vsub.s32 0, %v7558
    %v7560 = vsel %vm7550, %v7559, %v7558
    %vm7561 = vcmp.lt.s32.totalorder %v7429, 0
    %v7562 = vsub.s32 0, %v7429
    %v7563 = vsel %vm7561, %v7562, %v7429
    %v7564 = vmul.u32.u64.compose %v7563, 3817748708
    %v7565 = vextract.low.u32 %v7564
    %v7566 = vextract.high.u32 %v7564
    %v7567 = vshrl.u32 %v7566, 4
    %v7568 = vmul.u32 %v7567, 18
    %v7569 = vsub.s32 %v7563, %v7568
    %v7570 = vsub.s32 0, %v7569
    %v7571 = vsel %vm7561, %v7570, %v7569
    %vm7572 = vcmp.lt.s32.totalorder %v7430, 0
    %v7573 = vsub.s32 0, %v7430
    %v7574 = vsel %vm7572, %v7573, %v7430
    %v7575 = vmul.u32.u64.compose %v7574, 3817748708
    %v7576 = vextract.low.u32 %v7575
    %v7577 = vextract.high.u32 %v7575
    %v7578 = vshrl.u32 %v7577, 4
    %v7579 = vmul.u32 %v7578, 18
    %v7580 = vsub.s32 %v7574, %v7579
    %v7581 = vsub.s32 0, %v7580
    %v7582 = vsel %vm7572, %v7581, %v7580
    %vm7583 = vcmp.lt.s32.totalorder %v7431, 0
    %v7584 = vsub.s32 0, %v7431
    %v7585 = vsel %vm7583, %v7584, %v7431
    %v7586 = vmul.u32.u64.compose %v7585, 3817748708
    %v7587 = vextract.low.u32 %v7586
    %v7588 = vextract.high.u32 %v7586
    %v7589 = vshrl.u32 %v7588, 4
    %v7590 = vmul.u32 %v7589, 18
    %v7591 = vsub.s32 %v7585, %v7590
    %v7592 = vsub.s32 0, %v7591
    %v7593 = vsel %vm7583, %v7592, %v7591
    %vm7594 = vcmp.lt.s32.totalorder %v7432, 0
    %v7595 = vsub.s32 0, %v7432
    %v7596 = vsel %vm7594, %v7595, %v7432
    %v7597 = vmul.u32.u64.compose %v7596, 3817748708
    %v7598 = vextract.low.u32 %v7597
    %v7599 = vextract.high.u32 %v7597
    %v7600 = vshrl.u32 %v7599, 4
    %v7601 = vmul.u32 %v7600, 18
    %v7602 = vsub.s32 %v7596, %v7601
    %v7603 = vsub.s32 0, %v7602
    %v7604 = vsel %vm7594, %v7603, %v7602
    %vm7605 = vcmp.lt.s32.totalorder %v7433, 0
    %v7606 = vsub.s32 0, %v7433
    %v7607 = vsel %vm7605, %v7606, %v7433
    %v7608 = vmul.u32.u64.compose %v7607, 3817748708
    %v7609 = vextract.low.u32 %v7608
    %v7610 = vextract.high.u32 %v7608
    %v7611 = vshrl.u32 %v7610, 4
    %v7612 = vmul.u32 %v7611, 18
    %v7613 = vsub.s32 %v7607, %v7612
    %v7614 = vsub.s32 0, %v7613
    %v7615 = vsel %vm7605, %v7614, %v7613
    %vm7616 = vcmp.lt.s32.totalorder %v7434, 0
    %v7617 = vsub.s32 0, %v7434
    %v7618 = vsel %vm7616, %v7617, %v7434
    %v7619 = vmul.u32.u64.compose %v7618, 3817748708
    %v7620 = vextract.low.u32 %v7619
    %v7621 = vextract.high.u32 %v7619
    %v7622 = vshrl.u32 %v7621, 4
    %v7623 = vmul.u32 %v7622, 18
    %v7624 = vsub.s32 %v7618, %v7623
    %v7625 = vsub.s32 0, %v7624
    %v7626 = vsel %vm7616, %v7625, %v7624
    %vm7627 = vcmp.lt.s32.totalorder %v7435, 0
    %v7628 = vsub.s32 0, %v7435
    %v7629 = vsel %vm7627, %v7628, %v7435
    %v7630 = vmul.u32.u64.compose %v7629, 3817748708
    %v7631 = vextract.low.u32 %v7630
    %v7632 = vextract.high.u32 %v7630
    %v7633 = vshrl.u32 %v7632, 4
    %v7634 = vmul.u32 %v7633, 18
    %v7635 = vsub.s32 %v7629, %v7634
    %v7636 = vsub.s32 0, %v7635
    %v7637 = vsel %vm7627, %v7636, %v7635
    %vm7638 = vcmp.lt.s32.totalorder %v7436, 0
    %v7639 = vsub.s32 0, %v7436
    %v7640 = vsel %vm7638, %v7639, %v7436
    %v7641 = vmul.u32.u64.compose %v7640, 3817748708
    %v7642 = vextract.low.u32 %v7641
    %v7643 = vextract.high.u32 %v7641
    %v7644 = vshrl.u32 %v7643, 4
    %v7645 = vmul.u32 %v7644, 18
    %v7646 = vsub.s32 %v7640, %v7645
    %v7647 = vsub.s32 0, %v7646
    %v7648 = vsel %vm7638, %v7647, %v7646
    %vm7649 = vcmp.lt.s32.totalorder %v7437, 0
    %v7650 = vsub.s32 0, %v7437
    %v7651 = vsel %vm7649, %v7650, %v7437
    %v7652 = vmul.u32.u64.compose %v7651, 3817748708
    %v7653 = vextract.low.u32 %v7652
    %v7654 = vextract.high.u32 %v7652
    %v7655 = vshrl.u32 %v7654, 4
    %v7656 = vmul.u32 %v7655, 18
    %v7657 = vsub.s32 %v7651, %v7656
    %v7658 = vsub.s32 0, %v7657
    %v7659 = vsel %vm7649, %v7658, %v7657
    %vm7660 = vcmp.lt.s32.totalorder %v7438, 0
    %v7661 = vsub.s32 0, %v7438
    %v7662 = vsel %vm7660, %v7661, %v7438
    %v7663 = vmul.u32.u64.compose %v7662, 3817748708
    %v7664 = vextract.low.u32 %v7663
    %v7665 = vextract.high.u32 %v7663
    %v7666 = vshrl.u32 %v7665, 4
    %v7667 = vmul.u32 %v7666, 18
    %v7668 = vsub.s32 %v7662, %v7667
    %v7669 = vsub.s32 0, %v7668
    %v7670 = vsel %vm7660, %v7669, %v7668
    %vm7671 = vcmp.lt.s32.totalorder %v7439, 0
    %v7672 = vsub.s32 0, %v7439
    %v7673 = vsel %vm7671, %v7672, %v7439
    %v7674 = vmul.u32.u64.compose %v7673, 3817748708
    %v7675 = vextract.low.u32 %v7674
    %v7676 = vextract.high.u32 %v7674
    %v7677 = vshrl.u32 %v7676, 4
    %v7678 = vmul.u32 %v7677, 18
    %v7679 = vsub.s32 %v7673, %v7678
    %v7680 = vsub.s32 0, %v7679
    %v7681 = vsel %vm7671, %v7680, %v7679
    %vm7682 = vcmp.lt.s32.totalorder %v7440, 0
    %v7683 = vsub.s32 0, %v7440
    %v7684 = vsel %vm7682, %v7683, %v7440
    %v7685 = vmul.u32.u64.compose %v7684, 3817748708
    %v7686 = vextract.low.u32 %v7685
    %v7687 = vextract.high.u32 %v7685
    %v7688 = vshrl.u32 %v7687, 4
    %v7689 = vmul.u32 %v7688, 18
    %v7690 = vsub.s32 %v7684, %v7689
    %v7691 = vsub.s32 0, %v7690
    %v7692 = vsel %vm7682, %v7691, %v7690
    %vm7693 = vcmp.lt.s32.totalorder %v7441, 0
    %v7694 = vsub.s32 0, %v7441
    %v7695 = vsel %vm7693, %v7694, %v7441
    %v7696 = vmul.u32.u64.compose %v7695, 3817748708
    %v7697 = vextract.low.u32 %v7696
    %v7698 = vextract.high.u32 %v7696
    %v7699 = vshrl.u32 %v7698, 4
    %v7700 = vmul.u32 %v7699, 18
    %v7701 = vsub.s32 %v7695, %v7700
    %v7702 = vsub.s32 0, %v7701
    %v7703 = vsel %vm7693, %v7702, %v7701
    %vm7704 = vcmp.lt.s32.totalorder %v7442, 0
    %v7705 = vsub.s32 0, %v7442
    %v7706 = vsel %vm7704, %v7705, %v7442
    %v7707 = vmul.u32.u64.compose %v7706, 3817748708
    %v7708 = vextract.low.u32 %v7707
    %v7709 = vextract.high.u32 %v7707
    %v7710 = vshrl.u32 %v7709, 4
    %v7711 = vmul.u32 %v7710, 18
    %v7712 = vsub.s32 %v7706, %v7711
    %v7713 = vsub.s32 0, %v7712
    %v7714 = vsel %vm7704, %v7713, %v7712
    %vm7715 = vcmp.lt.s32.totalorder %v7443, 0
    %v7716 = vsub.s32 0, %v7443
    %v7717 = vsel %vm7715, %v7716, %v7443
    %v7718 = vmul.u32.u64.compose %v7717, 3817748708
    %v7719 = vextract.low.u32 %v7718
    %v7720 = vextract.high.u32 %v7718
    %v7721 = vshrl.u32 %v7720, 4
    %v7722 = vmul.u32 %v7721, 18
    %v7723 = vsub.s32 %v7717, %v7722
    %v7724 = vsub.s32 0, %v7723
    %v7725 = vsel %vm7715, %v7724, %v7723
    %vm7726 = vcmp.lt.s32.totalorder %v7444, 0
    %v7727 = vsub.s32 0, %v7444
    %v7728 = vsel %vm7726, %v7727, %v7444
    %v7729 = vmul.u32.u64.compose %v7728, 3817748708
    %v7730 = vextract.low.u32 %v7729
    %v7731 = vextract.high.u32 %v7729
    %v7732 = vshrl.u32 %v7731, 4
    %v7733 = vmul.u32 %v7732, 18
    %v7734 = vsub.s32 %v7728, %v7733
    %v7735 = vsub.s32 0, %v7734
    %v7736 = vsel %vm7726, %v7735, %v7734
    %vm7737 = vcmp.lt.s32.totalorder %v7445, 0
    %v7738 = vsub.s32 0, %v7445
    %v7739 = vsel %vm7737, %v7738, %v7445
    %v7740 = vmul.u32.u64.compose %v7739, 3817748708
    %v7741 = vextract.low.u32 %v7740
    %v7742 = vextract.high.u32 %v7740
    %v7743 = vshrl.u32 %v7742, 4
    %v7744 = vmul.u32 %v7743, 18
    %v7745 = vsub.s32 %v7739, %v7744
    %v7746 = vsub.s32 0, %v7745
    %v7747 = vsel %vm7737, %v7746, %v7745
    %vm7748 = vcmp.lt.s32.totalorder %v7446, 0
    %v7749 = vsub.s32 0, %v7446
    %v7750 = vsel %vm7748, %v7749, %v7446
    %v7751 = vmul.u32.u64.compose %v7750, 3817748708
    %v7752 = vextract.low.u32 %v7751
    %v7753 = vextract.high.u32 %v7751
    %v7754 = vshrl.u32 %v7753, 4
    %v7755 = vmul.u32 %v7754, 18
    %v7756 = vsub.s32 %v7750, %v7755
    %v7757 = vsub.s32 0, %v7756
    %v7758 = vsel %vm7748, %v7757, %v7756
    %vm7759 = vcmp.lt.s32.totalorder %v7447, 0
    %v7760 = vsub.s32 0, %v7447
    %v7761 = vsel %vm7759, %v7760, %v7447
    %v7762 = vmul.u32.u64.compose %v7761, 3817748708
    %v7763 = vextract.low.u32 %v7762
    %v7764 = vextract.high.u32 %v7762
    %v7765 = vshrl.u32 %v7764, 4
    %v7766 = vmul.u32 %v7765, 18
    %v7767 = vsub.s32 %v7761, %v7766
    %v7768 = vsub.s32 0, %v7767
    %v7769 = vsel %vm7759, %v7768, %v7767
    %vm7770 = vcmp.lt.s32.totalorder %v7448, 0
    %v7771 = vsub.s32 0, %v7448
    %v7772 = vsel %vm7770, %v7771, %v7448
    %v7773 = vmul.u32.u64.compose %v7772, 3817748708
    %v7774 = vextract.low.u32 %v7773
    %v7775 = vextract.high.u32 %v7773
    %v7776 = vshrl.u32 %v7775, 4
    %v7777 = vmul.u32 %v7776, 18
    %v7778 = vsub.s32 %v7772, %v7777
    %v7779 = vsub.s32 0, %v7778
    %v7780 = vsel %vm7770, %v7779, %v7778
    %vm7781 = vcmp.lt.s32.totalorder %v7449, 0
    %v7782 = vsub.s32 0, %v7449
    %v7783 = vsel %vm7781, %v7782, %v7449
    %v7784 = vmul.u32.u64.compose %v7783, 3817748708
    %v7785 = vextract.low.u32 %v7784
    %v7786 = vextract.high.u32 %v7784
    %v7787 = vshrl.u32 %v7786, 4
    %v7788 = vmul.u32 %v7787, 18
    %v7789 = vsub.s32 %v7783, %v7788
    %v7790 = vsub.s32 0, %v7789
    %v7791 = vsel %vm7781, %v7790, %v7789
    %vm7792 = vcmp.lt.s32.totalorder %v7450, 0
    %v7793 = vsub.s32 0, %v7450
    %v7794 = vsel %vm7792, %v7793, %v7450
    %v7795 = vmul.u32.u64.compose %v7794, 3817748708
    %v7796 = vextract.low.u32 %v7795
    %v7797 = vextract.high.u32 %v7795
    %v7798 = vshrl.u32 %v7797, 4
    %v7799 = vmul.u32 %v7798, 18
    %v7800 = vsub.s32 %v7794, %v7799
    %v7801 = vsub.s32 0, %v7800
    %v7802 = vsel %vm7792, %v7801, %v7800
    %vm7803 = vcmp.lt.s32.totalorder %v7451, 0
    %v7804 = vsub.s32 0, %v7451
    %v7805 = vsel %vm7803, %v7804, %v7451
    %v7806 = vmul.u32.u64.compose %v7805, 3817748708
    %v7807 = vextract.low.u32 %v7806
    %v7808 = vextract.high.u32 %v7806
    %v7809 = vshrl.u32 %v7808, 4
    %v7810 = vmul.u32 %v7809, 18
    %v7811 = vsub.s32 %v7805, %v7810
    %v7812 = vsub.s32 0, %v7811
    %v7813 = vsel %vm7803, %v7812, %v7811
    %vm7814 = vcmp.lt.s32.totalorder %v7452, 0
    %v7815 = vsub.s32 0, %v7452
    %v7816 = vsel %vm7814, %v7815, %v7452
    %v7817 = vmul.u32.u64.compose %v7816, 3817748708
    %v7818 = vextract.low.u32 %v7817
    %v7819 = vextract.high.u32 %v7817
    %v7820 = vshrl.u32 %v7819, 4
    %v7821 = vmul.u32 %v7820, 18
    %v7822 = vsub.s32 %v7816, %v7821
    %v7823 = vsub.s32 0, %v7822
    %v7824 = vsel %vm7814, %v7823, %v7822
    %vm7825 = vcmp.lt.s32.totalorder %v7453, 0
    %v7826 = vsub.s32 0, %v7453
    %v7827 = vsel %vm7825, %v7826, %v7453
    %v7828 = vmul.u32.u64.compose %v7827, 3817748708
    %v7829 = vextract.low.u32 %v7828
    %v7830 = vextract.high.u32 %v7828
    %v7831 = vshrl.u32 %v7830, 4
    %v7832 = vmul.u32 %v7831, 18
    %v7833 = vsub.s32 %v7827, %v7832
    %v7834 = vsub.s32 0, %v7833
    %v7835 = vsel %vm7825, %v7834, %v7833
    %vm7836 = vcmp.lt.s32.totalorder %v7454, 0
    %v7837 = vsub.s32 0, %v7454
    %v7838 = vsel %vm7836, %v7837, %v7454
    %v7839 = vmul.u32.u64.compose %v7838, 3817748708
    %v7840 = vextract.low.u32 %v7839
    %v7841 = vextract.high.u32 %v7839
    %v7842 = vshrl.u32 %v7841, 4
    %v7843 = vmul.u32 %v7842, 18
    %v7844 = vsub.s32 %v7838, %v7843
    %v7845 = vsub.s32 0, %v7844
    %v7846 = vsel %vm7836, %v7845, %v7844
    %vm7847 = vcmp.lt.s32.totalorder %v7455, 0
    %v7848 = vsub.s32 0, %v7455
    %v7849 = vsel %vm7847, %v7848, %v7455
    %v7850 = vmul.u32.u64.compose %v7849, 3817748708
    %v7851 = vextract.low.u32 %v7850
    %v7852 = vextract.high.u32 %v7850
    %v7853 = vshrl.u32 %v7852, 4
    %v7854 = vmul.u32 %v7853, 18
    %v7855 = vsub.s32 %v7849, %v7854
    %v7856 = vsub.s32 0, %v7855
    %v7857 = vsel %vm7847, %v7856, %v7855
    %vm7858 = vcmp.lt.s32.totalorder %v7456, 0
    %v7859 = vsub.s32 0, %v7456
    %v7860 = vsel %vm7858, %v7859, %v7456
    %v7861 = vmul.u32.u64.compose %v7860, 3817748708
    %v7862 = vextract.low.u32 %v7861
    %v7863 = vextract.high.u32 %v7861
    %v7864 = vshrl.u32 %v7863, 4
    %v7865 = vmul.u32 %v7864, 18
    %v7866 = vsub.s32 %v7860, %v7865
    %v7867 = vsub.s32 0, %v7866
    %v7868 = vsel %vm7858, %v7867, %v7866
    %vm7869 = vcmp.lt.s32.totalorder %v7457, 0
    %v7870 = vsub.s32 0, %v7457
    %v7871 = vsel %vm7869, %v7870, %v7457
    %v7872 = vmul.u32.u64.compose %v7871, 3817748708
    %v7873 = vextract.low.u32 %v7872
    %v7874 = vextract.high.u32 %v7872
    %v7875 = vshrl.u32 %v7874, 4
    %v7876 = vmul.u32 %v7875, 18
    %v7877 = vsub.s32 %v7871, %v7876
    %v7878 = vsub.s32 0, %v7877
    %v7879 = vsel %vm7869, %v7878, %v7877
    %vm7880 = vcmp.lt.s32.totalorder %v7458, 0
    %v7881 = vsub.s32 0, %v7458
    %v7882 = vsel %vm7880, %v7881, %v7458
    %v7883 = vmul.u32.u64.compose %v7882, 3817748708
    %v7884 = vextract.low.u32 %v7883
    %v7885 = vextract.high.u32 %v7883
    %v7886 = vshrl.u32 %v7885, 4
    %v7887 = vmul.u32 %v7886, 18
    %v7888 = vsub.s32 %v7882, %v7887
    %v7889 = vsub.s32 0, %v7888
    %v7890 = vsel %vm7880, %v7889, %v7888
    %vm7891 = vcmp.lt.s32.totalorder %v7459, 0
    %v7892 = vsub.s32 0, %v7459
    %v7893 = vsel %vm7891, %v7892, %v7459
    %v7894 = vmul.u32.u64.compose %v7893, 3817748708
    %v7895 = vextract.low.u32 %v7894
    %v7896 = vextract.high.u32 %v7894
    %v7897 = vshrl.u32 %v7896, 4
    %v7898 = vmul.u32 %v7897, 18
    %v7899 = vsub.s32 %v7893, %v7898
    %v7900 = vsub.s32 0, %v7899
    %v7901 = vsel %vm7891, %v7900, %v7899
    %vm7902 = vcmp.lt.s32.totalorder %v7460, 0
    %v7903 = vsub.s32 0, %v7460
    %v7904 = vsel %vm7902, %v7903, %v7460
    %v7905 = vmul.u32.u64.compose %v7904, 3817748708
    %v7906 = vextract.low.u32 %v7905
    %v7907 = vextract.high.u32 %v7905
    %v7908 = vshrl.u32 %v7907, 4
    %v7909 = vmul.u32 %v7908, 18
    %v7910 = vsub.s32 %v7904, %v7909
    %v7911 = vsub.s32 0, %v7910
    %v7912 = vsel %vm7902, %v7911, %v7910
    %vm7913 = vcmp.lt.s32.totalorder %v7461, 0
    %v7914 = vsub.s32 0, %v7461
    %v7915 = vsel %vm7913, %v7914, %v7461
    %v7916 = vmul.u32.u64.compose %v7915, 3817748708
    %v7917 = vextract.low.u32 %v7916
    %v7918 = vextract.high.u32 %v7916
    %v7919 = vshrl.u32 %v7918, 4
    %v7920 = vmul.u32 %v7919, 18
    %v7921 = vsub.s32 %v7915, %v7920
    %v7922 = vsub.s32 0, %v7921
    %v7923 = vsel %vm7913, %v7922, %v7921
    %vm7924 = vcmp.lt.s32.totalorder %v7462, 0
    %v7925 = vsub.s32 0, %v7462
    %v7926 = vsel %vm7924, %v7925, %v7462
    %v7927 = vmul.u32.u64.compose %v7926, 3817748708
    %v7928 = vextract.low.u32 %v7927
    %v7929 = vextract.high.u32 %v7927
    %v7930 = vshrl.u32 %v7929, 4
    %v7931 = vmul.u32 %v7930, 18
    %v7932 = vsub.s32 %v7926, %v7931
    %v7933 = vsub.s32 0, %v7932
    %v7934 = vsel %vm7924, %v7933, %v7932
    %vm7935 = vcmp.lt.s32.totalorder %v7463, 0
    %v7936 = vsub.s32 0, %v7463
    %v7937 = vsel %vm7935, %v7936, %v7463
    %v7938 = vmul.u32.u64.compose %v7937, 3817748708
    %v7939 = vextract.low.u32 %v7938
    %v7940 = vextract.high.u32 %v7938
    %v7941 = vshrl.u32 %v7940, 4
    %v7942 = vmul.u32 %v7941, 18
    %v7943 = vsub.s32 %v7937, %v7942
    %v7944 = vsub.s32 0, %v7943
    %v7945 = vsel %vm7935, %v7944, %v7943
    %vm7946 = vcmp.lt.s32.totalorder %v7464, 0
    %v7947 = vsub.s32 0, %v7464
    %v7948 = vsel %vm7946, %v7947, %v7464
    %v7949 = vmul.u32.u64.compose %v7948, 3817748708
    %v7950 = vextract.low.u32 %v7949
    %v7951 = vextract.high.u32 %v7949
    %v7952 = vshrl.u32 %v7951, 4
    %v7953 = vmul.u32 %v7952, 18
    %v7954 = vsub.s32 %v7948, %v7953
    %v7955 = vsub.s32 0, %v7954
    %v7956 = vsel %vm7946, %v7955, %v7954
    %vm7957 = vcmp.lt.s32.totalorder %v7465, 0
    %v7958 = vsub.s32 0, %v7465
    %v7959 = vsel %vm7957, %v7958, %v7465
    %v7960 = vmul.u32.u64.compose %v7959, 3817748708
    %v7961 = vextract.low.u32 %v7960
    %v7962 = vextract.high.u32 %v7960
    %v7963 = vshrl.u32 %v7962, 4
    %v7964 = vmul.u32 %v7963, 18
    %v7965 = vsub.s32 %v7959, %v7964
    %v7966 = vsub.s32 0, %v7965
    %v7967 = vsel %vm7957, %v7966, %v7965
    %vm7968 = vcmp.lt.s32.totalorder %v7466, 0
    %v7969 = vsub.s32 0, %v7466
    %v7970 = vsel %vm7968, %v7969, %v7466
    %v7971 = vmul.u32.u64.compose %v7970, 3817748708
    %v7972 = vextract.low.u32 %v7971
    %v7973 = vextract.high.u32 %v7971
    %v7974 = vshrl.u32 %v7973, 4
    %v7975 = vmul.u32 %v7974, 18
    %v7976 = vsub.s32 %v7970, %v7975
    %v7977 = vsub.s32 0, %v7976
    %v7978 = vsel %vm7968, %v7977, %v7976
    %vm7979 = vcmp.lt.s32.totalorder %v7467, 0
    %v7980 = vsub.s32 0, %v7467
    %v7981 = vsel %vm7979, %v7980, %v7467
    %v7982 = vmul.u32.u64.compose %v7981, 3817748708
    %v7983 = vextract.low.u32 %v7982
    %v7984 = vextract.high.u32 %v7982
    %v7985 = vshrl.u32 %v7984, 4
    %v7986 = vmul.u32 %v7985, 18
    %v7987 = vsub.s32 %v7981, %v7986
    %v7988 = vsub.s32 0, %v7987
    %v7989 = vsel %vm7979, %v7988, %v7987
    %vm7990 = vcmp.lt.s32.totalorder %v7468, 0
    %v7991 = vsub.s32 0, %v7468
    %v7992 = vsel %vm7990, %v7991, %v7468
    %v7993 = vmul.u32.u64.compose %v7992, 3817748708
    %v7994 = vextract.low.u32 %v7993
    %v7995 = vextract.high.u32 %v7993
    %v7996 = vshrl.u32 %v7995, 4
    %v7997 = vmul.u32 %v7996, 18
    %v7998 = vsub.s32 %v7992, %v7997
    %v7999 = vsub.s32 0, %v7998
    %v8000 = vsel %vm7990, %v7999, %v7998
    %vm8001 = vcmp.lt.s32.totalorder %v7469, 0
    %v8002 = vsub.s32 0, %v7469
    %v8003 = vsel %vm8001, %v8002, %v7469
    %v8004 = vmul.u32.u64.compose %v8003, 3817748708
    %v8005 = vextract.low.u32 %v8004
    %v8006 = vextract.high.u32 %v8004
    %v8007 = vshrl.u32 %v8006, 4
    %v8008 = vmul.u32 %v8007, 18
    %v8009 = vsub.s32 %v8003, %v8008
    %v8010 = vsub.s32 0, %v8009
    %v8011 = vsel %vm8001, %v8010, %v8009
    %vm8012 = vcmp.lt.s32.totalorder %v7470, 0
    %v8013 = vsub.s32 0, %v7470
    %v8014 = vsel %vm8012, %v8013, %v7470
    %v8015 = vmul.u32.u64.compose %v8014, 3817748708
    %v8016 = vextract.low.u32 %v8015
    %v8017 = vextract.high.u32 %v8015
    %v8018 = vshrl.u32 %v8017, 4
    %v8019 = vmul.u32 %v8018, 18
    %v8020 = vsub.s32 %v8014, %v8019
    %v8021 = vsub.s32 0, %v8020
    %v8022 = vsel %vm8012, %v8021, %v8020
    %vm8023 = vcmp.lt.s32.totalorder %v7471, 0
    %v8024 = vsub.s32 0, %v7471
    %v8025 = vsel %vm8023, %v8024, %v7471
    %v8026 = vmul.u32.u64.compose %v8025, 3817748708
    %v8027 = vextract.low.u32 %v8026
    %v8028 = vextract.high.u32 %v8026
    %v8029 = vshrl.u32 %v8028, 4
    %v8030 = vmul.u32 %v8029, 18
    %v8031 = vsub.s32 %v8025, %v8030
    %v8032 = vsub.s32 0, %v8031
    %v8033 = vsel %vm8023, %v8032, %v8031
    %vm8034 = vcmp.lt.s32.totalorder %v7472, 0
    %v8035 = vsub.s32 0, %v7472
    %v8036 = vsel %vm8034, %v8035, %v7472
    %v8037 = vmul.u32.u64.compose %v8036, 3817748708
    %v8038 = vextract.low.u32 %v8037
    %v8039 = vextract.high.u32 %v8037
    %v8040 = vshrl.u32 %v8039, 4
    %v8041 = vmul.u32 %v8040, 18
    %v8042 = vsub.s32 %v8036, %v8041
    %v8043 = vsub.s32 0, %v8042
    %v8044 = vsel %vm8034, %v8043, %v8042
    %vm8045 = vcmp.lt.s32.totalorder %v7473, 0
    %v8046 = vsub.s32 0, %v7473
    %v8047 = vsel %vm8045, %v8046, %v7473
    %v8048 = vmul.u32.u64.compose %v8047, 3817748708
    %v8049 = vextract.low.u32 %v8048
    %v8050 = vextract.high.u32 %v8048
    %v8051 = vshrl.u32 %v8050, 4
    %v8052 = vmul.u32 %v8051, 18
    %v8053 = vsub.s32 %v8047, %v8052
    %v8054 = vsub.s32 0, %v8053
    %v8055 = vsel %vm8045, %v8054, %v8053
    %vm8056 = vcmp.lt.s32.totalorder %v7474, 0
    %v8057 = vsub.s32 0, %v7474
    %v8058 = vsel %vm8056, %v8057, %v7474
    %v8059 = vmul.u32.u64.compose %v8058, 3817748708
    %v8060 = vextract.low.u32 %v8059
    %v8061 = vextract.high.u32 %v8059
    %v8062 = vshrl.u32 %v8061, 4
    %v8063 = vmul.u32 %v8062, 18
    %v8064 = vsub.s32 %v8058, %v8063
    %v8065 = vsub.s32 0, %v8064
    %v8066 = vsel %vm8056, %v8065, %v8064
    %vm8067 = vcmp.lt.s32.totalorder %v7475, 0
    %v8068 = vsub.s32 0, %v7475
    %v8069 = vsel %vm8067, %v8068, %v7475
    %v8070 = vmul.u32.u64.compose %v8069, 3817748708
    %v8071 = vextract.low.u32 %v8070
    %v8072 = vextract.high.u32 %v8070
    %v8073 = vshrl.u32 %v8072, 4
    %v8074 = vmul.u32 %v8073, 18
    %v8075 = vsub.s32 %v8069, %v8074
    %v8076 = vsub.s32 0, %v8075
    %v8077 = vsel %vm8067, %v8076, %v8075
    %vm8078 = vcmp.lt.s32.totalorder %v7476, 0
    %v8079 = vsub.s32 0, %v7476
    %v8080 = vsel %vm8078, %v8079, %v7476
    %v8081 = vmul.u32.u64.compose %v8080, 3817748708
    %v8082 = vextract.low.u32 %v8081
    %v8083 = vextract.high.u32 %v8081
    %v8084 = vshrl.u32 %v8083, 4
    %v8085 = vmul.u32 %v8084, 18
    %v8086 = vsub.s32 %v8080, %v8085
    %v8087 = vsub.s32 0, %v8086
    %v8088 = vsel %vm8078, %v8087, %v8086
    %vm8089 = vcmp.lt.s32.totalorder %v7477, 0
    %v8090 = vsub.s32 0, %v7477
    %v8091 = vsel %vm8089, %v8090, %v7477
    %v8092 = vmul.u32.u64.compose %v8091, 3817748708
    %v8093 = vextract.low.u32 %v8092
    %v8094 = vextract.high.u32 %v8092
    %v8095 = vshrl.u32 %v8094, 4
    %v8096 = vmul.u32 %v8095, 18
    %v8097 = vsub.s32 %v8091, %v8096
    %v8098 = vsub.s32 0, %v8097
    %v8099 = vsel %vm8089, %v8098, %v8097
    %vm8100 = vcmp.lt.s32.totalorder %v7478, 0
    %v8101 = vsub.s32 0, %v7478
    %v8102 = vsel %vm8100, %v8101, %v7478
    %v8103 = vmul.u32.u64.compose %v8102, 3817748708
    %v8104 = vextract.low.u32 %v8103
    %v8105 = vextract.high.u32 %v8103
    %v8106 = vshrl.u32 %v8105, 4
    %v8107 = vmul.u32 %v8106, 18
    %v8108 = vsub.s32 %v8102, %v8107
    %v8109 = vsub.s32 0, %v8108
    %v8110 = vsel %vm8100, %v8109, %v8108
    %vm8111 = vcmp.lt.s32.totalorder %v7479, 0
    %v8112 = vsub.s32 0, %v7479
    %v8113 = vsel %vm8111, %v8112, %v7479
    %v8114 = vmul.u32.u64.compose %v8113, 3817748708
    %v8115 = vextract.low.u32 %v8114
    %v8116 = vextract.high.u32 %v8114
    %v8117 = vshrl.u32 %v8116, 4
    %v8118 = vmul.u32 %v8117, 18
    %v8119 = vsub.s32 %v8113, %v8118
    %v8120 = vsub.s32 0, %v8119
    %v8121 = vsel %vm8111, %v8120, %v8119
    %vm8122 = vcmp.lt.s32.totalorder %v7480, 0
    %v8123 = vsub.s32 0, %v7480
    %v8124 = vsel %vm8122, %v8123, %v7480
    %v8125 = vmul.u32.u64.compose %v8124, 3817748708
    %v8126 = vextract.low.u32 %v8125
    %v8127 = vextract.high.u32 %v8125
    %v8128 = vshrl.u32 %v8127, 4
    %v8129 = vmul.u32 %v8128, 18
    %v8130 = vsub.s32 %v8124, %v8129
    %v8131 = vsub.s32 0, %v8130
    %v8132 = vsel %vm8122, %v8131, %v8130
    %vm8133 = vcmp.lt.s32.totalorder %v7481, 0
    %v8134 = vsub.s32 0, %v7481
    %v8135 = vsel %vm8133, %v8134, %v7481
    %v8136 = vmul.u32.u64.compose %v8135, 3817748708
    %v8137 = vextract.low.u32 %v8136
    %v8138 = vextract.high.u32 %v8136
    %v8139 = vshrl.u32 %v8138, 4
    %v8140 = vmul.u32 %v8139, 18
    %v8141 = vsub.s32 %v8135, %v8140
    %v8142 = vsub.s32 0, %v8141
    %v8143 = vsel %vm8133, %v8142, %v8141
    %vm8144 = vcmp.lt.s32.totalorder %v7482, 0
    %v8145 = vsub.s32 0, %v7482
    %v8146 = vsel %vm8144, %v8145, %v7482
    %v8147 = vmul.u32.u64.compose %v8146, 3817748708
    %v8148 = vextract.low.u32 %v8147
    %v8149 = vextract.high.u32 %v8147
    %v8150 = vshrl.u32 %v8149, 4
    %v8151 = vmul.u32 %v8150, 18
    %v8152 = vsub.s32 %v8146, %v8151
    %v8153 = vsub.s32 0, %v8152
    %v8154 = vsel %vm8144, %v8153, %v8152
    %vm8155 = vcmp.lt.s32.totalorder %v7483, 0
    %v8156 = vsub.s32 0, %v7483
    %v8157 = vsel %vm8155, %v8156, %v7483
    %v8158 = vmul.u32.u64.compose %v8157, 3817748708
    %v8159 = vextract.low.u32 %v8158
    %v8160 = vextract.high.u32 %v8158
    %v8161 = vshrl.u32 %v8160, 4
    %v8162 = vmul.u32 %v8161, 18
    %v8163 = vsub.s32 %v8157, %v8162
    %v8164 = vsub.s32 0, %v8163
    %v8165 = vsel %vm8155, %v8164, %v8163
    %vm8166 = vcmp.lt.s32.totalorder %v7484, 0
    %v8167 = vsub.s32 0, %v7484
    %v8168 = vsel %vm8166, %v8167, %v7484
    %v8169 = vmul.u32.u64.compose %v8168, 3817748708
    %v8170 = vextract.low.u32 %v8169
    %v8171 = vextract.high.u32 %v8169
    %v8172 = vshrl.u32 %v8171, 4
    %v8173 = vmul.u32 %v8172, 18
    %v8174 = vsub.s32 %v8168, %v8173
    %v8175 = vsub.s32 0, %v8174
    %v8176 = vsel %vm8166, %v8175, %v8174
    %vm8177 = vcmp.lt.s32.totalorder %v7485, 0
    %v8178 = vsub.s32 0, %v7485
    %v8179 = vsel %vm8177, %v8178, %v7485
    %v8180 = vmul.u32.u64.compose %v8179, 3817748708
    %v8181 = vextract.low.u32 %v8180
    %v8182 = vextract.high.u32 %v8180
    %v8183 = vshrl.u32 %v8182, 4
    %v8184 = vmul.u32 %v8183, 18
    %v8185 = vsub.s32 %v8179, %v8184
    %v8186 = vsub.s32 0, %v8185
    %v8187 = vsel %vm8177, %v8186, %v8185
    %vm8188 = vcmp.lt.s32.totalorder %v7486, 0
    %v8189 = vsub.s32 0, %v7486
    %v8190 = vsel %vm8188, %v8189, %v7486
    %v8191 = vmul.u32.u64.compose %v8190, 3817748708
    %v8192 = vextract.low.u32 %v8191
    %v8193 = vextract.high.u32 %v8191
    %v8194 = vshrl.u32 %v8193, 4
    %v8195 = vmul.u32 %v8194, 18
    %v8196 = vsub.s32 %v8190, %v8195
    %v8197 = vsub.s32 0, %v8196
    %v8198 = vsel %vm8188, %v8197, %v8196
    %vm8199 = vcmp.lt.s32.totalorder %v7487, 0
    %v8200 = vsub.s32 0, %v7487
    %v8201 = vsel %vm8199, %v8200, %v7487
    %v8202 = vmul.u32.u64.compose %v8201, 3817748708
    %v8203 = vextract.low.u32 %v8202
    %v8204 = vextract.high.u32 %v8202
    %v8205 = vshrl.u32 %v8204, 4
    %v8206 = vmul.u32 %v8205, 18
    %v8207 = vsub.s32 %v8201, %v8206
    %v8208 = vsub.s32 0, %v8207
    %v8209 = vsel %vm8199, %v8208, %v8207
    %vm8210 = vcmp.lt.s32.totalorder %v7488, 0
    %v8211 = vsub.s32 0, %v7488
    %v8212 = vsel %vm8210, %v8211, %v7488
    %v8213 = vmul.u32.u64.compose %v8212, 3817748708
    %v8214 = vextract.low.u32 %v8213
    %v8215 = vextract.high.u32 %v8213
    %v8216 = vshrl.u32 %v8215, 4
    %v8217 = vmul.u32 %v8216, 18
    %v8218 = vsub.s32 %v8212, %v8217
    %v8219 = vsub.s32 0, %v8218
    %v8220 = vsel %vm8210, %v8219, %v8218
    %vm8221 = vcmp.lt.s32.totalorder %v7489, 0
    %v8222 = vsub.s32 0, %v7489
    %v8223 = vsel %vm8221, %v8222, %v7489
    %v8224 = vmul.u32.u64.compose %v8223, 3817748708
    %v8225 = vextract.low.u32 %v8224
    %v8226 = vextract.high.u32 %v8224
    %v8227 = vshrl.u32 %v8226, 4
    %v8228 = vmul.u32 %v8227, 18
    %v8229 = vsub.s32 %v8223, %v8228
    %v8230 = vsub.s32 0, %v8229
    %v8231 = vsel %vm8221, %v8230, %v8229
    %vm8232 = vcmp.lt.s32.totalorder %v7490, 0
    %v8233 = vsub.s32 0, %v7490
    %v8234 = vsel %vm8232, %v8233, %v7490
    %v8235 = vmul.u32.u64.compose %v8234, 3817748708
    %v8236 = vextract.low.u32 %v8235
    %v8237 = vextract.high.u32 %v8235
    %v8238 = vshrl.u32 %v8237, 4
    %v8239 = vmul.u32 %v8238, 18
    %v8240 = vsub.s32 %v8234, %v8239
    %v8241 = vsub.s32 0, %v8240
    %v8242 = vsel %vm8232, %v8241, %v8240
    %vm8243 = vcmp.lt.s32.totalorder %v7491, 0
    %v8244 = vsub.s32 0, %v7491
    %v8245 = vsel %vm8243, %v8244, %v7491
    %v8246 = vmul.u32.u64.compose %v8245, 3817748708
    %v8247 = vextract.low.u32 %v8246
    %v8248 = vextract.high.u32 %v8246
    %v8249 = vshrl.u32 %v8248, 4
    %v8250 = vmul.u32 %v8249, 18
    %v8251 = vsub.s32 %v8245, %v8250
    %v8252 = vsub.s32 0, %v8251
    %v8253 = vsel %vm8243, %v8252, %v8251
    %vm8254 = vcmp.lt.s32.totalorder %v7492, 0
    %v8255 = vsub.s32 0, %v7492
    %v8256 = vsel %vm8254, %v8255, %v7492
    %v8257 = vmul.u32.u64.compose %v8256, 3817748708
    %v8258 = vextract.low.u32 %v8257
    %v8259 = vextract.high.u32 %v8257
    %v8260 = vshrl.u32 %v8259, 4
    %v8261 = vmul.u32 %v8260, 18
    %v8262 = vsub.s32 %v8256, %v8261
    %v8263 = vsub.s32 0, %v8262
    %v8264 = vsel %vm8254, %v8263, %v8262
    %vm8265 = vcmp.lt.s32.totalorder %v7493, 0
    %v8266 = vsub.s32 0, %v7493
    %v8267 = vsel %vm8265, %v8266, %v7493
    %v8268 = vmul.u32.u64.compose %v8267, 3817748708
    %v8269 = vextract.low.u32 %v8268
    %v8270 = vextract.high.u32 %v8268
    %v8271 = vshrl.u32 %v8270, 4
    %v8272 = vmul.u32 %v8271, 18
    %v8273 = vsub.s32 %v8267, %v8272
    %v8274 = vsub.s32 0, %v8273
    %v8275 = vsel %vm8265, %v8274, %v8273
    %vm8276 = vcmp.lt.s32.totalorder %v7494, 0
    %v8277 = vsub.s32 0, %v7494
    %v8278 = vsel %vm8276, %v8277, %v7494
    %v8279 = vmul.u32.u64.compose %v8278, 3817748708
    %v8280 = vextract.low.u32 %v8279
    %v8281 = vextract.high.u32 %v8279
    %v8282 = vshrl.u32 %v8281, 4
    %v8283 = vmul.u32 %v8282, 18
    %v8284 = vsub.s32 %v8278, %v8283
    %v8285 = vsub.s32 0, %v8284
    %v8286 = vsel %vm8276, %v8285, %v8284
    %vm8287 = vcmp.ne.s32.totalorder %v7505, 0
    %vm8288 = vcmp.ne.s32.totalorder %v7516, 0
    %vm8289 = vcmp.ne.s32.totalorder %v7527, 0
    %vm8290 = vcmp.ne.s32.totalorder %v7538, 0
    %vm8291 = vcmp.ne.s32.totalorder %v7549, 0
    %vm8292 = vcmp.ne.s32.totalorder %v7560, 0
    %vm8293 = vcmp.ne.s32.totalorder %v7571, 0
    %vm8294 = vcmp.ne.s32.totalorder %v7582, 0
    %vm8295 = vcmp.ne.s32.totalorder %v7593, 0
    %vm8296 = vcmp.ne.s32.totalorder %v7604, 0
    %vm8297 = vcmp.ne.s32.totalorder %v7615, 0
    %vm8298 = vcmp.ne.s32.totalorder %v7626, 0
    %vm8299 = vcmp.ne.s32.totalorder %v7637, 0
    %vm8300 = vcmp.ne.s32.totalorder %v7648, 0
    %vm8301 = vcmp.ne.s32.totalorder %v7659, 0
    %vm8302 = vcmp.ne.s32.totalorder %v7670, 0
    %vm8303 = vcmp.ne.s32.totalorder %v7681, 0
    %vm8304 = vcmp.ne.s32.totalorder %v7692, 0
    %vm8305 = vcmp.ne.s32.totalorder %v7703, 0
    %vm8306 = vcmp.ne.s32.totalorder %v7714, 0
    %vm8307 = vcmp.ne.s32.totalorder %v7725, 0
    %vm8308 = vcmp.ne.s32.totalorder %v7736, 0
    %vm8309 = vcmp.ne.s32.totalorder %v7747, 0
    %vm8310 = vcmp.ne.s32.totalorder %v7758, 0
    %vm8311 = vcmp.ne.s32.totalorder %v7769, 0
    %vm8312 = vcmp.ne.s32.totalorder %v7780, 0
    %vm8313 = vcmp.ne.s32.totalorder %v7791, 0
    %vm8314 = vcmp.ne.s32.totalorder %v7802, 0
    %vm8315 = vcmp.ne.s32.totalorder %v7813, 0
    %vm8316 = vcmp.ne.s32.totalorder %v7824, 0
    %vm8317 = vcmp.ne.s32.totalorder %v7835, 0
    %vm8318 = vcmp.ne.s32.totalorder %v7846, 0
    %vm8319 = vcmp.ne.s32.totalorder %v7857, 0
    %vm8320 = vcmp.ne.s32.totalorder %v7868, 0
    %vm8321 = vcmp.ne.s32.totalorder %v7879, 0
    %vm8322 = vcmp.ne.s32.totalorder %v7890, 0
    %vm8323 = vcmp.ne.s32.totalorder %v7901, 0
    %vm8324 = vcmp.ne.s32.totalorder %v7912, 0
    %vm8325 = vcmp.ne.s32.totalorder %v7923, 0
    %vm8326 = vcmp.ne.s32.totalorder %v7934, 0
    %vm8327 = vcmp.ne.s32.totalorder %v7945, 0
    %vm8328 = vcmp.ne.s32.totalorder %v7956, 0
    %vm8329 = vcmp.ne.s32.totalorder %v7967, 0
    %vm8330 = vcmp.ne.s32.totalorder %v7978, 0
    %vm8331 = vcmp.ne.s32.totalorder %v7989, 0
    %vm8332 = vcmp.ne.s32.totalorder %v8000, 0
    %vm8333 = vcmp.ne.s32.totalorder %v8011, 0
    %vm8334 = vcmp.ne.s32.totalorder %v8022, 0
    %vm8335 = vcmp.ne.s32.totalorder %v8033, 0
    %vm8336 = vcmp.ne.s32.totalorder %v8044, 0
    %vm8337 = vcmp.ne.s32.totalorder %v8055, 0
    %vm8338 = vcmp.ne.s32.totalorder %v8066, 0
    %vm8339 = vcmp.ne.s32.totalorder %v8077, 0
    %vm8340 = vcmp.ne.s32.totalorder %v8088, 0
    %vm8341 = vcmp.ne.s32.totalorder %v8099, 0
    %vm8342 = vcmp.ne.s32.totalorder %v8110, 0
    %vm8343 = vcmp.ne.s32.totalorder %v8121, 0
    %vm8344 = vcmp.ne.s32.totalorder %v8132, 0
    %vm8345 = vcmp.ne.s32.totalorder %v8143, 0
    %vm8346 = vcmp.ne.s32.totalorder %v8154, 0
    %vm8347 = vcmp.ne.s32.totalorder %v8165, 0
    %vm8348 = vcmp.ne.s32.totalorder %v8176, 0
    %vm8349 = vcmp.ne.s32.totalorder %v8187, 0
    %vm8350 = vcmp.ne.s32.totalorder %v8198, 0
    %vm8351 = vcmp.ne.s32.totalorder %v8209, 0
    %vm8352 = vcmp.ne.s32.totalorder %v8220, 0
    %vm8353 = vcmp.ne.s32.totalorder %v8231, 0
    %vm8354 = vcmp.ne.s32.totalorder %v8242, 0
    %vm8355 = vcmp.ne.s32.totalorder %v8253, 0
    %vm8356 = vcmp.ne.s32.totalorder %v8264, 0
    %vm8357 = vcmp.ne.s32.totalorder %v8275, 0
    %vm8358 = vcmp.ne.s32.totalorder %v8286, 0
    %vm8359 = vcmp.lt.s32.totalorder %v7505, 0
    %vm8360 = vcmp.lt.s32.totalorder %v7516, 0
    %vm8361 = vcmp.lt.s32.totalorder %v7527, 0
    %vm8362 = vcmp.lt.s32.totalorder %v7538, 0
    %vm8363 = vcmp.lt.s32.totalorder %v7549, 0
    %vm8364 = vcmp.lt.s32.totalorder %v7560, 0
    %vm8365 = vcmp.lt.s32.totalorder %v7571, 0
    %vm8366 = vcmp.lt.s32.totalorder %v7582, 0
    %vm8367 = vcmp.lt.s32.totalorder %v7593, 0
    %vm8368 = vcmp.lt.s32.totalorder %v7604, 0
    %vm8369 = vcmp.lt.s32.totalorder %v7615, 0
    %vm8370 = vcmp.lt.s32.totalorder %v7626, 0
    %vm8371 = vcmp.lt.s32.totalorder %v7637, 0
    %vm8372 = vcmp.lt.s32.totalorder %v7648, 0
    %vm8373 = vcmp.lt.s32.totalorder %v7659, 0
    %vm8374 = vcmp.lt.s32.totalorder %v7670, 0
    %vm8375 = vcmp.lt.s32.totalorder %v7681, 0
    %vm8376 = vcmp.lt.s32.totalorder %v7692, 0
    %vm8377 = vcmp.lt.s32.totalorder %v7703, 0
    %vm8378 = vcmp.lt.s32.totalorder %v7714, 0
    %vm8379 = vcmp.lt.s32.totalorder %v7725, 0
    %vm8380 = vcmp.lt.s32.totalorder %v7736, 0
    %vm8381 = vcmp.lt.s32.totalorder %v7747, 0
    %vm8382 = vcmp.lt.s32.totalorder %v7758, 0
    %vm8383 = vcmp.lt.s32.totalorder %v7769, 0
    %vm8384 = vcmp.lt.s32.totalorder %v7780, 0
    %vm8385 = vcmp.lt.s32.totalorder %v7791, 0
    %vm8386 = vcmp.lt.s32.totalorder %v7802, 0
    %vm8387 = vcmp.lt.s32.totalorder %v7813, 0
    %vm8388 = vcmp.lt.s32.totalorder %v7824, 0
    %vm8389 = vcmp.lt.s32.totalorder %v7835, 0
    %vm8390 = vcmp.lt.s32.totalorder %v7846, 0
    %vm8391 = vcmp.lt.s32.totalorder %v7857, 0
    %vm8392 = vcmp.lt.s32.totalorder %v7868, 0
    %vm8393 = vcmp.lt.s32.totalorder %v7879, 0
    %vm8394 = vcmp.lt.s32.totalorder %v7890, 0
    %vm8395 = vcmp.lt.s32.totalorder %v7901, 0
    %vm8396 = vcmp.lt.s32.totalorder %v7912, 0
    %vm8397 = vcmp.lt.s32.totalorder %v7923, 0
    %vm8398 = vcmp.lt.s32.totalorder %v7934, 0
    %vm8399 = vcmp.lt.s32.totalorder %v7945, 0
    %vm8400 = vcmp.lt.s32.totalorder %v7956, 0
    %vm8401 = vcmp.lt.s32.totalorder %v7967, 0
    %vm8402 = vcmp.lt.s32.totalorder %v7978, 0
    %vm8403 = vcmp.lt.s32.totalorder %v7989, 0
    %vm8404 = vcmp.lt.s32.totalorder %v8000, 0
    %vm8405 = vcmp.lt.s32.totalorder %v8011, 0
    %vm8406 = vcmp.lt.s32.totalorder %v8022, 0
    %vm8407 = vcmp.lt.s32.totalorder %v8033, 0
    %vm8408 = vcmp.lt.s32.totalorder %v8044, 0
    %vm8409 = vcmp.lt.s32.totalorder %v8055, 0
    %vm8410 = vcmp.lt.s32.totalorder %v8066, 0
    %vm8411 = vcmp.lt.s32.totalorder %v8077, 0
    %vm8412 = vcmp.lt.s32.totalorder %v8088, 0
    %vm8413 = vcmp.lt.s32.totalorder %v8099, 0
    %vm8414 = vcmp.lt.s32.totalorder %v8110, 0
    %vm8415 = vcmp.lt.s32.totalorder %v8121, 0
    %vm8416 = vcmp.lt.s32.totalorder %v8132, 0
    %vm8417 = vcmp.lt.s32.totalorder %v8143, 0
    %vm8418 = vcmp.lt.s32.totalorder %v8154, 0
    %vm8419 = vcmp.lt.s32.totalorder %v8165, 0
    %vm8420 = vcmp.lt.s32.totalorder %v8176, 0
    %vm8421 = vcmp.lt.s32.totalorder %v8187, 0
    %vm8422 = vcmp.lt.s32.totalorder %v8198, 0
    %vm8423 = vcmp.lt.s32.totalorder %v8209, 0
    %vm8424 = vcmp.lt.s32.totalorder %v8220, 0
    %vm8425 = vcmp.lt.s32.totalorder %v8231, 0
    %vm8426 = vcmp.lt.s32.totalorder %v8242, 0
    %vm8427 = vcmp.lt.s32.totalorder %v8253, 0
    %vm8428 = vcmp.lt.s32.totalorder %v8264, 0
    %vm8429 = vcmp.lt.s32.totalorder %v8275, 0
    %vm8430 = vcmp.lt.s32.totalorder %v8286, 0
    %vm8431 = vmand %vm8359, %vm8287
    %vm8432 = vmand %vm8360, %vm8288
    %vm8433 = vmand %vm8361, %vm8289
    %vm8434 = vmand %vm8362, %vm8290
    %vm8435 = vmand %vm8363, %vm8291
    %vm8436 = vmand %vm8364, %vm8292
    %vm8437 = vmand %vm8365, %vm8293
    %vm8438 = vmand %vm8366, %vm8294
    %vm8439 = vmand %vm8367, %vm8295
    %vm8440 = vmand %vm8368, %vm8296
    %vm8441 = vmand %vm8369, %vm8297
    %vm8442 = vmand %vm8370, %vm8298
    %vm8443 = vmand %vm8371, %vm8299
    %vm8444 = vmand %vm8372, %vm8300
    %vm8445 = vmand %vm8373, %vm8301
    %vm8446 = vmand %vm8374, %vm8302
    %vm8447 = vmand %vm8375, %vm8303
    %vm8448 = vmand %vm8376, %vm8304
    %vm8449 = vmand %vm8377, %vm8305
    %vm8450 = vmand %vm8378, %vm8306
    %vm8451 = vmand %vm8379, %vm8307
    %vm8452 = vmand %vm8380, %vm8308
    %vm8453 = vmand %vm8381, %vm8309
    %vm8454 = vmand %vm8382, %vm8310
    %vm8455 = vmand %vm8383, %vm8311
    %vm8456 = vmand %vm8384, %vm8312
    %vm8457 = vmand %vm8385, %vm8313
    %vm8458 = vmand %vm8386, %vm8314
    %vm8459 = vmand %vm8387, %vm8315
    %vm8460 = vmand %vm8388, %vm8316
    %vm8461 = vmand %vm8389, %vm8317
    %vm8462 = vmand %vm8390, %vm8318
    %vm8463 = vmand %vm8391, %vm8319
    %vm8464 = vmand %vm8392, %vm8320
    %vm8465 = vmand %vm8393, %vm8321
    %vm8466 = vmand %vm8394, %vm8322
    %vm8467 = vmand %vm8395, %vm8323
    %vm8468 = vmand %vm8396, %vm8324
    %vm8469 = vmand %vm8397, %vm8325
    %vm8470 = vmand %vm8398, %vm8326
    %vm8471 = vmand %vm8399, %vm8327
    %vm8472 = vmand %vm8400, %vm8328
    %vm8473 = vmand %vm8401, %vm8329
    %vm8474 = vmand %vm8402, %vm8330
    %vm8475 = vmand %vm8403, %vm8331
    %vm8476 = vmand %vm8404, %vm8332
    %vm8477 = vmand %vm8405, %vm8333
    %vm8478 = vmand %vm8406, %vm8334
    %vm8479 = vmand %vm8407, %vm8335
    %vm8480 = vmand %vm8408, %vm8336
    %vm8481 = vmand %vm8409, %vm8337
    %vm8482 = vmand %vm8410, %vm8338
    %vm8483 = vmand %vm8411, %vm8339
    %vm8484 = vmand %vm8412, %vm8340
    %vm8485 = vmand %vm8413, %vm8341
    %vm8486 = vmand %vm8414, %vm8342
    %vm8487 = vmand %vm8415, %vm8343
    %vm8488 = vmand %vm8416, %vm8344
    %vm8489 = vmand %vm8417, %vm8345
    %vm8490 = vmand %vm8418, %vm8346
    %vm8491 = vmand %vm8419, %vm8347
    %vm8492 = vmand %vm8420, %vm8348
    %vm8493 = vmand %vm8421, %vm8349
    %vm8494 = vmand %vm8422, %vm8350
    %vm8495 = vmand %vm8423, %vm8351
    %vm8496 = vmand %vm8424, %vm8352
    %vm8497 = vmand %vm8425, %vm8353
    %vm8498 = vmand %vm8426, %vm8354
    %vm8499 = vmand %vm8427, %vm8355
    %vm8500 = vmand %vm8428, %vm8356
    %vm8501 = vmand %vm8429, %vm8357
    %vm8502 = vmand %vm8430, %vm8358
    %v8503 = vadd.s32 %v7505, 18
    %v8504 = vadd.s32 %v7516, 18
    %v8505 = vadd.s32 %v7527, 18
    %v8506 = vadd.s32 %v7538, 18
    %v8507 = vadd.s32 %v7549, 18
    %v8508 = vadd.s32 %v7560, 18
    %v8509 = vadd.s32 %v7571, 18
    %v8510 = vadd.s32 %v7582, 18
    %v8511 = vadd.s32 %v7593, 18
    %v8512 = vadd.s32 %v7604, 18
    %v8513 = vadd.s32 %v7615, 18
    %v8514 = vadd.s32 %v7626, 18
    %v8515 = vadd.s32 %v7637, 18
    %v8516 = vadd.s32 %v7648, 18
    %v8517 = vadd.s32 %v7659, 18
    %v8518 = vadd.s32 %v7670, 18
    %v8519 = vadd.s32 %v7681, 18
    %v8520 = vadd.s32 %v7692, 18
    %v8521 = vadd.s32 %v7703, 18
    %v8522 = vadd.s32 %v7714, 18
    %v8523 = vadd.s32 %v7725, 18
    %v8524 = vadd.s32 %v7736, 18
    %v8525 = vadd.s32 %v7747, 18
    %v8526 = vadd.s32 %v7758, 18
    %v8527 = vadd.s32 %v7769, 18
    %v8528 = vadd.s32 %v7780, 18
    %v8529 = vadd.s32 %v7791, 18
    %v8530 = vadd.s32 %v7802, 18
    %v8531 = vadd.s32 %v7813, 18
    %v8532 = vadd.s32 %v7824, 18
    %v8533 = vadd.s32 %v7835, 18
    %v8534 = vadd.s32 %v7846, 18
    %v8535 = vadd.s32 %v7857, 18
    %v8536 = vadd.s32 %v7868, 18
    %v8537 = vadd.s32 %v7879, 18
    %v8538 = vadd.s32 %v7890, 18
    %v8539 = vadd.s32 %v7901, 18
    %v8540 = vadd.s32 %v7912, 18
    %v8541 = vadd.s32 %v7923, 18
    %v8542 = vadd.s32 %v7934, 18
    %v8543 = vadd.s32 %v7945, 18
    %v8544 = vadd.s32 %v7956, 18
    %v8545 = vadd.s32 %v7967, 18
    %v8546 = vadd.s32 %v7978, 18
    %v8547 = vadd.s32 %v7989, 18
    %v8548 = vadd.s32 %v8000, 18
    %v8549 = vadd.s32 %v8011, 18
    %v8550 = vadd.s32 %v8022, 18
    %v8551 = vadd.s32 %v8033, 18
    %v8552 = vadd.s32 %v8044, 18
    %v8553 = vadd.s32 %v8055, 18
    %v8554 = vadd.s32 %v8066, 18
    %v8555 = vadd.s32 %v8077, 18
    %v8556 = vadd.s32 %v8088, 18
    %v8557 = vadd.s32 %v8099, 18
    %v8558 = vadd.s32 %v8110, 18
    %v8559 = vadd.s32 %v8121, 18
    %v8560 = vadd.s32 %v8132, 18
    %v8561 = vadd.s32 %v8143, 18
    %v8562 = vadd.s32 %v8154, 18
    %v8563 = vadd.s32 %v8165, 18
    %v8564 = vadd.s32 %v8176, 18
    %v8565 = vadd.s32 %v8187, 18
    %v8566 = vadd.s32 %v8198, 18
    %v8567 = vadd.s32 %v8209, 18
    %v8568 = vadd.s32 %v8220, 18
    %v8569 = vadd.s32 %v8231, 18
    %v8570 = vadd.s32 %v8242, 18
    %v8571 = vadd.s32 %v8253, 18
    %v8572 = vadd.s32 %v8264, 18
    %v8573 = vadd.s32 %v8275, 18
    %v8574 = vadd.s32 %v8286, 18
    %v8575 = vsel %vm8431, %v8503, %v7505
    %v8576 = vsel %vm8432, %v8504, %v7516
    %v8577 = vsel %vm8433, %v8505, %v7527
    %v8578 = vsel %vm8434, %v8506, %v7538
    %v8579 = vsel %vm8435, %v8507, %v7549
    %v8580 = vsel %vm8436, %v8508, %v7560
    %v8581 = vsel %vm8437, %v8509, %v7571
    %v8582 = vsel %vm8438, %v8510, %v7582
    %v8583 = vsel %vm8439, %v8511, %v7593
    %v8584 = vsel %vm8440, %v8512, %v7604
    %v8585 = vsel %vm8441, %v8513, %v7615
    %v8586 = vsel %vm8442, %v8514, %v7626
    %v8587 = vsel %vm8443, %v8515, %v7637
    %v8588 = vsel %vm8444, %v8516, %v7648
    %v8589 = vsel %vm8445, %v8517, %v7659
    %v8590 = vsel %vm8446, %v8518, %v7670
    %v8591 = vsel %vm8447, %v8519, %v7681
    %v8592 = vsel %vm8448, %v8520, %v7692
    %v8593 = vsel %vm8449, %v8521, %v7703
    %v8594 = vsel %vm8450, %v8522, %v7714
    %v8595 = vsel %vm8451, %v8523, %v7725
    %v8596 = vsel %vm8452, %v8524, %v7736
    %v8597 = vsel %vm8453, %v8525, %v7747
    %v8598 = vsel %vm8454, %v8526, %v7758
    %v8599 = vsel %vm8455, %v8527, %v7769
    %v8600 = vsel %vm8456, %v8528, %v7780
    %v8601 = vsel %vm8457, %v8529, %v7791
    %v8602 = vsel %vm8458, %v8530, %v7802
    %v8603 = vsel %vm8459, %v8531, %v7813
    %v8604 = vsel %vm8460, %v8532, %v7824
    %v8605 = vsel %vm8461, %v8533, %v7835
    %v8606 = vsel %vm8462, %v8534, %v7846
    %v8607 = vsel %vm8463, %v8535, %v7857
    %v8608 = vsel %vm8464, %v8536, %v7868
    %v8609 = vsel %vm8465, %v8537, %v7879
    %v8610 = vsel %vm8466, %v8538, %v7890
    %v8611 = vsel %vm8467, %v8539, %v7901
    %v8612 = vsel %vm8468, %v8540, %v7912
    %v8613 = vsel %vm8469, %v8541, %v7923
    %v8614 = vsel %vm8470, %v8542, %v7934
    %v8615 = vsel %vm8471, %v8543, %v7945
    %v8616 = vsel %vm8472, %v8544, %v7956
    %v8617 = vsel %vm8473, %v8545, %v7967
    %v8618 = vsel %vm8474, %v8546, %v7978
    %v8619 = vsel %vm8475, %v8547, %v7989
    %v8620 = vsel %vm8476, %v8548, %v8000
    %v8621 = vsel %vm8477, %v8549, %v8011
    %v8622 = vsel %vm8478, %v8550, %v8022
    %v8623 = vsel %vm8479, %v8551, %v8033
    %v8624 = vsel %vm8480, %v8552, %v8044
    %v8625 = vsel %vm8481, %v8553, %v8055
    %v8626 = vsel %vm8482, %v8554, %v8066
    %v8627 = vsel %vm8483, %v8555, %v8077
    %v8628 = vsel %vm8484, %v8556, %v8088
    %v8629 = vsel %vm8485, %v8557, %v8099
    %v8630 = vsel %vm8486, %v8558, %v8110
    %v8631 = vsel %vm8487, %v8559, %v8121
    %v8632 = vsel %vm8488, %v8560, %v8132
    %v8633 = vsel %vm8489, %v8561, %v8143
    %v8634 = vsel %vm8490, %v8562, %v8154
    %v8635 = vsel %vm8491, %v8563, %v8165
    %v8636 = vsel %vm8492, %v8564, %v8176
    %v8637 = vsel %vm8493, %v8565, %v8187
    %v8638 = vsel %vm8494, %v8566, %v8198
    %v8639 = vsel %vm8495, %v8567, %v8209
    %v8640 = vsel %vm8496, %v8568, %v8220
    %v8641 = vsel %vm8497, %v8569, %v8231
    %v8642 = vsel %vm8498, %v8570, %v8242
    %v8643 = vsel %vm8499, %v8571, %v8253
    %v8644 = vsel %vm8500, %v8572, %v8264
    %v8645 = vsel %vm8501, %v8573, %v8275
    %v8646 = vsel %vm8502, %v8574, %v8286
    %vm8647 = vcmp.lt.s32.totalorder %v8575, 16
    %vm8648 = vcmp.lt.s32.totalorder %v8576, 16
    %vm8649 = vcmp.lt.s32.totalorder %v8577, 16
    %vm8650 = vcmp.lt.s32.totalorder %v8578, 16
    %vm8651 = vcmp.lt.s32.totalorder %v8579, 16
    %vm8652 = vcmp.lt.s32.totalorder %v8580, 16
    %vm8653 = vcmp.lt.s32.totalorder %v8581, 16
    %vm8654 = vcmp.lt.s32.totalorder %v8582, 16
    %vm8655 = vcmp.lt.s32.totalorder %v8583, 16
    %vm8656 = vcmp.lt.s32.totalorder %v8584, 16
    %vm8657 = vcmp.lt.s32.totalorder %v8585, 16
    %vm8658 = vcmp.lt.s32.totalorder %v8586, 16
    %vm8659 = vcmp.lt.s32.totalorder %v8587, 16
    %vm8660 = vcmp.lt.s32.totalorder %v8588, 16
    %vm8661 = vcmp.lt.s32.totalorder %v8589, 16
    %vm8662 = vcmp.lt.s32.totalorder %v8590, 16
    %vm8663 = vcmp.lt.s32.totalorder %v8591, 16
    %vm8664 = vcmp.lt.s32.totalorder %v8592, 16
    %vm8665 = vcmp.lt.s32.totalorder %v8593, 16
    %vm8666 = vcmp.lt.s32.totalorder %v8594, 16
    %vm8667 = vcmp.lt.s32.totalorder %v8595, 16
    %vm8668 = vcmp.lt.s32.totalorder %v8596, 16
    %vm8669 = vcmp.lt.s32.totalorder %v8597, 16
    %vm8670 = vcmp.lt.s32.totalorder %v8598, 16
    %vm8671 = vcmp.lt.s32.totalorder %v8599, 16
    %vm8672 = vcmp.lt.s32.totalorder %v8600, 16
    %vm8673 = vcmp.lt.s32.totalorder %v8601, 16
    %vm8674 = vcmp.lt.s32.totalorder %v8602, 16
    %vm8675 = vcmp.lt.s32.totalorder %v8603, 16
    %vm8676 = vcmp.lt.s32.totalorder %v8604, 16
    %vm8677 = vcmp.lt.s32.totalorder %v8605, 16
    %vm8678 = vcmp.lt.s32.totalorder %v8606, 16
    %vm8679 = vcmp.lt.s32.totalorder %v8607, 16
    %vm8680 = vcmp.lt.s32.totalorder %v8608, 16
    %vm8681 = vcmp.lt.s32.totalorder %v8609, 16
    %vm8682 = vcmp.lt.s32.totalorder %v8610, 16
    %vm8683 = vcmp.lt.s32.totalorder %v8611, 16
    %vm8684 = vcmp.lt.s32.totalorder %v8612, 16
    %vm8685 = vcmp.lt.s32.totalorder %v8613, 16
    %vm8686 = vcmp.lt.s32.totalorder %v8614, 16
    %vm8687 = vcmp.lt.s32.totalorder %v8615, 16
    %vm8688 = vcmp.lt.s32.totalorder %v8616, 16
    %vm8689 = vcmp.lt.s32.totalorder %v8617, 16
    %vm8690 = vcmp.lt.s32.totalorder %v8618, 16
    %vm8691 = vcmp.lt.s32.totalorder %v8619, 16
    %vm8692 = vcmp.lt.s32.totalorder %v8620, 16
    %vm8693 = vcmp.lt.s32.totalorder %v8621, 16
    %vm8694 = vcmp.lt.s32.totalorder %v8622, 16
    %vm8695 = vcmp.lt.s32.totalorder %v8623, 16
    %vm8696 = vcmp.lt.s32.totalorder %v8624, 16
    %vm8697 = vcmp.lt.s32.totalorder %v8625, 16
    %vm8698 = vcmp.lt.s32.totalorder %v8626, 16
    %vm8699 = vcmp.lt.s32.totalorder %v8627, 16
    %vm8700 = vcmp.lt.s32.totalorder %v8628, 16
    %vm8701 = vcmp.lt.s32.totalorder %v8629, 16
    %vm8702 = vcmp.lt.s32.totalorder %v8630, 16
    %vm8703 = vcmp.lt.s32.totalorder %v8631, 16
    %vm8704 = vcmp.lt.s32.totalorder %v8632, 16
    %vm8705 = vcmp.lt.s32.totalorder %v8633, 16
    %vm8706 = vcmp.lt.s32.totalorder %v8634, 16
    %vm8707 = vcmp.lt.s32.totalorder %v8635, 16
    %vm8708 = vcmp.lt.s32.totalorder %v8636, 16
    %vm8709 = vcmp.lt.s32.totalorder %v8637, 16
    %vm8710 = vcmp.lt.s32.totalorder %v8638, 16
    %vm8711 = vcmp.lt.s32.totalorder %v8639, 16
    %vm8712 = vcmp.lt.s32.totalorder %v8640, 16
    %vm8713 = vcmp.lt.s32.totalorder %v8641, 16
    %vm8714 = vcmp.lt.s32.totalorder %v8642, 16
    %vm8715 = vcmp.lt.s32.totalorder %v8643, 16
    %vm8716 = vcmp.lt.s32.totalorder %v8644, 16
    %vm8717 = vcmp.lt.s32.totalorder %v8645, 16
    %vm8718 = vcmp.lt.s32.totalorder %v8646, 16
    %v8719 = vsel %vm8647, 1, 0
    %v8720 = vsel %vm8648, 1, 0
    %v8721 = vsel %vm8649, 1, 0
    %v8722 = vsel %vm8650, 1, 0
    %v8723 = vsel %vm8651, 1, 0
    %v8724 = vsel %vm8652, 1, 0
    %v8725 = vsel %vm8653, 1, 0
    %v8726 = vsel %vm8654, 1, 0
    %v8727 = vsel %vm8655, 1, 0
    %v8728 = vsel %vm8656, 1, 0
    %v8729 = vsel %vm8657, 1, 0
    %v8730 = vsel %vm8658, 1, 0
    %v8731 = vsel %vm8659, 1, 0
    %v8732 = vsel %vm8660, 1, 0
    %v8733 = vsel %vm8661, 1, 0
    %v8734 = vsel %vm8662, 1, 0
    %v8735 = vsel %vm8663, 1, 0
    %v8736 = vsel %vm8664, 1, 0
    %v8737 = vsel %vm8665, 1, 0
    %v8738 = vsel %vm8666, 1, 0
    %v8739 = vsel %vm8667, 1, 0
    %v8740 = vsel %vm8668, 1, 0
    %v8741 = vsel %vm8669, 1, 0
    %v8742 = vsel %vm8670, 1, 0
    %v8743 = vsel %vm8671, 1, 0
    %v8744 = vsel %vm8672, 1, 0
    %v8745 = vsel %vm8673, 1, 0
    %v8746 = vsel %vm8674, 1, 0
    %v8747 = vsel %vm8675, 1, 0
    %v8748 = vsel %vm8676, 1, 0
    %v8749 = vsel %vm8677, 1, 0
    %v8750 = vsel %vm8678, 1, 0
    %v8751 = vsel %vm8679, 1, 0
    %v8752 = vsel %vm8680, 1, 0
    %v8753 = vsel %vm8681, 1, 0
    %v8754 = vsel %vm8682, 1, 0
    %v8755 = vsel %vm8683, 1, 0
    %v8756 = vsel %vm8684, 1, 0
    %v8757 = vsel %vm8685, 1, 0
    %v8758 = vsel %vm8686, 1, 0
    %v8759 = vsel %vm8687, 1, 0
    %v8760 = vsel %vm8688, 1, 0
    %v8761 = vsel %vm8689, 1, 0
    %v8762 = vsel %vm8690, 1, 0
    %v8763 = vsel %vm8691, 1, 0
    %v8764 = vsel %vm8692, 1, 0
    %v8765 = vsel %vm8693, 1, 0
    %v8766 = vsel %vm8694, 1, 0
    %v8767 = vsel %vm8695, 1, 0
    %v8768 = vsel %vm8696, 1, 0
    %v8769 = vsel %vm8697, 1, 0
    %v8770 = vsel %vm8698, 1, 0
    %v8771 = vsel %vm8699, 1, 0
    %v8772 = vsel %vm8700, 1, 0
    %v8773 = vsel %vm8701, 1, 0
    %v8774 = vsel %vm8702, 1, 0
    %v8775 = vsel %vm8703, 1, 0
    %v8776 = vsel %vm8704, 1, 0
    %v8777 = vsel %vm8705, 1, 0
    %v8778 = vsel %vm8706, 1, 0
    %v8779 = vsel %vm8707, 1, 0
    %v8780 = vsel %vm8708, 1, 0
    %v8781 = vsel %vm8709, 1, 0
    %v8782 = vsel %vm8710, 1, 0
    %v8783 = vsel %vm8711, 1, 0
    %v8784 = vsel %vm8712, 1, 0
    %v8785 = vsel %vm8713, 1, 0
    %v8786 = vsel %vm8714, 1, 0
    %v8787 = vsel %vm8715, 1, 0
    %v8788 = vsel %vm8716, 1, 0
    %v8789 = vsel %vm8717, 1, 0
    %v8790 = vsel %vm8718, 1, 0
    %v8791 = vcvt.s32.f32 %v8719
    %v8792 = vcvt.s32.f32 %v8720
    %v8793 = vcvt.s32.f32 %v8721
    %v8794 = vcvt.s32.f32 %v8722
    %v8795 = vcvt.s32.f32 %v8723
    %v8796 = vcvt.s32.f32 %v8724
    %v8797 = vcvt.s32.f32 %v8725
    %v8798 = vcvt.s32.f32 %v8726
    %v8799 = vcvt.s32.f32 %v8727
    %v8800 = vcvt.s32.f32 %v8728
    %v8801 = vcvt.s32.f32 %v8729
    %v8802 = vcvt.s32.f32 %v8730
    %v8803 = vcvt.s32.f32 %v8731
    %v8804 = vcvt.s32.f32 %v8732
    %v8805 = vcvt.s32.f32 %v8733
    %v8806 = vcvt.s32.f32 %v8734
    %v8807 = vcvt.s32.f32 %v8735
    %v8808 = vcvt.s32.f32 %v8736
    %v8809 = vcvt.s32.f32 %v8737
    %v8810 = vcvt.s32.f32 %v8738
    %v8811 = vcvt.s32.f32 %v8739
    %v8812 = vcvt.s32.f32 %v8740
    %v8813 = vcvt.s32.f32 %v8741
    %v8814 = vcvt.s32.f32 %v8742
    %v8815 = vcvt.s32.f32 %v8743
    %v8816 = vcvt.s32.f32 %v8744
    %v8817 = vcvt.s32.f32 %v8745
    %v8818 = vcvt.s32.f32 %v8746
    %v8819 = vcvt.s32.f32 %v8747
    %v8820 = vcvt.s32.f32 %v8748
    %v8821 = vcvt.s32.f32 %v8749
    %v8822 = vcvt.s32.f32 %v8750
    %v8823 = vcvt.s32.f32 %v8751
    %v8824 = vcvt.s32.f32 %v8752
    %v8825 = vcvt.s32.f32 %v8753
    %v8826 = vcvt.s32.f32 %v8754
    %v8827 = vcvt.s32.f32 %v8755
    %v8828 = vcvt.s32.f32 %v8756
    %v8829 = vcvt.s32.f32 %v8757
    %v8830 = vcvt.s32.f32 %v8758
    %v8831 = vcvt.s32.f32 %v8759
    %v8832 = vcvt.s32.f32 %v8760
    %v8833 = vcvt.s32.f32 %v8761
    %v8834 = vcvt.s32.f32 %v8762
    %v8835 = vcvt.s32.f32 %v8763
    %v8836 = vcvt.s32.f32 %v8764
    %v8837 = vcvt.s32.f32 %v8765
    %v8838 = vcvt.s32.f32 %v8766
    %v8839 = vcvt.s32.f32 %v8767
    %v8840 = vcvt.s32.f32 %v8768
    %v8841 = vcvt.s32.f32 %v8769
    %v8842 = vcvt.s32.f32 %v8770
    %v8843 = vcvt.s32.f32 %v8771
    %v8844 = vcvt.s32.f32 %v8772
    %v8845 = vcvt.s32.f32 %v8773
    %v8846 = vcvt.s32.f32 %v8774
    %v8847 = vcvt.s32.f32 %v8775
    %v8848 = vcvt.s32.f32 %v8776
    %v8849 = vcvt.s32.f32 %v8777
    %v8850 = vcvt.s32.f32 %v8778
    %v8851 = vcvt.s32.f32 %v8779
    %v8852 = vcvt.s32.f32 %v8780
    %v8853 = vcvt.s32.f32 %v8781
    %v8854 = vcvt.s32.f32 %v8782
    %v8855 = vcvt.s32.f32 %v8783
    %v8856 = vcvt.s32.f32 %v8784
    %v8857 = vcvt.s32.f32 %v8785
    %v8858 = vcvt.s32.f32 %v8786
    %v8859 = vcvt.s32.f32 %v8787
    %v8860 = vcvt.s32.f32 %v8788
    %v8861 = vcvt.s32.f32 %v8789
    %v8862 = vcvt.s32.f32 %v8790
    %v8863 = vmul.f32 %v7352, %v8791
    %v8864 = vmul.f32 %v7353, %v8792
    %v8865 = vmul.f32 %v7354, %v8793
    %v8866 = vmul.f32 %v7355, %v8794
    %v8867 = vmul.f32 %v7356, %v8795
    %v8868 = vmul.f32 %v7357, %v8796
    %v8869 = vmul.f32 %v7358, %v8797
    %v8870 = vmul.f32 %v7359, %v8798
    %v8871 = vmul.f32 %v7360, %v8799
    %v8872 = vmul.f32 %v7361, %v8800
    %v8873 = vmul.f32 %v7362, %v8801
    %v8874 = vmul.f32 %v7363, %v8802
    %v8875 = vmul.f32 %v7364, %v8803
    %v8876 = vmul.f32 %v7365, %v8804
    %v8877 = vmul.f32 %v7366, %v8805
    %v8878 = vmul.f32 %v7367, %v8806
    %v8879 = vmul.f32 %v7368, %v8807
    %v8880 = vmul.f32 %v7369, %v8808
    %v8881 = vmul.f32 %v7370, %v8809
    %v8882 = vmul.f32 %v7371, %v8810
    %v8883 = vmul.f32 %v7372, %v8811
    %v8884 = vmul.f32 %v7373, %v8812
    %v8885 = vmul.f32 %v7374, %v8813
    %v8886 = vmul.f32 %v7375, %v8814
    %v8887 = vmul.f32 %v7376, %v8815
    %v8888 = vmul.f32 %v7377, %v8816
    %v8889 = vmul.f32 %v7378, %v8817
    %v8890 = vmul.f32 %v7379, %v8818
    %v8891 = vmul.f32 %v7380, %v8819
    %v8892 = vmul.f32 %v7381, %v8820
    %v8893 = vmul.f32 %v7382, %v8821
    %v8894 = vmul.f32 %v7383, %v8822
    %v8895 = vmul.f32 %v7384, %v8823
    %v8896 = vmul.f32 %v7385, %v8824
    %v8897 = vmul.f32 %v7386, %v8825
    %v8898 = vmul.f32 %v7387, %v8826
    %v8899 = vmul.f32 %v7388, %v8827
    %v8900 = vmul.f32 %v7389, %v8828
    %v8901 = vmul.f32 %v7390, %v8829
    %v8902 = vmul.f32 %v7391, %v8830
    %v8903 = vmul.f32 %v7392, %v8831
    %v8904 = vmul.f32 %v7393, %v8832
    %v8905 = vmul.f32 %v7394, %v8833
    %v8906 = vmul.f32 %v7395, %v8834
    %v8907 = vmul.f32 %v7396, %v8835
    %v8908 = vmul.f32 %v7397, %v8836
    %v8909 = vmul.f32 %v7398, %v8837
    %v8910 = vmul.f32 %v7399, %v8838
    %v8911 = vmul.f32 %v7400, %v8839
    %v8912 = vmul.f32 %v7401, %v8840
    %v8913 = vmul.f32 %v7402, %v8841
    %v8914 = vmul.f32 %v7403, %v8842
    %v8915 = vmul.f32 %v7404, %v8843
    %v8916 = vmul.f32 %v7405, %v8844
    %v8917 = vmul.f32 %v7406, %v8845
    %v8918 = vmul.f32 %v7407, %v8846
    %v8919 = vmul.f32 %v7408, %v8847
    %v8920 = vmul.f32 %v7409, %v8848
    %v8921 = vmul.f32 %v7410, %v8849
    %v8922 = vmul.f32 %v7411, %v8850
    %v8923 = vmul.f32 %v7412, %v8851
    %v8924 = vmul.f32 %v7413, %v8852
    %v8925 = vmul.f32 %v7414, %v8853
    %v8926 = vmul.f32 %v7415, %v8854
    %v8927 = vmul.f32 %v7416, %v8855
    %v8928 = vmul.f32 %v7417, %v8856
    %v8929 = vmul.f32 %v7418, %v8857
    %v8930 = vmul.f32 %v7419, %v8858
    %v8931 = vmul.f32 %v7420, %v8859
    %v8932 = vmul.f32 %v7421, %v8860
    %v8933 = vmul.f32 %v7422, %v8861
    %v8934 = vmul.f32 %v7423, %v8862
    %v8935 = vadd.f32 %v8863, %v8864
    %v8936 = vadd.f32 %v8935, %v8865
    %v8937 = vadd.f32 %v8936, %v8866
    %v8938 = vadd.f32 %v8937, %v8867
    %v8939 = vadd.f32 %v8938, %v8868
    %v8940 = vadd.f32 %v8939, %v8869
    %v8941 = vadd.f32 %v8940, %v8870
    %v8942 = vadd.f32 %v8941, %v8871
    %v8943 = vadd.f32 %v8942, %v8872
    %v8944 = vadd.f32 %v8943, %v8873
    %v8945 = vadd.f32 %v8944, %v8874
    %v8946 = vadd.f32 %v8945, %v8875
    %v8947 = vadd.f32 %v8946, %v8876
    %v8948 = vadd.f32 %v8947, %v8877
    %v8949 = vadd.f32 %v8948, %v8878
    %v8950 = vadd.f32 %v8949, %v8879
    %v8951 = vadd.f32 %v8950, %v8880
    %v8952 = vadd.f32 %v8951, %v8881
    %v8953 = vadd.f32 %v8952, %v8882
    %v8954 = vadd.f32 %v8953, %v8883
    %v8955 = vadd.f32 %v8954, %v8884
    %v8956 = vadd.f32 %v8955, %v8885
    %v8957 = vadd.f32 %v8956, %v8886
    %v8958 = vadd.f32 %v8957, %v8887
    %v8959 = vadd.f32 %v8958, %v8888
    %v8960 = vadd.f32 %v8959, %v8889
    %v8961 = vadd.f32 %v8960, %v8890
    %v8962 = vadd.f32 %v8961, %v8891
    %v8963 = vadd.f32 %v8962, %v8892
    %v8964 = vadd.f32 %v8963, %v8893
    %v8965 = vadd.f32 %v8964, %v8894
    %v8966 = vadd.f32 %v8965, %v8895
    %v8967 = vadd.f32 %v8966, %v8896
    %v8968 = vadd.f32 %v8967, %v8897
    %v8969 = vadd.f32 %v8968, %v8898
    %v8970 = vadd.f32 %v8969, %v8899
    %v8971 = vadd.f32 %v8970, %v8900
    %v8972 = vadd.f32 %v8971, %v8901
    %v8973 = vadd.f32 %v8972, %v8902
    %v8974 = vadd.f32 %v8973, %v8903
    %v8975 = vadd.f32 %v8974, %v8904
    %v8976 = vadd.f32 %v8975, %v8905
    %v8977 = vadd.f32 %v8976, %v8906
    %v8978 = vadd.f32 %v8977, %v8907
    %v8979 = vadd.f32 %v8978, %v8908
    %v8980 = vadd.f32 %v8979, %v8909
    %v8981 = vadd.f32 %v8980, %v8910
    %v8982 = vadd.f32 %v8981, %v8911
    %v8983 = vadd.f32 %v8982, %v8912
    %v8984 = vadd.f32 %v8983, %v8913
    %v8985 = vadd.f32 %v8984, %v8914
    %v8986 = vadd.f32 %v8985, %v8915
    %v8987 = vadd.f32 %v8986, %v8916
    %v8988 = vadd.f32 %v8987, %v8917
    %v8989 = vadd.f32 %v8988, %v8918
    %v8990 = vadd.f32 %v8989, %v8919
    %v8991 = vadd.f32 %v8990, %v8920
    %v8992 = vadd.f32 %v8991, %v8921
    %v8993 = vadd.f32 %v8992, %v8922
    %v8994 = vadd.f32 %v8993, %v8923
    %v8995 = vadd.f32 %v8994, %v8924
    %v8996 = vadd.f32 %v8995, %v8925
    %v8997 = vadd.f32 %v8996, %v8926
    %v8998 = vadd.f32 %v8997, %v8927
    %v8999 = vadd.f32 %v8998, %v8928
    %v9000 = vadd.f32 %v8999, %v8929
    %v9001 = vadd.f32 %v9000, %v8930
    %v9002 = vadd.f32 %v9001, %v8931
    %v9003 = vadd.f32 %v9002, %v8932
    %v9004 = vadd.f32 %v9003, %v8933
    %v9005 = vadd.f32 %v9004, %v8934
    %v9006 = vrot.slane %v9005, 4
    %v9007 = vadd.f32 %v9005, %v9006
    %v9008 = vrot.slane %v9007, 2
    %v9009 = vadd.f32 %v9007, %v9008
    %v9010 = vrot.slane %v9009, 1
    %v9011 = vadd.f32 %v9009, %v9010
    %9012 = vst [vmem:[#allocation4] sm:$0x1] %v9011
    %v9013 = vmul.f32 %v8863, %v7352
    %v9014 = vmul.f32 %v8864, %v7353
    %v9015 = vmul.f32 %v8865, %v7354
    %v9016 = vmul.f32 %v8866, %v7355
    %v9017 = vmul.f32 %v8867, %v7356
    %v9018 = vmul.f32 %v8868, %v7357
    %v9019 = vmul.f32 %v8869, %v7358
    %v9020 = vmul.f32 %v8870, %v7359
    %v9021 = vmul.f32 %v8871, %v7360
    %v9022 = vmul.f32 %v8872, %v7361
    %v9023 = vmul.f32 %v8873, %v7362
    %v9024 = vmul.f32 %v8874, %v7363
    %v9025 = vmul.f32 %v8875, %v7364
    %v9026 = vmul.f32 %v8876, %v7365
    %v9027 = vmul.f32 %v8877, %v7366
    %v9028 = vmul.f32 %v8878, %v7367
    %v9029 = vmul.f32 %v8879, %v7368
    %v9030 = vmul.f32 %v8880, %v7369
    %v9031 = vmul.f32 %v8881, %v7370
    %v9032 = vmul.f32 %v8882, %v7371
    %v9033 = vmul.f32 %v8883, %v7372
    %v9034 = vmul.f32 %v8884, %v7373
    %v9035 = vmul.f32 %v8885, %v7374
    %v9036 = vmul.f32 %v8886, %v7375
    %v9037 = vmul.f32 %v8887, %v7376
    %v9038 = vmul.f32 %v8888, %v7377
    %v9039 = vmul.f32 %v8889, %v7378
    %v9040 = vmul.f32 %v8890, %v7379
    %v9041 = vmul.f32 %v8891, %v7380
    %v9042 = vmul.f32 %v8892, %v7381
    %v9043 = vmul.f32 %v8893, %v7382
    %v9044 = vmul.f32 %v8894, %v7383
    %v9045 = vmul.f32 %v8895, %v7384
    %v9046 = vmul.f32 %v8896, %v7385
    %v9047 = vmul.f32 %v8897, %v7386
    %v9048 = vmul.f32 %v8898, %v7387
    %v9049 = vmul.f32 %v8899, %v7388
    %v9050 = vmul.f32 %v8900, %v7389
    %v9051 = vmul.f32 %v8901, %v7390
    %v9052 = vmul.f32 %v8902, %v7391
    %v9053 = vmul.f32 %v8903, %v7392
    %v9054 = vmul.f32 %v8904, %v7393
    %v9055 = vmul.f32 %v8905, %v7394
    %v9056 = vmul.f32 %v8906, %v7395
    %v9057 = vmul.f32 %v8907, %v7396
    %v9058 = vmul.f32 %v8908, %v7397
    %v9059 = vmul.f32 %v8909, %v7398
    %v9060 = vmul.f32 %v8910, %v7399
    %v9061 = vmul.f32 %v8911, %v7400
    %v9062 = vmul.f32 %v8912, %v7401
    %v9063 = vmul.f32 %v8913, %v7402
    %v9064 = vmul.f32 %v8914, %v7403
    %v9065 = vmul.f32 %v8915, %v7404
    %v9066 = vmul.f32 %v8916, %v7405
    %v9067 = vmul.f32 %v8917, %v7406
    %v9068 = vmul.f32 %v8918, %v7407
    %v9069 = vmul.f32 %v8919, %v7408
    %v9070 = vmul.f32 %v8920, %v7409
    %v9071 = vmul.f32 %v8921, %v7410
    %v9072 = vmul.f32 %v8922, %v7411
    %v9073 = vmul.f32 %v8923, %v7412
    %v9074 = vmul.f32 %v8924, %v7413
    %v9075 = vmul.f32 %v8925, %v7414
    %v9076 = vmul.f32 %v8926, %v7415
    %v9077 = vmul.f32 %v8927, %v7416
    %v9078 = vmul.f32 %v8928, %v7417
    %v9079 = vmul.f32 %v8929, %v7418
    %v9080 = vmul.f32 %v8930, %v7419
    %v9081 = vmul.f32 %v8931, %v7420
    %v9082 = vmul.f32 %v8932, %v7421
    %v9083 = vmul.f32 %v8933, %v7422
    %v9084 = vmul.f32 %v8934, %v7423
    %v9085 = vadd.f32 %v9013, %v9014
    %v9086 = vadd.f32 %v9085, %v9015
    %v9087 = vadd.f32 %v9086, %v9016
    %v9088 = vadd.f32 %v9087, %v9017
    %v9089 = vadd.f32 %v9088, %v9018
    %v9090 = vadd.f32 %v9089, %v9019
    %v9091 = vadd.f32 %v9090, %v9020
    %v9092 = vadd.f32 %v9091, %v9021
    %v9093 = vadd.f32 %v9092, %v9022
    %v9094 = vadd.f32 %v9093, %v9023
    %v9095 = vadd.f32 %v9094, %v9024
    %v9096 = vadd.f32 %v9095, %v9025
    %v9097 = vadd.f32 %v9096, %v9026
    %v9098 = vadd.f32 %v9097, %v9027
    %v9099 = vadd.f32 %v9098, %v9028
    %v9100 = vadd.f32 %v9099, %v9029
    %v9101 = vadd.f32 %v9100, %v9030
    %v9102 = vadd.f32 %v9101, %v9031
    %v9103 = vadd.f32 %v9102, %v9032
    %v9104 = vadd.f32 %v9103, %v9033
    %v9105 = vadd.f32 %v9104, %v9034
    %v9106 = vadd.f32 %v9105, %v9035
    %v9107 = vadd.f32 %v9106, %v9036
    %v9108 = vadd.f32 %v9107, %v9037
    %v9109 = vadd.f32 %v9108, %v9038
    %v9110 = vadd.f32 %v9109, %v9039
    %v9111 = vadd.f32 %v9110, %v9040
    %v9112 = vadd.f32 %v9111, %v9041
    %v9113 = vadd.f32 %v9112, %v9042
    %v9114 = vadd.f32 %v9113, %v9043
    %v9115 = vadd.f32 %v9114, %v9044
    %v9116 = vadd.f32 %v9115, %v9045
    %v9117 = vadd.f32 %v9116, %v9046
    %v9118 = vadd.f32 %v9117, %v9047
    %v9119 = vadd.f32 %v9118, %v9048
    %v9120 = vadd.f32 %v9119, %v9049
    %v9121 = vadd.f32 %v9120, %v9050
    %v9122 = vadd.f32 %v9121, %v9051
    %v9123 = vadd.f32 %v9122, %v9052
    %v9124 = vadd.f32 %v9123, %v9053
    %v9125 = vadd.f32 %v9124, %v9054
    %v9126 = vadd.f32 %v9125, %v9055
    %v9127 = vadd.f32 %v9126, %v9056
    %v9128 = vadd.f32 %v9127, %v9057
    %v9129 = vadd.f32 %v9128, %v9058
    %v9130 = vadd.f32 %v9129, %v9059
    %v9131 = vadd.f32 %v9130, %v9060
    %v9132 = vadd.f32 %v9131, %v9061
    %v9133 = vadd.f32 %v9132, %v9062
    %v9134 = vadd.f32 %v9133, %v9063
    %v9135 = vadd.f32 %v9134, %v9064
    %v9136 = vadd.f32 %v9135, %v9065
    %v9137 = vadd.f32 %v9136, %v9066
    %v9138 = vadd.f32 %v9137, %v9067
    %v9139 = vadd.f32 %v9138, %v9068
    %v9140 = vadd.f32 %v9139, %v9069
    %v9141 = vadd.f32 %v9140, %v9070
    %v9142 = vadd.f32 %v9141, %v9071
    %v9143 = vadd.f32 %v9142, %v9072
    %v9144 = vadd.f32 %v9143, %v9073
    %v9145 = vadd.f32 %v9144, %v9074
    %v9146 = vadd.f32 %v9145, %v9075
    %v9147 = vadd.f32 %v9146, %v9076
    %v9148 = vadd.f32 %v9147, %v9077
    %v9149 = vadd.f32 %v9148, %v9078
    %v9150 = vadd.f32 %v9149, %v9079
    %v9151 = vadd.f32 %v9150, %v9080
    %v9152 = vadd.f32 %v9151, %v9081
    %v9153 = vadd.f32 %v9152, %v9082
    %v9154 = vadd.f32 %v9153, %v9083
    %v9155 = vadd.f32 %v9154, %v9084
    %v9156 = vrot.slane %v9155, 4
    %v9157 = vadd.f32 %v9155, %v9156
    %v9158 = vrot.slane %v9157, 2
    %v9159 = vadd.f32 %v9157, %v9158
    %v9160 = vrot.slane %v9159, 1
    %v9161 = vadd.f32 %v9159, %v9160
    %9162 = vst [vmem:[#allocation4 + $0x1] sm:$0x1] %v9161
    %9163 = vst [vmem:[#allocation2] sm:$0xff] %v7352
    %9164 = vst [vmem:[#allocation2 + $0x8] sm:$0xff] %v7353
    %9165 = vst [vmem:[#allocation2 + $0x10] sm:$0xff] %v7354
    %9166 = vst [vmem:[#allocation2 + $0x18] sm:$0xff] %v7355
    %9167 = vst [vmem:[#allocation2 + $0x20] sm:$0xff] %v7356
    %9168 = vst [vmem:[#allocation2 + $0x28] sm:$0xff] %v7357
    %9169 = vst [vmem:[#allocation2 + $0x30] sm:$0xff] %v7358
    %9170 = vst [vmem:[#allocation2 + $0x38] sm:$0xff] %v7359
    %9171 = vst [vmem:[#allocation2 + $0x40] sm:$0xff] %v7360
    %9172 = vst [vmem:[#allocation2 + $0x48] sm:$0xff] %v7361
    %9173 = vst [vmem:[#allocation2 + $0x50] sm:$0xff] %v7362
    %9174 = vst [vmem:[#allocation2 + $0x58] sm:$0xff] %v7363
    %9175 = vst [vmem:[#allocation2 + $0x60] sm:$0xff] %v7364
    %9176 = vst [vmem:[#allocation2 + $0x68] sm:$0xff] %v7365
    %9177 = vst [vmem:[#allocation2 + $0x70] sm:$0xff] %v7366
    %9178 = vst [vmem:[#allocation2 + $0x78] sm:$0xff] %v7367
    %9179 = vst [vmem:[#allocation2 + $0x80] sm:$0xff] %v7368
    %9180 = vst [vmem:[#allocation2 + $0x88] sm:$0xff] %v7369
    %9181 = vst [vmem:[#allocation2 + $0x90] sm:$0xff] %v7370
    %9182 = vst [vmem:[#allocation2 + $0x98] sm:$0xff] %v7371
    %9183 = vst [vmem:[#allocation2 + $0xa0] sm:$0xff] %v7372
    %9184 = vst [vmem:[#allocation2 + $0xa8] sm:$0xff] %v7373
    %9185 = vst [vmem:[#allocation2 + $0xb0] sm:$0xff] %v7374
    %9186 = vst [vmem:[#allocation2 + $0xb8] sm:$0xff] %v7375
    %9187 = vst [vmem:[#allocation2 + $0xc0] sm:$0xff] %v7376
    %9188 = vst [vmem:[#allocation2 + $0xc8] sm:$0xff] %v7377
    %9189 = vst [vmem:[#allocation2 + $0xd0] sm:$0xff] %v7378
    %9190 = vst [vmem:[#allocation2 + $0xd8] sm:$0xff] %v7379
    %9191 = vst [vmem:[#allocation2 + $0xe0] sm:$0xff] %v7380
    %9192 = vst [vmem:[#allocation2 + $0xe8] sm:$0xff] %v7381
    %9193 = vst [vmem:[#allocation2 + $0xf0] sm:$0xff] %v7382
    %9194 = vst [vmem:[#allocation2 + $0xf8] sm:$0xff] %v7383
    %9195 = vst [vmem:[#allocation2 + $0x100] sm:$0xff] %v7384
    %9196 = vst [vmem:[#allocation2 + $0x108] sm:$0xff] %v7385
    %9197 = vst [vmem:[#allocation2 + $0x110] sm:$0xff] %v7386
    %9198 = vst [vmem:[#allocation2 + $0x118] sm:$0xff] %v7387
    %9199 = vst [vmem:[#allocation2 + $0x120] sm:$0xff] %v7388
    %9200 = vst [vmem:[#allocation2 + $0x128] sm:$0xff] %v7389
    %9201 = vst [vmem:[#allocation2 + $0x130] sm:$0xff] %v7390
    %9202 = vst [vmem:[#allocation2 + $0x138] sm:$0xff] %v7391
    %9203 = vst [vmem:[#allocation2 + $0x140] sm:$0xff] %v7392
    %9204 = vst [vmem:[#allocation2 + $0x148] sm:$0xff] %v7393
    %9205 = vst [vmem:[#allocation2 + $0x150] sm:$0xff] %v7394
    %9206 = vst [vmem:[#allocation2 + $0x158] sm:$0xff] %v7395
    %9207 = vst [vmem:[#allocation2 + $0x160] sm:$0xff] %v7396
    %9208 = vst [vmem:[#allocation2 + $0x168] sm:$0xff] %v7397
    %9209 = vst [vmem:[#allocation2 + $0x170] sm:$0xff] %v7398
    %9210 = vst [vmem:[#allocation2 + $0x178] sm:$0xff] %v7399
    %9211 = vst [vmem:[#allocation2 + $0x180] sm:$0xff] %v7400
    %9212 = vst [vmem:[#allocation2 + $0x188] sm:$0xff] %v7401
    %9213 = vst [vmem:[#allocation2 + $0x190] sm:$0xff] %v7402
    %9214 = vst [vmem:[#allocation2 + $0x198] sm:$0xff] %v7403
    %9215 = vst [vmem:[#allocation2 + $0x1a0] sm:$0xff] %v7404
    %9216 = vst [vmem:[#allocation2 + $0x1a8] sm:$0xff] %v7405
    %9217 = vst [vmem:[#allocation2 + $0x1b0] sm:$0xff] %v7406
    %9218 = vst [vmem:[#allocation2 + $0x1b8] sm:$0xff] %v7407
    %9219 = vst [vmem:[#allocation2 + $0x1c0] sm:$0xff] %v7408
    %9220 = vst [vmem:[#allocation2 + $0x1c8] sm:$0xff] %v7409
    %9221 = vst [vmem:[#allocation2 + $0x1d0] sm:$0xff] %v7410
    %9222 = vst [vmem:[#allocation2 + $0x1d8] sm:$0xff] %v7411
    %9223 = vst [vmem:[#allocation2 + $0x1e0] sm:$0xff] %v7412
    %9224 = vst [vmem:[#allocation2 + $0x1e8] sm:$0xff] %v7413
    %9225 = vst [vmem:[#allocation2 + $0x1f0] sm:$0xff] %v7414
    %9226 = vst [vmem:[#allocation2 + $0x1f8] sm:$0xff] %v7415
    %9227 = vst [vmem:[#allocation2 + $0x200] sm:$0xff] %v7416
    %9228 = vst [vmem:[#allocation2 + $0x208] sm:$0xff] %v7417
    %9229 = vst [vmem:[#allocation2 + $0x210] sm:$0xff] %v7418
    %9230 = vst [vmem:[#allocation2 + $0x218] sm:$0xff] %v7419
    %9231 = vst [vmem:[#allocation2 + $0x220] sm:$0xff] %v7420
    %9232 = vst [vmem:[#allocation2 + $0x228] sm:$0xff] %v7421
    %9233 = vst [vmem:[#allocation2 + $0x230] sm:$0xff] %v7422
    %9234 = vst [vmem:[#allocation2 + $0x238] sm:$0xff] %v7423
    // Predicated region
    $region18: #{tpu_custom_call.1} parent=1 // pred_check
      _
    $region19: #{tpu_custom_call.1} parent=1 // pred_check_branch
      %9236 = sbr.rel (0) target = $region21
    $region20: #{tpu_custom_call.1} parent=1 // pred_region
      %s9238 = ssub.s32 9216, 9216
      %9239 = vsyncadd [#allocation3], %s9238
      %s9240 = sshll.u32 [#allocation2], 4
      %s9241 = int_to_ptr.vmem [resolvable:$true] %s9240
      %9246 = dma.vmem_to_hbm [thread:$0]  %s9241, 9216, %s4, [#allocation3], 128, 128, 8
    $region21: #{tpu_custom_call.1} parent=1 // pred_fallthru
      _
    // Predicated region
    $region22: #{tpu_custom_call.1} parent=1 // pred_check
      _
    $region23: #{tpu_custom_call.1} parent=1 // pred_check_branch
      %9248 = sbr.rel (0) target = $region25
    $region24: #{tpu_custom_call.1} parent=1 // pred_region
      %s9250 = ssub.s32 32, 32
      %9251 = vsyncadd [#allocation5], %s9250
      %s9253 = sshll.u32 [#allocation4], 4
      %s9254 = int_to_ptr.vmem [resolvable:$true] %s9253
      %9256 = dma.vmem_to_hbm [thread:$0]  %s9254, 32, %s5, [#allocation5]
    $region25: #{tpu_custom_call.1} parent=1 // pred_fallthru
      _
    // Predicated region
    $region26: #{tpu_custom_call.1} parent=1 // pred_check
      _
    $region27: #{tpu_custom_call.1} parent=1 // pred_check_branch
      %9258 = sbr.rel (0) target = $region29
    $region28: #{tpu_custom_call.1} parent=1 // pred_region
      %9259 = dma.done [#allocation3], 9216
    $region29: #{tpu_custom_call.1} parent=1 // pred_fallthru
      _
    // Predicated region
    $region30: #{tpu_custom_call.1} parent=1 // pred_check
      _
    $region31: #{tpu_custom_call.1} parent=1 // pred_check_branch
      %9261 = sbr.rel (0) target = $region33
    $region32: #{tpu_custom_call.1} parent=1 // pred_region
      %9262 = dma.done [#allocation5], 32
    $region33: #{tpu_custom_call.1} parent=1 // pred_fallthru
      _
    %9263 = vsyncpa [#allocation3], 1
    %9264 = vsyncpa [#allocation5], 1

</llo_original>
